<compile_context>
chip_gen: v7x
topology: tpu7x:2x2x1
jax: 0.10.0
libtpu: 0.0.40
codegen_flags: <defaults>
</compile_context>

<pallas_src>
import functools

import jax
import jax.numpy as jnp
from jax.experimental import pallas as pl
from jax.experimental.pallas import tpu as pltpu


def _gat_kernel(*refs, layer_cfgs, negative_slope):
    """Fully-fused multi-layer GAT forward.

    refs = [adj, feats, (w, alr, b) per layer ..., out_0 ... out_{L-1}]
    layer_cfgs = tuple of (num_heads, hpad, fout, act, combine, out_pad)
    """
    num_layers = len(layer_cfgs)
    adj_ref, h_ref = refs[0], refs[1]
    param_refs = refs[2:2 + 3 * num_layers]
    out_refs = refs[2 + 3 * num_layers:]

    adj_mask = adj_ref[...] > 0.0        # (N, N): adj[v,u]=1 iff edge u -> v
    neg_big = jnp.float32(-1e30)

    h = h_ref[...].astype(jnp.float32)
    for l, (num_heads, hpad, fout, act, combine, out_pad) in enumerate(layer_cfgs):
        w_ref, alr_ref, b_ref = param_refs[3 * l:3 * l + 3]
        out_ref = out_refs[l]

        # fc: bf16 operands, f32 accumulation on the MXU.
        z = jnp.dot(h.astype(jnp.bfloat16), w_ref[...].astype(jnp.bfloat16),
                    preferred_element_type=jnp.float32)              # (N, H*F)
        z_b = z.astype(jnp.bfloat16)

        # Fused attention projections (one tiny matmul).  Kept in f32 on purpose:
        # this feeds exp(), and the matmul is only (N,H*F)@(H*F,Hpad+H).
        lr = jnp.dot(z, alr_ref[...], preferred_element_type=jnp.float32)
        el = lr[:, :hpad]                                            # (N, Hpad) per source u
        er = lr[:, hpad:hpad + num_heads]                            # (N, H)    per dest   v
        el_t = jnp.transpose(el)                                     # (Hpad, N): lane = source
        bias = b_ref[...]                                            # (1, H*F)

        out_val = None
        for hh in range(num_heads):
            # logits[v, u] = LeakyReLU(er[v] + el[u]) : pure VPU broadcasts.
            logits = er[:, hh:hh + 1] + el_t[hh:hh + 1, :]           # (N, N)
            logits = jnp.where(logits > 0, logits, negative_slope * logits)
            logits = jnp.where(adj_mask, logits, neg_big)
            m = jnp.max(logits, axis=1, keepdims=True)
            p = jnp.exp(logits - m)                                  # masked entries -> 0.0
            s = jnp.sum(p, axis=1, keepdims=True)
            inv_s = pl.reciprocal(jnp.maximum(s, 1e-20), approx=True)
            # Aggregation matmul in bf16; normalization deferred past the dot.
            rst = jnp.dot(p.astype(jnp.bfloat16),
                          z_b[:, hh * fout:(hh + 1) * fout],
                          preferred_element_type=jnp.float32) * inv_s  # (N, F)
            if combine == "concat":
                out_val = rst if out_val is None else jnp.concatenate(
                    [out_val, rst], axis=1)
            else:
                rst = rst + bias[:, hh * fout:(hh + 1) * fout]
                out_val = rst if out_val is None else out_val + rst

        if combine == "concat":
            out_val = out_val + bias                                 # (N, H*F) = flatten(1)
        else:
            out_val = out_val / float(num_heads)                     # mean(1)

        if act == "relu":
            out_val = jnp.maximum(out_val, 0.0)
        elif act == "elu":
            out_val = jnp.where(out_val > 0, out_val,
                                jnp.exp(jnp.minimum(out_val, 0.0)) - 1.0)

        # Single lane-dense store per layer (narrow outputs zero-padded to 128 lanes).
        if out_pad > 0:
            out_ref[...] = jnp.concatenate(
                [out_val, jnp.zeros((out_val.shape[0], out_pad), jnp.float32)], axis=1)
        else:
            out_ref[...] = out_val

        # Next layer consumes the register value, not a VMEM readback.
        h = out_val


def _attn_projection_matrix(attn_l, attn_r):
    """Build the fused (H*F, Hpad+H) projection so that
    (z @ mat)[:, :Hpad][n, h]      == sum_f z[n, h*F+f] * attn_l[h, f]   (h < H)
    (z @ mat)[:, Hpad:Hpad+H][n,h] == sum_f z[n, h*F+f] * attn_r[h, f]
    Hpad = heads rounded up to a multiple of 8 (keeps the in-kernel transpose of el
    on a sublane-friendly shape)."""
    num_heads, fout = attn_l.shape
    hpad = max(8, ((num_heads + 7) // 8) * 8)
    eye = jnp.eye(num_heads, dtype=attn_l.dtype)

    def head_mat(a):
        return (a[:, :, None] * eye[:, None, :]).reshape(num_heads * fout, num_heads)

    al = head_mat(attn_l)
    ar = head_mat(attn_r)
    if hpad > num_heads:
        al = jnp.concatenate(
            [al, jnp.zeros((num_heads * fout, hpad - num_heads), al.dtype)], axis=1)
    return jnp.concatenate([al, ar], axis=1), hpad


def gat_forward(adj, feats, params, *, negative_slope=0.2, activation="relu"):
    """Replicates GAT.forward: returns (h_list, h_final). One fused pallas_call."""
    n = feats.shape[0]
    num_layers = len(params)

    inputs = [adj, feats]
    in_specs = [pl.BlockSpec(adj.shape, lambda i: (0, 0)),
                pl.BlockSpec(feats.shape, lambda i: (0, 0))]
    layer_cfgs = []
    out_shapes = []
    logical_widths = []
    for l, p in enumerate(params):
        num_heads, fout = p["attn_l"].shape
        alr_mat, hpad = _attn_projection_matrix(p["attn_l"], p["attn_r"])
        b2 = p["b"].reshape(1, num_heads * fout)
        for arr in (p["w"], alr_mat, b2):
            inputs.append(arr)
            in_specs.append(pl.BlockSpec(arr.shape, lambda i: (0, 0)))
        is_last = (l == num_layers - 1)
        combine = "mean" if is_last else "concat"
        act = None if is_last else activation
        out_dim = fout if is_last else num_heads * fout
        padded = max(128, ((out_dim + 127) // 128) * 128)       # lane-dense store width
        layer_cfgs.append((num_heads, hpad, fout, act, combine, padded - out_dim))
        logical_widths.append(out_dim)
        out_shapes.append(jax.ShapeDtypeStruct((n, padded), jnp.float32))

    out_specs = tuple(pl.BlockSpec(s.shape, lambda i: (0, 0)) for s in out_shapes)
    kernel = functools.partial(_gat_kernel, layer_cfgs=tuple(layer_cfgs),
                               negative_slope=negative_slope)
    outs = pl.pallas_call(
        kernel,
        out_shape=tuple(out_shapes),
        grid_spec=pltpu.PrefetchScalarGridSpec(
            num_scalar_prefetch=0,
            grid=(1,),
            in_specs=in_specs,
            out_specs=out_specs,
        ),
        compiler_params=pltpu.CompilerParams(
            dimension_semantics=("arbitrary",)),
    )(*inputs)
    h_list = [o[:, :w] for o, w in zip(outs, logical_widths)]
    return h_list, h_list[-1]


def init_gat_params(key, num_layers, input_dim, hidden_dim, output_dim, num_heads):
    """Mimics the module constructor (hidden_dim //= num_heads, heads=[H]*L+[1])
    with xavier-normal(gain=sqrt(2)) init like DGL GATConv; bias zero-init."""
    hid = hidden_dim // num_heads
    heads = [num_heads] * num_layers + [1]
    dims = [(input_dim, hid, heads[0])]
    for l in range(1, num_layers - 1):
        dims.append((hid * heads[l - 1], hid, heads[l]))
    dims.append((hid * heads[-2], output_dim, heads[-1]))

    gain = 2.0 ** 0.5
    params = []
    for din, fout, nh in dims:
        key, kw, kl, kr = jax.random.split(key, 4)
        w_std = gain * (2.0 / (din + nh * fout)) ** 0.5
        a_std = gain * (2.0 / (1 + fout)) ** 0.5
        params.append(dict(
            w=w_std * jax.random.normal(kw, (din, nh * fout), jnp.float32),
            attn_l=a_std * jax.random.normal(kl, (nh, fout), jnp.float32),
            attn_r=a_std * jax.random.normal(kr, (nh, fout), jnp.float32),
            b=jnp.zeros((nh * fout,), jnp.float32),
        ))
    return params


def gat_forward_ref(adj, feats, params, *, negative_slope, activation):
    """Pure-JAX reference of the same forward (HIGHEST precision matmuls)."""
    hp = jax.lax.Precision.HIGHEST
    num_layers = len(params)
    h = feats
    h_list = []
    for l, p in enumerate(params):
        num_heads, fout = p["attn_l"].shape
        z = jnp.dot(h, p["w"], precision=hp)
        z3 = z.reshape(-1, num_heads, fout)
        el = jnp.einsum("uhf,hf->uh", z3, p["attn_l"], precision=hp)
        er = jnp.einsum("vhf,hf->vh", z3, p["attn_r"], precision=hp)
        logits = er[:, None, :] + el[None, :, :]               # (v, u, h)
        logits = jnp.where(logits > 0, logits, negative_slope * logits)
        logits = jnp.where((adj > 0)[:, :, None], logits, -1e30)
        m = jnp.max(logits, axis=1, keepdims=True)
        pw = jnp.exp(logits - m) * adj[:, :, None]
        s = jnp.sum(pw, axis=1, keepdims=True)
        alpha = pw / jnp.maximum(s, 1e-20)
        rst = jnp.einsum("vuh,uhf->vhf", alpha, z3, precision=hp)
        rst = rst + p["b"].reshape(1, num_heads, fout)
        is_last = (l == num_layers - 1)
        if not is_last:
            if activation == "relu":
                rst = jnp.maximum(rst, 0.0)
            elif activation == "elu":
                rst = jnp.where(rst > 0, rst, jnp.exp(jnp.minimum(rst, 0.0)) - 1.0)
            h = rst.reshape(rst.shape[0], num_heads * fout)    # flatten(1)
        else:
            h = rst.mean(axis=1)                               # mean(1)
        h_list.append(h)
    return h_list, h


if __name__ == "__main__":
    key = jax.random.PRNGKey(0)
    k_p, k_x, k_adj = jax.random.split(key, 3)

    num_layers = 3
    num_nodes = 64
    input_dim = 64
    hidden_dim = 128          # 8 heads * 16 feats/head -> 128-wide (lane-dense) hidden
    output_dim = 32
    num_heads = 8
    negative_slope = 0.2
    activation = "relu"       # activation passed to hidden GATConv layers
    # dropout_ratio=0.5, attn_drop=0.3 : identity at inference time.

    params = init_gat_params(k_p, num_layers, input_dim, hidden_dim,
                             output_dim, num_heads)
    feats = jax.random.normal(k_x, (num_nodes, input_dim), jnp.float32)
    # Dense adjacency stands in for the DGL graph g: adj[v,u]=1 iff edge u->v.
    adj = jax.random.bernoulli(k_adj, 0.25, (num_nodes, num_nodes)).astype(jnp.float32)
    adj = jnp.maximum(adj, jnp.eye(num_nodes, dtype=jnp.float32))   # self-loops

    h_list, h = gat_forward(adj, feats, params,
                            negative_slope=negative_slope, activation=activation)
    h = jax.block_until_ready(h)
    for t in h_list:
        jax.block_until_ready(t)

    ref_list, ref_h = gat_forward_ref(adj, feats, params,
                                      negative_slope=negative_slope,
                                      activation=activation)

    assert h.shape == (num_nodes, output_dim)
    assert len(h_list) == num_layers
    # Tolerance accommodates bf16 MXU matmuls + approx reciprocal vs the
    # HIGHEST-precision f32 reference.
    for got, want in zip(h_list, ref_list):
        assert got.shape == want.shape
        assert jnp.allclose(got, want, atol=5e-2, rtol=5e-2), \
            float(jnp.max(jnp.abs(got - want)))

    print("KERNEL_OK")
</pallas_src>

<mosaic_0001>
module attributes {stable_mosaic.version = 11 : i64} {
  func.func @_gat_kernel(%arg0: i32, %arg1: memref<64x64xf32, #tpu.memory_space<vmem>>, %arg2: memref<64x64xf32, #tpu.memory_space<vmem>>, %arg3: memref<64x128xf32, #tpu.memory_space<vmem>>, %arg4: memref<128x16xf32, #tpu.memory_space<vmem>>, %arg5: memref<1x128xf32, #tpu.memory_space<vmem>>, %arg6: memref<128x128xf32, #tpu.memory_space<vmem>>, %arg7: memref<128x16xf32, #tpu.memory_space<vmem>>, %arg8: memref<1x128xf32, #tpu.memory_space<vmem>>, %arg9: memref<128x32xf32, #tpu.memory_space<vmem>>, %arg10: memref<32x9xf32, #tpu.memory_space<vmem>>, %arg11: memref<1x32xf32, #tpu.memory_space<vmem>>, %arg12: memref<64x128xf32, #tpu.memory_space<vmem>>, %arg13: memref<64x128xf32, #tpu.memory_space<vmem>>, %arg14: memref<64x128xf32, #tpu.memory_space<vmem>>) attributes {dimension_semantics = [#tpu.dimension_semantics<arbitrary>], iteration_bounds = array<i64: 1>, scalar_prefetch = 0 : i64, scratch_operands = 0 : i64, tpu.core_type = #tpu.core_type<tc>, window_params = [{pipeline_mode = #tpu.pipeline_mode<synchronous>, transform_indices = @transform_0, window_bounds = array<i64: 64, 64>}, {pipeline_mode = #tpu.pipeline_mode<synchronous>, transform_indices = @transform_1, window_bounds = array<i64: 64, 64>}, {pipeline_mode = #tpu.pipeline_mode<synchronous>, transform_indices = @transform_2, window_bounds = array<i64: 64, 128>}, {pipeline_mode = #tpu.pipeline_mode<synchronous>, transform_indices = @transform_3, window_bounds = array<i64: 128, 16>}, {pipeline_mode = #tpu.pipeline_mode<synchronous>, transform_indices = @transform_4, window_bounds = array<i64: 1, 128>}, {pipeline_mode = #tpu.pipeline_mode<synchronous>, transform_indices = @transform_5, window_bounds = array<i64: 128, 128>}, {pipeline_mode = #tpu.pipeline_mode<synchronous>, transform_indices = @transform_6, window_bounds = array<i64: 128, 16>}, {pipeline_mode = #tpu.pipeline_mode<synchronous>, transform_indices = @transform_7, window_bounds = array<i64: 1, 128>}, {pipeline_mode = #tpu.pipeline_mode<synchronous>, transform_indices = @transform_8, window_bounds = array<i64: 128, 32>}, {pipeline_mode = #tpu.pipeline_mode<synchronous>, transform_indices = @transform_9, window_bounds = array<i64: 32, 9>}, {pipeline_mode = #tpu.pipeline_mode<synchronous>, transform_indices = @transform_10, window_bounds = array<i64: 1, 32>}, {pipeline_mode = #tpu.pipeline_mode<synchronous>, transform_indices = @transform_11, window_bounds = array<i64: 64, 128>}, {pipeline_mode = #tpu.pipeline_mode<synchronous>, transform_indices = @transform_12, window_bounds = array<i64: 64, 128>}, {pipeline_mode = #tpu.pipeline_mode<synchronous>, transform_indices = @transform_13, window_bounds = array<i64: 64, 128>}]} {
    %c0 = arith.constant 0 : index
    %c0_0 = arith.constant 0 : index
    %0 = vector.load %arg1[%c0, %c0_0] : memref<64x64xf32, #tpu.memory_space<vmem>>, vector<64x64xf32>
    %cst = arith.constant 0.000000e+00 : f32
    %1 = vector.broadcast %cst : f32 to vector<64x64xf32>
    %2 = arith.cmpf ogt, %0, %1 : vector<64x64xf32>
    %c0_1 = arith.constant 0 : index
    %c0_2 = arith.constant 0 : index
    %3 = vector.load %arg2[%c0_1, %c0_2] : memref<64x64xf32, #tpu.memory_space<vmem>>, vector<64x64xf32>
    %4 = arith.truncf %3 : vector<64x64xf32> to vector<64x64xbf16>
    %c0_3 = arith.constant 0 : index
    %c0_4 = arith.constant 0 : index
    %5 = vector.load %arg3[%c0_3, %c0_4] : memref<64x128xf32, #tpu.memory_space<vmem>>, vector<64x128xf32>
    %6 = arith.truncf %5 : vector<64x128xf32> to vector<64x128xbf16>
    %cst_5 = arith.constant dense<0.000000e+00> : vector<64x128xf32>
    %7 = tpu.matmul %4, %6, %cst_5 {dimension_numbers = #tpu.dot_dimension_numbers<[1], [0], [0], [1], [0, 0, 1, 1], [], []>} : vector<64x64xbf16>, vector<64x128xbf16>, vector<64x128xf32> -> vector<64x128xf32>
    %8 = arith.truncf %7 : vector<64x128xf32> to vector<64x128xbf16>
    %c0_6 = arith.constant 0 : index
    %c0_7 = arith.constant 0 : index
    %9 = vector.load %arg4[%c0_6, %c0_7] : memref<128x16xf32, #tpu.memory_space<vmem>>, vector<128x16xf32>
    %cst_8 = arith.constant dense<0.000000e+00> : vector<64x16xf32>
    %10 = tpu.matmul %7, %9, %cst_8 {dimension_numbers = #tpu.dot_dimension_numbers<[1], [0], [0], [1], [0, 0, 1, 1], [], []>} : vector<64x128xf32>, vector<128x16xf32>, vector<64x16xf32> -> vector<64x16xf32>
    %11 = vector.extract_strided_slice %10 {offsets = [0, 0], sizes = [64, 8], strides = [1, 1]} : vector<64x16xf32> to vector<64x8xf32>
    %12 = vector.extract_strided_slice %10 {offsets = [0, 8], sizes = [64, 8], strides = [1, 1]} : vector<64x16xf32> to vector<64x8xf32>
    %13 = tpu.transpose %11, [1, 0] : vector<64x8xf32> -> vector<8x64xf32>
    %c0_9 = arith.constant 0 : index
    %c0_10 = arith.constant 0 : index
    %14 = vector.load %arg5[%c0_9, %c0_10] : memref<1x128xf32, #tpu.memory_space<vmem>>, vector<1x128xf32>
    %15 = vector.extract_strided_slice %12 {offsets = [0, 0], sizes = [64, 1], strides = [1, 1]} : vector<64x8xf32> to vector<64x1xf32>
    %16 = vector.extract_strided_slice %13 {offsets = [0, 0], sizes = [1, 64], strides = [1, 1]} : vector<8x64xf32> to vector<1x64xf32>
    %17 = vector.broadcast %15 : vector<64x1xf32> to vector<64x64xf32>
    %18 = vector.broadcast %16 : vector<1x64xf32> to vector<64x64xf32>
    %19 = arith.addf %17, %18 : vector<64x64xf32>
    %cst_11 = arith.constant 0.000000e+00 : f32
    %20 = vector.broadcast %cst_11 : f32 to vector<64x64xf32>
    %21 = arith.cmpf ogt, %19, %20 : vector<64x64xf32>
    %cst_12 = arith.constant 2.000000e-01 : f32
    %22 = vector.broadcast %cst_12 : f32 to vector<64x64xf32>
    %23 = arith.mulf %22, %19 : vector<64x64xf32>
    %24 = arith.select %21, %19, %23 : vector<64x64xi1>, vector<64x64xf32>
    %cst_13 = arith.constant -1.000000e+30 : f32
    %25 = vector.broadcast %cst_13 : f32 to vector<64x64xf32>
    %26 = arith.select %2, %24, %25 : vector<64x64xi1>, vector<64x64xf32>
    %cst_14 = arith.constant dense<0xFF800000> : vector<64xf32>
    %27 = vector.multi_reduction <maximumf>, %26, %cst_14 [1] : vector<64x64xf32> to vector<64xf32>
    %28 = vector.shape_cast %27 : vector<64xf32> to vector<64x1xf32>
    %29 = vector.broadcast %28 : vector<64x1xf32> to vector<64x64xf32>
    %30 = arith.subf %26, %29 : vector<64x64xf32>
    %31 = math.exp %30 : vector<64x64xf32>
    %cst_15 = arith.constant dense<0.000000e+00> : vector<64xf32>
    %32 = vector.multi_reduction <add>, %31, %cst_15 [1] : vector<64x64xf32> to vector<64xf32>
    %33 = vector.shape_cast %32 : vector<64xf32> to vector<64x1xf32>
    %cst_16 = arith.constant 9.99999968E-21 : f32
    %34 = vector.broadcast %cst_16 : f32 to vector<64x1xf32>
    %35 = arith.maximumf %33, %34 : vector<64x1xf32>
    %36 = tpu.reciprocal %35 {approx = true} : vector<64x1xf32> -> vector<64x1xf32>
    %37 = arith.truncf %31 : vector<64x64xf32> to vector<64x64xbf16>
    %38 = vector.extract_strided_slice %8 {offsets = [0, 0], sizes = [64, 16], strides = [1, 1]} : vector<64x128xbf16> to vector<64x16xbf16>
    %cst_17 = arith.constant dense<0.000000e+00> : vector<64x16xf32>
    %39 = tpu.matmul %37, %38, %cst_17 {dimension_numbers = #tpu.dot_dimension_numbers<[1], [0], [0], [1], [0, 0, 1, 1], [], []>} : vector<64x64xbf16>, vector<64x16xbf16>, vector<64x16xf32> -> vector<64x16xf32>
    %40 = vector.broadcast %36 : vector<64x1xf32> to vector<64x16xf32>
    %41 = arith.mulf %39, %40 : vector<64x16xf32>
    %42 = vector.extract_strided_slice %12 {offsets = [0, 1], sizes = [64, 1], strides = [1, 1]} : vector<64x8xf32> to vector<64x1xf32>
    %43 = vector.extract_strided_slice %13 {offsets = [1, 0], sizes = [1, 64], strides = [1, 1]} : vector<8x64xf32> to vector<1x64xf32>
    %44 = vector.broadcast %42 : vector<64x1xf32> to vector<64x64xf32>
    %45 = vector.broadcast %43 : vector<1x64xf32> to vector<64x64xf32>
    %46 = arith.addf %44, %45 : vector<64x64xf32>
    %cst_18 = arith.constant 0.000000e+00 : f32
    %47 = vector.broadcast %cst_18 : f32 to vector<64x64xf32>
    %48 = arith.cmpf ogt, %46, %47 : vector<64x64xf32>
    %cst_19 = arith.constant 2.000000e-01 : f32
    %49 = vector.broadcast %cst_19 : f32 to vector<64x64xf32>
    %50 = arith.mulf %49, %46 : vector<64x64xf32>
    %51 = arith.select %48, %46, %50 : vector<64x64xi1>, vector<64x64xf32>
    %cst_20 = arith.constant -1.000000e+30 : f32
    %52 = vector.broadcast %cst_20 : f32 to vector<64x64xf32>
    %53 = arith.select %2, %51, %52 : vector<64x64xi1>, vector<64x64xf32>
    %cst_21 = arith.constant dense<0xFF800000> : vector<64xf32>
    %54 = vector.multi_reduction <maximumf>, %53, %cst_21 [1] : vector<64x64xf32> to vector<64xf32>
    %55 = vector.shape_cast %54 : vector<64xf32> to vector<64x1xf32>
    %56 = vector.broadcast %55 : vector<64x1xf32> to vector<64x64xf32>
    %57 = arith.subf %53, %56 : vector<64x64xf32>
    %58 = math.exp %57 : vector<64x64xf32>
    %cst_22 = arith.constant dense<0.000000e+00> : vector<64xf32>
    %59 = vector.multi_reduction <add>, %58, %cst_22 [1] : vector<64x64xf32> to vector<64xf32>
    %60 = vector.shape_cast %59 : vector<64xf32> to vector<64x1xf32>
    %cst_23 = arith.constant 9.99999968E-21 : f32
    %61 = vector.broadcast %cst_23 : f32 to vector<64x1xf32>
    %62 = arith.maximumf %60, %61 : vector<64x1xf32>
    %63 = tpu.reciprocal %62 {approx = true} : vector<64x1xf32> -> vector<64x1xf32>
    %64 = arith.truncf %58 : vector<64x64xf32> to vector<64x64xbf16>
    %65 = vector.extract_strided_slice %8 {offsets = [0, 16], sizes = [64, 16], strides = [1, 1]} : vector<64x128xbf16> to vector<64x16xbf16>
    %cst_24 = arith.constant dense<0.000000e+00> : vector<64x16xf32>
    %66 = tpu.matmul %64, %65, %cst_24 {dimension_numbers = #tpu.dot_dimension_numbers<[1], [0], [0], [1], [0, 0, 1, 1], [], []>} : vector<64x64xbf16>, vector<64x16xbf16>, vector<64x16xf32> -> vector<64x16xf32>
    %67 = vector.broadcast %63 : vector<64x1xf32> to vector<64x16xf32>
    %68 = arith.mulf %66, %67 : vector<64x16xf32>
    %69 = tpu.concatenate %41, %68 in 1 : vector<64x16xf32>, vector<64x16xf32> -> vector<64x32xf32>
    %70 = vector.extract_strided_slice %12 {offsets = [0, 2], sizes = [64, 1], strides = [1, 1]} : vector<64x8xf32> to vector<64x1xf32>
    %71 = vector.extract_strided_slice %13 {offsets = [2, 0], sizes = [1, 64], strides = [1, 1]} : vector<8x64xf32> to vector<1x64xf32>
    %72 = vector.broadcast %70 : vector<64x1xf32> to vector<64x64xf32>
    %73 = vector.broadcast %71 : vector<1x64xf32> to vector<64x64xf32>
    %74 = arith.addf %72, %73 : vector<64x64xf32>
    %cst_25 = arith.constant 0.000000e+00 : f32
    %75 = vector.broadcast %cst_25 : f32 to vector<64x64xf32>
    %76 = arith.cmpf ogt, %74, %75 : vector<64x64xf32>
    %cst_26 = arith.constant 2.000000e-01 : f32
    %77 = vector.broadcast %cst_26 : f32 to vector<64x64xf32>
    %78 = arith.mulf %77, %74 : vector<64x64xf32>
    %79 = arith.select %76, %74, %78 : vector<64x64xi1>, vector<64x64xf32>
    %cst_27 = arith.constant -1.000000e+30 : f32
    %80 = vector.broadcast %cst_27 : f32 to vector<64x64xf32>
    %81 = arith.select %2, %79, %80 : vector<64x64xi1>, vector<64x64xf32>
    %cst_28 = arith.constant dense<0xFF800000> : vector<64xf32>
    %82 = vector.multi_reduction <maximumf>, %81, %cst_28 [1] : vector<64x64xf32> to vector<64xf32>
    %83 = vector.shape_cast %82 : vector<64xf32> to vector<64x1xf32>
    %84 = vector.broadcast %83 : vector<64x1xf32> to vector<64x64xf32>
    %85 = arith.subf %81, %84 : vector<64x64xf32>
    %86 = math.exp %85 : vector<64x64xf32>
    %cst_29 = arith.constant dense<0.000000e+00> : vector<64xf32>
    %87 = vector.multi_reduction <add>, %86, %cst_29 [1] : vector<64x64xf32> to vector<64xf32>
    %88 = vector.shape_cast %87 : vector<64xf32> to vector<64x1xf32>
    %cst_30 = arith.constant 9.99999968E-21 : f32
    %89 = vector.broadcast %cst_30 : f32 to vector<64x1xf32>
    %90 = arith.maximumf %88, %89 : vector<64x1xf32>
    %91 = tpu.reciprocal %90 {approx = true} : vector<64x1xf32> -> vector<64x1xf32>
    %92 = arith.truncf %86 : vector<64x64xf32> to vector<64x64xbf16>
    %93 = vector.extract_strided_slice %8 {offsets = [0, 32], sizes = [64, 16], strides = [1, 1]} : vector<64x128xbf16> to vector<64x16xbf16>
    %cst_31 = arith.constant dense<0.000000e+00> : vector<64x16xf32>
    %94 = tpu.matmul %92, %93, %cst_31 {dimension_numbers = #tpu.dot_dimension_numbers<[1], [0], [0], [1], [0, 0, 1, 1], [], []>} : vector<64x64xbf16>, vector<64x16xbf16>, vector<64x16xf32> -> vector<64x16xf32>
    %95 = vector.broadcast %91 : vector<64x1xf32> to vector<64x16xf32>
    %96 = arith.mulf %94, %95 : vector<64x16xf32>
    %97 = tpu.concatenate %69, %96 in 1 : vector<64x32xf32>, vector<64x16xf32> -> vector<64x48xf32>
    %98 = vector.extract_strided_slice %12 {offsets = [0, 3], sizes = [64, 1], strides = [1, 1]} : vector<64x8xf32> to vector<64x1xf32>
    %99 = vector.extract_strided_slice %13 {offsets = [3, 0], sizes = [1, 64], strides = [1, 1]} : vector<8x64xf32> to vector<1x64xf32>
    %100 = vector.broadcast %98 : vector<64x1xf32> to vector<64x64xf32>
    %101 = vector.broadcast %99 : vector<1x64xf32> to vector<64x64xf32>
    %102 = arith.addf %100, %101 : vector<64x64xf32>
    %cst_32 = arith.constant 0.000000e+00 : f32
    %103 = vector.broadcast %cst_32 : f32 to vector<64x64xf32>
    %104 = arith.cmpf ogt, %102, %103 : vector<64x64xf32>
    %cst_33 = arith.constant 2.000000e-01 : f32
    %105 = vector.broadcast %cst_33 : f32 to vector<64x64xf32>
    %106 = arith.mulf %105, %102 : vector<64x64xf32>
    %107 = arith.select %104, %102, %106 : vector<64x64xi1>, vector<64x64xf32>
    %cst_34 = arith.constant -1.000000e+30 : f32
    %108 = vector.broadcast %cst_34 : f32 to vector<64x64xf32>
    %109 = arith.select %2, %107, %108 : vector<64x64xi1>, vector<64x64xf32>
    %cst_35 = arith.constant dense<0xFF800000> : vector<64xf32>
    %110 = vector.multi_reduction <maximumf>, %109, %cst_35 [1] : vector<64x64xf32> to vector<64xf32>
    %111 = vector.shape_cast %110 : vector<64xf32> to vector<64x1xf32>
    %112 = vector.broadcast %111 : vector<64x1xf32> to vector<64x64xf32>
    %113 = arith.subf %109, %112 : vector<64x64xf32>
    %114 = math.exp %113 : vector<64x64xf32>
    %cst_36 = arith.constant dense<0.000000e+00> : vector<64xf32>
    %115 = vector.multi_reduction <add>, %114, %cst_36 [1] : vector<64x64xf32> to vector<64xf32>
    %116 = vector.shape_cast %115 : vector<64xf32> to vector<64x1xf32>
    %cst_37 = arith.constant 9.99999968E-21 : f32
    %117 = vector.broadcast %cst_37 : f32 to vector<64x1xf32>
    %118 = arith.maximumf %116, %117 : vector<64x1xf32>
    %119 = tpu.reciprocal %118 {approx = true} : vector<64x1xf32> -> vector<64x1xf32>
    %120 = arith.truncf %114 : vector<64x64xf32> to vector<64x64xbf16>
    %121 = vector.extract_strided_slice %8 {offsets = [0, 48], sizes = [64, 16], strides = [1, 1]} : vector<64x128xbf16> to vector<64x16xbf16>
    %cst_38 = arith.constant dense<0.000000e+00> : vector<64x16xf32>
    %122 = tpu.matmul %120, %121, %cst_38 {dimension_numbers = #tpu.dot_dimension_numbers<[1], [0], [0], [1], [0, 0, 1, 1], [], []>} : vector<64x64xbf16>, vector<64x16xbf16>, vector<64x16xf32> -> vector<64x16xf32>
    %123 = vector.broadcast %119 : vector<64x1xf32> to vector<64x16xf32>
    %124 = arith.mulf %122, %123 : vector<64x16xf32>
    %125 = tpu.concatenate %97, %124 in 1 : vector<64x48xf32>, vector<64x16xf32> -> vector<64x64xf32>
    %126 = vector.extract_strided_slice %12 {offsets = [0, 4], sizes = [64, 1], strides = [1, 1]} : vector<64x8xf32> to vector<64x1xf32>
    %127 = vector.extract_strided_slice %13 {offsets = [4, 0], sizes = [1, 64], strides = [1, 1]} : vector<8x64xf32> to vector<1x64xf32>
    %128 = vector.broadcast %126 : vector<64x1xf32> to vector<64x64xf32>
    %129 = vector.broadcast %127 : vector<1x64xf32> to vector<64x64xf32>
    %130 = arith.addf %128, %129 : vector<64x64xf32>
    %cst_39 = arith.constant 0.000000e+00 : f32
    %131 = vector.broadcast %cst_39 : f32 to vector<64x64xf32>
    %132 = arith.cmpf ogt, %130, %131 : vector<64x64xf32>
    %cst_40 = arith.constant 2.000000e-01 : f32
    %133 = vector.broadcast %cst_40 : f32 to vector<64x64xf32>
    %134 = arith.mulf %133, %130 : vector<64x64xf32>
    %135 = arith.select %132, %130, %134 : vector<64x64xi1>, vector<64x64xf32>
    %cst_41 = arith.constant -1.000000e+30 : f32
    %136 = vector.broadcast %cst_41 : f32 to vector<64x64xf32>
    %137 = arith.select %2, %135, %136 : vector<64x64xi1>, vector<64x64xf32>
    %cst_42 = arith.constant dense<0xFF800000> : vector<64xf32>
    %138 = vector.multi_reduction <maximumf>, %137, %cst_42 [1] : vector<64x64xf32> to vector<64xf32>
    %139 = vector.shape_cast %138 : vector<64xf32> to vector<64x1xf32>
    %140 = vector.broadcast %139 : vector<64x1xf32> to vector<64x64xf32>
    %141 = arith.subf %137, %140 : vector<64x64xf32>
    %142 = math.exp %141 : vector<64x64xf32>
    %cst_43 = arith.constant dense<0.000000e+00> : vector<64xf32>
    %143 = vector.multi_reduction <add>, %142, %cst_43 [1] : vector<64x64xf32> to vector<64xf32>
    %144 = vector.shape_cast %143 : vector<64xf32> to vector<64x1xf32>
    %cst_44 = arith.constant 9.99999968E-21 : f32
    %145 = vector.broadcast %cst_44 : f32 to vector<64x1xf32>
    %146 = arith.maximumf %144, %145 : vector<64x1xf32>
    %147 = tpu.reciprocal %146 {approx = true} : vector<64x1xf32> -> vector<64x1xf32>
    %148 = arith.truncf %142 : vector<64x64xf32> to vector<64x64xbf16>
    %149 = vector.extract_strided_slice %8 {offsets = [0, 64], sizes = [64, 16], strides = [1, 1]} : vector<64x128xbf16> to vector<64x16xbf16>
    %cst_45 = arith.constant dense<0.000000e+00> : vector<64x16xf32>
    %150 = tpu.matmul %148, %149, %cst_45 {dimension_numbers = #tpu.dot_dimension_numbers<[1], [0], [0], [1], [0, 0, 1, 1], [], []>} : vector<64x64xbf16>, vector<64x16xbf16>, vector<64x16xf32> -> vector<64x16xf32>
    %151 = vector.broadcast %147 : vector<64x1xf32> to vector<64x16xf32>
    %152 = arith.mulf %150, %151 : vector<64x16xf32>
    %153 = tpu.concatenate %125, %152 in 1 : vector<64x64xf32>, vector<64x16xf32> -> vector<64x80xf32>
    %154 = vector.extract_strided_slice %12 {offsets = [0, 5], sizes = [64, 1], strides = [1, 1]} : vector<64x8xf32> to vector<64x1xf32>
    %155 = vector.extract_strided_slice %13 {offsets = [5, 0], sizes = [1, 64], strides = [1, 1]} : vector<8x64xf32> to vector<1x64xf32>
    %156 = vector.broadcast %154 : vector<64x1xf32> to vector<64x64xf32>
    %157 = vector.broadcast %155 : vector<1x64xf32> to vector<64x64xf32>
    %158 = arith.addf %156, %157 : vector<64x64xf32>
    %cst_46 = arith.constant 0.000000e+00 : f32
    %159 = vector.broadcast %cst_46 : f32 to vector<64x64xf32>
    %160 = arith.cmpf ogt, %158, %159 : vector<64x64xf32>
    %cst_47 = arith.constant 2.000000e-01 : f32
    %161 = vector.broadcast %cst_47 : f32 to vector<64x64xf32>
    %162 = arith.mulf %161, %158 : vector<64x64xf32>
    %163 = arith.select %160, %158, %162 : vector<64x64xi1>, vector<64x64xf32>
    %cst_48 = arith.constant -1.000000e+30 : f32
    %164 = vector.broadcast %cst_48 : f32 to vector<64x64xf32>
    %165 = arith.select %2, %163, %164 : vector<64x64xi1>, vector<64x64xf32>
    %cst_49 = arith.constant dense<0xFF800000> : vector<64xf32>
    %166 = vector.multi_reduction <maximumf>, %165, %cst_49 [1] : vector<64x64xf32> to vector<64xf32>
    %167 = vector.shape_cast %166 : vector<64xf32> to vector<64x1xf32>
    %168 = vector.broadcast %167 : vector<64x1xf32> to vector<64x64xf32>
    %169 = arith.subf %165, %168 : vector<64x64xf32>
    %170 = math.exp %169 : vector<64x64xf32>
    %cst_50 = arith.constant dense<0.000000e+00> : vector<64xf32>
    %171 = vector.multi_reduction <add>, %170, %cst_50 [1] : vector<64x64xf32> to vector<64xf32>
    %172 = vector.shape_cast %171 : vector<64xf32> to vector<64x1xf32>
    %cst_51 = arith.constant 9.99999968E-21 : f32
    %173 = vector.broadcast %cst_51 : f32 to vector<64x1xf32>
    %174 = arith.maximumf %172, %173 : vector<64x1xf32>
    %175 = tpu.reciprocal %174 {approx = true} : vector<64x1xf32> -> vector<64x1xf32>
    %176 = arith.truncf %170 : vector<64x64xf32> to vector<64x64xbf16>
    %177 = vector.extract_strided_slice %8 {offsets = [0, 80], sizes = [64, 16], strides = [1, 1]} : vector<64x128xbf16> to vector<64x16xbf16>
    %cst_52 = arith.constant dense<0.000000e+00> : vector<64x16xf32>
    %178 = tpu.matmul %176, %177, %cst_52 {dimension_numbers = #tpu.dot_dimension_numbers<[1], [0], [0], [1], [0, 0, 1, 1], [], []>} : vector<64x64xbf16>, vector<64x16xbf16>, vector<64x16xf32> -> vector<64x16xf32>
    %179 = vector.broadcast %175 : vector<64x1xf32> to vector<64x16xf32>
    %180 = arith.mulf %178, %179 : vector<64x16xf32>
    %181 = tpu.concatenate %153, %180 in 1 : vector<64x80xf32>, vector<64x16xf32> -> vector<64x96xf32>
    %182 = vector.extract_strided_slice %12 {offsets = [0, 6], sizes = [64, 1], strides = [1, 1]} : vector<64x8xf32> to vector<64x1xf32>
    %183 = vector.extract_strided_slice %13 {offsets = [6, 0], sizes = [1, 64], strides = [1, 1]} : vector<8x64xf32> to vector<1x64xf32>
    %184 = vector.broadcast %182 : vector<64x1xf32> to vector<64x64xf32>
    %185 = vector.broadcast %183 : vector<1x64xf32> to vector<64x64xf32>
    %186 = arith.addf %184, %185 : vector<64x64xf32>
    %cst_53 = arith.constant 0.000000e+00 : f32
    %187 = vector.broadcast %cst_53 : f32 to vector<64x64xf32>
    %188 = arith.cmpf ogt, %186, %187 : vector<64x64xf32>
    %cst_54 = arith.constant 2.000000e-01 : f32
    %189 = vector.broadcast %cst_54 : f32 to vector<64x64xf32>
    %190 = arith.mulf %189, %186 : vector<64x64xf32>
    %191 = arith.select %188, %186, %190 : vector<64x64xi1>, vector<64x64xf32>
    %cst_55 = arith.constant -1.000000e+30 : f32
    %192 = vector.broadcast %cst_55 : f32 to vector<64x64xf32>
    %193 = arith.select %2, %191, %192 : vector<64x64xi1>, vector<64x64xf32>
    %cst_56 = arith.constant dense<0xFF800000> : vector<64xf32>
    %194 = vector.multi_reduction <maximumf>, %193, %cst_56 [1] : vector<64x64xf32> to vector<64xf32>
    %195 = vector.shape_cast %194 : vector<64xf32> to vector<64x1xf32>
    %196 = vector.broadcast %195 : vector<64x1xf32> to vector<64x64xf32>
    %197 = arith.subf %193, %196 : vector<64x64xf32>
    %198 = math.exp %197 : vector<64x64xf32>
    %cst_57 = arith.constant dense<0.000000e+00> : vector<64xf32>
    %199 = vector.multi_reduction <add>, %198, %cst_57 [1] : vector<64x64xf32> to vector<64xf32>
    %200 = vector.shape_cast %199 : vector<64xf32> to vector<64x1xf32>
    %cst_58 = arith.constant 9.99999968E-21 : f32
    %201 = vector.broadcast %cst_58 : f32 to vector<64x1xf32>
    %202 = arith.maximumf %200, %201 : vector<64x1xf32>
    %203 = tpu.reciprocal %202 {approx = true} : vector<64x1xf32> -> vector<64x1xf32>
    %204 = arith.truncf %198 : vector<64x64xf32> to vector<64x64xbf16>
    %205 = vector.extract_strided_slice %8 {offsets = [0, 96], sizes = [64, 16], strides = [1, 1]} : vector<64x128xbf16> to vector<64x16xbf16>
    %cst_59 = arith.constant dense<0.000000e+00> : vector<64x16xf32>
    %206 = tpu.matmul %204, %205, %cst_59 {dimension_numbers = #tpu.dot_dimension_numbers<[1], [0], [0], [1], [0, 0, 1, 1], [], []>} : vector<64x64xbf16>, vector<64x16xbf16>, vector<64x16xf32> -> vector<64x16xf32>
    %207 = vector.broadcast %203 : vector<64x1xf32> to vector<64x16xf32>
    %208 = arith.mulf %206, %207 : vector<64x16xf32>
    %209 = tpu.concatenate %181, %208 in 1 : vector<64x96xf32>, vector<64x16xf32> -> vector<64x112xf32>
    %210 = vector.extract_strided_slice %12 {offsets = [0, 7], sizes = [64, 1], strides = [1, 1]} : vector<64x8xf32> to vector<64x1xf32>
    %211 = vector.extract_strided_slice %13 {offsets = [7, 0], sizes = [1, 64], strides = [1, 1]} : vector<8x64xf32> to vector<1x64xf32>
    %212 = vector.broadcast %210 : vector<64x1xf32> to vector<64x64xf32>
    %213 = vector.broadcast %211 : vector<1x64xf32> to vector<64x64xf32>
    %214 = arith.addf %212, %213 : vector<64x64xf32>
    %cst_60 = arith.constant 0.000000e+00 : f32
    %215 = vector.broadcast %cst_60 : f32 to vector<64x64xf32>
    %216 = arith.cmpf ogt, %214, %215 : vector<64x64xf32>
    %cst_61 = arith.constant 2.000000e-01 : f32
    %217 = vector.broadcast %cst_61 : f32 to vector<64x64xf32>
    %218 = arith.mulf %217, %214 : vector<64x64xf32>
    %219 = arith.select %216, %214, %218 : vector<64x64xi1>, vector<64x64xf32>
    %cst_62 = arith.constant -1.000000e+30 : f32
    %220 = vector.broadcast %cst_62 : f32 to vector<64x64xf32>
    %221 = arith.select %2, %219, %220 : vector<64x64xi1>, vector<64x64xf32>
    %cst_63 = arith.constant dense<0xFF800000> : vector<64xf32>
    %222 = vector.multi_reduction <maximumf>, %221, %cst_63 [1] : vector<64x64xf32> to vector<64xf32>
    %223 = vector.shape_cast %222 : vector<64xf32> to vector<64x1xf32>
    %224 = vector.broadcast %223 : vector<64x1xf32> to vector<64x64xf32>
    %225 = arith.subf %221, %224 : vector<64x64xf32>
    %226 = math.exp %225 : vector<64x64xf32>
    %cst_64 = arith.constant dense<0.000000e+00> : vector<64xf32>
    %227 = vector.multi_reduction <add>, %226, %cst_64 [1] : vector<64x64xf32> to vector<64xf32>
    %228 = vector.shape_cast %227 : vector<64xf32> to vector<64x1xf32>
    %cst_65 = arith.constant 9.99999968E-21 : f32
    %229 = vector.broadcast %cst_65 : f32 to vector<64x1xf32>
    %230 = arith.maximumf %228, %229 : vector<64x1xf32>
    %231 = tpu.reciprocal %230 {approx = true} : vector<64x1xf32> -> vector<64x1xf32>
    %232 = arith.truncf %226 : vector<64x64xf32> to vector<64x64xbf16>
    %233 = vector.extract_strided_slice %8 {offsets = [0, 112], sizes = [64, 16], strides = [1, 1]} : vector<64x128xbf16> to vector<64x16xbf16>
    %cst_66 = arith.constant dense<0.000000e+00> : vector<64x16xf32>
    %234 = tpu.matmul %232, %233, %cst_66 {dimension_numbers = #tpu.dot_dimension_numbers<[1], [0], [0], [1], [0, 0, 1, 1], [], []>} : vector<64x64xbf16>, vector<64x16xbf16>, vector<64x16xf32> -> vector<64x16xf32>
    %235 = vector.broadcast %231 : vector<64x1xf32> to vector<64x16xf32>
    %236 = arith.mulf %234, %235 : vector<64x16xf32>
    %237 = tpu.concatenate %209, %236 in 1 : vector<64x112xf32>, vector<64x16xf32> -> vector<64x128xf32>
    %238 = vector.broadcast %14 : vector<1x128xf32> to vector<64x128xf32>
    %239 = arith.addf %237, %238 : vector<64x128xf32>
    %cst_67 = arith.constant 0.000000e+00 : f32
    %240 = vector.broadcast %cst_67 : f32 to vector<64x128xf32>
    %241 = arith.maximumf %239, %240 : vector<64x128xf32>
    %c0_68 = arith.constant 0 : index
    %c0_69 = arith.constant 0 : index
    %242 = vector.load %arg12[%c0_68, %c0_69] : memref<64x128xf32, #tpu.memory_space<vmem>>, vector<64x128xf32>
    tpu.vector_store %arg12[%c0_68, %c0_69], %241 {strides = array<i32>} : memref<64x128xf32, #tpu.memory_space<vmem>>, vector<64x128xf32>,
    %243 = arith.truncf %241 : vector<64x128xf32> to vector<64x128xbf16>
    %c0_70 = arith.constant 0 : index
    %c0_71 = arith.constant 0 : index
    %244 = vector.load %arg6[%c0_70, %c0_71] : memref<128x128xf32, #tpu.memory_space<vmem>>, vector<128x128xf32>
    %245 = arith.truncf %244 : vector<128x128xf32> to vector<128x128xbf16>
    %cst_72 = arith.constant dense<0.000000e+00> : vector<64x128xf32>
    %246 = tpu.matmul %243, %245, %cst_72 {dimension_numbers = #tpu.dot_dimension_numbers<[1], [0], [0], [1], [0, 0, 1, 1], [], []>} : vector<64x128xbf16>, vector<128x128xbf16>, vector<64x128xf32> -> vector<64x128xf32>
    %247 = arith.truncf %246 : vector<64x128xf32> to vector<64x128xbf16>
    %c0_73 = arith.constant 0 : index
    %c0_74 = arith.constant 0 : index
    %248 = vector.load %arg7[%c0_73, %c0_74] : memref<128x16xf32, #tpu.memory_space<vmem>>, vector<128x16xf32>
    %cst_75 = arith.constant dense<0.000000e+00> : vector<64x16xf32>
    %249 = tpu.matmul %246, %248, %cst_75 {dimension_numbers = #tpu.dot_dimension_numbers<[1], [0], [0], [1], [0, 0, 1, 1], [], []>} : vector<64x128xf32>, vector<128x16xf32>, vector<64x16xf32> -> vector<64x16xf32>
    %250 = vector.extract_strided_slice %249 {offsets = [0, 0], sizes = [64, 8], strides = [1, 1]} : vector<64x16xf32> to vector<64x8xf32>
    %251 = vector.extract_strided_slice %249 {offsets = [0, 8], sizes = [64, 8], strides = [1, 1]} : vector<64x16xf32> to vector<64x8xf32>
    %252 = tpu.transpose %250, [1, 0] : vector<64x8xf32> -> vector<8x64xf32>
    %c0_76 = arith.constant 0 : index
    %c0_77 = arith.constant 0 : index
    %253 = vector.load %arg8[%c0_76, %c0_77] : memref<1x128xf32, #tpu.memory_space<vmem>>, vector<1x128xf32>
    %254 = vector.extract_strided_slice %251 {offsets = [0, 0], sizes = [64, 1], strides = [1, 1]} : vector<64x8xf32> to vector<64x1xf32>
    %255 = vector.extract_strided_slice %252 {offsets = [0, 0], sizes = [1, 64], strides = [1, 1]} : vector<8x64xf32> to vector<1x64xf32>
    %256 = vector.broadcast %254 : vector<64x1xf32> to vector<64x64xf32>
    %257 = vector.broadcast %255 : vector<1x64xf32> to vector<64x64xf32>
    %258 = arith.addf %256, %257 : vector<64x64xf32>
    %cst_78 = arith.constant 0.000000e+00 : f32
    %259 = vector.broadcast %cst_78 : f32 to vector<64x64xf32>
    %260 = arith.cmpf ogt, %258, %259 : vector<64x64xf32>
    %cst_79 = arith.constant 2.000000e-01 : f32
    %261 = vector.broadcast %cst_79 : f32 to vector<64x64xf32>
    %262 = arith.mulf %261, %258 : vector<64x64xf32>
    %263 = arith.select %260, %258, %262 : vector<64x64xi1>, vector<64x64xf32>
    %cst_80 = arith.constant -1.000000e+30 : f32
    %264 = vector.broadcast %cst_80 : f32 to vector<64x64xf32>
    %265 = arith.select %2, %263, %264 : vector<64x64xi1>, vector<64x64xf32>
    %cst_81 = arith.constant dense<0xFF800000> : vector<64xf32>
    %266 = vector.multi_reduction <maximumf>, %265, %cst_81 [1] : vector<64x64xf32> to vector<64xf32>
    %267 = vector.shape_cast %266 : vector<64xf32> to vector<64x1xf32>
    %268 = vector.broadcast %267 : vector<64x1xf32> to vector<64x64xf32>
    %269 = arith.subf %265, %268 : vector<64x64xf32>
    %270 = math.exp %269 : vector<64x64xf32>
    %cst_82 = arith.constant dense<0.000000e+00> : vector<64xf32>
    %271 = vector.multi_reduction <add>, %270, %cst_82 [1] : vector<64x64xf32> to vector<64xf32>
    %272 = vector.shape_cast %271 : vector<64xf32> to vector<64x1xf32>
    %cst_83 = arith.constant 9.99999968E-21 : f32
    %273 = vector.broadcast %cst_83 : f32 to vector<64x1xf32>
    %274 = arith.maximumf %272, %273 : vector<64x1xf32>
    %275 = tpu.reciprocal %274 {approx = true} : vector<64x1xf32> -> vector<64x1xf32>
    %276 = arith.truncf %270 : vector<64x64xf32> to vector<64x64xbf16>
    %277 = vector.extract_strided_slice %247 {offsets = [0, 0], sizes = [64, 16], strides = [1, 1]} : vector<64x128xbf16> to vector<64x16xbf16>
    %cst_84 = arith.constant dense<0.000000e+00> : vector<64x16xf32>
    %278 = tpu.matmul %276, %277, %cst_84 {dimension_numbers = #tpu.dot_dimension_numbers<[1], [0], [0], [1], [0, 0, 1, 1], [], []>} : vector<64x64xbf16>, vector<64x16xbf16>, vector<64x16xf32> -> vector<64x16xf32>
    %279 = vector.broadcast %275 : vector<64x1xf32> to vector<64x16xf32>
    %280 = arith.mulf %278, %279 : vector<64x16xf32>
    %281 = vector.extract_strided_slice %251 {offsets = [0, 1], sizes = [64, 1], strides = [1, 1]} : vector<64x8xf32> to vector<64x1xf32>
    %282 = vector.extract_strided_slice %252 {offsets = [1, 0], sizes = [1, 64], strides = [1, 1]} : vector<8x64xf32> to vector<1x64xf32>
    %283 = vector.broadcast %281 : vector<64x1xf32> to vector<64x64xf32>
    %284 = vector.broadcast %282 : vector<1x64xf32> to vector<64x64xf32>
    %285 = arith.addf %283, %284 : vector<64x64xf32>
    %cst_85 = arith.constant 0.000000e+00 : f32
    %286 = vector.broadcast %cst_85 : f32 to vector<64x64xf32>
    %287 = arith.cmpf ogt, %285, %286 : vector<64x64xf32>
    %cst_86 = arith.constant 2.000000e-01 : f32
    %288 = vector.broadcast %cst_86 : f32 to vector<64x64xf32>
    %289 = arith.mulf %288, %285 : vector<64x64xf32>
    %290 = arith.select %287, %285, %289 : vector<64x64xi1>, vector<64x64xf32>
    %cst_87 = arith.constant -1.000000e+30 : f32
    %291 = vector.broadcast %cst_87 : f32 to vector<64x64xf32>
    %292 = arith.select %2, %290, %291 : vector<64x64xi1>, vector<64x64xf32>
    %cst_88 = arith.constant dense<0xFF800000> : vector<64xf32>
    %293 = vector.multi_reduction <maximumf>, %292, %cst_88 [1] : vector<64x64xf32> to vector<64xf32>
    %294 = vector.shape_cast %293 : vector<64xf32> to vector<64x1xf32>
    %295 = vector.broadcast %294 : vector<64x1xf32> to vector<64x64xf32>
    %296 = arith.subf %292, %295 : vector<64x64xf32>
    %297 = math.exp %296 : vector<64x64xf32>
    %cst_89 = arith.constant dense<0.000000e+00> : vector<64xf32>
    %298 = vector.multi_reduction <add>, %297, %cst_89 [1] : vector<64x64xf32> to vector<64xf32>
    %299 = vector.shape_cast %298 : vector<64xf32> to vector<64x1xf32>
    %cst_90 = arith.constant 9.99999968E-21 : f32
    %300 = vector.broadcast %cst_90 : f32 to vector<64x1xf32>
    %301 = arith.maximumf %299, %300 : vector<64x1xf32>
    %302 = tpu.reciprocal %301 {approx = true} : vector<64x1xf32> -> vector<64x1xf32>
    %303 = arith.truncf %297 : vector<64x64xf32> to vector<64x64xbf16>
    %304 = vector.extract_strided_slice %247 {offsets = [0, 16], sizes = [64, 16], strides = [1, 1]} : vector<64x128xbf16> to vector<64x16xbf16>
    %cst_91 = arith.constant dense<0.000000e+00> : vector<64x16xf32>
    %305 = tpu.matmul %303, %304, %cst_91 {dimension_numbers = #tpu.dot_dimension_numbers<[1], [0], [0], [1], [0, 0, 1, 1], [], []>} : vector<64x64xbf16>, vector<64x16xbf16>, vector<64x16xf32> -> vector<64x16xf32>
    %306 = vector.broadcast %302 : vector<64x1xf32> to vector<64x16xf32>
    %307 = arith.mulf %305, %306 : vector<64x16xf32>
    %308 = tpu.concatenate %280, %307 in 1 : vector<64x16xf32>, vector<64x16xf32> -> vector<64x32xf32>
    %309 = vector.extract_strided_slice %251 {offsets = [0, 2], sizes = [64, 1], strides = [1, 1]} : vector<64x8xf32> to vector<64x1xf32>
    %310 = vector.extract_strided_slice %252 {offsets = [2, 0], sizes = [1, 64], strides = [1, 1]} : vector<8x64xf32> to vector<1x64xf32>
    %311 = vector.broadcast %309 : vector<64x1xf32> to vector<64x64xf32>
    %312 = vector.broadcast %310 : vector<1x64xf32> to vector<64x64xf32>
    %313 = arith.addf %311, %312 : vector<64x64xf32>
    %cst_92 = arith.constant 0.000000e+00 : f32
    %314 = vector.broadcast %cst_92 : f32 to vector<64x64xf32>
    %315 = arith.cmpf ogt, %313, %314 : vector<64x64xf32>
    %cst_93 = arith.constant 2.000000e-01 : f32
    %316 = vector.broadcast %cst_93 : f32 to vector<64x64xf32>
    %317 = arith.mulf %316, %313 : vector<64x64xf32>
    %318 = arith.select %315, %313, %317 : vector<64x64xi1>, vector<64x64xf32>
    %cst_94 = arith.constant -1.000000e+30 : f32
    %319 = vector.broadcast %cst_94 : f32 to vector<64x64xf32>
    %320 = arith.select %2, %318, %319 : vector<64x64xi1>, vector<64x64xf32>
    %cst_95 = arith.constant dense<0xFF800000> : vector<64xf32>
    %321 = vector.multi_reduction <maximumf>, %320, %cst_95 [1] : vector<64x64xf32> to vector<64xf32>
    %322 = vector.shape_cast %321 : vector<64xf32> to vector<64x1xf32>
    %323 = vector.broadcast %322 : vector<64x1xf32> to vector<64x64xf32>
    %324 = arith.subf %320, %323 : vector<64x64xf32>
    %325 = math.exp %324 : vector<64x64xf32>
    %cst_96 = arith.constant dense<0.000000e+00> : vector<64xf32>
    %326 = vector.multi_reduction <add>, %325, %cst_96 [1] : vector<64x64xf32> to vector<64xf32>
    %327 = vector.shape_cast %326 : vector<64xf32> to vector<64x1xf32>
    %cst_97 = arith.constant 9.99999968E-21 : f32
    %328 = vector.broadcast %cst_97 : f32 to vector<64x1xf32>
    %329 = arith.maximumf %327, %328 : vector<64x1xf32>
    %330 = tpu.reciprocal %329 {approx = true} : vector<64x1xf32> -> vector<64x1xf32>
    %331 = arith.truncf %325 : vector<64x64xf32> to vector<64x64xbf16>
    %332 = vector.extract_strided_slice %247 {offsets = [0, 32], sizes = [64, 16], strides = [1, 1]} : vector<64x128xbf16> to vector<64x16xbf16>
    %cst_98 = arith.constant dense<0.000000e+00> : vector<64x16xf32>
    %333 = tpu.matmul %331, %332, %cst_98 {dimension_numbers = #tpu.dot_dimension_numbers<[1], [0], [0], [1], [0, 0, 1, 1], [], []>} : vector<64x64xbf16>, vector<64x16xbf16>, vector<64x16xf32> -> vector<64x16xf32>
    %334 = vector.broadcast %330 : vector<64x1xf32> to vector<64x16xf32>
    %335 = arith.mulf %333, %334 : vector<64x16xf32>
    %336 = tpu.concatenate %308, %335 in 1 : vector<64x32xf32>, vector<64x16xf32> -> vector<64x48xf32>
    %337 = vector.extract_strided_slice %251 {offsets = [0, 3], sizes = [64, 1], strides = [1, 1]} : vector<64x8xf32> to vector<64x1xf32>
    %338 = vector.extract_strided_slice %252 {offsets = [3, 0], sizes = [1, 64], strides = [1, 1]} : vector<8x64xf32> to vector<1x64xf32>
    %339 = vector.broadcast %337 : vector<64x1xf32> to vector<64x64xf32>
    %340 = vector.broadcast %338 : vector<1x64xf32> to vector<64x64xf32>
    %341 = arith.addf %339, %340 : vector<64x64xf32>
    %cst_99 = arith.constant 0.000000e+00 : f32
    %342 = vector.broadcast %cst_99 : f32 to vector<64x64xf32>
    %343 = arith.cmpf ogt, %341, %342 : vector<64x64xf32>
    %cst_100 = arith.constant 2.000000e-01 : f32
    %344 = vector.broadcast %cst_100 : f32 to vector<64x64xf32>
    %345 = arith.mulf %344, %341 : vector<64x64xf32>
    %346 = arith.select %343, %341, %345 : vector<64x64xi1>, vector<64x64xf32>
    %cst_101 = arith.constant -1.000000e+30 : f32
    %347 = vector.broadcast %cst_101 : f32 to vector<64x64xf32>
    %348 = arith.select %2, %346, %347 : vector<64x64xi1>, vector<64x64xf32>
    %cst_102 = arith.constant dense<0xFF800000> : vector<64xf32>
    %349 = vector.multi_reduction <maximumf>, %348, %cst_102 [1] : vector<64x64xf32> to vector<64xf32>
    %350 = vector.shape_cast %349 : vector<64xf32> to vector<64x1xf32>
    %351 = vector.broadcast %350 : vector<64x1xf32> to vector<64x64xf32>
    %352 = arith.subf %348, %351 : vector<64x64xf32>
    %353 = math.exp %352 : vector<64x64xf32>
    %cst_103 = arith.constant dense<0.000000e+00> : vector<64xf32>
    %354 = vector.multi_reduction <add>, %353, %cst_103 [1] : vector<64x64xf32> to vector<64xf32>
    %355 = vector.shape_cast %354 : vector<64xf32> to vector<64x1xf32>
    %cst_104 = arith.constant 9.99999968E-21 : f32
    %356 = vector.broadcast %cst_104 : f32 to vector<64x1xf32>
    %357 = arith.maximumf %355, %356 : vector<64x1xf32>
    %358 = tpu.reciprocal %357 {approx = true} : vector<64x1xf32> -> vector<64x1xf32>
    %359 = arith.truncf %353 : vector<64x64xf32> to vector<64x64xbf16>
    %360 = vector.extract_strided_slice %247 {offsets = [0, 48], sizes = [64, 16], strides = [1, 1]} : vector<64x128xbf16> to vector<64x16xbf16>
    %cst_105 = arith.constant dense<0.000000e+00> : vector<64x16xf32>
    %361 = tpu.matmul %359, %360, %cst_105 {dimension_numbers = #tpu.dot_dimension_numbers<[1], [0], [0], [1], [0, 0, 1, 1], [], []>} : vector<64x64xbf16>, vector<64x16xbf16>, vector<64x16xf32> -> vector<64x16xf32>
    %362 = vector.broadcast %358 : vector<64x1xf32> to vector<64x16xf32>
    %363 = arith.mulf %361, %362 : vector<64x16xf32>
    %364 = tpu.concatenate %336, %363 in 1 : vector<64x48xf32>, vector<64x16xf32> -> vector<64x64xf32>
    %365 = vector.extract_strided_slice %251 {offsets = [0, 4], sizes = [64, 1], strides = [1, 1]} : vector<64x8xf32> to vector<64x1xf32>
    %366 = vector.extract_strided_slice %252 {offsets = [4, 0], sizes = [1, 64], strides = [1, 1]} : vector<8x64xf32> to vector<1x64xf32>
    %367 = vector.broadcast %365 : vector<64x1xf32> to vector<64x64xf32>
    %368 = vector.broadcast %366 : vector<1x64xf32> to vector<64x64xf32>
    %369 = arith.addf %367, %368 : vector<64x64xf32>
    %cst_106 = arith.constant 0.000000e+00 : f32
    %370 = vector.broadcast %cst_106 : f32 to vector<64x64xf32>
    %371 = arith.cmpf ogt, %369, %370 : vector<64x64xf32>
    %cst_107 = arith.constant 2.000000e-01 : f32
    %372 = vector.broadcast %cst_107 : f32 to vector<64x64xf32>
    %373 = arith.mulf %372, %369 : vector<64x64xf32>
    %374 = arith.select %371, %369, %373 : vector<64x64xi1>, vector<64x64xf32>
    %cst_108 = arith.constant -1.000000e+30 : f32
    %375 = vector.broadcast %cst_108 : f32 to vector<64x64xf32>
    %376 = arith.select %2, %374, %375 : vector<64x64xi1>, vector<64x64xf32>
    %cst_109 = arith.constant dense<0xFF800000> : vector<64xf32>
    %377 = vector.multi_reduction <maximumf>, %376, %cst_109 [1] : vector<64x64xf32> to vector<64xf32>
    %378 = vector.shape_cast %377 : vector<64xf32> to vector<64x1xf32>
    %379 = vector.broadcast %378 : vector<64x1xf32> to vector<64x64xf32>
    %380 = arith.subf %376, %379 : vector<64x64xf32>
    %381 = math.exp %380 : vector<64x64xf32>
    %cst_110 = arith.constant dense<0.000000e+00> : vector<64xf32>
    %382 = vector.multi_reduction <add>, %381, %cst_110 [1] : vector<64x64xf32> to vector<64xf32>
    %383 = vector.shape_cast %382 : vector<64xf32> to vector<64x1xf32>
    %cst_111 = arith.constant 9.99999968E-21 : f32
    %384 = vector.broadcast %cst_111 : f32 to vector<64x1xf32>
    %385 = arith.maximumf %383, %384 : vector<64x1xf32>
    %386 = tpu.reciprocal %385 {approx = true} : vector<64x1xf32> -> vector<64x1xf32>
    %387 = arith.truncf %381 : vector<64x64xf32> to vector<64x64xbf16>
    %388 = vector.extract_strided_slice %247 {offsets = [0, 64], sizes = [64, 16], strides = [1, 1]} : vector<64x128xbf16> to vector<64x16xbf16>
    %cst_112 = arith.constant dense<0.000000e+00> : vector<64x16xf32>
    %389 = tpu.matmul %387, %388, %cst_112 {dimension_numbers = #tpu.dot_dimension_numbers<[1], [0], [0], [1], [0, 0, 1, 1], [], []>} : vector<64x64xbf16>, vector<64x16xbf16>, vector<64x16xf32> -> vector<64x16xf32>
    %390 = vector.broadcast %386 : vector<64x1xf32> to vector<64x16xf32>
    %391 = arith.mulf %389, %390 : vector<64x16xf32>
    %392 = tpu.concatenate %364, %391 in 1 : vector<64x64xf32>, vector<64x16xf32> -> vector<64x80xf32>
    %393 = vector.extract_strided_slice %251 {offsets = [0, 5], sizes = [64, 1], strides = [1, 1]} : vector<64x8xf32> to vector<64x1xf32>
    %394 = vector.extract_strided_slice %252 {offsets = [5, 0], sizes = [1, 64], strides = [1, 1]} : vector<8x64xf32> to vector<1x64xf32>
    %395 = vector.broadcast %393 : vector<64x1xf32> to vector<64x64xf32>
    %396 = vector.broadcast %394 : vector<1x64xf32> to vector<64x64xf32>
    %397 = arith.addf %395, %396 : vector<64x64xf32>
    %cst_113 = arith.constant 0.000000e+00 : f32
    %398 = vector.broadcast %cst_113 : f32 to vector<64x64xf32>
    %399 = arith.cmpf ogt, %397, %398 : vector<64x64xf32>
    %cst_114 = arith.constant 2.000000e-01 : f32
    %400 = vector.broadcast %cst_114 : f32 to vector<64x64xf32>
    %401 = arith.mulf %400, %397 : vector<64x64xf32>
    %402 = arith.select %399, %397, %401 : vector<64x64xi1>, vector<64x64xf32>
    %cst_115 = arith.constant -1.000000e+30 : f32
    %403 = vector.broadcast %cst_115 : f32 to vector<64x64xf32>
    %404 = arith.select %2, %402, %403 : vector<64x64xi1>, vector<64x64xf32>
    %cst_116 = arith.constant dense<0xFF800000> : vector<64xf32>
    %405 = vector.multi_reduction <maximumf>, %404, %cst_116 [1] : vector<64x64xf32> to vector<64xf32>
    %406 = vector.shape_cast %405 : vector<64xf32> to vector<64x1xf32>
    %407 = vector.broadcast %406 : vector<64x1xf32> to vector<64x64xf32>
    %408 = arith.subf %404, %407 : vector<64x64xf32>
    %409 = math.exp %408 : vector<64x64xf32>
    %cst_117 = arith.constant dense<0.000000e+00> : vector<64xf32>
    %410 = vector.multi_reduction <add>, %409, %cst_117 [1] : vector<64x64xf32> to vector<64xf32>
    %411 = vector.shape_cast %410 : vector<64xf32> to vector<64x1xf32>
    %cst_118 = arith.constant 9.99999968E-21 : f32
    %412 = vector.broadcast %cst_118 : f32 to vector<64x1xf32>
    %413 = arith.maximumf %411, %412 : vector<64x1xf32>
    %414 = tpu.reciprocal %413 {approx = true} : vector<64x1xf32> -> vector<64x1xf32>
    %415 = arith.truncf %409 : vector<64x64xf32> to vector<64x64xbf16>
    %416 = vector.extract_strided_slice %247 {offsets = [0, 80], sizes = [64, 16], strides = [1, 1]} : vector<64x128xbf16> to vector<64x16xbf16>
    %cst_119 = arith.constant dense<0.000000e+00> : vector<64x16xf32>
    %417 = tpu.matmul %415, %416, %cst_119 {dimension_numbers = #tpu.dot_dimension_numbers<[1], [0], [0], [1], [0, 0, 1, 1], [], []>} : vector<64x64xbf16>, vector<64x16xbf16>, vector<64x16xf32> -> vector<64x16xf32>
    %418 = vector.broadcast %414 : vector<64x1xf32> to vector<64x16xf32>
    %419 = arith.mulf %417, %418 : vector<64x16xf32>
    %420 = tpu.concatenate %392, %419 in 1 : vector<64x80xf32>, vector<64x16xf32> -> vector<64x96xf32>
    %421 = vector.extract_strided_slice %251 {offsets = [0, 6], sizes = [64, 1], strides = [1, 1]} : vector<64x8xf32> to vector<64x1xf32>
    %422 = vector.extract_strided_slice %252 {offsets = [6, 0], sizes = [1, 64], strides = [1, 1]} : vector<8x64xf32> to vector<1x64xf32>
    %423 = vector.broadcast %421 : vector<64x1xf32> to vector<64x64xf32>
    %424 = vector.broadcast %422 : vector<1x64xf32> to vector<64x64xf32>
    %425 = arith.addf %423, %424 : vector<64x64xf32>
    %cst_120 = arith.constant 0.000000e+00 : f32
    %426 = vector.broadcast %cst_120 : f32 to vector<64x64xf32>
    %427 = arith.cmpf ogt, %425, %426 : vector<64x64xf32>
    %cst_121 = arith.constant 2.000000e-01 : f32
    %428 = vector.broadcast %cst_121 : f32 to vector<64x64xf32>
    %429 = arith.mulf %428, %425 : vector<64x64xf32>
    %430 = arith.select %427, %425, %429 : vector<64x64xi1>, vector<64x64xf32>
    %cst_122 = arith.constant -1.000000e+30 : f32
    %431 = vector.broadcast %cst_122 : f32 to vector<64x64xf32>
    %432 = arith.select %2, %430, %431 : vector<64x64xi1>, vector<64x64xf32>
    %cst_123 = arith.constant dense<0xFF800000> : vector<64xf32>
    %433 = vector.multi_reduction <maximumf>, %432, %cst_123 [1] : vector<64x64xf32> to vector<64xf32>
    %434 = vector.shape_cast %433 : vector<64xf32> to vector<64x1xf32>
    %435 = vector.broadcast %434 : vector<64x1xf32> to vector<64x64xf32>
    %436 = arith.subf %432, %435 : vector<64x64xf32>
    %437 = math.exp %436 : vector<64x64xf32>
    %cst_124 = arith.constant dense<0.000000e+00> : vector<64xf32>
    %438 = vector.multi_reduction <add>, %437, %cst_124 [1] : vector<64x64xf32> to vector<64xf32>
    %439 = vector.shape_cast %438 : vector<64xf32> to vector<64x1xf32>
    %cst_125 = arith.constant 9.99999968E-21 : f32
    %440 = vector.broadcast %cst_125 : f32 to vector<64x1xf32>
    %441 = arith.maximumf %439, %440 : vector<64x1xf32>
    %442 = tpu.reciprocal %441 {approx = true} : vector<64x1xf32> -> vector<64x1xf32>
    %443 = arith.truncf %437 : vector<64x64xf32> to vector<64x64xbf16>
    %444 = vector.extract_strided_slice %247 {offsets = [0, 96], sizes = [64, 16], strides = [1, 1]} : vector<64x128xbf16> to vector<64x16xbf16>
    %cst_126 = arith.constant dense<0.000000e+00> : vector<64x16xf32>
    %445 = tpu.matmul %443, %444, %cst_126 {dimension_numbers = #tpu.dot_dimension_numbers<[1], [0], [0], [1], [0, 0, 1, 1], [], []>} : vector<64x64xbf16>, vector<64x16xbf16>, vector<64x16xf32> -> vector<64x16xf32>
    %446 = vector.broadcast %442 : vector<64x1xf32> to vector<64x16xf32>
    %447 = arith.mulf %445, %446 : vector<64x16xf32>
    %448 = tpu.concatenate %420, %447 in 1 : vector<64x96xf32>, vector<64x16xf32> -> vector<64x112xf32>
    %449 = vector.extract_strided_slice %251 {offsets = [0, 7], sizes = [64, 1], strides = [1, 1]} : vector<64x8xf32> to vector<64x1xf32>
    %450 = vector.extract_strided_slice %252 {offsets = [7, 0], sizes = [1, 64], strides = [1, 1]} : vector<8x64xf32> to vector<1x64xf32>
    %451 = vector.broadcast %449 : vector<64x1xf32> to vector<64x64xf32>
    %452 = vector.broadcast %450 : vector<1x64xf32> to vector<64x64xf32>
    %453 = arith.addf %451, %452 : vector<64x64xf32>
    %cst_127 = arith.constant 0.000000e+00 : f32
    %454 = vector.broadcast %cst_127 : f32 to vector<64x64xf32>
    %455 = arith.cmpf ogt, %453, %454 : vector<64x64xf32>
    %cst_128 = arith.constant 2.000000e-01 : f32
    %456 = vector.broadcast %cst_128 : f32 to vector<64x64xf32>
    %457 = arith.mulf %456, %453 : vector<64x64xf32>
    %458 = arith.select %455, %453, %457 : vector<64x64xi1>, vector<64x64xf32>
    %cst_129 = arith.constant -1.000000e+30 : f32
    %459 = vector.broadcast %cst_129 : f32 to vector<64x64xf32>
    %460 = arith.select %2, %458, %459 : vector<64x64xi1>, vector<64x64xf32>
    %cst_130 = arith.constant dense<0xFF800000> : vector<64xf32>
    %461 = vector.multi_reduction <maximumf>, %460, %cst_130 [1] : vector<64x64xf32> to vector<64xf32>
    %462 = vector.shape_cast %461 : vector<64xf32> to vector<64x1xf32>
    %463 = vector.broadcast %462 : vector<64x1xf32> to vector<64x64xf32>
    %464 = arith.subf %460, %463 : vector<64x64xf32>
    %465 = math.exp %464 : vector<64x64xf32>
    %cst_131 = arith.constant dense<0.000000e+00> : vector<64xf32>
    %466 = vector.multi_reduction <add>, %465, %cst_131 [1] : vector<64x64xf32> to vector<64xf32>
    %467 = vector.shape_cast %466 : vector<64xf32> to vector<64x1xf32>
    %cst_132 = arith.constant 9.99999968E-21 : f32
    %468 = vector.broadcast %cst_132 : f32 to vector<64x1xf32>
    %469 = arith.maximumf %467, %468 : vector<64x1xf32>
    %470 = tpu.reciprocal %469 {approx = true} : vector<64x1xf32> -> vector<64x1xf32>
    %471 = arith.truncf %465 : vector<64x64xf32> to vector<64x64xbf16>
    %472 = vector.extract_strided_slice %247 {offsets = [0, 112], sizes = [64, 16], strides = [1, 1]} : vector<64x128xbf16> to vector<64x16xbf16>
    %cst_133 = arith.constant dense<0.000000e+00> : vector<64x16xf32>
    %473 = tpu.matmul %471, %472, %cst_133 {dimension_numbers = #tpu.dot_dimension_numbers<[1], [0], [0], [1], [0, 0, 1, 1], [], []>} : vector<64x64xbf16>, vector<64x16xbf16>, vector<64x16xf32> -> vector<64x16xf32>
    %474 = vector.broadcast %470 : vector<64x1xf32> to vector<64x16xf32>
    %475 = arith.mulf %473, %474 : vector<64x16xf32>
    %476 = tpu.concatenate %448, %475 in 1 : vector<64x112xf32>, vector<64x16xf32> -> vector<64x128xf32>
    %477 = vector.broadcast %253 : vector<1x128xf32> to vector<64x128xf32>
    %478 = arith.addf %476, %477 : vector<64x128xf32>
    %cst_134 = arith.constant 0.000000e+00 : f32
    %479 = vector.broadcast %cst_134 : f32 to vector<64x128xf32>
    %480 = arith.maximumf %478, %479 : vector<64x128xf32>
    %c0_135 = arith.constant 0 : index
    %c0_136 = arith.constant 0 : index
    %481 = vector.load %arg13[%c0_135, %c0_136] : memref<64x128xf32, #tpu.memory_space<vmem>>, vector<64x128xf32>
    tpu.vector_store %arg13[%c0_135, %c0_136], %480 {strides = array<i32>} : memref<64x128xf32, #tpu.memory_space<vmem>>, vector<64x128xf32>,
    %482 = arith.truncf %480 : vector<64x128xf32> to vector<64x128xbf16>
    %c0_137 = arith.constant 0 : index
    %c0_138 = arith.constant 0 : index
    %483 = vector.load %arg9[%c0_137, %c0_138] : memref<128x32xf32, #tpu.memory_space<vmem>>, vector<128x32xf32>
    %484 = arith.truncf %483 : vector<128x32xf32> to vector<128x32xbf16>
    %cst_139 = arith.constant dense<0.000000e+00> : vector<64x32xf32>
    %485 = tpu.matmul %482, %484, %cst_139 {dimension_numbers = #tpu.dot_dimension_numbers<[1], [0], [0], [1], [0, 0, 1, 1], [], []>} : vector<64x128xbf16>, vector<128x32xbf16>, vector<64x32xf32> -> vector<64x32xf32>
    %486 = arith.truncf %485 : vector<64x32xf32> to vector<64x32xbf16>
    %c0_140 = arith.constant 0 : index
    %c0_141 = arith.constant 0 : index
    %487 = vector.load %arg10[%c0_140, %c0_141] : memref<32x9xf32, #tpu.memory_space<vmem>>, vector<32x9xf32>
    %cst_142 = arith.constant dense<0.000000e+00> : vector<64x9xf32>
    %488 = tpu.matmul %485, %487, %cst_142 {dimension_numbers = #tpu.dot_dimension_numbers<[1], [0], [0], [1], [0, 0, 1, 1], [], []>} : vector<64x32xf32>, vector<32x9xf32>, vector<64x9xf32> -> vector<64x9xf32>
    %489 = vector.extract_strided_slice %488 {offsets = [0, 0], sizes = [64, 8], strides = [1, 1]} : vector<64x9xf32> to vector<64x8xf32>
    %490 = vector.extract_strided_slice %488 {offsets = [0, 8], sizes = [64, 1], strides = [1, 1]} : vector<64x9xf32> to vector<64x1xf32>
    %491 = tpu.transpose %489, [1, 0] : vector<64x8xf32> -> vector<8x64xf32>
    %c0_143 = arith.constant 0 : index
    %c0_144 = arith.constant 0 : index
    %492 = vector.load %arg11[%c0_143, %c0_144] : memref<1x32xf32, #tpu.memory_space<vmem>>, vector<1x32xf32>
    %493 = vector.extract_strided_slice %491 {offsets = [0, 0], sizes = [1, 64], strides = [1, 1]} : vector<8x64xf32> to vector<1x64xf32>
    %494 = vector.broadcast %490 : vector<64x1xf32> to vector<64x64xf32>
    %495 = vector.broadcast %493 : vector<1x64xf32> to vector<64x64xf32>
    %496 = arith.addf %494, %495 : vector<64x64xf32>
    %cst_145 = arith.constant 0.000000e+00 : f32
    %497 = vector.broadcast %cst_145 : f32 to vector<64x64xf32>
    %498 = arith.cmpf ogt, %496, %497 : vector<64x64xf32>
    %cst_146 = arith.constant 2.000000e-01 : f32
    %499 = vector.broadcast %cst_146 : f32 to vector<64x64xf32>
    %500 = arith.mulf %499, %496 : vector<64x64xf32>
    %501 = arith.select %498, %496, %500 : vector<64x64xi1>, vector<64x64xf32>
    %cst_147 = arith.constant -1.000000e+30 : f32
    %502 = vector.broadcast %cst_147 : f32 to vector<64x64xf32>
    %503 = arith.select %2, %501, %502 : vector<64x64xi1>, vector<64x64xf32>
    %cst_148 = arith.constant dense<0xFF800000> : vector<64xf32>
    %504 = vector.multi_reduction <maximumf>, %503, %cst_148 [1] : vector<64x64xf32> to vector<64xf32>
    %505 = vector.shape_cast %504 : vector<64xf32> to vector<64x1xf32>
    %506 = vector.broadcast %505 : vector<64x1xf32> to vector<64x64xf32>
    %507 = arith.subf %503, %506 : vector<64x64xf32>
    %508 = math.exp %507 : vector<64x64xf32>
    %cst_149 = arith.constant dense<0.000000e+00> : vector<64xf32>
    %509 = vector.multi_reduction <add>, %508, %cst_149 [1] : vector<64x64xf32> to vector<64xf32>
    %510 = vector.shape_cast %509 : vector<64xf32> to vector<64x1xf32>
    %cst_150 = arith.constant 9.99999968E-21 : f32
    %511 = vector.broadcast %cst_150 : f32 to vector<64x1xf32>
    %512 = arith.maximumf %510, %511 : vector<64x1xf32>
    %513 = tpu.reciprocal %512 {approx = true} : vector<64x1xf32> -> vector<64x1xf32>
    %514 = arith.truncf %508 : vector<64x64xf32> to vector<64x64xbf16>
    %cst_151 = arith.constant dense<0.000000e+00> : vector<64x32xf32>
    %515 = tpu.matmul %514, %486, %cst_151 {dimension_numbers = #tpu.dot_dimension_numbers<[1], [0], [0], [1], [0, 0, 1, 1], [], []>} : vector<64x64xbf16>, vector<64x32xbf16>, vector<64x32xf32> -> vector<64x32xf32>
    %516 = vector.broadcast %513 : vector<64x1xf32> to vector<64x32xf32>
    %517 = arith.mulf %515, %516 : vector<64x32xf32>
    %518 = vector.broadcast %492 : vector<1x32xf32> to vector<64x32xf32>
    %519 = arith.addf %517, %518 : vector<64x32xf32>
    %cst_152 = arith.constant 1.000000e+00 : f32
    %520 = vector.broadcast %cst_152 : f32 to vector<64x32xf32>
    %521 = arith.divf %519, %520 : vector<64x32xf32>
    %cst_153 = arith.constant 0.000000e+00 : f32
    %522 = vector.broadcast %cst_153 : f32 to vector<64x96xf32>
    %523 = tpu.concatenate %521, %522 in 1 : vector<64x32xf32>, vector<64x96xf32> -> vector<64x128xf32>
    %c0_154 = arith.constant 0 : index
    %c0_155 = arith.constant 0 : index
    %524 = vector.load %arg14[%c0_154, %c0_155] : memref<64x128xf32, #tpu.memory_space<vmem>>, vector<64x128xf32>
    tpu.vector_store %arg14[%c0_154, %c0_155], %523 {strides = array<i32>} : memref<64x128xf32, #tpu.memory_space<vmem>>, vector<64x128xf32>,
    return
  }
  func.func @transform_0(%arg0: i32) -> (i32, i32) {
    %c0_i32 = arith.constant 0 : i32
    %c0_i32_0 = arith.constant 0 : i32
    %c0_i32_1 = arith.constant 0 : i32
    return %c0_i32, %c0_i32_0 : i32, i32
  }
  func.func @transform_1(%arg0: i32) -> (i32, i32) {
    %c0_i32 = arith.constant 0 : i32
    %c0_i32_0 = arith.constant 0 : i32
    %c0_i32_1 = arith.constant 0 : i32
    return %c0_i32, %c0_i32_0 : i32, i32
  }
  func.func @transform_2(%arg0: i32) -> (i32, i32) {
    %c0_i32 = arith.constant 0 : i32
    %c0_i32_0 = arith.constant 0 : i32
    %c0_i32_1 = arith.constant 0 : i32
    return %c0_i32, %c0_i32_0 : i32, i32
  }
  func.func @transform_3(%arg0: i32) -> (i32, i32) {
    %c0_i32 = arith.constant 0 : i32
    %c0_i32_0 = arith.constant 0 : i32
    %c0_i32_1 = arith.constant 0 : i32
    return %c0_i32, %c0_i32_0 : i32, i32
  }
  func.func @transform_4(%arg0: i32) -> (i32, i32) {
    %c0_i32 = arith.constant 0 : i32
    %c0_i32_0 = arith.constant 0 : i32
    %c0_i32_1 = arith.constant 0 : i32
    return %c0_i32, %c0_i32_0 : i32, i32
  }
  func.func @transform_5(%arg0: i32) -> (i32, i32) {
    %c0_i32 = arith.constant 0 : i32
    %c0_i32_0 = arith.constant 0 : i32
    %c0_i32_1 = arith.constant 0 : i32
    return %c0_i32, %c0_i32_0 : i32, i32
  }
  func.func @transform_6(%arg0: i32) -> (i32, i32) {
    %c0_i32 = arith.constant 0 : i32
    %c0_i32_0 = arith.constant 0 : i32
    %c0_i32_1 = arith.constant 0 : i32
    return %c0_i32, %c0_i32_0 : i32, i32
  }
  func.func @transform_7(%arg0: i32) -> (i32, i32) {
    %c0_i32 = arith.constant 0 : i32
    %c0_i32_0 = arith.constant 0 : i32
    %c0_i32_1 = arith.constant 0 : i32
    return %c0_i32, %c0_i32_0 : i32, i32
  }
  func.func @transform_8(%arg0: i32) -> (i32, i32) {
    %c0_i32 = arith.constant 0 : i32
    %c0_i32_0 = arith.constant 0 : i32
    %c0_i32_1 = arith.constant 0 : i32
    return %c0_i32, %c0_i32_0 : i32, i32
  }
  func.func @transform_9(%arg0: i32) -> (i32, i32) {
    %c0_i32 = arith.constant 0 : i32
    %c0_i32_0 = arith.constant 0 : i32
    %c0_i32_1 = arith.constant 0 : i32
    return %c0_i32, %c0_i32_0 : i32, i32
  }
  func.func @transform_10(%arg0: i32) -> (i32, i32) {
    %c0_i32 = arith.constant 0 : i32
    %c0_i32_0 = arith.constant 0 : i32
    %c0_i32_1 = arith.constant 0 : i32
    return %c0_i32, %c0_i32_0 : i32, i32
  }
  func.func @transform_11(%arg0: i32) -> (i32, i32) {
    %c0_i32 = arith.constant 0 : i32
    %c0_i32_0 = arith.constant 0 : i32
    %c0_i32_1 = arith.constant 0 : i32
    return %c0_i32, %c0_i32_0 : i32, i32
  }
  func.func @transform_12(%arg0: i32) -> (i32, i32) {
    %c0_i32 = arith.constant 0 : i32
    %c0_i32_0 = arith.constant 0 : i32
    %c0_i32_1 = arith.constant 0 : i32
    return %c0_i32, %c0_i32_0 : i32, i32
  }
  func.func @transform_13(%arg0: i32) -> (i32, i32) {
    %c0_i32 = arith.constant 0 : i32
    %c0_i32_0 = arith.constant 0 : i32
    %c0_i32_1 = arith.constant 0 : i32
    return %c0_i32, %c0_i32_0 : i32, i32
  }
}

</mosaic_0001>

<llo_original>
// kernel: tpu_custom_call.1
$region0: #{tpu_custom_call.1}
  #allocation0 [shape = 'u32[]', space=smem, size = 0x4, offset = 0x4, fixed_abs, tag = 'smem constant byte address 0x4 - core index']
  #allocation1 [shape = 'u32[144,128]{1,0:T(1,128)}', space=vmem, size = 0x12000, scoped, tag = 'internal scratch']
  %s0 = inlined_call_operand.vmem [shape: f32[64,64], index: 0, kind: input, shape index: {}]
  %s1 = inlined_call_operand.vmem [shape: f32[64,64], index: 1, kind: input, shape index: {}]
  %s2 = inlined_call_operand.vmem [shape: f32[64,128], index: 2, kind: input, shape index: {}]
  %s3 = inlined_call_operand.vmem [shape: f32[128,16], index: 3, kind: input, shape index: {}]
  %s4 = inlined_call_operand.vmem [shape: f32[1,128], index: 4, kind: input, shape index: {}]
  %s5 = inlined_call_operand.vmem [shape: f32[128,128], index: 5, kind: input, shape index: {}]
  %s6 = inlined_call_operand.vmem [shape: f32[128,16], index: 6, kind: input, shape index: {}]
  %s7 = inlined_call_operand.vmem [shape: f32[1,128], index: 7, kind: input, shape index: {}]
  %s8 = inlined_call_operand.vmem [shape: f32[128,32], index: 8, kind: input, shape index: {}]
  %s9 = inlined_call_operand.vmem [shape: f32[32,9], index: 9, kind: input, shape index: {}]
  %s10 = inlined_call_operand.vmem [shape: f32[1,32], index: 10, kind: input, shape index: {}]
  %s11 = inlined_call_operand.hbm [shape: f32[64,128], index: 11, kind: output, shape index: {0}]
  %s12 = inlined_call_operand.hbm [shape: f32[64,128], index: 12, kind: output, shape index: {1}]
  %s13 = inlined_call_operand.hbm [shape: f32[64,128], index: 13, kind: output, shape index: {2}]
  %14 = xla_tuple %s11, %s12, %s13
  %s15 = sld [smem:[#allocation0]]
  $region70: #{tpu_custom_call.1} parent=0
    _
  %s17 = ssub.s32 1, %s15
  %s18 = scalar_select 0, %s17, %s15
  $region1: #{tpu_custom_call.1} parent=0
    #allocation2 [shape = 'u8[32768]{0}', space=vmem, size = 0x8000, scoped, tag = 'output window, operand 0, single buffered']
    #allocation3 [shape = 's32[1]{0}', space=sflag, size = 0x4, scoped, tag = 'scoped memory for tpu_custom_call.1']
    #allocation4 [shape = 'u8[32768]{0}', space=vmem, size = 0x8000, scoped, tag = 'output window, operand 1, single buffered']
    #allocation5 [shape = 's32[1]{0}', space=sflag, size = 0x4, scoped, tag = 'scoped memory for tpu_custom_call.1']
    #allocation6 [shape = 'u8[32768]{0}', space=vmem, size = 0x8000, scoped, tag = 'output window, operand 2, single buffered']
    %19 = vsyncpa [#allocation3], 0
    %20 = vsyncpa [#allocation5], 0
    // Predicated region
    $region2: #{tpu_custom_call.1} parent=1 // pred_check
      _
    $region3: #{tpu_custom_call.1} parent=1 // pred_check_branch
      %22 = sbr.rel (0) target = $region5
    $region4: #{tpu_custom_call.1} parent=1 // pred_region
      _
    $region5: #{tpu_custom_call.1} parent=1 // pred_fallthru
      _
    // Predicated region
    $region6: #{tpu_custom_call.1} parent=1 // pred_check
      _
    $region7: #{tpu_custom_call.1} parent=1 // pred_check_branch
      %24 = sbr.rel (0) target = $region9
    $region8: #{tpu_custom_call.1} parent=1 // pred_region
      _
    $region9: #{tpu_custom_call.1} parent=1 // pred_fallthru
      _
    // Predicated region
    $region10: #{tpu_custom_call.1} parent=1 // pred_check
      _
    $region11: #{tpu_custom_call.1} parent=1 // pred_check_branch
      %26 = sbr.rel (0) target = $region13
    $region12: #{tpu_custom_call.1} parent=1 // pred_region
      _
    $region13: #{tpu_custom_call.1} parent=1 // pred_fallthru
      _
    // Predicated region
    $region14: #{tpu_custom_call.1} parent=1 // pred_check
      _
    $region15: #{tpu_custom_call.1} parent=1 // pred_check_branch
      %28 = sbr.rel (0) target = $region17
    $region16: #{tpu_custom_call.1} parent=1 // pred_region
      _
    $region17: #{tpu_custom_call.1} parent=1 // pred_fallthru
      _
    // Predicated region
    $region18: #{tpu_custom_call.1} parent=1 // pred_check
      _
    $region19: #{tpu_custom_call.1} parent=1 // pred_check_branch
      %30 = sbr.rel (0) target = $region21
    $region20: #{tpu_custom_call.1} parent=1 // pred_region
      _
    $region21: #{tpu_custom_call.1} parent=1 // pred_fallthru
      _
    // Predicated region
    $region22: #{tpu_custom_call.1} parent=1 // pred_check
      _
    $region23: #{tpu_custom_call.1} parent=1 // pred_check_branch
      %32 = sbr.rel (0) target = $region25
    $region24: #{tpu_custom_call.1} parent=1 // pred_region
      _
    $region25: #{tpu_custom_call.1} parent=1 // pred_fallthru
      _
    // Predicated region
    $region26: #{tpu_custom_call.1} parent=1 // pred_check
      _
    $region27: #{tpu_custom_call.1} parent=1 // pred_check_branch
      %34 = sbr.rel (0) target = $region29
    $region28: #{tpu_custom_call.1} parent=1 // pred_region
      _
    $region29: #{tpu_custom_call.1} parent=1 // pred_fallthru
      _
    // Predicated region
    $region30: #{tpu_custom_call.1} parent=1 // pred_check
      _
    $region31: #{tpu_custom_call.1} parent=1 // pred_check_branch
      %36 = sbr.rel (0) target = $region33
    $region32: #{tpu_custom_call.1} parent=1 // pred_region
      _
    $region33: #{tpu_custom_call.1} parent=1 // pred_fallthru
      _
    // Predicated region
    $region34: #{tpu_custom_call.1} parent=1 // pred_check
      _
    $region35: #{tpu_custom_call.1} parent=1 // pred_check_branch
      %38 = sbr.rel (0) target = $region37
    $region36: #{tpu_custom_call.1} parent=1 // pred_region
      _
    $region37: #{tpu_custom_call.1} parent=1 // pred_fallthru
      _
    // Predicated region
    $region38: #{tpu_custom_call.1} parent=1 // pred_check
      _
    $region39: #{tpu_custom_call.1} parent=1 // pred_check_branch
      %40 = sbr.rel (0) target = $region41
    $region40: #{tpu_custom_call.1} parent=1 // pred_region
      _
    $region41: #{tpu_custom_call.1} parent=1 // pred_fallthru
      _
    // Predicated region
    $region42: #{tpu_custom_call.1} parent=1 // pred_check
      _
    $region43: #{tpu_custom_call.1} parent=1 // pred_check_branch
      %42 = sbr.rel (0) target = $region45
    $region44: #{tpu_custom_call.1} parent=1 // pred_region
      _
    $region45: #{tpu_custom_call.1} parent=1 // pred_fallthru
      _
    %v44 = vld [vmem:[%s0] sm:$0xff]
    %v45 = vld [vmem:[%s0 + $0x8] sm:$0xff]
    %v46 = vld [vmem:[%s0 + $0x10] sm:$0xff]
    %v47 = vld [vmem:[%s0 + $0x18] sm:$0xff]
    %v48 = vld [vmem:[%s0 + $0x20] sm:$0xff]
    %v49 = vld [vmem:[%s0 + $0x28] sm:$0xff]
    %v50 = vld [vmem:[%s0 + $0x30] sm:$0xff]
    %v51 = vld [vmem:[%s0 + $0x38] sm:$0xff]
    %vm52 = vcmp.gt.f32.partialorder %v44, 0.0
    %vm53 = vcmp.gt.f32.partialorder %v45, 0.0
    %vm54 = vcmp.gt.f32.partialorder %v46, 0.0
    %vm55 = vcmp.gt.f32.partialorder %v47, 0.0
    %vm56 = vcmp.gt.f32.partialorder %v48, 0.0
    %vm57 = vcmp.gt.f32.partialorder %v49, 0.0
    %vm58 = vcmp.gt.f32.partialorder %v50, 0.0
    %vm59 = vcmp.gt.f32.partialorder %v51, 0.0
    %v60 = vld [vmem:[%s1] sm:$0xff]
    %v61 = vld [vmem:[%s1 + $0x8] sm:$0xff]
    %v62 = vld [vmem:[%s1 + $0x10] sm:$0xff]
    %v63 = vld [vmem:[%s1 + $0x18] sm:$0xff]
    %v64 = vld [vmem:[%s1 + $0x20] sm:$0xff]
    %v65 = vld [vmem:[%s1 + $0x28] sm:$0xff]
    %v66 = vld [vmem:[%s1 + $0x30] sm:$0xff]
    %v67 = vld [vmem:[%s1 + $0x38] sm:$0xff]
    %v68 = vpack.c.bf16 %v61, %v60
    %v69 = vpack.c.bf16 %v63, %v62
    %v70 = vpack.c.bf16 %v65, %v64
    %v71 = vpack.c.bf16 %v67, %v66
    %v72 = vld [vmem:[%s2] sm:$0xff]
    %v73 = vld [vmem:[%s2 + $0x8] sm:$0xff]
    %v74 = vld [vmem:[%s2 + $0x10] sm:$0xff]
    %v75 = vld [vmem:[%s2 + $0x18] sm:$0xff]
    %v76 = vld [vmem:[%s2 + $0x20] sm:$0xff]
    %v77 = vld [vmem:[%s2 + $0x28] sm:$0xff]
    %v78 = vld [vmem:[%s2 + $0x30] sm:$0xff]
    %v79 = vld [vmem:[%s2 + $0x38] sm:$0xff]
    %v80 = vpack.c.bf16 %v73, %v72
    %v81 = vpack.c.bf16 %v75, %v74
    %v82 = vpack.c.bf16 %v77, %v76
    %v83 = vpack.c.bf16 %v79, %v78
    %vm84 = vcmask 523264
    %v86 = vsel %vm84, %v68, 0
    %v89 = vsel %vm84, %v69, 0
    %v92 = vsel %vm84, %v70, 0
    %v95 = vsel %vm84, %v71, 0
    %97 = vmatprep.subr.bf16.mxu0 0
    %98 = vmatpush1.bf16.msra.mxu0 %v80
    %99 = vmatprep.subr.bf16.mxu0 0
    %100 = vmatpush1.bf16.msra.mxu0 %v81
    %101 = vmatprep.subr.bf16.mxu0 0
    %102 = vmatpush1.bf16.msra.mxu0 %v82
    %103 = vmatprep.subr.bf16.mxu0 0
    %104 = vmatpush1.bf16.msra.mxu0 %v83
    %105 = vmatprep.subr.bf16.mxu0 0
    %106 = vmatpush1.bf16.msra.mxu0 0
    %107 = vmatprep.subr.bf16.mxu0 0
    %108 = vmatpush1.bf16.msra.mxu0 0
    %109 = vmatprep.subr.bf16.mxu0 0
    %110 = vmatpush1.bf16.msra.mxu0 0
    %111 = vmatprep.subr.bf16.mxu0 0
    %112 = vmatpush1.bf16.msra.mxu0 0
    %113 = vmatprep.subr.bf16.mxu0 0
    %114 = vmatpush1.bf16.msra.mxu0 0
    %115 = vmatprep.subr.bf16.mxu0 0
    %116 = vmatpush1.bf16.msra.mxu0 0
    %117 = vmatprep.subr.bf16.mxu0 0
    %118 = vmatpush1.bf16.msra.mxu0 0
    %119 = vmatprep.subr.bf16.mxu0 0
    %120 = vmatpush1.bf16.msra.mxu0 0
    %121 = vmatprep.subr.bf16.mxu0 0
    %122 = vmatpush1.bf16.msra.mxu0 0
    %123 = vmatprep.subr.bf16.mxu0 0
    %124 = vmatpush1.bf16.msra.mxu0 0
    %125 = vmatprep.subr.bf16.mxu0 0
    %126 = vmatpush1.bf16.msra.mxu0 0
    %127 = vmatprep.subr.bf16.mxu0 0
    %128 = vmatpush1.bf16.msra.mxu0 0
    %129 = vmatprep.mubr.bf16.mxu0 0
    %130 = vmatmul.mubr.bf16.gmra.mrb[0].mxu0 %v86
    %v131 = vpop.f32.mrb[0].mxu0
    %v132 = vadd.f32 0.0, %v131
    %v133 = vpop.f32.mrb[0].mxu0
    %v134 = vpop.f32.mrb[0].mxu0
    %v135 = vadd.f32 0.0, %v134
    %v136 = vpop.f32.mrb[0].mxu0
    %137 = vmatprep.mubr.bf16.mxu0 0
    %138 = vmatmul.mubr.bf16.gmra.mrb[0].mxu0 %v89
    %v139 = vpop.f32.mrb[0].mxu0
    %v140 = vadd.f32 0.0, %v139
    %v141 = vpop.f32.mrb[0].mxu0
    %v142 = vpop.f32.mrb[0].mxu0
    %v143 = vadd.f32 0.0, %v142
    %v144 = vpop.f32.mrb[0].mxu0
    %145 = vmatprep.mubr.bf16.mxu0 0
    %146 = vmatmul.mubr.bf16.gmra.mrb[0].mxu0 %v92
    %v147 = vpop.f32.mrb[0].mxu0
    %v148 = vadd.f32 0.0, %v147
    %v149 = vpop.f32.mrb[0].mxu0
    %v150 = vpop.f32.mrb[0].mxu0
    %v151 = vadd.f32 0.0, %v150
    %v152 = vpop.f32.mrb[0].mxu0
    %153 = vmatprep.mubr.bf16.mxu0 0
    %154 = vmatmul.mubr.bf16.gmra.mrb[0].mxu0 %v95
    %v155 = vpop.f32.mrb[0].mxu0
    %v156 = vadd.f32 0.0, %v155
    %v157 = vpop.f32.mrb[0].mxu0
    %v158 = vpop.f32.mrb[0].mxu0
    %v159 = vadd.f32 0.0, %v158
    %v160 = vpop.f32.mrb[0].mxu0
    %161 = vdwg.mxu0
    %v162 = vpack.c.bf16 %v135, %v132
    %v163 = vpack.c.bf16 %v143, %v140
    %v164 = vpack.c.bf16 %v151, %v148
    %v165 = vpack.c.bf16 %v159, %v156
    %v166 = vld [vmem:[%s3] sm:$0xff]
    %v167 = vld [vmem:[%s3 + $0x8] sm:$0xff]
    %v168 = vld [vmem:[%s3 + $0x10] sm:$0xff]
    %v169 = vld [vmem:[%s3 + $0x18] sm:$0xff]
    %v170 = vld [vmem:[%s3 + $0x20] sm:$0xff]
    %v171 = vld [vmem:[%s3 + $0x28] sm:$0xff]
    %v172 = vld [vmem:[%s3 + $0x30] sm:$0xff]
    %v173 = vld [vmem:[%s3 + $0x38] sm:$0xff]
    %v174 = vld [vmem:[%s3 + $0x40] sm:$0xff]
    %v175 = vld [vmem:[%s3 + $0x48] sm:$0xff]
    %v176 = vld [vmem:[%s3 + $0x50] sm:$0xff]
    %v177 = vld [vmem:[%s3 + $0x58] sm:$0xff]
    %v178 = vld [vmem:[%s3 + $0x60] sm:$0xff]
    %v179 = vld [vmem:[%s3 + $0x68] sm:$0xff]
    %v180 = vld [vmem:[%s3 + $0x70] sm:$0xff]
    %v181 = vld [vmem:[%s3 + $0x78] sm:$0xff]
    %182 = vmatprep.subr.mxu0 0.0
    %183 = vmatpush1.msra.mxu0 %v166
    %184 = vmatprep.subr.mxu0 0.0
    %185 = vmatpush1.msra.mxu0 %v167
    %186 = vmatprep.subr.mxu0 0.0
    %187 = vmatpush1.msra.mxu0 %v168
    %188 = vmatprep.subr.mxu0 0.0
    %189 = vmatpush1.msra.mxu0 %v169
    %190 = vmatprep.subr.mxu0 0.0
    %191 = vmatpush1.msra.mxu0 %v170
    %192 = vmatprep.subr.mxu0 0.0
    %193 = vmatpush1.msra.mxu0 %v171
    %194 = vmatprep.subr.mxu0 0.0
    %195 = vmatpush1.msra.mxu0 %v172
    %196 = vmatprep.subr.mxu0 0.0
    %197 = vmatpush1.msra.mxu0 %v173
    %198 = vmatprep.subr.mxu0 0.0
    %199 = vmatpush1.msra.mxu0 %v174
    %200 = vmatprep.subr.mxu0 0.0
    %201 = vmatpush1.msra.mxu0 %v175
    %202 = vmatprep.subr.mxu0 0.0
    %203 = vmatpush1.msra.mxu0 %v176
    %204 = vmatprep.subr.mxu0 0.0
    %205 = vmatpush1.msra.mxu0 %v177
    %206 = vmatprep.subr.mxu0 0.0
    %207 = vmatpush1.msra.mxu0 %v178
    %208 = vmatprep.subr.mxu0 0.0
    %209 = vmatpush1.msra.mxu0 %v179
    %210 = vmatprep.subr.mxu0 0.0
    %211 = vmatpush1.msra.mxu0 %v180
    %212 = vmatprep.subr.mxu0 0.0
    %213 = vmatpush1.msra.mxu0 %v181
    %214 = vmatprep.subr.mxu0 0.0
    %215 = vmatpush1.msra.mxu0 0.0
    %216 = vmatprep.subr.mxu0 0.0
    %217 = vmatpush1.msra.mxu0 0.0
    %218 = vmatprep.subr.mxu0 0.0
    %219 = vmatpush1.msra.mxu0 0.0
    %220 = vmatprep.subr.mxu0 0.0
    %221 = vmatpush1.msra.mxu0 0.0
    %222 = vmatprep.subr.mxu0 0.0
    %223 = vmatpush1.msra.mxu0 0.0
    %224 = vmatprep.subr.mxu0 0.0
    %225 = vmatpush1.msra.mxu0 0.0
    %226 = vmatprep.subr.mxu0 0.0
    %227 = vmatpush1.msra.mxu0 0.0
    %228 = vmatprep.subr.mxu0 0.0
    %229 = vmatpush1.msra.mxu0 0.0
    %230 = vmatprep.subr.mxu0 0.0
    %231 = vmatpush1.msra.mxu0 0.0
    %232 = vmatprep.subr.mxu0 0.0
    %233 = vmatpush1.msra.mxu0 0.0
    %234 = vmatprep.subr.mxu0 0.0
    %235 = vmatpush1.msra.mxu0 0.0
    %236 = vmatprep.subr.mxu0 0.0
    %237 = vmatpush1.msra.mxu0 0.0
    %238 = vmatprep.subr.mxu0 0.0
    %239 = vmatpush1.msra.mxu0 0.0
    %240 = vmatprep.subr.mxu0 0.0
    %241 = vmatpush1.msra.mxu0 0.0
    %242 = vmatprep.subr.mxu0 0.0
    %243 = vmatpush1.msra.mxu0 0.0
    %244 = vmatprep.subr.mxu0 0.0
    %245 = vmatpush1.msra.mxu0 0.0
    %246 = vmatprep.mubr.f32.mxu0 0.0
    %247 = vmatmul.mubr.f32.gmra.mrb[0].mxu0 %v132
    %v248 = vpop.f32.mrb[0].mxu0
    %v249 = vadd.f32 0.0, %v248
    %v250 = vpop.f32.mrb[0].mxu0
    %251 = vmatprep.mubr.f32.mxu0 0.0
    %252 = vmatmul.mubr.f32.gmra.mrb[0].mxu0 %v135
    %v253 = vpop.f32.mrb[0].mxu0
    %v254 = vadd.f32 0.0, %v253
    %v255 = vpop.f32.mrb[0].mxu0
    %256 = vmatprep.mubr.f32.mxu0 0.0
    %257 = vmatmul.mubr.f32.gmra.mrb[0].mxu0 %v140
    %v258 = vpop.f32.mrb[0].mxu0
    %v259 = vadd.f32 0.0, %v258
    %v260 = vpop.f32.mrb[0].mxu0
    %261 = vmatprep.mubr.f32.mxu0 0.0
    %262 = vmatmul.mubr.f32.gmra.mrb[0].mxu0 %v143
    %v263 = vpop.f32.mrb[0].mxu0
    %v264 = vadd.f32 0.0, %v263
    %v265 = vpop.f32.mrb[0].mxu0
    %266 = vmatprep.mubr.f32.mxu0 0.0
    %267 = vmatmul.mubr.f32.gmra.mrb[0].mxu0 %v148
    %v268 = vpop.f32.mrb[0].mxu0
    %v269 = vadd.f32 0.0, %v268
    %v270 = vpop.f32.mrb[0].mxu0
    %271 = vmatprep.mubr.f32.mxu0 0.0
    %272 = vmatmul.mubr.f32.gmra.mrb[0].mxu0 %v151
    %v273 = vpop.f32.mrb[0].mxu0
    %v274 = vadd.f32 0.0, %v273
    %v275 = vpop.f32.mrb[0].mxu0
    %276 = vmatprep.mubr.f32.mxu0 0.0
    %277 = vmatmul.mubr.f32.gmra.mrb[0].mxu0 %v156
    %v278 = vpop.f32.mrb[0].mxu0
    %v279 = vadd.f32 0.0, %v278
    %v280 = vpop.f32.mrb[0].mxu0
    %281 = vmatprep.mubr.f32.mxu0 0.0
    %282 = vmatmul.mubr.f32.gmra.mrb[0].mxu0 %v159
    %v283 = vpop.f32.mrb[0].mxu0
    %v284 = vadd.f32 0.0, %v283
    %v285 = vpop.f32.mrb[0].mxu0
    %286 = vdwg.mxu0
    %287 = vxpose.xlu0.b32.start [1/16] %v249, 128
    %288 = vxpose.xlu0.b32.cont [2/16] %v254, 128
    %289 = vxpose.xlu0.b32.cont [3/16] %v259, 128
    %290 = vxpose.xlu0.b32.cont [4/16] %v264, 128
    %291 = vxpose.xlu0.b32.cont [5/16] %v269, 128
    %292 = vxpose.xlu0.b32.cont [6/16] %v274, 128
    %293 = vxpose.xlu0.b32.cont [7/16] %v279, 128
    %294 = vxpose.xlu0.b32.cont [8/16] %v284, 128
    %295 = vxpose.xlu0.b32.cont [9/16] 0.0, 128
    %296 = vxpose.xlu0.b32.cont [10/16] 0.0, 128
    %297 = vxpose.xlu0.b32.cont [11/16] 0.0, 128
    %298 = vxpose.xlu0.b32.cont [12/16] 0.0, 128
    %299 = vxpose.xlu0.b32.cont [13/16] 0.0, 128
    %300 = vxpose.xlu0.b32.cont [14/16] 0.0, 128
    %301 = vxpose.xlu0.b32.cont [15/16] 0.0, 128
    %302 = vxpose.xlu0.b32.end [16/16] 0.0, 128
    %v303 = vpop.trf.xlu0
    %v304 = vpop.trf.xlu0
    %v305 = vpop.trf.xlu0
    %v306 = vpop.trf.xlu0
    %v307 = vpop.trf.xlu0
    %v308 = vpop.trf.xlu0
    %v309 = vpop.trf.xlu0
    %v310 = vpop.trf.xlu0
    %v311 = vpop.trf.xlu0
    %v312 = vpop.trf.xlu0
    %v313 = vpop.trf.xlu0
    %v314 = vpop.trf.xlu0
    %v315 = vpop.trf.xlu0
    %v316 = vpop.trf.xlu0
    %v317 = vpop.trf.xlu0
    %v318 = vpop.trf.xlu0
    %v319 = vld [vmem:[%s4] sm:$0x1]
    %321 = vset.pattern.permute.xlu0 8
    %322 = vperm.xlu0 %321, %v249
    %v323 = vpop.permute.xlu0 %322
    %326 = vset.pattern.permute.xlu0 8
    %327 = vperm.xlu0 %326, %v254
    %v328 = vpop.permute.xlu0 %327
    %331 = vset.pattern.permute.xlu0 8
    %332 = vperm.xlu0 %331, %v259
    %v333 = vpop.permute.xlu0 %332
    %336 = vset.pattern.permute.xlu0 8
    %337 = vperm.xlu0 %336, %v264
    %v338 = vpop.permute.xlu0 %337
    %341 = vset.pattern.permute.xlu0 8
    %342 = vperm.xlu0 %341, %v269
    %v343 = vpop.permute.xlu0 %342
    %346 = vset.pattern.permute.xlu0 8
    %347 = vperm.xlu0 %346, %v274
    %v348 = vpop.permute.xlu0 %347
    %351 = vset.pattern.permute.xlu0 8
    %352 = vperm.xlu0 %351, %v279
    %v353 = vpop.permute.xlu0 %352
    %356 = vset.pattern.permute.xlu0 8
    %357 = vperm.xlu0 %356, %v284
    %v358 = vpop.permute.xlu0 %357
    %v360 = vlaneseq
    %v361 = vshrl.u32 %v360, 7
    %v362 = vsub.s32 0, %v361
    %v363 = vrot.slane %v303, %v362
    %v364 = vadd.f32 %v323, %v363
    %v365 = vadd.f32 %v328, %v363
    %v366 = vadd.f32 %v333, %v363
    %v367 = vadd.f32 %v338, %v363
    %v368 = vadd.f32 %v343, %v363
    %v369 = vadd.f32 %v348, %v363
    %v370 = vadd.f32 %v353, %v363
    %v371 = vadd.f32 %v358, %v363
    %vm372 = vcmp.gt.f32.partialorder %v364, 0.0
    %vm373 = vcmp.gt.f32.partialorder %v365, 0.0
    %vm374 = vcmp.gt.f32.partialorder %v366, 0.0
    %vm375 = vcmp.gt.f32.partialorder %v367, 0.0
    %vm376 = vcmp.gt.f32.partialorder %v368, 0.0
    %vm377 = vcmp.gt.f32.partialorder %v369, 0.0
    %vm378 = vcmp.gt.f32.partialorder %v370, 0.0
    %vm379 = vcmp.gt.f32.partialorder %v371, 0.0
    %v380 = vmul.f32 %v364, 0.2
    %v381 = vmul.f32 %v365, 0.2
    %v382 = vmul.f32 %v366, 0.2
    %v383 = vmul.f32 %v367, 0.2
    %v384 = vmul.f32 %v368, 0.2
    %v385 = vmul.f32 %v369, 0.2
    %v386 = vmul.f32 %v370, 0.2
    %v387 = vmul.f32 %v371, 0.2
    %v388 = vsel %vm372, %v364, %v380
    %v389 = vsel %vm373, %v365, %v381
    %v390 = vsel %vm374, %v366, %v382
    %v391 = vsel %vm375, %v367, %v383
    %v392 = vsel %vm376, %v368, %v384
    %v393 = vsel %vm377, %v369, %v385
    %v394 = vsel %vm378, %v370, %v386
    %v395 = vsel %vm379, %v371, %v387
    %v396 = vsel %vm52, %v388, -1e+30
    %v397 = vsel %vm53, %v389, -1e+30
    %v398 = vsel %vm54, %v390, -1e+30
    %v399 = vsel %vm55, %v391, -1e+30
    %v400 = vsel %vm56, %v392, -1e+30
    %v401 = vsel %vm57, %v393, -1e+30
    %v402 = vsel %vm58, %v394, -1e+30
    %v403 = vsel %vm59, %v395, -1e+30
    %v404 = vsel %vm84, %v396, -inf
    %405 = vmax.xlane.f32.xlu0 %v404
    %v406 = vpop.xlane.xlu0 %405
    %v407 = vsel %vm84, %v397, -inf
    %408 = vmax.xlane.f32.xlu0 %v407
    %v409 = vpop.xlane.xlu0 %408
    %v410 = vsel %vm84, %v398, -inf
    %411 = vmax.xlane.f32.xlu0 %v410
    %v412 = vpop.xlane.xlu0 %411
    %v413 = vsel %vm84, %v399, -inf
    %414 = vmax.xlane.f32.xlu0 %v413
    %v415 = vpop.xlane.xlu0 %414
    %v416 = vsel %vm84, %v400, -inf
    %417 = vmax.xlane.f32.xlu0 %v416
    %v418 = vpop.xlane.xlu0 %417
    %v419 = vsel %vm84, %v401, -inf
    %420 = vmax.xlane.f32.xlu0 %v419
    %v421 = vpop.xlane.xlu0 %420
    %v422 = vsel %vm84, %v402, -inf
    %423 = vmax.xlane.f32.xlu0 %v422
    %v424 = vpop.xlane.xlu0 %423
    %v425 = vsel %vm84, %v403, -inf
    %426 = vmax.xlane.f32.xlu0 %v425
    %v427 = vpop.xlane.xlu0 %426
    %v428 = vsub.f32 %v396, %v406
    %v429 = vsub.f32 %v397, %v409
    %v430 = vsub.f32 %v398, %v412
    %v431 = vsub.f32 %v399, %v415
    %v432 = vsub.f32 %v400, %v418
    %v433 = vsub.f32 %v401, %v421
    %v434 = vsub.f32 %v402, %v424
    %v435 = vsub.f32 %v403, %v427
    %v436 = vmul.f32 %v428, 1.442695
    %v437 = vpow.pop %v436
    %v438 = vmul.f32 %v429, 1.442695
    %v439 = vpow.pop %v438
    %v440 = vmul.f32 %v430, 1.442695
    %v441 = vpow.pop %v440
    %v442 = vmul.f32 %v431, 1.442695
    %v443 = vpow.pop %v442
    %v444 = vmul.f32 %v432, 1.442695
    %v445 = vpow.pop %v444
    %v446 = vmul.f32 %v433, 1.442695
    %v447 = vpow.pop %v446
    %v448 = vmul.f32 %v434, 1.442695
    %v449 = vpow.pop %v448
    %v450 = vmul.f32 %v435, 1.442695
    %v451 = vpow.pop %v450
    %v452 = vsel %vm84, %v437, 0.0
    %453 = vadd.xlane.f32.xlu0 %v452
    %v454 = vpop.xlane.xlu0 %453
    %v455 = vsel %vm84, %v439, 0.0
    %456 = vadd.xlane.f32.xlu0 %v455
    %v457 = vpop.xlane.xlu0 %456
    %v458 = vsel %vm84, %v441, 0.0
    %459 = vadd.xlane.f32.xlu0 %v458
    %v460 = vpop.xlane.xlu0 %459
    %v461 = vsel %vm84, %v443, 0.0
    %462 = vadd.xlane.f32.xlu0 %v461
    %v463 = vpop.xlane.xlu0 %462
    %v464 = vsel %vm84, %v445, 0.0
    %465 = vadd.xlane.f32.xlu0 %v464
    %v466 = vpop.xlane.xlu0 %465
    %v467 = vsel %vm84, %v447, 0.0
    %468 = vadd.xlane.f32.xlu0 %v467
    %v469 = vpop.xlane.xlu0 %468
    %v470 = vsel %vm84, %v449, 0.0
    %471 = vadd.xlane.f32.xlu0 %v470
    %v472 = vpop.xlane.xlu0 %471
    %v473 = vsel %vm84, %v451, 0.0
    %474 = vadd.xlane.f32.xlu0 %v473
    %v475 = vpop.xlane.xlu0 %474
    %v476 = vmax.f32 %v454, 1e-20
    %v477 = vmax.f32 %v457, 1e-20
    %v478 = vmax.f32 %v460, 1e-20
    %v479 = vmax.f32 %v463, 1e-20
    %v480 = vmax.f32 %v466, 1e-20
    %v481 = vmax.f32 %v469, 1e-20
    %v482 = vmax.f32 %v472, 1e-20
    %v483 = vmax.f32 %v475, 1e-20
    %v484 = vrcp.pop %v476
    %v485 = vrcp.pop %v477
    %v486 = vrcp.pop %v478
    %v487 = vrcp.pop %v479
    %v488 = vrcp.pop %v480
    %v489 = vrcp.pop %v481
    %v490 = vrcp.pop %v482
    %v491 = vrcp.pop %v483
    %v492 = vpack.c.bf16 %v439, %v437
    %v493 = vpack.c.bf16 %v443, %v441
    %v494 = vpack.c.bf16 %v447, %v445
    %v495 = vpack.c.bf16 %v451, %v449
    %v497 = vsel %vm84, %v492, 0
    %v500 = vsel %vm84, %v493, 0
    %v503 = vsel %vm84, %v494, 0
    %v506 = vsel %vm84, %v495, 0
    %508 = vmatprep.subr.bf16.mxu0 0
    %509 = vmatpush1.bf16.msra.mxu0 %v162
    %510 = vmatprep.subr.bf16.mxu0 0
    %511 = vmatpush1.bf16.msra.mxu0 %v163
    %512 = vmatprep.subr.bf16.mxu0 0
    %513 = vmatpush1.bf16.msra.mxu0 %v164
    %514 = vmatprep.subr.bf16.mxu0 0
    %515 = vmatpush1.bf16.msra.mxu0 %v165
    %516 = vmatprep.subr.bf16.mxu0 0
    %517 = vmatpush1.bf16.msra.mxu0 0
    %518 = vmatprep.subr.bf16.mxu0 0
    %519 = vmatpush1.bf16.msra.mxu0 0
    %520 = vmatprep.subr.bf16.mxu0 0
    %521 = vmatpush1.bf16.msra.mxu0 0
    %522 = vmatprep.subr.bf16.mxu0 0
    %523 = vmatpush1.bf16.msra.mxu0 0
    %524 = vmatprep.subr.bf16.mxu0 0
    %525 = vmatpush1.bf16.msra.mxu0 0
    %526 = vmatprep.subr.bf16.mxu0 0
    %527 = vmatpush1.bf16.msra.mxu0 0
    %528 = vmatprep.subr.bf16.mxu0 0
    %529 = vmatpush1.bf16.msra.mxu0 0
    %530 = vmatprep.subr.bf16.mxu0 0
    %531 = vmatpush1.bf16.msra.mxu0 0
    %532 = vmatprep.subr.bf16.mxu0 0
    %533 = vmatpush1.bf16.msra.mxu0 0
    %534 = vmatprep.subr.bf16.mxu0 0
    %535 = vmatpush1.bf16.msra.mxu0 0
    %536 = vmatprep.subr.bf16.mxu0 0
    %537 = vmatpush1.bf16.msra.mxu0 0
    %538 = vmatprep.subr.bf16.mxu0 0
    %539 = vmatpush1.bf16.msra.mxu0 0
    %540 = vmatprep.mubr.bf16.mxu0 0
    %541 = vmatmul.mubr.bf16.gmra.mrb[0].mxu0 %v497
    %v542 = vpop.f32.mrb[0].mxu0
    %v543 = vadd.f32 0.0, %v542
    %v544 = vpop.f32.mrb[0].mxu0
    %v545 = vpop.f32.mrb[0].mxu0
    %v546 = vadd.f32 0.0, %v545
    %v547 = vpop.f32.mrb[0].mxu0
    %548 = vmatprep.mubr.bf16.mxu0 0
    %549 = vmatmul.mubr.bf16.gmra.mrb[0].mxu0 %v500
    %v550 = vpop.f32.mrb[0].mxu0
    %v551 = vadd.f32 0.0, %v550
    %v552 = vpop.f32.mrb[0].mxu0
    %v553 = vpop.f32.mrb[0].mxu0
    %v554 = vadd.f32 0.0, %v553
    %v555 = vpop.f32.mrb[0].mxu0
    %556 = vmatprep.mubr.bf16.mxu0 0
    %557 = vmatmul.mubr.bf16.gmra.mrb[0].mxu0 %v503
    %v558 = vpop.f32.mrb[0].mxu0
    %v559 = vadd.f32 0.0, %v558
    %v560 = vpop.f32.mrb[0].mxu0
    %v561 = vpop.f32.mrb[0].mxu0
    %v562 = vadd.f32 0.0, %v561
    %v563 = vpop.f32.mrb[0].mxu0
    %564 = vmatprep.mubr.bf16.mxu0 0
    %565 = vmatmul.mubr.bf16.gmra.mrb[0].mxu0 %v506
    %v566 = vpop.f32.mrb[0].mxu0
    %v567 = vadd.f32 0.0, %v566
    %v568 = vpop.f32.mrb[0].mxu0
    %v569 = vpop.f32.mrb[0].mxu0
    %v570 = vadd.f32 0.0, %v569
    %v571 = vpop.f32.mrb[0].mxu0
    %572 = vdwg.mxu0
    %v573 = vmul.f32 %v543, %v484
    %v574 = vmul.f32 %v546, %v485
    %v575 = vmul.f32 %v551, %v486
    %v576 = vmul.f32 %v554, %v487
    %v577 = vmul.f32 %v559, %v488
    %v578 = vmul.f32 %v562, %v489
    %v579 = vmul.f32 %v567, %v490
    %v580 = vmul.f32 %v570, %v491
    %581 = vset.pattern.permute.xlu0 9
    %582 = vperm.xlu0 %581, %v249
    %v583 = vpop.permute.xlu0 %582
    %585 = vset.pattern.permute.xlu0 9
    %586 = vperm.xlu0 %585, %v254
    %v587 = vpop.permute.xlu0 %586
    %589 = vset.pattern.permute.xlu0 9
    %590 = vperm.xlu0 %589, %v259
    %v591 = vpop.permute.xlu0 %590
    %593 = vset.pattern.permute.xlu0 9
    %594 = vperm.xlu0 %593, %v264
    %v595 = vpop.permute.xlu0 %594
    %597 = vset.pattern.permute.xlu0 9
    %598 = vperm.xlu0 %597, %v269
    %v599 = vpop.permute.xlu0 %598
    %601 = vset.pattern.permute.xlu0 9
    %602 = vperm.xlu0 %601, %v274
    %v603 = vpop.permute.xlu0 %602
    %605 = vset.pattern.permute.xlu0 9
    %606 = vperm.xlu0 %605, %v279
    %v607 = vpop.permute.xlu0 %606
    %609 = vset.pattern.permute.xlu0 9
    %610 = vperm.xlu0 %609, %v284
    %v611 = vpop.permute.xlu0 %610
    %v613 = vlaneseq
    %v614 = vshrl.u32 %v613, 7
    %v615 = vsub.s32 1, %v614
    %v616 = vrot.slane %v303, %v615
    %v617 = vadd.f32 %v583, %v616
    %v618 = vadd.f32 %v587, %v616
    %v619 = vadd.f32 %v591, %v616
    %v620 = vadd.f32 %v595, %v616
    %v621 = vadd.f32 %v599, %v616
    %v622 = vadd.f32 %v603, %v616
    %v623 = vadd.f32 %v607, %v616
    %v624 = vadd.f32 %v611, %v616
    %vm625 = vcmp.gt.f32.partialorder %v617, 0.0
    %vm626 = vcmp.gt.f32.partialorder %v618, 0.0
    %vm627 = vcmp.gt.f32.partialorder %v619, 0.0
    %vm628 = vcmp.gt.f32.partialorder %v620, 0.0
    %vm629 = vcmp.gt.f32.partialorder %v621, 0.0
    %vm630 = vcmp.gt.f32.partialorder %v622, 0.0
    %vm631 = vcmp.gt.f32.partialorder %v623, 0.0
    %vm632 = vcmp.gt.f32.partialorder %v624, 0.0
    %v633 = vmul.f32 %v617, 0.2
    %v634 = vmul.f32 %v618, 0.2
    %v635 = vmul.f32 %v619, 0.2
    %v636 = vmul.f32 %v620, 0.2
    %v637 = vmul.f32 %v621, 0.2
    %v638 = vmul.f32 %v622, 0.2
    %v639 = vmul.f32 %v623, 0.2
    %v640 = vmul.f32 %v624, 0.2
    %v641 = vsel %vm625, %v617, %v633
    %v642 = vsel %vm626, %v618, %v634
    %v643 = vsel %vm627, %v619, %v635
    %v644 = vsel %vm628, %v620, %v636
    %v645 = vsel %vm629, %v621, %v637
    %v646 = vsel %vm630, %v622, %v638
    %v647 = vsel %vm631, %v623, %v639
    %v648 = vsel %vm632, %v624, %v640
    %v649 = vsel %vm52, %v641, -1e+30
    %v650 = vsel %vm53, %v642, -1e+30
    %v651 = vsel %vm54, %v643, -1e+30
    %v652 = vsel %vm55, %v644, -1e+30
    %v653 = vsel %vm56, %v645, -1e+30
    %v654 = vsel %vm57, %v646, -1e+30
    %v655 = vsel %vm58, %v647, -1e+30
    %v656 = vsel %vm59, %v648, -1e+30
    %v657 = vsel %vm84, %v649, -inf
    %658 = vmax.xlane.f32.xlu0 %v657
    %v659 = vpop.xlane.xlu0 %658
    %v660 = vsel %vm84, %v650, -inf
    %661 = vmax.xlane.f32.xlu0 %v660
    %v662 = vpop.xlane.xlu0 %661
    %v663 = vsel %vm84, %v651, -inf
    %664 = vmax.xlane.f32.xlu0 %v663
    %v665 = vpop.xlane.xlu0 %664
    %v666 = vsel %vm84, %v652, -inf
    %667 = vmax.xlane.f32.xlu0 %v666
    %v668 = vpop.xlane.xlu0 %667
    %v669 = vsel %vm84, %v653, -inf
    %670 = vmax.xlane.f32.xlu0 %v669
    %v671 = vpop.xlane.xlu0 %670
    %v672 = vsel %vm84, %v654, -inf
    %673 = vmax.xlane.f32.xlu0 %v672
    %v674 = vpop.xlane.xlu0 %673
    %v675 = vsel %vm84, %v655, -inf
    %676 = vmax.xlane.f32.xlu0 %v675
    %v677 = vpop.xlane.xlu0 %676
    %v678 = vsel %vm84, %v656, -inf
    %679 = vmax.xlane.f32.xlu0 %v678
    %v680 = vpop.xlane.xlu0 %679
    %v681 = vsub.f32 %v649, %v659
    %v682 = vsub.f32 %v650, %v662
    %v683 = vsub.f32 %v651, %v665
    %v684 = vsub.f32 %v652, %v668
    %v685 = vsub.f32 %v653, %v671
    %v686 = vsub.f32 %v654, %v674
    %v687 = vsub.f32 %v655, %v677
    %v688 = vsub.f32 %v656, %v680
    %v689 = vmul.f32 %v681, 1.442695
    %v690 = vpow.pop %v689
    %v691 = vmul.f32 %v682, 1.442695
    %v692 = vpow.pop %v691
    %v693 = vmul.f32 %v683, 1.442695
    %v694 = vpow.pop %v693
    %v695 = vmul.f32 %v684, 1.442695
    %v696 = vpow.pop %v695
    %v697 = vmul.f32 %v685, 1.442695
    %v698 = vpow.pop %v697
    %v699 = vmul.f32 %v686, 1.442695
    %v700 = vpow.pop %v699
    %v701 = vmul.f32 %v687, 1.442695
    %v702 = vpow.pop %v701
    %v703 = vmul.f32 %v688, 1.442695
    %v704 = vpow.pop %v703
    %v705 = vsel %vm84, %v690, 0.0
    %706 = vadd.xlane.f32.xlu0 %v705
    %v707 = vpop.xlane.xlu0 %706
    %v708 = vsel %vm84, %v692, 0.0
    %709 = vadd.xlane.f32.xlu0 %v708
    %v710 = vpop.xlane.xlu0 %709
    %v711 = vsel %vm84, %v694, 0.0
    %712 = vadd.xlane.f32.xlu0 %v711
    %v713 = vpop.xlane.xlu0 %712
    %v714 = vsel %vm84, %v696, 0.0
    %715 = vadd.xlane.f32.xlu0 %v714
    %v716 = vpop.xlane.xlu0 %715
    %v717 = vsel %vm84, %v698, 0.0
    %718 = vadd.xlane.f32.xlu0 %v717
    %v719 = vpop.xlane.xlu0 %718
    %v720 = vsel %vm84, %v700, 0.0
    %721 = vadd.xlane.f32.xlu0 %v720
    %v722 = vpop.xlane.xlu0 %721
    %v723 = vsel %vm84, %v702, 0.0
    %724 = vadd.xlane.f32.xlu0 %v723
    %v725 = vpop.xlane.xlu0 %724
    %v726 = vsel %vm84, %v704, 0.0
    %727 = vadd.xlane.f32.xlu0 %v726
    %v728 = vpop.xlane.xlu0 %727
    %v729 = vmax.f32 %v707, 1e-20
    %v730 = vmax.f32 %v710, 1e-20
    %v731 = vmax.f32 %v713, 1e-20
    %v732 = vmax.f32 %v716, 1e-20
    %v733 = vmax.f32 %v719, 1e-20
    %v734 = vmax.f32 %v722, 1e-20
    %v735 = vmax.f32 %v725, 1e-20
    %v736 = vmax.f32 %v728, 1e-20
    %v737 = vrcp.pop %v729
    %v738 = vrcp.pop %v730
    %v739 = vrcp.pop %v731
    %v740 = vrcp.pop %v732
    %v741 = vrcp.pop %v733
    %v742 = vrcp.pop %v734
    %v743 = vrcp.pop %v735
    %v744 = vrcp.pop %v736
    %v745 = vpack.c.bf16 %v692, %v690
    %v746 = vpack.c.bf16 %v696, %v694
    %v747 = vpack.c.bf16 %v700, %v698
    %v748 = vpack.c.bf16 %v704, %v702
    %753 = vrot.lane.b32.xlu0 %v162, 112
    %v754 = vpop.permute.xlu0 %753
    %755 = vrot.lane.b32.xlu0 %v163, 112
    %v756 = vpop.permute.xlu0 %755
    %757 = vrot.lane.b32.xlu0 %v164, 112
    %v758 = vpop.permute.xlu0 %757
    %759 = vrot.lane.b32.xlu0 %v165, 112
    %v760 = vpop.permute.xlu0 %759
    %v766 = vsel %vm84, %v745, 0
    %v769 = vsel %vm84, %v746, 0
    %v772 = vsel %vm84, %v747, 0
    %v775 = vsel %vm84, %v748, 0
    %777 = vmatprep.subr.bf16.mxu0 0
    %778 = vmatpush1.bf16.msra.mxu0 %v754
    %779 = vmatprep.subr.bf16.mxu0 0
    %780 = vmatpush1.bf16.msra.mxu0 %v756
    %781 = vmatprep.subr.bf16.mxu0 0
    %782 = vmatpush1.bf16.msra.mxu0 %v758
    %783 = vmatprep.subr.bf16.mxu0 0
    %784 = vmatpush1.bf16.msra.mxu0 %v760
    %785 = vmatprep.subr.bf16.mxu0 0
    %786 = vmatpush1.bf16.msra.mxu0 0
    %787 = vmatprep.subr.bf16.mxu0 0
    %788 = vmatpush1.bf16.msra.mxu0 0
    %789 = vmatprep.subr.bf16.mxu0 0
    %790 = vmatpush1.bf16.msra.mxu0 0
    %791 = vmatprep.subr.bf16.mxu0 0
    %792 = vmatpush1.bf16.msra.mxu0 0
    %793 = vmatprep.subr.bf16.mxu0 0
    %794 = vmatpush1.bf16.msra.mxu0 0
    %795 = vmatprep.subr.bf16.mxu0 0
    %796 = vmatpush1.bf16.msra.mxu0 0
    %797 = vmatprep.subr.bf16.mxu0 0
    %798 = vmatpush1.bf16.msra.mxu0 0
    %799 = vmatprep.subr.bf16.mxu0 0
    %800 = vmatpush1.bf16.msra.mxu0 0
    %801 = vmatprep.subr.bf16.mxu0 0
    %802 = vmatpush1.bf16.msra.mxu0 0
    %803 = vmatprep.subr.bf16.mxu0 0
    %804 = vmatpush1.bf16.msra.mxu0 0
    %805 = vmatprep.subr.bf16.mxu0 0
    %806 = vmatpush1.bf16.msra.mxu0 0
    %807 = vmatprep.subr.bf16.mxu0 0
    %808 = vmatpush1.bf16.msra.mxu0 0
    %809 = vmatprep.mubr.bf16.mxu0 0
    %810 = vmatmul.mubr.bf16.gmra.mrb[0].mxu0 %v766
    %v811 = vpop.f32.mrb[0].mxu0
    %v812 = vadd.f32 0.0, %v811
    %v813 = vpop.f32.mrb[0].mxu0
    %v814 = vpop.f32.mrb[0].mxu0
    %v815 = vadd.f32 0.0, %v814
    %v816 = vpop.f32.mrb[0].mxu0
    %817 = vmatprep.mubr.bf16.mxu0 0
    %818 = vmatmul.mubr.bf16.gmra.mrb[0].mxu0 %v769
    %v819 = vpop.f32.mrb[0].mxu0
    %v820 = vadd.f32 0.0, %v819
    %v821 = vpop.f32.mrb[0].mxu0
    %v822 = vpop.f32.mrb[0].mxu0
    %v823 = vadd.f32 0.0, %v822
    %v824 = vpop.f32.mrb[0].mxu0
    %825 = vmatprep.mubr.bf16.mxu0 0
    %826 = vmatmul.mubr.bf16.gmra.mrb[0].mxu0 %v772
    %v827 = vpop.f32.mrb[0].mxu0
    %v828 = vadd.f32 0.0, %v827
    %v829 = vpop.f32.mrb[0].mxu0
    %v830 = vpop.f32.mrb[0].mxu0
    %v831 = vadd.f32 0.0, %v830
    %v832 = vpop.f32.mrb[0].mxu0
    %833 = vmatprep.mubr.bf16.mxu0 0
    %834 = vmatmul.mubr.bf16.gmra.mrb[0].mxu0 %v775
    %v835 = vpop.f32.mrb[0].mxu0
    %v836 = vadd.f32 0.0, %v835
    %v837 = vpop.f32.mrb[0].mxu0
    %v838 = vpop.f32.mrb[0].mxu0
    %v839 = vadd.f32 0.0, %v838
    %v840 = vpop.f32.mrb[0].mxu0
    %841 = vdwg.mxu0
    %v842 = vmul.f32 %v812, %v737
    %v843 = vmul.f32 %v815, %v738
    %v844 = vmul.f32 %v820, %v739
    %v845 = vmul.f32 %v823, %v740
    %v846 = vmul.f32 %v828, %v741
    %v847 = vmul.f32 %v831, %v742
    %v848 = vmul.f32 %v836, %v743
    %v849 = vmul.f32 %v839, %v744
    %858 = vrot.lane.b32.xlu0 %v842, 16
    %v859 = vpop.permute.xlu0 %858
    %860 = vrot.lane.b32.xlu0 %v843, 16
    %v861 = vpop.permute.xlu0 %860
    %862 = vrot.lane.b32.xlu0 %v844, 16
    %v863 = vpop.permute.xlu0 %862
    %864 = vrot.lane.b32.xlu0 %v845, 16
    %v865 = vpop.permute.xlu0 %864
    %866 = vrot.lane.b32.xlu0 %v846, 16
    %v867 = vpop.permute.xlu0 %866
    %868 = vrot.lane.b32.xlu0 %v847, 16
    %v869 = vpop.permute.xlu0 %868
    %870 = vrot.lane.b32.xlu0 %v848, 16
    %v871 = vpop.permute.xlu0 %870
    %872 = vrot.lane.b32.xlu0 %v849, 16
    %v873 = vpop.permute.xlu0 %872
    %vm882 = vcmask 130048
    %v883 = vsel %vm882, %v573, %v859
    %v884 = vsel %vm882, %v574, %v861
    %v885 = vsel %vm882, %v575, %v863
    %v886 = vsel %vm882, %v576, %v865
    %v887 = vsel %vm882, %v577, %v867
    %v888 = vsel %vm882, %v578, %v869
    %v889 = vsel %vm882, %v579, %v871
    %v890 = vsel %vm882, %v580, %v873
    %891 = vset.pattern.permute.xlu0 10
    %892 = vperm.xlu0 %891, %v249
    %v893 = vpop.permute.xlu0 %892
    %895 = vset.pattern.permute.xlu0 10
    %896 = vperm.xlu0 %895, %v254
    %v897 = vpop.permute.xlu0 %896
    %899 = vset.pattern.permute.xlu0 10
    %900 = vperm.xlu0 %899, %v259
    %v901 = vpop.permute.xlu0 %900
    %903 = vset.pattern.permute.xlu0 10
    %904 = vperm.xlu0 %903, %v264
    %v905 = vpop.permute.xlu0 %904
    %907 = vset.pattern.permute.xlu0 10
    %908 = vperm.xlu0 %907, %v269
    %v909 = vpop.permute.xlu0 %908
    %911 = vset.pattern.permute.xlu0 10
    %912 = vperm.xlu0 %911, %v274
    %v913 = vpop.permute.xlu0 %912
    %915 = vset.pattern.permute.xlu0 10
    %916 = vperm.xlu0 %915, %v279
    %v917 = vpop.permute.xlu0 %916
    %919 = vset.pattern.permute.xlu0 10
    %920 = vperm.xlu0 %919, %v284
    %v921 = vpop.permute.xlu0 %920
    %v923 = vlaneseq
    %v924 = vshrl.u32 %v923, 7
    %v925 = vsub.s32 2, %v924
    %v926 = vrot.slane %v303, %v925
    %v927 = vadd.f32 %v893, %v926
    %v928 = vadd.f32 %v897, %v926
    %v929 = vadd.f32 %v901, %v926
    %v930 = vadd.f32 %v905, %v926
    %v931 = vadd.f32 %v909, %v926
    %v932 = vadd.f32 %v913, %v926
    %v933 = vadd.f32 %v917, %v926
    %v934 = vadd.f32 %v921, %v926
    %vm935 = vcmp.gt.f32.partialorder %v927, 0.0
    %vm936 = vcmp.gt.f32.partialorder %v928, 0.0
    %vm937 = vcmp.gt.f32.partialorder %v929, 0.0
    %vm938 = vcmp.gt.f32.partialorder %v930, 0.0
    %vm939 = vcmp.gt.f32.partialorder %v931, 0.0
    %vm940 = vcmp.gt.f32.partialorder %v932, 0.0
    %vm941 = vcmp.gt.f32.partialorder %v933, 0.0
    %vm942 = vcmp.gt.f32.partialorder %v934, 0.0
    %v943 = vmul.f32 %v927, 0.2
    %v944 = vmul.f32 %v928, 0.2
    %v945 = vmul.f32 %v929, 0.2
    %v946 = vmul.f32 %v930, 0.2
    %v947 = vmul.f32 %v931, 0.2
    %v948 = vmul.f32 %v932, 0.2
    %v949 = vmul.f32 %v933, 0.2
    %v950 = vmul.f32 %v934, 0.2
    %v951 = vsel %vm935, %v927, %v943
    %v952 = vsel %vm936, %v928, %v944
    %v953 = vsel %vm937, %v929, %v945
    %v954 = vsel %vm938, %v930, %v946
    %v955 = vsel %vm939, %v931, %v947
    %v956 = vsel %vm940, %v932, %v948
    %v957 = vsel %vm941, %v933, %v949
    %v958 = vsel %vm942, %v934, %v950
    %v959 = vsel %vm52, %v951, -1e+30
    %v960 = vsel %vm53, %v952, -1e+30
    %v961 = vsel %vm54, %v953, -1e+30
    %v962 = vsel %vm55, %v954, -1e+30
    %v963 = vsel %vm56, %v955, -1e+30
    %v964 = vsel %vm57, %v956, -1e+30
    %v965 = vsel %vm58, %v957, -1e+30
    %v966 = vsel %vm59, %v958, -1e+30
    %v967 = vsel %vm84, %v959, -inf
    %968 = vmax.xlane.f32.xlu0 %v967
    %v969 = vpop.xlane.xlu0 %968
    %v970 = vsel %vm84, %v960, -inf
    %971 = vmax.xlane.f32.xlu0 %v970
    %v972 = vpop.xlane.xlu0 %971
    %v973 = vsel %vm84, %v961, -inf
    %974 = vmax.xlane.f32.xlu0 %v973
    %v975 = vpop.xlane.xlu0 %974
    %v976 = vsel %vm84, %v962, -inf
    %977 = vmax.xlane.f32.xlu0 %v976
    %v978 = vpop.xlane.xlu0 %977
    %v979 = vsel %vm84, %v963, -inf
    %980 = vmax.xlane.f32.xlu0 %v979
    %v981 = vpop.xlane.xlu0 %980
    %v982 = vsel %vm84, %v964, -inf
    %983 = vmax.xlane.f32.xlu0 %v982
    %v984 = vpop.xlane.xlu0 %983
    %v985 = vsel %vm84, %v965, -inf
    %986 = vmax.xlane.f32.xlu0 %v985
    %v987 = vpop.xlane.xlu0 %986
    %v988 = vsel %vm84, %v966, -inf
    %989 = vmax.xlane.f32.xlu0 %v988
    %v990 = vpop.xlane.xlu0 %989
    %v991 = vsub.f32 %v959, %v969
    %v992 = vsub.f32 %v960, %v972
    %v993 = vsub.f32 %v961, %v975
    %v994 = vsub.f32 %v962, %v978
    %v995 = vsub.f32 %v963, %v981
    %v996 = vsub.f32 %v964, %v984
    %v997 = vsub.f32 %v965, %v987
    %v998 = vsub.f32 %v966, %v990
    %v999 = vmul.f32 %v991, 1.442695
    %v1000 = vpow.pop %v999
    %v1001 = vmul.f32 %v992, 1.442695
    %v1002 = vpow.pop %v1001
    %v1003 = vmul.f32 %v993, 1.442695
    %v1004 = vpow.pop %v1003
    %v1005 = vmul.f32 %v994, 1.442695
    %v1006 = vpow.pop %v1005
    %v1007 = vmul.f32 %v995, 1.442695
    %v1008 = vpow.pop %v1007
    %v1009 = vmul.f32 %v996, 1.442695
    %v1010 = vpow.pop %v1009
    %v1011 = vmul.f32 %v997, 1.442695
    %v1012 = vpow.pop %v1011
    %v1013 = vmul.f32 %v998, 1.442695
    %v1014 = vpow.pop %v1013
    %v1015 = vsel %vm84, %v1000, 0.0
    %1016 = vadd.xlane.f32.xlu0 %v1015
    %v1017 = vpop.xlane.xlu0 %1016
    %v1018 = vsel %vm84, %v1002, 0.0
    %1019 = vadd.xlane.f32.xlu0 %v1018
    %v1020 = vpop.xlane.xlu0 %1019
    %v1021 = vsel %vm84, %v1004, 0.0
    %1022 = vadd.xlane.f32.xlu0 %v1021
    %v1023 = vpop.xlane.xlu0 %1022
    %v1024 = vsel %vm84, %v1006, 0.0
    %1025 = vadd.xlane.f32.xlu0 %v1024
    %v1026 = vpop.xlane.xlu0 %1025
    %v1027 = vsel %vm84, %v1008, 0.0
    %1028 = vadd.xlane.f32.xlu0 %v1027
    %v1029 = vpop.xlane.xlu0 %1028
    %v1030 = vsel %vm84, %v1010, 0.0
    %1031 = vadd.xlane.f32.xlu0 %v1030
    %v1032 = vpop.xlane.xlu0 %1031
    %v1033 = vsel %vm84, %v1012, 0.0
    %1034 = vadd.xlane.f32.xlu0 %v1033
    %v1035 = vpop.xlane.xlu0 %1034
    %v1036 = vsel %vm84, %v1014, 0.0
    %1037 = vadd.xlane.f32.xlu0 %v1036
    %v1038 = vpop.xlane.xlu0 %1037
    %v1039 = vmax.f32 %v1017, 1e-20
    %v1040 = vmax.f32 %v1020, 1e-20
    %v1041 = vmax.f32 %v1023, 1e-20
    %v1042 = vmax.f32 %v1026, 1e-20
    %v1043 = vmax.f32 %v1029, 1e-20
    %v1044 = vmax.f32 %v1032, 1e-20
    %v1045 = vmax.f32 %v1035, 1e-20
    %v1046 = vmax.f32 %v1038, 1e-20
    %v1047 = vrcp.pop %v1039
    %v1048 = vrcp.pop %v1040
    %v1049 = vrcp.pop %v1041
    %v1050 = vrcp.pop %v1042
    %v1051 = vrcp.pop %v1043
    %v1052 = vrcp.pop %v1044
    %v1053 = vrcp.pop %v1045
    %v1054 = vrcp.pop %v1046
    %v1055 = vpack.c.bf16 %v1002, %v1000
    %v1056 = vpack.c.bf16 %v1006, %v1004
    %v1057 = vpack.c.bf16 %v1010, %v1008
    %v1058 = vpack.c.bf16 %v1014, %v1012
    %1059 = vrot.lane.b32.xlu0 %v162, 96
    %v1060 = vpop.permute.xlu0 %1059
    %1061 = vrot.lane.b32.xlu0 %v163, 96
    %v1062 = vpop.permute.xlu0 %1061
    %1063 = vrot.lane.b32.xlu0 %v164, 96
    %v1064 = vpop.permute.xlu0 %1063
    %1065 = vrot.lane.b32.xlu0 %v165, 96
    %v1066 = vpop.permute.xlu0 %1065
    %v1072 = vsel %vm84, %v1055, 0
    %v1075 = vsel %vm84, %v1056, 0
    %v1078 = vsel %vm84, %v1057, 0
    %v1081 = vsel %vm84, %v1058, 0
    %1083 = vmatprep.subr.bf16.mxu0 0
    %1084 = vmatpush1.bf16.msra.mxu0 %v1060
    %1085 = vmatprep.subr.bf16.mxu0 0
    %1086 = vmatpush1.bf16.msra.mxu0 %v1062
    %1087 = vmatprep.subr.bf16.mxu0 0
    %1088 = vmatpush1.bf16.msra.mxu0 %v1064
    %1089 = vmatprep.subr.bf16.mxu0 0
    %1090 = vmatpush1.bf16.msra.mxu0 %v1066
    %1091 = vmatprep.subr.bf16.mxu0 0
    %1092 = vmatpush1.bf16.msra.mxu0 0
    %1093 = vmatprep.subr.bf16.mxu0 0
    %1094 = vmatpush1.bf16.msra.mxu0 0
    %1095 = vmatprep.subr.bf16.mxu0 0
    %1096 = vmatpush1.bf16.msra.mxu0 0
    %1097 = vmatprep.subr.bf16.mxu0 0
    %1098 = vmatpush1.bf16.msra.mxu0 0
    %1099 = vmatprep.subr.bf16.mxu0 0
    %1100 = vmatpush1.bf16.msra.mxu0 0
    %1101 = vmatprep.subr.bf16.mxu0 0
    %1102 = vmatpush1.bf16.msra.mxu0 0
    %1103 = vmatprep.subr.bf16.mxu0 0
    %1104 = vmatpush1.bf16.msra.mxu0 0
    %1105 = vmatprep.subr.bf16.mxu0 0
    %1106 = vmatpush1.bf16.msra.mxu0 0
    %1107 = vmatprep.subr.bf16.mxu0 0
    %1108 = vmatpush1.bf16.msra.mxu0 0
    %1109 = vmatprep.subr.bf16.mxu0 0
    %1110 = vmatpush1.bf16.msra.mxu0 0
    %1111 = vmatprep.subr.bf16.mxu0 0
    %1112 = vmatpush1.bf16.msra.mxu0 0
    %1113 = vmatprep.subr.bf16.mxu0 0
    %1114 = vmatpush1.bf16.msra.mxu0 0
    %1115 = vmatprep.mubr.bf16.mxu0 0
    %1116 = vmatmul.mubr.bf16.gmra.mrb[0].mxu0 %v1072
    %v1117 = vpop.f32.mrb[0].mxu0
    %v1118 = vadd.f32 0.0, %v1117
    %v1119 = vpop.f32.mrb[0].mxu0
    %v1120 = vpop.f32.mrb[0].mxu0
    %v1121 = vadd.f32 0.0, %v1120
    %v1122 = vpop.f32.mrb[0].mxu0
    %1123 = vmatprep.mubr.bf16.mxu0 0
    %1124 = vmatmul.mubr.bf16.gmra.mrb[0].mxu0 %v1075
    %v1125 = vpop.f32.mrb[0].mxu0
    %v1126 = vadd.f32 0.0, %v1125
    %v1127 = vpop.f32.mrb[0].mxu0
    %v1128 = vpop.f32.mrb[0].mxu0
    %v1129 = vadd.f32 0.0, %v1128
    %v1130 = vpop.f32.mrb[0].mxu0
    %1131 = vmatprep.mubr.bf16.mxu0 0
    %1132 = vmatmul.mubr.bf16.gmra.mrb[0].mxu0 %v1078
    %v1133 = vpop.f32.mrb[0].mxu0
    %v1134 = vadd.f32 0.0, %v1133
    %v1135 = vpop.f32.mrb[0].mxu0
    %v1136 = vpop.f32.mrb[0].mxu0
    %v1137 = vadd.f32 0.0, %v1136
    %v1138 = vpop.f32.mrb[0].mxu0
    %1139 = vmatprep.mubr.bf16.mxu0 0
    %1140 = vmatmul.mubr.bf16.gmra.mrb[0].mxu0 %v1081
    %v1141 = vpop.f32.mrb[0].mxu0
    %v1142 = vadd.f32 0.0, %v1141
    %v1143 = vpop.f32.mrb[0].mxu0
    %v1144 = vpop.f32.mrb[0].mxu0
    %v1145 = vadd.f32 0.0, %v1144
    %v1146 = vpop.f32.mrb[0].mxu0
    %1147 = vdwg.mxu0
    %v1148 = vmul.f32 %v1118, %v1047
    %v1149 = vmul.f32 %v1121, %v1048
    %v1150 = vmul.f32 %v1126, %v1049
    %v1151 = vmul.f32 %v1129, %v1050
    %v1152 = vmul.f32 %v1134, %v1051
    %v1153 = vmul.f32 %v1137, %v1052
    %v1154 = vmul.f32 %v1142, %v1053
    %v1155 = vmul.f32 %v1145, %v1054
    %1164 = vrot.lane.b32.xlu0 %v1148, 32
    %v1165 = vpop.permute.xlu0 %1164
    %1166 = vrot.lane.b32.xlu0 %v1149, 32
    %v1167 = vpop.permute.xlu0 %1166
    %1168 = vrot.lane.b32.xlu0 %v1150, 32
    %v1169 = vpop.permute.xlu0 %1168
    %1170 = vrot.lane.b32.xlu0 %v1151, 32
    %v1171 = vpop.permute.xlu0 %1170
    %1172 = vrot.lane.b32.xlu0 %v1152, 32
    %v1173 = vpop.permute.xlu0 %1172
    %1174 = vrot.lane.b32.xlu0 %v1153, 32
    %v1175 = vpop.permute.xlu0 %1174
    %1176 = vrot.lane.b32.xlu0 %v1154, 32
    %v1177 = vpop.permute.xlu0 %1176
    %1178 = vrot.lane.b32.xlu0 %v1155, 32
    %v1179 = vpop.permute.xlu0 %1178
    %vm1188 = vcmask 261120
    %v1189 = vsel %vm1188, %v883, %v1165
    %v1190 = vsel %vm1188, %v884, %v1167
    %v1191 = vsel %vm1188, %v885, %v1169
    %v1192 = vsel %vm1188, %v886, %v1171
    %v1193 = vsel %vm1188, %v887, %v1173
    %v1194 = vsel %vm1188, %v888, %v1175
    %v1195 = vsel %vm1188, %v889, %v1177
    %v1196 = vsel %vm1188, %v890, %v1179
    %1197 = vset.pattern.permute.xlu0 11
    %1198 = vperm.xlu0 %1197, %v249
    %v1199 = vpop.permute.xlu0 %1198
    %1201 = vset.pattern.permute.xlu0 11
    %1202 = vperm.xlu0 %1201, %v254
    %v1203 = vpop.permute.xlu0 %1202
    %1205 = vset.pattern.permute.xlu0 11
    %1206 = vperm.xlu0 %1205, %v259
    %v1207 = vpop.permute.xlu0 %1206
    %1209 = vset.pattern.permute.xlu0 11
    %1210 = vperm.xlu0 %1209, %v264
    %v1211 = vpop.permute.xlu0 %1210
    %1213 = vset.pattern.permute.xlu0 11
    %1214 = vperm.xlu0 %1213, %v269
    %v1215 = vpop.permute.xlu0 %1214
    %1217 = vset.pattern.permute.xlu0 11
    %1218 = vperm.xlu0 %1217, %v274
    %v1219 = vpop.permute.xlu0 %1218
    %1221 = vset.pattern.permute.xlu0 11
    %1222 = vperm.xlu0 %1221, %v279
    %v1223 = vpop.permute.xlu0 %1222
    %1225 = vset.pattern.permute.xlu0 11
    %1226 = vperm.xlu0 %1225, %v284
    %v1227 = vpop.permute.xlu0 %1226
    %v1229 = vlaneseq
    %v1230 = vshrl.u32 %v1229, 7
    %v1231 = vsub.s32 3, %v1230
    %v1232 = vrot.slane %v303, %v1231
    %v1233 = vadd.f32 %v1199, %v1232
    %v1234 = vadd.f32 %v1203, %v1232
    %v1235 = vadd.f32 %v1207, %v1232
    %v1236 = vadd.f32 %v1211, %v1232
    %v1237 = vadd.f32 %v1215, %v1232
    %v1238 = vadd.f32 %v1219, %v1232
    %v1239 = vadd.f32 %v1223, %v1232
    %v1240 = vadd.f32 %v1227, %v1232
    %vm1241 = vcmp.gt.f32.partialorder %v1233, 0.0
    %vm1242 = vcmp.gt.f32.partialorder %v1234, 0.0
    %vm1243 = vcmp.gt.f32.partialorder %v1235, 0.0
    %vm1244 = vcmp.gt.f32.partialorder %v1236, 0.0
    %vm1245 = vcmp.gt.f32.partialorder %v1237, 0.0
    %vm1246 = vcmp.gt.f32.partialorder %v1238, 0.0
    %vm1247 = vcmp.gt.f32.partialorder %v1239, 0.0
    %vm1248 = vcmp.gt.f32.partialorder %v1240, 0.0
    %v1249 = vmul.f32 %v1233, 0.2
    %v1250 = vmul.f32 %v1234, 0.2
    %v1251 = vmul.f32 %v1235, 0.2
    %v1252 = vmul.f32 %v1236, 0.2
    %v1253 = vmul.f32 %v1237, 0.2
    %v1254 = vmul.f32 %v1238, 0.2
    %v1255 = vmul.f32 %v1239, 0.2
    %v1256 = vmul.f32 %v1240, 0.2
    %v1257 = vsel %vm1241, %v1233, %v1249
    %v1258 = vsel %vm1242, %v1234, %v1250
    %v1259 = vsel %vm1243, %v1235, %v1251
    %v1260 = vsel %vm1244, %v1236, %v1252
    %v1261 = vsel %vm1245, %v1237, %v1253
    %v1262 = vsel %vm1246, %v1238, %v1254
    %v1263 = vsel %vm1247, %v1239, %v1255
    %v1264 = vsel %vm1248, %v1240, %v1256
    %v1265 = vsel %vm52, %v1257, -1e+30
    %v1266 = vsel %vm53, %v1258, -1e+30
    %v1267 = vsel %vm54, %v1259, -1e+30
    %v1268 = vsel %vm55, %v1260, -1e+30
    %v1269 = vsel %vm56, %v1261, -1e+30
    %v1270 = vsel %vm57, %v1262, -1e+30
    %v1271 = vsel %vm58, %v1263, -1e+30
    %v1272 = vsel %vm59, %v1264, -1e+30
    %v1273 = vsel %vm84, %v1265, -inf
    %1274 = vmax.xlane.f32.xlu0 %v1273
    %v1275 = vpop.xlane.xlu0 %1274
    %v1276 = vsel %vm84, %v1266, -inf
    %1277 = vmax.xlane.f32.xlu0 %v1276
    %v1278 = vpop.xlane.xlu0 %1277
    %v1279 = vsel %vm84, %v1267, -inf
    %1280 = vmax.xlane.f32.xlu0 %v1279
    %v1281 = vpop.xlane.xlu0 %1280
    %v1282 = vsel %vm84, %v1268, -inf
    %1283 = vmax.xlane.f32.xlu0 %v1282
    %v1284 = vpop.xlane.xlu0 %1283
    %v1285 = vsel %vm84, %v1269, -inf
    %1286 = vmax.xlane.f32.xlu0 %v1285
    %v1287 = vpop.xlane.xlu0 %1286
    %v1288 = vsel %vm84, %v1270, -inf
    %1289 = vmax.xlane.f32.xlu0 %v1288
    %v1290 = vpop.xlane.xlu0 %1289
    %v1291 = vsel %vm84, %v1271, -inf
    %1292 = vmax.xlane.f32.xlu0 %v1291
    %v1293 = vpop.xlane.xlu0 %1292
    %v1294 = vsel %vm84, %v1272, -inf
    %1295 = vmax.xlane.f32.xlu0 %v1294
    %v1296 = vpop.xlane.xlu0 %1295
    %v1297 = vsub.f32 %v1265, %v1275
    %v1298 = vsub.f32 %v1266, %v1278
    %v1299 = vsub.f32 %v1267, %v1281
    %v1300 = vsub.f32 %v1268, %v1284
    %v1301 = vsub.f32 %v1269, %v1287
    %v1302 = vsub.f32 %v1270, %v1290
    %v1303 = vsub.f32 %v1271, %v1293
    %v1304 = vsub.f32 %v1272, %v1296
    %v1305 = vmul.f32 %v1297, 1.442695
    %v1306 = vpow.pop %v1305
    %v1307 = vmul.f32 %v1298, 1.442695
    %v1308 = vpow.pop %v1307
    %v1309 = vmul.f32 %v1299, 1.442695
    %v1310 = vpow.pop %v1309
    %v1311 = vmul.f32 %v1300, 1.442695
    %v1312 = vpow.pop %v1311
    %v1313 = vmul.f32 %v1301, 1.442695
    %v1314 = vpow.pop %v1313
    %v1315 = vmul.f32 %v1302, 1.442695
    %v1316 = vpow.pop %v1315
    %v1317 = vmul.f32 %v1303, 1.442695
    %v1318 = vpow.pop %v1317
    %v1319 = vmul.f32 %v1304, 1.442695
    %v1320 = vpow.pop %v1319
    %v1321 = vsel %vm84, %v1306, 0.0
    %1322 = vadd.xlane.f32.xlu0 %v1321
    %v1323 = vpop.xlane.xlu0 %1322
    %v1324 = vsel %vm84, %v1308, 0.0
    %1325 = vadd.xlane.f32.xlu0 %v1324
    %v1326 = vpop.xlane.xlu0 %1325
    %v1327 = vsel %vm84, %v1310, 0.0
    %1328 = vadd.xlane.f32.xlu0 %v1327
    %v1329 = vpop.xlane.xlu0 %1328
    %v1330 = vsel %vm84, %v1312, 0.0
    %1331 = vadd.xlane.f32.xlu0 %v1330
    %v1332 = vpop.xlane.xlu0 %1331
    %v1333 = vsel %vm84, %v1314, 0.0
    %1334 = vadd.xlane.f32.xlu0 %v1333
    %v1335 = vpop.xlane.xlu0 %1334
    %v1336 = vsel %vm84, %v1316, 0.0
    %1337 = vadd.xlane.f32.xlu0 %v1336
    %v1338 = vpop.xlane.xlu0 %1337
    %v1339 = vsel %vm84, %v1318, 0.0
    %1340 = vadd.xlane.f32.xlu0 %v1339
    %v1341 = vpop.xlane.xlu0 %1340
    %v1342 = vsel %vm84, %v1320, 0.0
    %1343 = vadd.xlane.f32.xlu0 %v1342
    %v1344 = vpop.xlane.xlu0 %1343
    %v1345 = vmax.f32 %v1323, 1e-20
    %v1346 = vmax.f32 %v1326, 1e-20
    %v1347 = vmax.f32 %v1329, 1e-20
    %v1348 = vmax.f32 %v1332, 1e-20
    %v1349 = vmax.f32 %v1335, 1e-20
    %v1350 = vmax.f32 %v1338, 1e-20
    %v1351 = vmax.f32 %v1341, 1e-20
    %v1352 = vmax.f32 %v1344, 1e-20
    %v1353 = vrcp.pop %v1345
    %v1354 = vrcp.pop %v1346
    %v1355 = vrcp.pop %v1347
    %v1356 = vrcp.pop %v1348
    %v1357 = vrcp.pop %v1349
    %v1358 = vrcp.pop %v1350
    %v1359 = vrcp.pop %v1351
    %v1360 = vrcp.pop %v1352
    %v1361 = vpack.c.bf16 %v1308, %v1306
    %v1362 = vpack.c.bf16 %v1312, %v1310
    %v1363 = vpack.c.bf16 %v1316, %v1314
    %v1364 = vpack.c.bf16 %v1320, %v1318
    %1365 = vrot.lane.b32.xlu0 %v162, 80
    %v1366 = vpop.permute.xlu0 %1365
    %1367 = vrot.lane.b32.xlu0 %v163, 80
    %v1368 = vpop.permute.xlu0 %1367
    %1369 = vrot.lane.b32.xlu0 %v164, 80
    %v1370 = vpop.permute.xlu0 %1369
    %1371 = vrot.lane.b32.xlu0 %v165, 80
    %v1372 = vpop.permute.xlu0 %1371
    %v1378 = vsel %vm84, %v1361, 0
    %v1381 = vsel %vm84, %v1362, 0
    %v1384 = vsel %vm84, %v1363, 0
    %v1387 = vsel %vm84, %v1364, 0
    %1389 = vmatprep.subr.bf16.mxu0 0
    %1390 = vmatpush1.bf16.msra.mxu0 %v1366
    %1391 = vmatprep.subr.bf16.mxu0 0
    %1392 = vmatpush1.bf16.msra.mxu0 %v1368
    %1393 = vmatprep.subr.bf16.mxu0 0
    %1394 = vmatpush1.bf16.msra.mxu0 %v1370
    %1395 = vmatprep.subr.bf16.mxu0 0
    %1396 = vmatpush1.bf16.msra.mxu0 %v1372
    %1397 = vmatprep.subr.bf16.mxu0 0
    %1398 = vmatpush1.bf16.msra.mxu0 0
    %1399 = vmatprep.subr.bf16.mxu0 0
    %1400 = vmatpush1.bf16.msra.mxu0 0
    %1401 = vmatprep.subr.bf16.mxu0 0
    %1402 = vmatpush1.bf16.msra.mxu0 0
    %1403 = vmatprep.subr.bf16.mxu0 0
    %1404 = vmatpush1.bf16.msra.mxu0 0
    %1405 = vmatprep.subr.bf16.mxu0 0
    %1406 = vmatpush1.bf16.msra.mxu0 0
    %1407 = vmatprep.subr.bf16.mxu0 0
    %1408 = vmatpush1.bf16.msra.mxu0 0
    %1409 = vmatprep.subr.bf16.mxu0 0
    %1410 = vmatpush1.bf16.msra.mxu0 0
    %1411 = vmatprep.subr.bf16.mxu0 0
    %1412 = vmatpush1.bf16.msra.mxu0 0
    %1413 = vmatprep.subr.bf16.mxu0 0
    %1414 = vmatpush1.bf16.msra.mxu0 0
    %1415 = vmatprep.subr.bf16.mxu0 0
    %1416 = vmatpush1.bf16.msra.mxu0 0
    %1417 = vmatprep.subr.bf16.mxu0 0
    %1418 = vmatpush1.bf16.msra.mxu0 0
    %1419 = vmatprep.subr.bf16.mxu0 0
    %1420 = vmatpush1.bf16.msra.mxu0 0
    %1421 = vmatprep.mubr.bf16.mxu0 0
    %1422 = vmatmul.mubr.bf16.gmra.mrb[0].mxu0 %v1378
    %v1423 = vpop.f32.mrb[0].mxu0
    %v1424 = vadd.f32 0.0, %v1423
    %v1425 = vpop.f32.mrb[0].mxu0
    %v1426 = vpop.f32.mrb[0].mxu0
    %v1427 = vadd.f32 0.0, %v1426
    %v1428 = vpop.f32.mrb[0].mxu0
    %1429 = vmatprep.mubr.bf16.mxu0 0
    %1430 = vmatmul.mubr.bf16.gmra.mrb[0].mxu0 %v1381
    %v1431 = vpop.f32.mrb[0].mxu0
    %v1432 = vadd.f32 0.0, %v1431
    %v1433 = vpop.f32.mrb[0].mxu0
    %v1434 = vpop.f32.mrb[0].mxu0
    %v1435 = vadd.f32 0.0, %v1434
    %v1436 = vpop.f32.mrb[0].mxu0
    %1437 = vmatprep.mubr.bf16.mxu0 0
    %1438 = vmatmul.mubr.bf16.gmra.mrb[0].mxu0 %v1384
    %v1439 = vpop.f32.mrb[0].mxu0
    %v1440 = vadd.f32 0.0, %v1439
    %v1441 = vpop.f32.mrb[0].mxu0
    %v1442 = vpop.f32.mrb[0].mxu0
    %v1443 = vadd.f32 0.0, %v1442
    %v1444 = vpop.f32.mrb[0].mxu0
    %1445 = vmatprep.mubr.bf16.mxu0 0
    %1446 = vmatmul.mubr.bf16.gmra.mrb[0].mxu0 %v1387
    %v1447 = vpop.f32.mrb[0].mxu0
    %v1448 = vadd.f32 0.0, %v1447
    %v1449 = vpop.f32.mrb[0].mxu0
    %v1450 = vpop.f32.mrb[0].mxu0
    %v1451 = vadd.f32 0.0, %v1450
    %v1452 = vpop.f32.mrb[0].mxu0
    %1453 = vdwg.mxu0
    %v1454 = vmul.f32 %v1424, %v1353
    %v1455 = vmul.f32 %v1427, %v1354
    %v1456 = vmul.f32 %v1432, %v1355
    %v1457 = vmul.f32 %v1435, %v1356
    %v1458 = vmul.f32 %v1440, %v1357
    %v1459 = vmul.f32 %v1443, %v1358
    %v1460 = vmul.f32 %v1448, %v1359
    %v1461 = vmul.f32 %v1451, %v1360
    %1470 = vrot.lane.b32.xlu0 %v1454, 48
    %v1471 = vpop.permute.xlu0 %1470
    %1472 = vrot.lane.b32.xlu0 %v1455, 48
    %v1473 = vpop.permute.xlu0 %1472
    %1474 = vrot.lane.b32.xlu0 %v1456, 48
    %v1475 = vpop.permute.xlu0 %1474
    %1476 = vrot.lane.b32.xlu0 %v1457, 48
    %v1477 = vpop.permute.xlu0 %1476
    %1478 = vrot.lane.b32.xlu0 %v1458, 48
    %v1479 = vpop.permute.xlu0 %1478
    %1480 = vrot.lane.b32.xlu0 %v1459, 48
    %v1481 = vpop.permute.xlu0 %1480
    %1482 = vrot.lane.b32.xlu0 %v1460, 48
    %v1483 = vpop.permute.xlu0 %1482
    %1484 = vrot.lane.b32.xlu0 %v1461, 48
    %v1485 = vpop.permute.xlu0 %1484
    %vm1494 = vcmask 392192
    %v1495 = vsel %vm1494, %v1189, %v1471
    %v1496 = vsel %vm1494, %v1190, %v1473
    %v1497 = vsel %vm1494, %v1191, %v1475
    %v1498 = vsel %vm1494, %v1192, %v1477
    %v1499 = vsel %vm1494, %v1193, %v1479
    %v1500 = vsel %vm1494, %v1194, %v1481
    %v1501 = vsel %vm1494, %v1195, %v1483
    %v1502 = vsel %vm1494, %v1196, %v1485
    %1503 = vset.pattern.permute.xlu0 12
    %1504 = vperm.xlu0 %1503, %v249
    %v1505 = vpop.permute.xlu0 %1504
    %1507 = vset.pattern.permute.xlu0 12
    %1508 = vperm.xlu0 %1507, %v254
    %v1509 = vpop.permute.xlu0 %1508
    %1511 = vset.pattern.permute.xlu0 12
    %1512 = vperm.xlu0 %1511, %v259
    %v1513 = vpop.permute.xlu0 %1512
    %1515 = vset.pattern.permute.xlu0 12
    %1516 = vperm.xlu0 %1515, %v264
    %v1517 = vpop.permute.xlu0 %1516
    %1519 = vset.pattern.permute.xlu0 12
    %1520 = vperm.xlu0 %1519, %v269
    %v1521 = vpop.permute.xlu0 %1520
    %1523 = vset.pattern.permute.xlu0 12
    %1524 = vperm.xlu0 %1523, %v274
    %v1525 = vpop.permute.xlu0 %1524
    %1527 = vset.pattern.permute.xlu0 12
    %1528 = vperm.xlu0 %1527, %v279
    %v1529 = vpop.permute.xlu0 %1528
    %1531 = vset.pattern.permute.xlu0 12
    %1532 = vperm.xlu0 %1531, %v284
    %v1533 = vpop.permute.xlu0 %1532
    %v1535 = vlaneseq
    %v1536 = vshrl.u32 %v1535, 7
    %v1537 = vsub.s32 4, %v1536
    %v1538 = vrot.slane %v303, %v1537
    %v1539 = vadd.f32 %v1505, %v1538
    %v1540 = vadd.f32 %v1509, %v1538
    %v1541 = vadd.f32 %v1513, %v1538
    %v1542 = vadd.f32 %v1517, %v1538
    %v1543 = vadd.f32 %v1521, %v1538
    %v1544 = vadd.f32 %v1525, %v1538
    %v1545 = vadd.f32 %v1529, %v1538
    %v1546 = vadd.f32 %v1533, %v1538
    %vm1547 = vcmp.gt.f32.partialorder %v1539, 0.0
    %vm1548 = vcmp.gt.f32.partialorder %v1540, 0.0
    %vm1549 = vcmp.gt.f32.partialorder %v1541, 0.0
    %vm1550 = vcmp.gt.f32.partialorder %v1542, 0.0
    %vm1551 = vcmp.gt.f32.partialorder %v1543, 0.0
    %vm1552 = vcmp.gt.f32.partialorder %v1544, 0.0
    %vm1553 = vcmp.gt.f32.partialorder %v1545, 0.0
    %vm1554 = vcmp.gt.f32.partialorder %v1546, 0.0
    %v1555 = vmul.f32 %v1539, 0.2
    %v1556 = vmul.f32 %v1540, 0.2
    %v1557 = vmul.f32 %v1541, 0.2
    %v1558 = vmul.f32 %v1542, 0.2
    %v1559 = vmul.f32 %v1543, 0.2
    %v1560 = vmul.f32 %v1544, 0.2
    %v1561 = vmul.f32 %v1545, 0.2
    %v1562 = vmul.f32 %v1546, 0.2
    %v1563 = vsel %vm1547, %v1539, %v1555
    %v1564 = vsel %vm1548, %v1540, %v1556
    %v1565 = vsel %vm1549, %v1541, %v1557
    %v1566 = vsel %vm1550, %v1542, %v1558
    %v1567 = vsel %vm1551, %v1543, %v1559
    %v1568 = vsel %vm1552, %v1544, %v1560
    %v1569 = vsel %vm1553, %v1545, %v1561
    %v1570 = vsel %vm1554, %v1546, %v1562
    %v1571 = vsel %vm52, %v1563, -1e+30
    %v1572 = vsel %vm53, %v1564, -1e+30
    %v1573 = vsel %vm54, %v1565, -1e+30
    %v1574 = vsel %vm55, %v1566, -1e+30
    %v1575 = vsel %vm56, %v1567, -1e+30
    %v1576 = vsel %vm57, %v1568, -1e+30
    %v1577 = vsel %vm58, %v1569, -1e+30
    %v1578 = vsel %vm59, %v1570, -1e+30
    %v1579 = vsel %vm84, %v1571, -inf
    %1580 = vmax.xlane.f32.xlu0 %v1579
    %v1581 = vpop.xlane.xlu0 %1580
    %v1582 = vsel %vm84, %v1572, -inf
    %1583 = vmax.xlane.f32.xlu0 %v1582
    %v1584 = vpop.xlane.xlu0 %1583
    %v1585 = vsel %vm84, %v1573, -inf
    %1586 = vmax.xlane.f32.xlu0 %v1585
    %v1587 = vpop.xlane.xlu0 %1586
    %v1588 = vsel %vm84, %v1574, -inf
    %1589 = vmax.xlane.f32.xlu0 %v1588
    %v1590 = vpop.xlane.xlu0 %1589
    %v1591 = vsel %vm84, %v1575, -inf
    %1592 = vmax.xlane.f32.xlu0 %v1591
    %v1593 = vpop.xlane.xlu0 %1592
    %v1594 = vsel %vm84, %v1576, -inf
    %1595 = vmax.xlane.f32.xlu0 %v1594
    %v1596 = vpop.xlane.xlu0 %1595
    %v1597 = vsel %vm84, %v1577, -inf
    %1598 = vmax.xlane.f32.xlu0 %v1597
    %v1599 = vpop.xlane.xlu0 %1598
    %v1600 = vsel %vm84, %v1578, -inf
    %1601 = vmax.xlane.f32.xlu0 %v1600
    %v1602 = vpop.xlane.xlu0 %1601
    %v1603 = vsub.f32 %v1571, %v1581
    %v1604 = vsub.f32 %v1572, %v1584
    %v1605 = vsub.f32 %v1573, %v1587
    %v1606 = vsub.f32 %v1574, %v1590
    %v1607 = vsub.f32 %v1575, %v1593
    %v1608 = vsub.f32 %v1576, %v1596
    %v1609 = vsub.f32 %v1577, %v1599
    %v1610 = vsub.f32 %v1578, %v1602
    %v1611 = vmul.f32 %v1603, 1.442695
    %v1612 = vpow.pop %v1611
    %v1613 = vmul.f32 %v1604, 1.442695
    %v1614 = vpow.pop %v1613
    %v1615 = vmul.f32 %v1605, 1.442695
    %v1616 = vpow.pop %v1615
    %v1617 = vmul.f32 %v1606, 1.442695
    %v1618 = vpow.pop %v1617
    %v1619 = vmul.f32 %v1607, 1.442695
    %v1620 = vpow.pop %v1619
    %v1621 = vmul.f32 %v1608, 1.442695
    %v1622 = vpow.pop %v1621
    %v1623 = vmul.f32 %v1609, 1.442695
    %v1624 = vpow.pop %v1623
    %v1625 = vmul.f32 %v1610, 1.442695
    %v1626 = vpow.pop %v1625
    %v1627 = vsel %vm84, %v1612, 0.0
    %1628 = vadd.xlane.f32.xlu0 %v1627
    %v1629 = vpop.xlane.xlu0 %1628
    %v1630 = vsel %vm84, %v1614, 0.0
    %1631 = vadd.xlane.f32.xlu0 %v1630
    %v1632 = vpop.xlane.xlu0 %1631
    %v1633 = vsel %vm84, %v1616, 0.0
    %1634 = vadd.xlane.f32.xlu0 %v1633
    %v1635 = vpop.xlane.xlu0 %1634
    %v1636 = vsel %vm84, %v1618, 0.0
    %1637 = vadd.xlane.f32.xlu0 %v1636
    %v1638 = vpop.xlane.xlu0 %1637
    %v1639 = vsel %vm84, %v1620, 0.0
    %1640 = vadd.xlane.f32.xlu0 %v1639
    %v1641 = vpop.xlane.xlu0 %1640
    %v1642 = vsel %vm84, %v1622, 0.0
    %1643 = vadd.xlane.f32.xlu0 %v1642
    %v1644 = vpop.xlane.xlu0 %1643
    %v1645 = vsel %vm84, %v1624, 0.0
    %1646 = vadd.xlane.f32.xlu0 %v1645
    %v1647 = vpop.xlane.xlu0 %1646
    %v1648 = vsel %vm84, %v1626, 0.0
    %1649 = vadd.xlane.f32.xlu0 %v1648
    %v1650 = vpop.xlane.xlu0 %1649
    %v1651 = vmax.f32 %v1629, 1e-20
    %v1652 = vmax.f32 %v1632, 1e-20
    %v1653 = vmax.f32 %v1635, 1e-20
    %v1654 = vmax.f32 %v1638, 1e-20
    %v1655 = vmax.f32 %v1641, 1e-20
    %v1656 = vmax.f32 %v1644, 1e-20
    %v1657 = vmax.f32 %v1647, 1e-20
    %v1658 = vmax.f32 %v1650, 1e-20
    %v1659 = vrcp.pop %v1651
    %v1660 = vrcp.pop %v1652
    %v1661 = vrcp.pop %v1653
    %v1662 = vrcp.pop %v1654
    %v1663 = vrcp.pop %v1655
    %v1664 = vrcp.pop %v1656
    %v1665 = vrcp.pop %v1657
    %v1666 = vrcp.pop %v1658
    %v1667 = vpack.c.bf16 %v1614, %v1612
    %v1668 = vpack.c.bf16 %v1618, %v1616
    %v1669 = vpack.c.bf16 %v1622, %v1620
    %v1670 = vpack.c.bf16 %v1626, %v1624
    %1671 = vrot.lane.b32.xlu0 %v162, 64
    %v1672 = vpop.permute.xlu0 %1671
    %1673 = vrot.lane.b32.xlu0 %v163, 64
    %v1674 = vpop.permute.xlu0 %1673
    %1675 = vrot.lane.b32.xlu0 %v164, 64
    %v1676 = vpop.permute.xlu0 %1675
    %1677 = vrot.lane.b32.xlu0 %v165, 64
    %v1678 = vpop.permute.xlu0 %1677
    %v1684 = vsel %vm84, %v1667, 0
    %v1687 = vsel %vm84, %v1668, 0
    %v1690 = vsel %vm84, %v1669, 0
    %v1693 = vsel %vm84, %v1670, 0
    %1695 = vmatprep.subr.bf16.mxu0 0
    %1696 = vmatpush1.bf16.msra.mxu0 %v1672
    %1697 = vmatprep.subr.bf16.mxu0 0
    %1698 = vmatpush1.bf16.msra.mxu0 %v1674
    %1699 = vmatprep.subr.bf16.mxu0 0
    %1700 = vmatpush1.bf16.msra.mxu0 %v1676
    %1701 = vmatprep.subr.bf16.mxu0 0
    %1702 = vmatpush1.bf16.msra.mxu0 %v1678
    %1703 = vmatprep.subr.bf16.mxu0 0
    %1704 = vmatpush1.bf16.msra.mxu0 0
    %1705 = vmatprep.subr.bf16.mxu0 0
    %1706 = vmatpush1.bf16.msra.mxu0 0
    %1707 = vmatprep.subr.bf16.mxu0 0
    %1708 = vmatpush1.bf16.msra.mxu0 0
    %1709 = vmatprep.subr.bf16.mxu0 0
    %1710 = vmatpush1.bf16.msra.mxu0 0
    %1711 = vmatprep.subr.bf16.mxu0 0
    %1712 = vmatpush1.bf16.msra.mxu0 0
    %1713 = vmatprep.subr.bf16.mxu0 0
    %1714 = vmatpush1.bf16.msra.mxu0 0
    %1715 = vmatprep.subr.bf16.mxu0 0
    %1716 = vmatpush1.bf16.msra.mxu0 0
    %1717 = vmatprep.subr.bf16.mxu0 0
    %1718 = vmatpush1.bf16.msra.mxu0 0
    %1719 = vmatprep.subr.bf16.mxu0 0
    %1720 = vmatpush1.bf16.msra.mxu0 0
    %1721 = vmatprep.subr.bf16.mxu0 0
    %1722 = vmatpush1.bf16.msra.mxu0 0
    %1723 = vmatprep.subr.bf16.mxu0 0
    %1724 = vmatpush1.bf16.msra.mxu0 0
    %1725 = vmatprep.subr.bf16.mxu0 0
    %1726 = vmatpush1.bf16.msra.mxu0 0
    %1727 = vmatprep.mubr.bf16.mxu0 0
    %1728 = vmatmul.mubr.bf16.gmra.mrb[0].mxu0 %v1684
    %v1729 = vpop.f32.mrb[0].mxu0
    %v1730 = vadd.f32 0.0, %v1729
    %v1731 = vpop.f32.mrb[0].mxu0
    %v1732 = vpop.f32.mrb[0].mxu0
    %v1733 = vadd.f32 0.0, %v1732
    %v1734 = vpop.f32.mrb[0].mxu0
    %1735 = vmatprep.mubr.bf16.mxu0 0
    %1736 = vmatmul.mubr.bf16.gmra.mrb[0].mxu0 %v1687
    %v1737 = vpop.f32.mrb[0].mxu0
    %v1738 = vadd.f32 0.0, %v1737
    %v1739 = vpop.f32.mrb[0].mxu0
    %v1740 = vpop.f32.mrb[0].mxu0
    %v1741 = vadd.f32 0.0, %v1740
    %v1742 = vpop.f32.mrb[0].mxu0
    %1743 = vmatprep.mubr.bf16.mxu0 0
    %1744 = vmatmul.mubr.bf16.gmra.mrb[0].mxu0 %v1690
    %v1745 = vpop.f32.mrb[0].mxu0
    %v1746 = vadd.f32 0.0, %v1745
    %v1747 = vpop.f32.mrb[0].mxu0
    %v1748 = vpop.f32.mrb[0].mxu0
    %v1749 = vadd.f32 0.0, %v1748
    %v1750 = vpop.f32.mrb[0].mxu0
    %1751 = vmatprep.mubr.bf16.mxu0 0
    %1752 = vmatmul.mubr.bf16.gmra.mrb[0].mxu0 %v1693
    %v1753 = vpop.f32.mrb[0].mxu0
    %v1754 = vadd.f32 0.0, %v1753
    %v1755 = vpop.f32.mrb[0].mxu0
    %v1756 = vpop.f32.mrb[0].mxu0
    %v1757 = vadd.f32 0.0, %v1756
    %v1758 = vpop.f32.mrb[0].mxu0
    %1759 = vdwg.mxu0
    %v1760 = vmul.f32 %v1730, %v1659
    %v1761 = vmul.f32 %v1733, %v1660
    %v1762 = vmul.f32 %v1738, %v1661
    %v1763 = vmul.f32 %v1741, %v1662
    %v1764 = vmul.f32 %v1746, %v1663
    %v1765 = vmul.f32 %v1749, %v1664
    %v1766 = vmul.f32 %v1754, %v1665
    %v1767 = vmul.f32 %v1757, %v1666
    %1776 = vrot.lane.b32.xlu0 %v1760, 64
    %v1777 = vpop.permute.xlu0 %1776
    %1778 = vrot.lane.b32.xlu0 %v1761, 64
    %v1779 = vpop.permute.xlu0 %1778
    %1780 = vrot.lane.b32.xlu0 %v1762, 64
    %v1781 = vpop.permute.xlu0 %1780
    %1782 = vrot.lane.b32.xlu0 %v1763, 64
    %v1783 = vpop.permute.xlu0 %1782
    %1784 = vrot.lane.b32.xlu0 %v1764, 64
    %v1785 = vpop.permute.xlu0 %1784
    %1786 = vrot.lane.b32.xlu0 %v1765, 64
    %v1787 = vpop.permute.xlu0 %1786
    %1788 = vrot.lane.b32.xlu0 %v1766, 64
    %v1789 = vpop.permute.xlu0 %1788
    %1790 = vrot.lane.b32.xlu0 %v1767, 64
    %v1791 = vpop.permute.xlu0 %1790
    %v1800 = vsel %vm84, %v1495, %v1777
    %v1801 = vsel %vm84, %v1496, %v1779
    %v1802 = vsel %vm84, %v1497, %v1781
    %v1803 = vsel %vm84, %v1498, %v1783
    %v1804 = vsel %vm84, %v1499, %v1785
    %v1805 = vsel %vm84, %v1500, %v1787
    %v1806 = vsel %vm84, %v1501, %v1789
    %v1807 = vsel %vm84, %v1502, %v1791
    %1808 = vset.pattern.permute.xlu0 13
    %1809 = vperm.xlu0 %1808, %v249
    %v1810 = vpop.permute.xlu0 %1809
    %1812 = vset.pattern.permute.xlu0 13
    %1813 = vperm.xlu0 %1812, %v254
    %v1814 = vpop.permute.xlu0 %1813
    %1816 = vset.pattern.permute.xlu0 13
    %1817 = vperm.xlu0 %1816, %v259
    %v1818 = vpop.permute.xlu0 %1817
    %1820 = vset.pattern.permute.xlu0 13
    %1821 = vperm.xlu0 %1820, %v264
    %v1822 = vpop.permute.xlu0 %1821
    %1824 = vset.pattern.permute.xlu0 13
    %1825 = vperm.xlu0 %1824, %v269
    %v1826 = vpop.permute.xlu0 %1825
    %1828 = vset.pattern.permute.xlu0 13
    %1829 = vperm.xlu0 %1828, %v274
    %v1830 = vpop.permute.xlu0 %1829
    %1832 = vset.pattern.permute.xlu0 13
    %1833 = vperm.xlu0 %1832, %v279
    %v1834 = vpop.permute.xlu0 %1833
    %1836 = vset.pattern.permute.xlu0 13
    %1837 = vperm.xlu0 %1836, %v284
    %v1838 = vpop.permute.xlu0 %1837
    %v1840 = vlaneseq
    %v1841 = vshrl.u32 %v1840, 7
    %v1842 = vsub.s32 5, %v1841
    %v1843 = vrot.slane %v303, %v1842
    %v1844 = vadd.f32 %v1810, %v1843
    %v1845 = vadd.f32 %v1814, %v1843
    %v1846 = vadd.f32 %v1818, %v1843
    %v1847 = vadd.f32 %v1822, %v1843
    %v1848 = vadd.f32 %v1826, %v1843
    %v1849 = vadd.f32 %v1830, %v1843
    %v1850 = vadd.f32 %v1834, %v1843
    %v1851 = vadd.f32 %v1838, %v1843
    %vm1852 = vcmp.gt.f32.partialorder %v1844, 0.0
    %vm1853 = vcmp.gt.f32.partialorder %v1845, 0.0
    %vm1854 = vcmp.gt.f32.partialorder %v1846, 0.0
    %vm1855 = vcmp.gt.f32.partialorder %v1847, 0.0
    %vm1856 = vcmp.gt.f32.partialorder %v1848, 0.0
    %vm1857 = vcmp.gt.f32.partialorder %v1849, 0.0
    %vm1858 = vcmp.gt.f32.partialorder %v1850, 0.0
    %vm1859 = vcmp.gt.f32.partialorder %v1851, 0.0
    %v1860 = vmul.f32 %v1844, 0.2
    %v1861 = vmul.f32 %v1845, 0.2
    %v1862 = vmul.f32 %v1846, 0.2
    %v1863 = vmul.f32 %v1847, 0.2
    %v1864 = vmul.f32 %v1848, 0.2
    %v1865 = vmul.f32 %v1849, 0.2
    %v1866 = vmul.f32 %v1850, 0.2
    %v1867 = vmul.f32 %v1851, 0.2
    %v1868 = vsel %vm1852, %v1844, %v1860
    %v1869 = vsel %vm1853, %v1845, %v1861
    %v1870 = vsel %vm1854, %v1846, %v1862
    %v1871 = vsel %vm1855, %v1847, %v1863
    %v1872 = vsel %vm1856, %v1848, %v1864
    %v1873 = vsel %vm1857, %v1849, %v1865
    %v1874 = vsel %vm1858, %v1850, %v1866
    %v1875 = vsel %vm1859, %v1851, %v1867
    %v1876 = vsel %vm52, %v1868, -1e+30
    %v1877 = vsel %vm53, %v1869, -1e+30
    %v1878 = vsel %vm54, %v1870, -1e+30
    %v1879 = vsel %vm55, %v1871, -1e+30
    %v1880 = vsel %vm56, %v1872, -1e+30
    %v1881 = vsel %vm57, %v1873, -1e+30
    %v1882 = vsel %vm58, %v1874, -1e+30
    %v1883 = vsel %vm59, %v1875, -1e+30
    %v1884 = vsel %vm84, %v1876, -inf
    %1885 = vmax.xlane.f32.xlu0 %v1884
    %v1886 = vpop.xlane.xlu0 %1885
    %v1887 = vsel %vm84, %v1877, -inf
    %1888 = vmax.xlane.f32.xlu0 %v1887
    %v1889 = vpop.xlane.xlu0 %1888
    %v1890 = vsel %vm84, %v1878, -inf
    %1891 = vmax.xlane.f32.xlu0 %v1890
    %v1892 = vpop.xlane.xlu0 %1891
    %v1893 = vsel %vm84, %v1879, -inf
    %1894 = vmax.xlane.f32.xlu0 %v1893
    %v1895 = vpop.xlane.xlu0 %1894
    %v1896 = vsel %vm84, %v1880, -inf
    %1897 = vmax.xlane.f32.xlu0 %v1896
    %v1898 = vpop.xlane.xlu0 %1897
    %v1899 = vsel %vm84, %v1881, -inf
    %1900 = vmax.xlane.f32.xlu0 %v1899
    %v1901 = vpop.xlane.xlu0 %1900
    %v1902 = vsel %vm84, %v1882, -inf
    %1903 = vmax.xlane.f32.xlu0 %v1902
    %v1904 = vpop.xlane.xlu0 %1903
    %v1905 = vsel %vm84, %v1883, -inf
    %1906 = vmax.xlane.f32.xlu0 %v1905
    %v1907 = vpop.xlane.xlu0 %1906
    %v1908 = vsub.f32 %v1876, %v1886
    %v1909 = vsub.f32 %v1877, %v1889
    %v1910 = vsub.f32 %v1878, %v1892
    %v1911 = vsub.f32 %v1879, %v1895
    %v1912 = vsub.f32 %v1880, %v1898
    %v1913 = vsub.f32 %v1881, %v1901
    %v1914 = vsub.f32 %v1882, %v1904
    %v1915 = vsub.f32 %v1883, %v1907
    %v1916 = vmul.f32 %v1908, 1.442695
    %v1917 = vpow.pop %v1916
    %v1918 = vmul.f32 %v1909, 1.442695
    %v1919 = vpow.pop %v1918
    %v1920 = vmul.f32 %v1910, 1.442695
    %v1921 = vpow.pop %v1920
    %v1922 = vmul.f32 %v1911, 1.442695
    %v1923 = vpow.pop %v1922
    %v1924 = vmul.f32 %v1912, 1.442695
    %v1925 = vpow.pop %v1924
    %v1926 = vmul.f32 %v1913, 1.442695
    %v1927 = vpow.pop %v1926
    %v1928 = vmul.f32 %v1914, 1.442695
    %v1929 = vpow.pop %v1928
    %v1930 = vmul.f32 %v1915, 1.442695
    %v1931 = vpow.pop %v1930
    %v1932 = vsel %vm84, %v1917, 0.0
    %1933 = vadd.xlane.f32.xlu0 %v1932
    %v1934 = vpop.xlane.xlu0 %1933
    %v1935 = vsel %vm84, %v1919, 0.0
    %1936 = vadd.xlane.f32.xlu0 %v1935
    %v1937 = vpop.xlane.xlu0 %1936
    %v1938 = vsel %vm84, %v1921, 0.0
    %1939 = vadd.xlane.f32.xlu0 %v1938
    %v1940 = vpop.xlane.xlu0 %1939
    %v1941 = vsel %vm84, %v1923, 0.0
    %1942 = vadd.xlane.f32.xlu0 %v1941
    %v1943 = vpop.xlane.xlu0 %1942
    %v1944 = vsel %vm84, %v1925, 0.0
    %1945 = vadd.xlane.f32.xlu0 %v1944
    %v1946 = vpop.xlane.xlu0 %1945
    %v1947 = vsel %vm84, %v1927, 0.0
    %1948 = vadd.xlane.f32.xlu0 %v1947
    %v1949 = vpop.xlane.xlu0 %1948
    %v1950 = vsel %vm84, %v1929, 0.0
    %1951 = vadd.xlane.f32.xlu0 %v1950
    %v1952 = vpop.xlane.xlu0 %1951
    %v1953 = vsel %vm84, %v1931, 0.0
    %1954 = vadd.xlane.f32.xlu0 %v1953
    %v1955 = vpop.xlane.xlu0 %1954
    %v1956 = vmax.f32 %v1934, 1e-20
    %v1957 = vmax.f32 %v1937, 1e-20
    %v1958 = vmax.f32 %v1940, 1e-20
    %v1959 = vmax.f32 %v1943, 1e-20
    %v1960 = vmax.f32 %v1946, 1e-20
    %v1961 = vmax.f32 %v1949, 1e-20
    %v1962 = vmax.f32 %v1952, 1e-20
    %v1963 = vmax.f32 %v1955, 1e-20
    %v1964 = vrcp.pop %v1956
    %v1965 = vrcp.pop %v1957
    %v1966 = vrcp.pop %v1958
    %v1967 = vrcp.pop %v1959
    %v1968 = vrcp.pop %v1960
    %v1969 = vrcp.pop %v1961
    %v1970 = vrcp.pop %v1962
    %v1971 = vrcp.pop %v1963
    %v1972 = vpack.c.bf16 %v1919, %v1917
    %v1973 = vpack.c.bf16 %v1923, %v1921
    %v1974 = vpack.c.bf16 %v1927, %v1925
    %v1975 = vpack.c.bf16 %v1931, %v1929
    %1976 = vrot.lane.b32.xlu0 %v162, 48
    %v1977 = vpop.permute.xlu0 %1976
    %1978 = vrot.lane.b32.xlu0 %v163, 48
    %v1979 = vpop.permute.xlu0 %1978
    %1980 = vrot.lane.b32.xlu0 %v164, 48
    %v1981 = vpop.permute.xlu0 %1980
    %1982 = vrot.lane.b32.xlu0 %v165, 48
    %v1983 = vpop.permute.xlu0 %1982
    %v1989 = vsel %vm84, %v1972, 0
    %v1992 = vsel %vm84, %v1973, 0
    %v1995 = vsel %vm84, %v1974, 0
    %v1998 = vsel %vm84, %v1975, 0
    %2000 = vmatprep.subr.bf16.mxu0 0
    %2001 = vmatpush1.bf16.msra.mxu0 %v1977
    %2002 = vmatprep.subr.bf16.mxu0 0
    %2003 = vmatpush1.bf16.msra.mxu0 %v1979
    %2004 = vmatprep.subr.bf16.mxu0 0
    %2005 = vmatpush1.bf16.msra.mxu0 %v1981
    %2006 = vmatprep.subr.bf16.mxu0 0
    %2007 = vmatpush1.bf16.msra.mxu0 %v1983
    %2008 = vmatprep.subr.bf16.mxu0 0
    %2009 = vmatpush1.bf16.msra.mxu0 0
    %2010 = vmatprep.subr.bf16.mxu0 0
    %2011 = vmatpush1.bf16.msra.mxu0 0
    %2012 = vmatprep.subr.bf16.mxu0 0
    %2013 = vmatpush1.bf16.msra.mxu0 0
    %2014 = vmatprep.subr.bf16.mxu0 0
    %2015 = vmatpush1.bf16.msra.mxu0 0
    %2016 = vmatprep.subr.bf16.mxu0 0
    %2017 = vmatpush1.bf16.msra.mxu0 0
    %2018 = vmatprep.subr.bf16.mxu0 0
    %2019 = vmatpush1.bf16.msra.mxu0 0
    %2020 = vmatprep.subr.bf16.mxu0 0
    %2021 = vmatpush1.bf16.msra.mxu0 0
    %2022 = vmatprep.subr.bf16.mxu0 0
    %2023 = vmatpush1.bf16.msra.mxu0 0
    %2024 = vmatprep.subr.bf16.mxu0 0
    %2025 = vmatpush1.bf16.msra.mxu0 0
    %2026 = vmatprep.subr.bf16.mxu0 0
    %2027 = vmatpush1.bf16.msra.mxu0 0
    %2028 = vmatprep.subr.bf16.mxu0 0
    %2029 = vmatpush1.bf16.msra.mxu0 0
    %2030 = vmatprep.subr.bf16.mxu0 0
    %2031 = vmatpush1.bf16.msra.mxu0 0
    %2032 = vmatprep.mubr.bf16.mxu0 0
    %2033 = vmatmul.mubr.bf16.gmra.mrb[0].mxu0 %v1989
    %v2034 = vpop.f32.mrb[0].mxu0
    %v2035 = vadd.f32 0.0, %v2034
    %v2036 = vpop.f32.mrb[0].mxu0
    %v2037 = vpop.f32.mrb[0].mxu0
    %v2038 = vadd.f32 0.0, %v2037
    %v2039 = vpop.f32.mrb[0].mxu0
    %2040 = vmatprep.mubr.bf16.mxu0 0
    %2041 = vmatmul.mubr.bf16.gmra.mrb[0].mxu0 %v1992
    %v2042 = vpop.f32.mrb[0].mxu0
    %v2043 = vadd.f32 0.0, %v2042
    %v2044 = vpop.f32.mrb[0].mxu0
    %v2045 = vpop.f32.mrb[0].mxu0
    %v2046 = vadd.f32 0.0, %v2045
    %v2047 = vpop.f32.mrb[0].mxu0
    %2048 = vmatprep.mubr.bf16.mxu0 0
    %2049 = vmatmul.mubr.bf16.gmra.mrb[0].mxu0 %v1995
    %v2050 = vpop.f32.mrb[0].mxu0
    %v2051 = vadd.f32 0.0, %v2050
    %v2052 = vpop.f32.mrb[0].mxu0
    %v2053 = vpop.f32.mrb[0].mxu0
    %v2054 = vadd.f32 0.0, %v2053
    %v2055 = vpop.f32.mrb[0].mxu0
    %2056 = vmatprep.mubr.bf16.mxu0 0
    %2057 = vmatmul.mubr.bf16.gmra.mrb[0].mxu0 %v1998
    %v2058 = vpop.f32.mrb[0].mxu0
    %v2059 = vadd.f32 0.0, %v2058
    %v2060 = vpop.f32.mrb[0].mxu0
    %v2061 = vpop.f32.mrb[0].mxu0
    %v2062 = vadd.f32 0.0, %v2061
    %v2063 = vpop.f32.mrb[0].mxu0
    %2064 = vdwg.mxu0
    %v2065 = vmul.f32 %v2035, %v1964
    %v2066 = vmul.f32 %v2038, %v1965
    %v2067 = vmul.f32 %v2043, %v1966
    %v2068 = vmul.f32 %v2046, %v1967
    %v2069 = vmul.f32 %v2051, %v1968
    %v2070 = vmul.f32 %v2054, %v1969
    %v2071 = vmul.f32 %v2059, %v1970
    %v2072 = vmul.f32 %v2062, %v1971
    %2081 = vrot.lane.b32.xlu0 %v2065, 80
    %v2082 = vpop.permute.xlu0 %2081
    %2083 = vrot.lane.b32.xlu0 %v2066, 80
    %v2084 = vpop.permute.xlu0 %2083
    %2085 = vrot.lane.b32.xlu0 %v2067, 80
    %v2086 = vpop.permute.xlu0 %2085
    %2087 = vrot.lane.b32.xlu0 %v2068, 80
    %v2088 = vpop.permute.xlu0 %2087
    %2089 = vrot.lane.b32.xlu0 %v2069, 80
    %v2090 = vpop.permute.xlu0 %2089
    %2091 = vrot.lane.b32.xlu0 %v2070, 80
    %v2092 = vpop.permute.xlu0 %2091
    %2093 = vrot.lane.b32.xlu0 %v2071, 80
    %v2094 = vpop.permute.xlu0 %2093
    %2095 = vrot.lane.b32.xlu0 %v2072, 80
    %v2096 = vpop.permute.xlu0 %2095
    %vm2105 = vcmask 654336
    %v2106 = vsel %vm2105, %v1800, %v2082
    %v2107 = vsel %vm2105, %v1801, %v2084
    %v2108 = vsel %vm2105, %v1802, %v2086
    %v2109 = vsel %vm2105, %v1803, %v2088
    %v2110 = vsel %vm2105, %v1804, %v2090
    %v2111 = vsel %vm2105, %v1805, %v2092
    %v2112 = vsel %vm2105, %v1806, %v2094
    %v2113 = vsel %vm2105, %v1807, %v2096
    %2114 = vset.pattern.permute.xlu0 14
    %2115 = vperm.xlu0 %2114, %v249
    %v2116 = vpop.permute.xlu0 %2115
    %2118 = vset.pattern.permute.xlu0 14
    %2119 = vperm.xlu0 %2118, %v254
    %v2120 = vpop.permute.xlu0 %2119
    %2122 = vset.pattern.permute.xlu0 14
    %2123 = vperm.xlu0 %2122, %v259
    %v2124 = vpop.permute.xlu0 %2123
    %2126 = vset.pattern.permute.xlu0 14
    %2127 = vperm.xlu0 %2126, %v264
    %v2128 = vpop.permute.xlu0 %2127
    %2130 = vset.pattern.permute.xlu0 14
    %2131 = vperm.xlu0 %2130, %v269
    %v2132 = vpop.permute.xlu0 %2131
    %2134 = vset.pattern.permute.xlu0 14
    %2135 = vperm.xlu0 %2134, %v274
    %v2136 = vpop.permute.xlu0 %2135
    %2138 = vset.pattern.permute.xlu0 14
    %2139 = vperm.xlu0 %2138, %v279
    %v2140 = vpop.permute.xlu0 %2139
    %2142 = vset.pattern.permute.xlu0 14
    %2143 = vperm.xlu0 %2142, %v284
    %v2144 = vpop.permute.xlu0 %2143
    %v2146 = vlaneseq
    %v2147 = vshrl.u32 %v2146, 7
    %v2148 = vsub.s32 6, %v2147
    %v2149 = vrot.slane %v303, %v2148
    %v2150 = vadd.f32 %v2116, %v2149
    %v2151 = vadd.f32 %v2120, %v2149
    %v2152 = vadd.f32 %v2124, %v2149
    %v2153 = vadd.f32 %v2128, %v2149
    %v2154 = vadd.f32 %v2132, %v2149
    %v2155 = vadd.f32 %v2136, %v2149
    %v2156 = vadd.f32 %v2140, %v2149
    %v2157 = vadd.f32 %v2144, %v2149
    %vm2158 = vcmp.gt.f32.partialorder %v2150, 0.0
    %vm2159 = vcmp.gt.f32.partialorder %v2151, 0.0
    %vm2160 = vcmp.gt.f32.partialorder %v2152, 0.0
    %vm2161 = vcmp.gt.f32.partialorder %v2153, 0.0
    %vm2162 = vcmp.gt.f32.partialorder %v2154, 0.0
    %vm2163 = vcmp.gt.f32.partialorder %v2155, 0.0
    %vm2164 = vcmp.gt.f32.partialorder %v2156, 0.0
    %vm2165 = vcmp.gt.f32.partialorder %v2157, 0.0
    %v2166 = vmul.f32 %v2150, 0.2
    %v2167 = vmul.f32 %v2151, 0.2
    %v2168 = vmul.f32 %v2152, 0.2
    %v2169 = vmul.f32 %v2153, 0.2
    %v2170 = vmul.f32 %v2154, 0.2
    %v2171 = vmul.f32 %v2155, 0.2
    %v2172 = vmul.f32 %v2156, 0.2
    %v2173 = vmul.f32 %v2157, 0.2
    %v2174 = vsel %vm2158, %v2150, %v2166
    %v2175 = vsel %vm2159, %v2151, %v2167
    %v2176 = vsel %vm2160, %v2152, %v2168
    %v2177 = vsel %vm2161, %v2153, %v2169
    %v2178 = vsel %vm2162, %v2154, %v2170
    %v2179 = vsel %vm2163, %v2155, %v2171
    %v2180 = vsel %vm2164, %v2156, %v2172
    %v2181 = vsel %vm2165, %v2157, %v2173
    %v2182 = vsel %vm52, %v2174, -1e+30
    %v2183 = vsel %vm53, %v2175, -1e+30
    %v2184 = vsel %vm54, %v2176, -1e+30
    %v2185 = vsel %vm55, %v2177, -1e+30
    %v2186 = vsel %vm56, %v2178, -1e+30
    %v2187 = vsel %vm57, %v2179, -1e+30
    %v2188 = vsel %vm58, %v2180, -1e+30
    %v2189 = vsel %vm59, %v2181, -1e+30
    %v2190 = vsel %vm84, %v2182, -inf
    %2191 = vmax.xlane.f32.xlu0 %v2190
    %v2192 = vpop.xlane.xlu0 %2191
    %v2193 = vsel %vm84, %v2183, -inf
    %2194 = vmax.xlane.f32.xlu0 %v2193
    %v2195 = vpop.xlane.xlu0 %2194
    %v2196 = vsel %vm84, %v2184, -inf
    %2197 = vmax.xlane.f32.xlu0 %v2196
    %v2198 = vpop.xlane.xlu0 %2197
    %v2199 = vsel %vm84, %v2185, -inf
    %2200 = vmax.xlane.f32.xlu0 %v2199
    %v2201 = vpop.xlane.xlu0 %2200
    %v2202 = vsel %vm84, %v2186, -inf
    %2203 = vmax.xlane.f32.xlu0 %v2202
    %v2204 = vpop.xlane.xlu0 %2203
    %v2205 = vsel %vm84, %v2187, -inf
    %2206 = vmax.xlane.f32.xlu0 %v2205
    %v2207 = vpop.xlane.xlu0 %2206
    %v2208 = vsel %vm84, %v2188, -inf
    %2209 = vmax.xlane.f32.xlu0 %v2208
    %v2210 = vpop.xlane.xlu0 %2209
    %v2211 = vsel %vm84, %v2189, -inf
    %2212 = vmax.xlane.f32.xlu0 %v2211
    %v2213 = vpop.xlane.xlu0 %2212
    %v2214 = vsub.f32 %v2182, %v2192
    %v2215 = vsub.f32 %v2183, %v2195
    %v2216 = vsub.f32 %v2184, %v2198
    %v2217 = vsub.f32 %v2185, %v2201
    %v2218 = vsub.f32 %v2186, %v2204
    %v2219 = vsub.f32 %v2187, %v2207
    %v2220 = vsub.f32 %v2188, %v2210
    %v2221 = vsub.f32 %v2189, %v2213
    %v2222 = vmul.f32 %v2214, 1.442695
    %v2223 = vpow.pop %v2222
    %v2224 = vmul.f32 %v2215, 1.442695
    %v2225 = vpow.pop %v2224
    %v2226 = vmul.f32 %v2216, 1.442695
    %v2227 = vpow.pop %v2226
    %v2228 = vmul.f32 %v2217, 1.442695
    %v2229 = vpow.pop %v2228
    %v2230 = vmul.f32 %v2218, 1.442695
    %v2231 = vpow.pop %v2230
    %v2232 = vmul.f32 %v2219, 1.442695
    %v2233 = vpow.pop %v2232
    %v2234 = vmul.f32 %v2220, 1.442695
    %v2235 = vpow.pop %v2234
    %v2236 = vmul.f32 %v2221, 1.442695
    %v2237 = vpow.pop %v2236
    %v2238 = vsel %vm84, %v2223, 0.0
    %2239 = vadd.xlane.f32.xlu0 %v2238
    %v2240 = vpop.xlane.xlu0 %2239
    %v2241 = vsel %vm84, %v2225, 0.0
    %2242 = vadd.xlane.f32.xlu0 %v2241
    %v2243 = vpop.xlane.xlu0 %2242
    %v2244 = vsel %vm84, %v2227, 0.0
    %2245 = vadd.xlane.f32.xlu0 %v2244
    %v2246 = vpop.xlane.xlu0 %2245
    %v2247 = vsel %vm84, %v2229, 0.0
    %2248 = vadd.xlane.f32.xlu0 %v2247
    %v2249 = vpop.xlane.xlu0 %2248
    %v2250 = vsel %vm84, %v2231, 0.0
    %2251 = vadd.xlane.f32.xlu0 %v2250
    %v2252 = vpop.xlane.xlu0 %2251
    %v2253 = vsel %vm84, %v2233, 0.0
    %2254 = vadd.xlane.f32.xlu0 %v2253
    %v2255 = vpop.xlane.xlu0 %2254
    %v2256 = vsel %vm84, %v2235, 0.0
    %2257 = vadd.xlane.f32.xlu0 %v2256
    %v2258 = vpop.xlane.xlu0 %2257
    %v2259 = vsel %vm84, %v2237, 0.0
    %2260 = vadd.xlane.f32.xlu0 %v2259
    %v2261 = vpop.xlane.xlu0 %2260
    %v2262 = vmax.f32 %v2240, 1e-20
    %v2263 = vmax.f32 %v2243, 1e-20
    %v2264 = vmax.f32 %v2246, 1e-20
    %v2265 = vmax.f32 %v2249, 1e-20
    %v2266 = vmax.f32 %v2252, 1e-20
    %v2267 = vmax.f32 %v2255, 1e-20
    %v2268 = vmax.f32 %v2258, 1e-20
    %v2269 = vmax.f32 %v2261, 1e-20
    %v2270 = vrcp.pop %v2262
    %v2271 = vrcp.pop %v2263
    %v2272 = vrcp.pop %v2264
    %v2273 = vrcp.pop %v2265
    %v2274 = vrcp.pop %v2266
    %v2275 = vrcp.pop %v2267
    %v2276 = vrcp.pop %v2268
    %v2277 = vrcp.pop %v2269
    %v2278 = vpack.c.bf16 %v2225, %v2223
    %v2279 = vpack.c.bf16 %v2229, %v2227
    %v2280 = vpack.c.bf16 %v2233, %v2231
    %v2281 = vpack.c.bf16 %v2237, %v2235
    %2282 = vrot.lane.b32.xlu0 %v162, 32
    %v2283 = vpop.permute.xlu0 %2282
    %2284 = vrot.lane.b32.xlu0 %v163, 32
    %v2285 = vpop.permute.xlu0 %2284
    %2286 = vrot.lane.b32.xlu0 %v164, 32
    %v2287 = vpop.permute.xlu0 %2286
    %2288 = vrot.lane.b32.xlu0 %v165, 32
    %v2289 = vpop.permute.xlu0 %2288
    %v2295 = vsel %vm84, %v2278, 0
    %v2298 = vsel %vm84, %v2279, 0
    %v2301 = vsel %vm84, %v2280, 0
    %v2304 = vsel %vm84, %v2281, 0
    %2306 = vmatprep.subr.bf16.mxu0 0
    %2307 = vmatpush1.bf16.msra.mxu0 %v2283
    %2308 = vmatprep.subr.bf16.mxu0 0
    %2309 = vmatpush1.bf16.msra.mxu0 %v2285
    %2310 = vmatprep.subr.bf16.mxu0 0
    %2311 = vmatpush1.bf16.msra.mxu0 %v2287
    %2312 = vmatprep.subr.bf16.mxu0 0
    %2313 = vmatpush1.bf16.msra.mxu0 %v2289
    %2314 = vmatprep.subr.bf16.mxu0 0
    %2315 = vmatpush1.bf16.msra.mxu0 0
    %2316 = vmatprep.subr.bf16.mxu0 0
    %2317 = vmatpush1.bf16.msra.mxu0 0
    %2318 = vmatprep.subr.bf16.mxu0 0
    %2319 = vmatpush1.bf16.msra.mxu0 0
    %2320 = vmatprep.subr.bf16.mxu0 0
    %2321 = vmatpush1.bf16.msra.mxu0 0
    %2322 = vmatprep.subr.bf16.mxu0 0
    %2323 = vmatpush1.bf16.msra.mxu0 0
    %2324 = vmatprep.subr.bf16.mxu0 0
    %2325 = vmatpush1.bf16.msra.mxu0 0
    %2326 = vmatprep.subr.bf16.mxu0 0
    %2327 = vmatpush1.bf16.msra.mxu0 0
    %2328 = vmatprep.subr.bf16.mxu0 0
    %2329 = vmatpush1.bf16.msra.mxu0 0
    %2330 = vmatprep.subr.bf16.mxu0 0
    %2331 = vmatpush1.bf16.msra.mxu0 0
    %2332 = vmatprep.subr.bf16.mxu0 0
    %2333 = vmatpush1.bf16.msra.mxu0 0
    %2334 = vmatprep.subr.bf16.mxu0 0
    %2335 = vmatpush1.bf16.msra.mxu0 0
    %2336 = vmatprep.subr.bf16.mxu0 0
    %2337 = vmatpush1.bf16.msra.mxu0 0
    %2338 = vmatprep.mubr.bf16.mxu0 0
    %2339 = vmatmul.mubr.bf16.gmra.mrb[0].mxu0 %v2295
    %v2340 = vpop.f32.mrb[0].mxu0
    %v2341 = vadd.f32 0.0, %v2340
    %v2342 = vpop.f32.mrb[0].mxu0
    %v2343 = vpop.f32.mrb[0].mxu0
    %v2344 = vadd.f32 0.0, %v2343
    %v2345 = vpop.f32.mrb[0].mxu0
    %2346 = vmatprep.mubr.bf16.mxu0 0
    %2347 = vmatmul.mubr.bf16.gmra.mrb[0].mxu0 %v2298
    %v2348 = vpop.f32.mrb[0].mxu0
    %v2349 = vadd.f32 0.0, %v2348
    %v2350 = vpop.f32.mrb[0].mxu0
    %v2351 = vpop.f32.mrb[0].mxu0
    %v2352 = vadd.f32 0.0, %v2351
    %v2353 = vpop.f32.mrb[0].mxu0
    %2354 = vmatprep.mubr.bf16.mxu0 0
    %2355 = vmatmul.mubr.bf16.gmra.mrb[0].mxu0 %v2301
    %v2356 = vpop.f32.mrb[0].mxu0
    %v2357 = vadd.f32 0.0, %v2356
    %v2358 = vpop.f32.mrb[0].mxu0
    %v2359 = vpop.f32.mrb[0].mxu0
    %v2360 = vadd.f32 0.0, %v2359
    %v2361 = vpop.f32.mrb[0].mxu0
    %2362 = vmatprep.mubr.bf16.mxu0 0
    %2363 = vmatmul.mubr.bf16.gmra.mrb[0].mxu0 %v2304
    %v2364 = vpop.f32.mrb[0].mxu0
    %v2365 = vadd.f32 0.0, %v2364
    %v2366 = vpop.f32.mrb[0].mxu0
    %v2367 = vpop.f32.mrb[0].mxu0
    %v2368 = vadd.f32 0.0, %v2367
    %v2369 = vpop.f32.mrb[0].mxu0
    %2370 = vdwg.mxu0
    %v2371 = vmul.f32 %v2341, %v2270
    %v2372 = vmul.f32 %v2344, %v2271
    %v2373 = vmul.f32 %v2349, %v2272
    %v2374 = vmul.f32 %v2352, %v2273
    %v2375 = vmul.f32 %v2357, %v2274
    %v2376 = vmul.f32 %v2360, %v2275
    %v2377 = vmul.f32 %v2365, %v2276
    %v2378 = vmul.f32 %v2368, %v2277
    %2387 = vrot.lane.b32.xlu0 %v2371, 96
    %v2388 = vpop.permute.xlu0 %2387
    %2389 = vrot.lane.b32.xlu0 %v2372, 96
    %v2390 = vpop.permute.xlu0 %2389
    %2391 = vrot.lane.b32.xlu0 %v2373, 96
    %v2392 = vpop.permute.xlu0 %2391
    %2393 = vrot.lane.b32.xlu0 %v2374, 96
    %v2394 = vpop.permute.xlu0 %2393
    %2395 = vrot.lane.b32.xlu0 %v2375, 96
    %v2396 = vpop.permute.xlu0 %2395
    %2397 = vrot.lane.b32.xlu0 %v2376, 96
    %v2398 = vpop.permute.xlu0 %2397
    %2399 = vrot.lane.b32.xlu0 %v2377, 96
    %v2400 = vpop.permute.xlu0 %2399
    %2401 = vrot.lane.b32.xlu0 %v2378, 96
    %v2402 = vpop.permute.xlu0 %2401
    %vm2411 = vcmask 785408
    %v2412 = vsel %vm2411, %v2106, %v2388
    %v2413 = vsel %vm2411, %v2107, %v2390
    %v2414 = vsel %vm2411, %v2108, %v2392
    %v2415 = vsel %vm2411, %v2109, %v2394
    %v2416 = vsel %vm2411, %v2110, %v2396
    %v2417 = vsel %vm2411, %v2111, %v2398
    %v2418 = vsel %vm2411, %v2112, %v2400
    %v2419 = vsel %vm2411, %v2113, %v2402
    %2420 = vset.pattern.permute.xlu0 15
    %2421 = vperm.xlu0 %2420, %v249
    %v2422 = vpop.permute.xlu0 %2421
    %2424 = vset.pattern.permute.xlu0 15
    %2425 = vperm.xlu0 %2424, %v254
    %v2426 = vpop.permute.xlu0 %2425
    %2428 = vset.pattern.permute.xlu0 15
    %2429 = vperm.xlu0 %2428, %v259
    %v2430 = vpop.permute.xlu0 %2429
    %2432 = vset.pattern.permute.xlu0 15
    %2433 = vperm.xlu0 %2432, %v264
    %v2434 = vpop.permute.xlu0 %2433
    %2436 = vset.pattern.permute.xlu0 15
    %2437 = vperm.xlu0 %2436, %v269
    %v2438 = vpop.permute.xlu0 %2437
    %2440 = vset.pattern.permute.xlu0 15
    %2441 = vperm.xlu0 %2440, %v274
    %v2442 = vpop.permute.xlu0 %2441
    %2444 = vset.pattern.permute.xlu0 15
    %2445 = vperm.xlu0 %2444, %v279
    %v2446 = vpop.permute.xlu0 %2445
    %2448 = vset.pattern.permute.xlu0 15
    %2449 = vperm.xlu0 %2448, %v284
    %v2450 = vpop.permute.xlu0 %2449
    %v2452 = vlaneseq
    %v2453 = vshrl.u32 %v2452, 7
    %v2454 = vsub.s32 7, %v2453
    %v2455 = vrot.slane %v303, %v2454
    %v2456 = vadd.f32 %v2422, %v2455
    %v2457 = vadd.f32 %v2426, %v2455
    %v2458 = vadd.f32 %v2430, %v2455
    %v2459 = vadd.f32 %v2434, %v2455
    %v2460 = vadd.f32 %v2438, %v2455
    %v2461 = vadd.f32 %v2442, %v2455
    %v2462 = vadd.f32 %v2446, %v2455
    %v2463 = vadd.f32 %v2450, %v2455
    %vm2464 = vcmp.gt.f32.partialorder %v2456, 0.0
    %vm2465 = vcmp.gt.f32.partialorder %v2457, 0.0
    %vm2466 = vcmp.gt.f32.partialorder %v2458, 0.0
    %vm2467 = vcmp.gt.f32.partialorder %v2459, 0.0
    %vm2468 = vcmp.gt.f32.partialorder %v2460, 0.0
    %vm2469 = vcmp.gt.f32.partialorder %v2461, 0.0
    %vm2470 = vcmp.gt.f32.partialorder %v2462, 0.0
    %vm2471 = vcmp.gt.f32.partialorder %v2463, 0.0
    %v2472 = vmul.f32 %v2456, 0.2
    %v2473 = vmul.f32 %v2457, 0.2
    %v2474 = vmul.f32 %v2458, 0.2
    %v2475 = vmul.f32 %v2459, 0.2
    %v2476 = vmul.f32 %v2460, 0.2
    %v2477 = vmul.f32 %v2461, 0.2
    %v2478 = vmul.f32 %v2462, 0.2
    %v2479 = vmul.f32 %v2463, 0.2
    %v2480 = vsel %vm2464, %v2456, %v2472
    %v2481 = vsel %vm2465, %v2457, %v2473
    %v2482 = vsel %vm2466, %v2458, %v2474
    %v2483 = vsel %vm2467, %v2459, %v2475
    %v2484 = vsel %vm2468, %v2460, %v2476
    %v2485 = vsel %vm2469, %v2461, %v2477
    %v2486 = vsel %vm2470, %v2462, %v2478
    %v2487 = vsel %vm2471, %v2463, %v2479
    %v2488 = vsel %vm52, %v2480, -1e+30
    %v2489 = vsel %vm53, %v2481, -1e+30
    %v2490 = vsel %vm54, %v2482, -1e+30
    %v2491 = vsel %vm55, %v2483, -1e+30
    %v2492 = vsel %vm56, %v2484, -1e+30
    %v2493 = vsel %vm57, %v2485, -1e+30
    %v2494 = vsel %vm58, %v2486, -1e+30
    %v2495 = vsel %vm59, %v2487, -1e+30
    %v2496 = vsel %vm84, %v2488, -inf
    %2497 = vmax.xlane.f32.xlu0 %v2496
    %v2498 = vpop.xlane.xlu0 %2497
    %v2499 = vsel %vm84, %v2489, -inf
    %2500 = vmax.xlane.f32.xlu0 %v2499
    %v2501 = vpop.xlane.xlu0 %2500
    %v2502 = vsel %vm84, %v2490, -inf
    %2503 = vmax.xlane.f32.xlu0 %v2502
    %v2504 = vpop.xlane.xlu0 %2503
    %v2505 = vsel %vm84, %v2491, -inf
    %2506 = vmax.xlane.f32.xlu0 %v2505
    %v2507 = vpop.xlane.xlu0 %2506
    %v2508 = vsel %vm84, %v2492, -inf
    %2509 = vmax.xlane.f32.xlu0 %v2508
    %v2510 = vpop.xlane.xlu0 %2509
    %v2511 = vsel %vm84, %v2493, -inf
    %2512 = vmax.xlane.f32.xlu0 %v2511
    %v2513 = vpop.xlane.xlu0 %2512
    %v2514 = vsel %vm84, %v2494, -inf
    %2515 = vmax.xlane.f32.xlu0 %v2514
    %v2516 = vpop.xlane.xlu0 %2515
    %v2517 = vsel %vm84, %v2495, -inf
    %2518 = vmax.xlane.f32.xlu0 %v2517
    %v2519 = vpop.xlane.xlu0 %2518
    %v2520 = vsub.f32 %v2488, %v2498
    %v2521 = vsub.f32 %v2489, %v2501
    %v2522 = vsub.f32 %v2490, %v2504
    %v2523 = vsub.f32 %v2491, %v2507
    %v2524 = vsub.f32 %v2492, %v2510
    %v2525 = vsub.f32 %v2493, %v2513
    %v2526 = vsub.f32 %v2494, %v2516
    %v2527 = vsub.f32 %v2495, %v2519
    %v2528 = vmul.f32 %v2520, 1.442695
    %v2529 = vpow.pop %v2528
    %v2530 = vmul.f32 %v2521, 1.442695
    %v2531 = vpow.pop %v2530
    %v2532 = vmul.f32 %v2522, 1.442695
    %v2533 = vpow.pop %v2532
    %v2534 = vmul.f32 %v2523, 1.442695
    %v2535 = vpow.pop %v2534
    %v2536 = vmul.f32 %v2524, 1.442695
    %v2537 = vpow.pop %v2536
    %v2538 = vmul.f32 %v2525, 1.442695
    %v2539 = vpow.pop %v2538
    %v2540 = vmul.f32 %v2526, 1.442695
    %v2541 = vpow.pop %v2540
    %v2542 = vmul.f32 %v2527, 1.442695
    %v2543 = vpow.pop %v2542
    %v2544 = vsel %vm84, %v2529, 0.0
    %2545 = vadd.xlane.f32.xlu0 %v2544
    %v2546 = vpop.xlane.xlu0 %2545
    %v2547 = vsel %vm84, %v2531, 0.0
    %2548 = vadd.xlane.f32.xlu0 %v2547
    %v2549 = vpop.xlane.xlu0 %2548
    %v2550 = vsel %vm84, %v2533, 0.0
    %2551 = vadd.xlane.f32.xlu0 %v2550
    %v2552 = vpop.xlane.xlu0 %2551
    %v2553 = vsel %vm84, %v2535, 0.0
    %2554 = vadd.xlane.f32.xlu0 %v2553
    %v2555 = vpop.xlane.xlu0 %2554
    %v2556 = vsel %vm84, %v2537, 0.0
    %2557 = vadd.xlane.f32.xlu0 %v2556
    %v2558 = vpop.xlane.xlu0 %2557
    %v2559 = vsel %vm84, %v2539, 0.0
    %2560 = vadd.xlane.f32.xlu0 %v2559
    %v2561 = vpop.xlane.xlu0 %2560
    %v2562 = vsel %vm84, %v2541, 0.0
    %2563 = vadd.xlane.f32.xlu0 %v2562
    %v2564 = vpop.xlane.xlu0 %2563
    %v2565 = vsel %vm84, %v2543, 0.0
    %2566 = vadd.xlane.f32.xlu0 %v2565
    %v2567 = vpop.xlane.xlu0 %2566
    %v2568 = vmax.f32 %v2546, 1e-20
    %v2569 = vmax.f32 %v2549, 1e-20
    %v2570 = vmax.f32 %v2552, 1e-20
    %v2571 = vmax.f32 %v2555, 1e-20
    %v2572 = vmax.f32 %v2558, 1e-20
    %v2573 = vmax.f32 %v2561, 1e-20
    %v2574 = vmax.f32 %v2564, 1e-20
    %v2575 = vmax.f32 %v2567, 1e-20
    %v2576 = vrcp.pop %v2568
    %v2577 = vrcp.pop %v2569
    %v2578 = vrcp.pop %v2570
    %v2579 = vrcp.pop %v2571
    %v2580 = vrcp.pop %v2572
    %v2581 = vrcp.pop %v2573
    %v2582 = vrcp.pop %v2574
    %v2583 = vrcp.pop %v2575
    %v2584 = vpack.c.bf16 %v2531, %v2529
    %v2585 = vpack.c.bf16 %v2535, %v2533
    %v2586 = vpack.c.bf16 %v2539, %v2537
    %v2587 = vpack.c.bf16 %v2543, %v2541
    %2588 = vrot.lane.b32.xlu0 %v162, 16
    %v2589 = vpop.permute.xlu0 %2588
    %2590 = vrot.lane.b32.xlu0 %v163, 16
    %v2591 = vpop.permute.xlu0 %2590
    %2592 = vrot.lane.b32.xlu0 %v164, 16
    %v2593 = vpop.permute.xlu0 %2592
    %2594 = vrot.lane.b32.xlu0 %v165, 16
    %v2595 = vpop.permute.xlu0 %2594
    %v2601 = vsel %vm84, %v2584, 0
    %v2604 = vsel %vm84, %v2585, 0
    %v2607 = vsel %vm84, %v2586, 0
    %v2610 = vsel %vm84, %v2587, 0
    %2612 = vmatprep.subr.bf16.mxu0 0
    %2613 = vmatpush1.bf16.msra.mxu0 %v2589
    %2614 = vmatprep.subr.bf16.mxu0 0
    %2615 = vmatpush1.bf16.msra.mxu0 %v2591
    %2616 = vmatprep.subr.bf16.mxu0 0
    %2617 = vmatpush1.bf16.msra.mxu0 %v2593
    %2618 = vmatprep.subr.bf16.mxu0 0
    %2619 = vmatpush1.bf16.msra.mxu0 %v2595
    %2620 = vmatprep.subr.bf16.mxu0 0
    %2621 = vmatpush1.bf16.msra.mxu0 0
    %2622 = vmatprep.subr.bf16.mxu0 0
    %2623 = vmatpush1.bf16.msra.mxu0 0
    %2624 = vmatprep.subr.bf16.mxu0 0
    %2625 = vmatpush1.bf16.msra.mxu0 0
    %2626 = vmatprep.subr.bf16.mxu0 0
    %2627 = vmatpush1.bf16.msra.mxu0 0
    %2628 = vmatprep.subr.bf16.mxu0 0
    %2629 = vmatpush1.bf16.msra.mxu0 0
    %2630 = vmatprep.subr.bf16.mxu0 0
    %2631 = vmatpush1.bf16.msra.mxu0 0
    %2632 = vmatprep.subr.bf16.mxu0 0
    %2633 = vmatpush1.bf16.msra.mxu0 0
    %2634 = vmatprep.subr.bf16.mxu0 0
    %2635 = vmatpush1.bf16.msra.mxu0 0
    %2636 = vmatprep.subr.bf16.mxu0 0
    %2637 = vmatpush1.bf16.msra.mxu0 0
    %2638 = vmatprep.subr.bf16.mxu0 0
    %2639 = vmatpush1.bf16.msra.mxu0 0
    %2640 = vmatprep.subr.bf16.mxu0 0
    %2641 = vmatpush1.bf16.msra.mxu0 0
    %2642 = vmatprep.subr.bf16.mxu0 0
    %2643 = vmatpush1.bf16.msra.mxu0 0
    %2644 = vmatprep.mubr.bf16.mxu0 0
    %2645 = vmatmul.mubr.bf16.gmra.mrb[0].mxu0 %v2601
    %v2646 = vpop.f32.mrb[0].mxu0
    %v2647 = vadd.f32 0.0, %v2646
    %v2648 = vpop.f32.mrb[0].mxu0
    %v2649 = vpop.f32.mrb[0].mxu0
    %v2650 = vadd.f32 0.0, %v2649
    %v2651 = vpop.f32.mrb[0].mxu0
    %2652 = vmatprep.mubr.bf16.mxu0 0
    %2653 = vmatmul.mubr.bf16.gmra.mrb[0].mxu0 %v2604
    %v2654 = vpop.f32.mrb[0].mxu0
    %v2655 = vadd.f32 0.0, %v2654
    %v2656 = vpop.f32.mrb[0].mxu0
    %v2657 = vpop.f32.mrb[0].mxu0
    %v2658 = vadd.f32 0.0, %v2657
    %v2659 = vpop.f32.mrb[0].mxu0
    %2660 = vmatprep.mubr.bf16.mxu0 0
    %2661 = vmatmul.mubr.bf16.gmra.mrb[0].mxu0 %v2607
    %v2662 = vpop.f32.mrb[0].mxu0
    %v2663 = vadd.f32 0.0, %v2662
    %v2664 = vpop.f32.mrb[0].mxu0
    %v2665 = vpop.f32.mrb[0].mxu0
    %v2666 = vadd.f32 0.0, %v2665
    %v2667 = vpop.f32.mrb[0].mxu0
    %2668 = vmatprep.mubr.bf16.mxu0 0
    %2669 = vmatmul.mubr.bf16.gmra.mrb[0].mxu0 %v2610
    %v2670 = vpop.f32.mrb[0].mxu0
    %v2671 = vadd.f32 0.0, %v2670
    %v2672 = vpop.f32.mrb[0].mxu0
    %v2673 = vpop.f32.mrb[0].mxu0
    %v2674 = vadd.f32 0.0, %v2673
    %v2675 = vpop.f32.mrb[0].mxu0
    %2676 = vdwg.mxu0
    %v2677 = vmul.f32 %v2647, %v2576
    %v2678 = vmul.f32 %v2650, %v2577
    %v2679 = vmul.f32 %v2655, %v2578
    %v2680 = vmul.f32 %v2658, %v2579
    %v2681 = vmul.f32 %v2663, %v2580
    %v2682 = vmul.f32 %v2666, %v2581
    %v2683 = vmul.f32 %v2671, %v2582
    %v2684 = vmul.f32 %v2674, %v2583
    %2693 = vrot.lane.b32.xlu0 %v2677, 112
    %v2694 = vpop.permute.xlu0 %2693
    %2695 = vrot.lane.b32.xlu0 %v2678, 112
    %v2696 = vpop.permute.xlu0 %2695
    %2697 = vrot.lane.b32.xlu0 %v2679, 112
    %v2698 = vpop.permute.xlu0 %2697
    %2699 = vrot.lane.b32.xlu0 %v2680, 112
    %v2700 = vpop.permute.xlu0 %2699
    %2701 = vrot.lane.b32.xlu0 %v2681, 112
    %v2702 = vpop.permute.xlu0 %2701
    %2703 = vrot.lane.b32.xlu0 %v2682, 112
    %v2704 = vpop.permute.xlu0 %2703
    %2705 = vrot.lane.b32.xlu0 %v2683, 112
    %v2706 = vpop.permute.xlu0 %2705
    %2707 = vrot.lane.b32.xlu0 %v2684, 112
    %v2708 = vpop.permute.xlu0 %2707
    %vm2717 = vcmask 916480
    %v2718 = vsel %vm2717, %v2412, %v2694
    %v2719 = vsel %vm2717, %v2413, %v2696
    %v2720 = vsel %vm2717, %v2414, %v2698
    %v2721 = vsel %vm2717, %v2415, %v2700
    %v2722 = vsel %vm2717, %v2416, %v2702
    %v2723 = vsel %vm2717, %v2417, %v2704
    %v2724 = vsel %vm2717, %v2418, %v2706
    %v2725 = vsel %vm2717, %v2419, %v2708
    %v2727 = vlaneseq
    %v2728 = vshrl.u32 %v2727, 7
    %v2729 = vsub.s32 0, %v2728
    %v2730 = vrot.slane %v319, %v2729
    %v2732 = vadd.f32 %v2718, %v2730
    %v2733 = vadd.f32 %v2719, %v2730
    %v2734 = vadd.f32 %v2720, %v2730
    %v2735 = vadd.f32 %v2721, %v2730
    %v2736 = vadd.f32 %v2722, %v2730
    %v2737 = vadd.f32 %v2723, %v2730
    %v2738 = vadd.f32 %v2724, %v2730
    %v2739 = vadd.f32 %v2725, %v2730
    %v2740 = vmax.f32 %v2732, 0.0
    %v2741 = vmax.f32 %v2733, 0.0
    %v2742 = vmax.f32 %v2734, 0.0
    %v2743 = vmax.f32 %v2735, 0.0
    %v2744 = vmax.f32 %v2736, 0.0
    %v2745 = vmax.f32 %v2737, 0.0
    %v2746 = vmax.f32 %v2738, 0.0
    %v2747 = vmax.f32 %v2739, 0.0
    %2748 = vst [vmem:[#allocation2] sm:$0xff] %v2740
    %2749 = vst [vmem:[#allocation2 + $0x8] sm:$0xff] %v2741
    %2750 = vst [vmem:[#allocation2 + $0x10] sm:$0xff] %v2742
    %2751 = vst [vmem:[#allocation2 + $0x18] sm:$0xff] %v2743
    %2752 = vst [vmem:[#allocation2 + $0x20] sm:$0xff] %v2744
    %2753 = vst [vmem:[#allocation2 + $0x28] sm:$0xff] %v2745
    %2754 = vst [vmem:[#allocation2 + $0x30] sm:$0xff] %v2746
    %2755 = vst [vmem:[#allocation2 + $0x38] sm:$0xff] %v2747
    %v2756 = vpack.c.bf16 %v2741, %v2740
    %v2757 = vpack.c.bf16 %v2743, %v2742
    %v2758 = vpack.c.bf16 %v2745, %v2744
    %v2759 = vpack.c.bf16 %v2747, %v2746
    %v2760 = vld [vmem:[%s5] sm:$0xff]
    %v2761 = vld [vmem:[%s5 + $0x8] sm:$0xff]
    %v2762 = vld [vmem:[%s5 + $0x10] sm:$0xff]
    %v2763 = vld [vmem:[%s5 + $0x18] sm:$0xff]
    %v2764 = vld [vmem:[%s5 + $0x20] sm:$0xff]
    %v2765 = vld [vmem:[%s5 + $0x28] sm:$0xff]
    %v2766 = vld [vmem:[%s5 + $0x30] sm:$0xff]
    %v2767 = vld [vmem:[%s5 + $0x38] sm:$0xff]
    %v2768 = vld [vmem:[%s5 + $0x40] sm:$0xff]
    %v2769 = vld [vmem:[%s5 + $0x48] sm:$0xff]
    %v2770 = vld [vmem:[%s5 + $0x50] sm:$0xff]
    %v2771 = vld [vmem:[%s5 + $0x58] sm:$0xff]
    %v2772 = vld [vmem:[%s5 + $0x60] sm:$0xff]
    %v2773 = vld [vmem:[%s5 + $0x68] sm:$0xff]
    %v2774 = vld [vmem:[%s5 + $0x70] sm:$0xff]
    %v2775 = vld [vmem:[%s5 + $0x78] sm:$0xff]
    %v2776 = vpack.c.bf16 %v2761, %v2760
    %v2777 = vpack.c.bf16 %v2763, %v2762
    %v2778 = vpack.c.bf16 %v2765, %v2764
    %v2779 = vpack.c.bf16 %v2767, %v2766
    %v2780 = vpack.c.bf16 %v2769, %v2768
    %v2781 = vpack.c.bf16 %v2771, %v2770
    %v2782 = vpack.c.bf16 %v2773, %v2772
    %v2783 = vpack.c.bf16 %v2775, %v2774
    %2784 = vmatprep.subr.bf16.mxu0 0
    %2785 = vmatpush1.bf16.msra.mxu0 %v2776
    %2786 = vmatprep.subr.bf16.mxu0 0
    %2787 = vmatpush1.bf16.msra.mxu0 %v2777
    %2788 = vmatprep.subr.bf16.mxu0 0
    %2789 = vmatpush1.bf16.msra.mxu0 %v2778
    %2790 = vmatprep.subr.bf16.mxu0 0
    %2791 = vmatpush1.bf16.msra.mxu0 %v2779
    %2792 = vmatprep.subr.bf16.mxu0 0
    %2793 = vmatpush1.bf16.msra.mxu0 %v2780
    %2794 = vmatprep.subr.bf16.mxu0 0
    %2795 = vmatpush1.bf16.msra.mxu0 %v2781
    %2796 = vmatprep.subr.bf16.mxu0 0
    %2797 = vmatpush1.bf16.msra.mxu0 %v2782
    %2798 = vmatprep.subr.bf16.mxu0 0
    %2799 = vmatpush1.bf16.msra.mxu0 %v2783
    %2800 = vmatprep.subr.bf16.mxu0 0
    %2801 = vmatpush1.bf16.msra.mxu0 0
    %2802 = vmatprep.subr.bf16.mxu0 0
    %2803 = vmatpush1.bf16.msra.mxu0 0
    %2804 = vmatprep.subr.bf16.mxu0 0
    %2805 = vmatpush1.bf16.msra.mxu0 0
    %2806 = vmatprep.subr.bf16.mxu0 0
    %2807 = vmatpush1.bf16.msra.mxu0 0
    %2808 = vmatprep.subr.bf16.mxu0 0
    %2809 = vmatpush1.bf16.msra.mxu0 0
    %2810 = vmatprep.subr.bf16.mxu0 0
    %2811 = vmatpush1.bf16.msra.mxu0 0
    %2812 = vmatprep.subr.bf16.mxu0 0
    %2813 = vmatpush1.bf16.msra.mxu0 0
    %2814 = vmatprep.subr.bf16.mxu0 0
    %2815 = vmatpush1.bf16.msra.mxu0 0
    %2816 = vmatprep.mubr.bf16.mxu0 0
    %2817 = vmatmul.mubr.bf16.gmra.mrb[0].mxu0 %v2756
    %v2818 = vpop.f32.mrb[0].mxu0
    %v2819 = vadd.f32 0.0, %v2818
    %v2820 = vpop.f32.mrb[0].mxu0
    %v2821 = vpop.f32.mrb[0].mxu0
    %v2822 = vadd.f32 0.0, %v2821
    %v2823 = vpop.f32.mrb[0].mxu0
    %2824 = vmatprep.mubr.bf16.mxu0 0
    %2825 = vmatmul.mubr.bf16.gmra.mrb[0].mxu0 %v2757
    %v2826 = vpop.f32.mrb[0].mxu0
    %v2827 = vadd.f32 0.0, %v2826
    %v2828 = vpop.f32.mrb[0].mxu0
    %v2829 = vpop.f32.mrb[0].mxu0
    %v2830 = vadd.f32 0.0, %v2829
    %v2831 = vpop.f32.mrb[0].mxu0
    %2832 = vmatprep.mubr.bf16.mxu0 0
    %2833 = vmatmul.mubr.bf16.gmra.mrb[0].mxu0 %v2758
    %v2834 = vpop.f32.mrb[0].mxu0
    %v2835 = vadd.f32 0.0, %v2834
    %v2836 = vpop.f32.mrb[0].mxu0
    %v2837 = vpop.f32.mrb[0].mxu0
    %v2838 = vadd.f32 0.0, %v2837
    %v2839 = vpop.f32.mrb[0].mxu0
    %2840 = vmatprep.mubr.bf16.mxu0 0
    %2841 = vmatmul.mubr.bf16.gmra.mrb[0].mxu0 %v2759
    %v2842 = vpop.f32.mrb[0].mxu0
    %v2843 = vadd.f32 0.0, %v2842
    %v2844 = vpop.f32.mrb[0].mxu0
    %v2845 = vpop.f32.mrb[0].mxu0
    %v2846 = vadd.f32 0.0, %v2845
    %v2847 = vpop.f32.mrb[0].mxu0
    %2848 = vdwg.mxu0
    %v2849 = vpack.c.bf16 %v2822, %v2819
    %v2850 = vpack.c.bf16 %v2830, %v2827
    %v2851 = vpack.c.bf16 %v2838, %v2835
    %v2852 = vpack.c.bf16 %v2846, %v2843
    %v2853 = vld [vmem:[%s6] sm:$0xff]
    %v2854 = vld [vmem:[%s6 + $0x8] sm:$0xff]
    %v2855 = vld [vmem:[%s6 + $0x10] sm:$0xff]
    %v2856 = vld [vmem:[%s6 + $0x18] sm:$0xff]
    %v2857 = vld [vmem:[%s6 + $0x20] sm:$0xff]
    %v2858 = vld [vmem:[%s6 + $0x28] sm:$0xff]
    %v2859 = vld [vmem:[%s6 + $0x30] sm:$0xff]
    %v2860 = vld [vmem:[%s6 + $0x38] sm:$0xff]
    %v2861 = vld [vmem:[%s6 + $0x40] sm:$0xff]
    %v2862 = vld [vmem:[%s6 + $0x48] sm:$0xff]
    %v2863 = vld [vmem:[%s6 + $0x50] sm:$0xff]
    %v2864 = vld [vmem:[%s6 + $0x58] sm:$0xff]
    %v2865 = vld [vmem:[%s6 + $0x60] sm:$0xff]
    %v2866 = vld [vmem:[%s6 + $0x68] sm:$0xff]
    %v2867 = vld [vmem:[%s6 + $0x70] sm:$0xff]
    %v2868 = vld [vmem:[%s6 + $0x78] sm:$0xff]
    %2869 = vmatprep.subr.mxu0 0.0
    %2870 = vmatpush1.msra.mxu0 %v2853
    %2871 = vmatprep.subr.mxu0 0.0
    %2872 = vmatpush1.msra.mxu0 %v2854
    %2873 = vmatprep.subr.mxu0 0.0
    %2874 = vmatpush1.msra.mxu0 %v2855
    %2875 = vmatprep.subr.mxu0 0.0
    %2876 = vmatpush1.msra.mxu0 %v2856
    %2877 = vmatprep.subr.mxu0 0.0
    %2878 = vmatpush1.msra.mxu0 %v2857
    %2879 = vmatprep.subr.mxu0 0.0
    %2880 = vmatpush1.msra.mxu0 %v2858
    %2881 = vmatprep.subr.mxu0 0.0
    %2882 = vmatpush1.msra.mxu0 %v2859
    %2883 = vmatprep.subr.mxu0 0.0
    %2884 = vmatpush1.msra.mxu0 %v2860
    %2885 = vmatprep.subr.mxu0 0.0
    %2886 = vmatpush1.msra.mxu0 %v2861
    %2887 = vmatprep.subr.mxu0 0.0
    %2888 = vmatpush1.msra.mxu0 %v2862
    %2889 = vmatprep.subr.mxu0 0.0
    %2890 = vmatpush1.msra.mxu0 %v2863
    %2891 = vmatprep.subr.mxu0 0.0
    %2892 = vmatpush1.msra.mxu0 %v2864
    %2893 = vmatprep.subr.mxu0 0.0
    %2894 = vmatpush1.msra.mxu0 %v2865
    %2895 = vmatprep.subr.mxu0 0.0
    %2896 = vmatpush1.msra.mxu0 %v2866
    %2897 = vmatprep.subr.mxu0 0.0
    %2898 = vmatpush1.msra.mxu0 %v2867
    %2899 = vmatprep.subr.mxu0 0.0
    %2900 = vmatpush1.msra.mxu0 %v2868
    %2901 = vmatprep.subr.mxu0 0.0
    %2902 = vmatpush1.msra.mxu0 0.0
    %2903 = vmatprep.subr.mxu0 0.0
    %2904 = vmatpush1.msra.mxu0 0.0
    %2905 = vmatprep.subr.mxu0 0.0
    %2906 = vmatpush1.msra.mxu0 0.0
    %2907 = vmatprep.subr.mxu0 0.0
    %2908 = vmatpush1.msra.mxu0 0.0
    %2909 = vmatprep.subr.mxu0 0.0
    %2910 = vmatpush1.msra.mxu0 0.0
    %2911 = vmatprep.subr.mxu0 0.0
    %2912 = vmatpush1.msra.mxu0 0.0
    %2913 = vmatprep.subr.mxu0 0.0
    %2914 = vmatpush1.msra.mxu0 0.0
    %2915 = vmatprep.subr.mxu0 0.0
    %2916 = vmatpush1.msra.mxu0 0.0
    %2917 = vmatprep.subr.mxu0 0.0
    %2918 = vmatpush1.msra.mxu0 0.0
    %2919 = vmatprep.subr.mxu0 0.0
    %2920 = vmatpush1.msra.mxu0 0.0
    %2921 = vmatprep.subr.mxu0 0.0
    %2922 = vmatpush1.msra.mxu0 0.0
    %2923 = vmatprep.subr.mxu0 0.0
    %2924 = vmatpush1.msra.mxu0 0.0
    %2925 = vmatprep.subr.mxu0 0.0
    %2926 = vmatpush1.msra.mxu0 0.0
    %2927 = vmatprep.subr.mxu0 0.0
    %2928 = vmatpush1.msra.mxu0 0.0
    %2929 = vmatprep.subr.mxu0 0.0
    %2930 = vmatpush1.msra.mxu0 0.0
    %2931 = vmatprep.subr.mxu0 0.0
    %2932 = vmatpush1.msra.mxu0 0.0
    %2933 = vmatprep.mubr.f32.mxu0 0.0
    %2934 = vmatmul.mubr.f32.gmra.mrb[0].mxu0 %v2819
    %v2935 = vpop.f32.mrb[0].mxu0
    %v2936 = vadd.f32 0.0, %v2935
    %v2937 = vpop.f32.mrb[0].mxu0
    %2938 = vmatprep.mubr.f32.mxu0 0.0
    %2939 = vmatmul.mubr.f32.gmra.mrb[0].mxu0 %v2822
    %v2940 = vpop.f32.mrb[0].mxu0
    %v2941 = vadd.f32 0.0, %v2940
    %v2942 = vpop.f32.mrb[0].mxu0
    %2943 = vmatprep.mubr.f32.mxu0 0.0
    %2944 = vmatmul.mubr.f32.gmra.mrb[0].mxu0 %v2827
    %v2945 = vpop.f32.mrb[0].mxu0
    %v2946 = vadd.f32 0.0, %v2945
    %v2947 = vpop.f32.mrb[0].mxu0
    %2948 = vmatprep.mubr.f32.mxu0 0.0
    %2949 = vmatmul.mubr.f32.gmra.mrb[0].mxu0 %v2830
    %v2950 = vpop.f32.mrb[0].mxu0
    %v2951 = vadd.f32 0.0, %v2950
    %v2952 = vpop.f32.mrb[0].mxu0
    %2953 = vmatprep.mubr.f32.mxu0 0.0
    %2954 = vmatmul.mubr.f32.gmra.mrb[0].mxu0 %v2835
    %v2955 = vpop.f32.mrb[0].mxu0
    %v2956 = vadd.f32 0.0, %v2955
    %v2957 = vpop.f32.mrb[0].mxu0
    %2958 = vmatprep.mubr.f32.mxu0 0.0
    %2959 = vmatmul.mubr.f32.gmra.mrb[0].mxu0 %v2838
    %v2960 = vpop.f32.mrb[0].mxu0
    %v2961 = vadd.f32 0.0, %v2960
    %v2962 = vpop.f32.mrb[0].mxu0
    %2963 = vmatprep.mubr.f32.mxu0 0.0
    %2964 = vmatmul.mubr.f32.gmra.mrb[0].mxu0 %v2843
    %v2965 = vpop.f32.mrb[0].mxu0
    %v2966 = vadd.f32 0.0, %v2965
    %v2967 = vpop.f32.mrb[0].mxu0
    %2968 = vmatprep.mubr.f32.mxu0 0.0
    %2969 = vmatmul.mubr.f32.gmra.mrb[0].mxu0 %v2846
    %v2970 = vpop.f32.mrb[0].mxu0
    %v2971 = vadd.f32 0.0, %v2970
    %v2972 = vpop.f32.mrb[0].mxu0
    %2973 = vdwg.mxu0
    %2974 = vxpose.xlu0.b32.start [1/16] %v2936, 128
    %2975 = vxpose.xlu0.b32.cont [2/16] %v2941, 128
    %2976 = vxpose.xlu0.b32.cont [3/16] %v2946, 128
    %2977 = vxpose.xlu0.b32.cont [4/16] %v2951, 128
    %2978 = vxpose.xlu0.b32.cont [5/16] %v2956, 128
    %2979 = vxpose.xlu0.b32.cont [6/16] %v2961, 128
    %2980 = vxpose.xlu0.b32.cont [7/16] %v2966, 128
    %2981 = vxpose.xlu0.b32.cont [8/16] %v2971, 128
    %2982 = vxpose.xlu0.b32.cont [9/16] 0.0, 128
    %2983 = vxpose.xlu0.b32.cont [10/16] 0.0, 128
    %2984 = vxpose.xlu0.b32.cont [11/16] 0.0, 128
    %2985 = vxpose.xlu0.b32.cont [12/16] 0.0, 128
    %2986 = vxpose.xlu0.b32.cont [13/16] 0.0, 128
    %2987 = vxpose.xlu0.b32.cont [14/16] 0.0, 128
    %2988 = vxpose.xlu0.b32.cont [15/16] 0.0, 128
    %2989 = vxpose.xlu0.b32.end [16/16] 0.0, 128
    %v2990 = vpop.trf.xlu0
    %v2991 = vpop.trf.xlu0
    %v2992 = vpop.trf.xlu0
    %v2993 = vpop.trf.xlu0
    %v2994 = vpop.trf.xlu0
    %v2995 = vpop.trf.xlu0
    %v2996 = vpop.trf.xlu0
    %v2997 = vpop.trf.xlu0
    %v2998 = vpop.trf.xlu0
    %v2999 = vpop.trf.xlu0
    %v3000 = vpop.trf.xlu0
    %v3001 = vpop.trf.xlu0
    %v3002 = vpop.trf.xlu0
    %v3003 = vpop.trf.xlu0
    %v3004 = vpop.trf.xlu0
    %v3005 = vpop.trf.xlu0
    %v3006 = vld [vmem:[%s7] sm:$0x1]
    %3008 = vset.pattern.permute.xlu0 8
    %3009 = vperm.xlu0 %3008, %v2936
    %v3010 = vpop.permute.xlu0 %3009
    %3013 = vset.pattern.permute.xlu0 8
    %3014 = vperm.xlu0 %3013, %v2941
    %v3015 = vpop.permute.xlu0 %3014
    %3018 = vset.pattern.permute.xlu0 8
    %3019 = vperm.xlu0 %3018, %v2946
    %v3020 = vpop.permute.xlu0 %3019
    %3023 = vset.pattern.permute.xlu0 8
    %3024 = vperm.xlu0 %3023, %v2951
    %v3025 = vpop.permute.xlu0 %3024
    %3028 = vset.pattern.permute.xlu0 8
    %3029 = vperm.xlu0 %3028, %v2956
    %v3030 = vpop.permute.xlu0 %3029
    %3033 = vset.pattern.permute.xlu0 8
    %3034 = vperm.xlu0 %3033, %v2961
    %v3035 = vpop.permute.xlu0 %3034
    %3038 = vset.pattern.permute.xlu0 8
    %3039 = vperm.xlu0 %3038, %v2966
    %v3040 = vpop.permute.xlu0 %3039
    %3043 = vset.pattern.permute.xlu0 8
    %3044 = vperm.xlu0 %3043, %v2971
    %v3045 = vpop.permute.xlu0 %3044
    %v3047 = vlaneseq
    %v3048 = vshrl.u32 %v3047, 7
    %v3049 = vsub.s32 0, %v3048
    %v3050 = vrot.slane %v2990, %v3049
    %v3051 = vadd.f32 %v3010, %v3050
    %v3052 = vadd.f32 %v3015, %v3050
    %v3053 = vadd.f32 %v3020, %v3050
    %v3054 = vadd.f32 %v3025, %v3050
    %v3055 = vadd.f32 %v3030, %v3050
    %v3056 = vadd.f32 %v3035, %v3050
    %v3057 = vadd.f32 %v3040, %v3050
    %v3058 = vadd.f32 %v3045, %v3050
    %vm3059 = vcmp.gt.f32.partialorder %v3051, 0.0
    %vm3060 = vcmp.gt.f32.partialorder %v3052, 0.0
    %vm3061 = vcmp.gt.f32.partialorder %v3053, 0.0
    %vm3062 = vcmp.gt.f32.partialorder %v3054, 0.0
    %vm3063 = vcmp.gt.f32.partialorder %v3055, 0.0
    %vm3064 = vcmp.gt.f32.partialorder %v3056, 0.0
    %vm3065 = vcmp.gt.f32.partialorder %v3057, 0.0
    %vm3066 = vcmp.gt.f32.partialorder %v3058, 0.0
    %v3067 = vmul.f32 %v3051, 0.2
    %v3068 = vmul.f32 %v3052, 0.2
    %v3069 = vmul.f32 %v3053, 0.2
    %v3070 = vmul.f32 %v3054, 0.2
    %v3071 = vmul.f32 %v3055, 0.2
    %v3072 = vmul.f32 %v3056, 0.2
    %v3073 = vmul.f32 %v3057, 0.2
    %v3074 = vmul.f32 %v3058, 0.2
    %v3075 = vsel %vm3059, %v3051, %v3067
    %v3076 = vsel %vm3060, %v3052, %v3068
    %v3077 = vsel %vm3061, %v3053, %v3069
    %v3078 = vsel %vm3062, %v3054, %v3070
    %v3079 = vsel %vm3063, %v3055, %v3071
    %v3080 = vsel %vm3064, %v3056, %v3072
    %v3081 = vsel %vm3065, %v3057, %v3073
    %v3082 = vsel %vm3066, %v3058, %v3074
    %v3083 = vsel %vm52, %v3075, -1e+30
    %v3084 = vsel %vm53, %v3076, -1e+30
    %v3085 = vsel %vm54, %v3077, -1e+30
    %v3086 = vsel %vm55, %v3078, -1e+30
    %v3087 = vsel %vm56, %v3079, -1e+30
    %v3088 = vsel %vm57, %v3080, -1e+30
    %v3089 = vsel %vm58, %v3081, -1e+30
    %v3090 = vsel %vm59, %v3082, -1e+30
    %v3091 = vsel %vm84, %v3083, -inf
    %3092 = vmax.xlane.f32.xlu0 %v3091
    %v3093 = vpop.xlane.xlu0 %3092
    %v3094 = vsel %vm84, %v3084, -inf
    %3095 = vmax.xlane.f32.xlu0 %v3094
    %v3096 = vpop.xlane.xlu0 %3095
    %v3097 = vsel %vm84, %v3085, -inf
    %3098 = vmax.xlane.f32.xlu0 %v3097
    %v3099 = vpop.xlane.xlu0 %3098
    %v3100 = vsel %vm84, %v3086, -inf
    %3101 = vmax.xlane.f32.xlu0 %v3100
    %v3102 = vpop.xlane.xlu0 %3101
    %v3103 = vsel %vm84, %v3087, -inf
    %3104 = vmax.xlane.f32.xlu0 %v3103
    %v3105 = vpop.xlane.xlu0 %3104
    %v3106 = vsel %vm84, %v3088, -inf
    %3107 = vmax.xlane.f32.xlu0 %v3106
    %v3108 = vpop.xlane.xlu0 %3107
    %v3109 = vsel %vm84, %v3089, -inf
    %3110 = vmax.xlane.f32.xlu0 %v3109
    %v3111 = vpop.xlane.xlu0 %3110
    %v3112 = vsel %vm84, %v3090, -inf
    %3113 = vmax.xlane.f32.xlu0 %v3112
    %v3114 = vpop.xlane.xlu0 %3113
    %v3115 = vsub.f32 %v3083, %v3093
    %v3116 = vsub.f32 %v3084, %v3096
    %v3117 = vsub.f32 %v3085, %v3099
    %v3118 = vsub.f32 %v3086, %v3102
    %v3119 = vsub.f32 %v3087, %v3105
    %v3120 = vsub.f32 %v3088, %v3108
    %v3121 = vsub.f32 %v3089, %v3111
    %v3122 = vsub.f32 %v3090, %v3114
    %v3123 = vmul.f32 %v3115, 1.442695
    %v3124 = vpow.pop %v3123
    %v3125 = vmul.f32 %v3116, 1.442695
    %v3126 = vpow.pop %v3125
    %v3127 = vmul.f32 %v3117, 1.442695
    %v3128 = vpow.pop %v3127
    %v3129 = vmul.f32 %v3118, 1.442695
    %v3130 = vpow.pop %v3129
    %v3131 = vmul.f32 %v3119, 1.442695
    %v3132 = vpow.pop %v3131
    %v3133 = vmul.f32 %v3120, 1.442695
    %v3134 = vpow.pop %v3133
    %v3135 = vmul.f32 %v3121, 1.442695
    %v3136 = vpow.pop %v3135
    %v3137 = vmul.f32 %v3122, 1.442695
    %v3138 = vpow.pop %v3137
    %v3139 = vsel %vm84, %v3124, 0.0
    %3140 = vadd.xlane.f32.xlu0 %v3139
    %v3141 = vpop.xlane.xlu0 %3140
    %v3142 = vsel %vm84, %v3126, 0.0
    %3143 = vadd.xlane.f32.xlu0 %v3142
    %v3144 = vpop.xlane.xlu0 %3143
    %v3145 = vsel %vm84, %v3128, 0.0
    %3146 = vadd.xlane.f32.xlu0 %v3145
    %v3147 = vpop.xlane.xlu0 %3146
    %v3148 = vsel %vm84, %v3130, 0.0
    %3149 = vadd.xlane.f32.xlu0 %v3148
    %v3150 = vpop.xlane.xlu0 %3149
    %v3151 = vsel %vm84, %v3132, 0.0
    %3152 = vadd.xlane.f32.xlu0 %v3151
    %v3153 = vpop.xlane.xlu0 %3152
    %v3154 = vsel %vm84, %v3134, 0.0
    %3155 = vadd.xlane.f32.xlu0 %v3154
    %v3156 = vpop.xlane.xlu0 %3155
    %v3157 = vsel %vm84, %v3136, 0.0
    %3158 = vadd.xlane.f32.xlu0 %v3157
    %v3159 = vpop.xlane.xlu0 %3158
    %v3160 = vsel %vm84, %v3138, 0.0
    %3161 = vadd.xlane.f32.xlu0 %v3160
    %v3162 = vpop.xlane.xlu0 %3161
    %v3163 = vmax.f32 %v3141, 1e-20
    %v3164 = vmax.f32 %v3144, 1e-20
    %v3165 = vmax.f32 %v3147, 1e-20
    %v3166 = vmax.f32 %v3150, 1e-20
    %v3167 = vmax.f32 %v3153, 1e-20
    %v3168 = vmax.f32 %v3156, 1e-20
    %v3169 = vmax.f32 %v3159, 1e-20
    %v3170 = vmax.f32 %v3162, 1e-20
    %v3171 = vrcp.pop %v3163
    %v3172 = vrcp.pop %v3164
    %v3173 = vrcp.pop %v3165
    %v3174 = vrcp.pop %v3166
    %v3175 = vrcp.pop %v3167
    %v3176 = vrcp.pop %v3168
    %v3177 = vrcp.pop %v3169
    %v3178 = vrcp.pop %v3170
    %v3179 = vpack.c.bf16 %v3126, %v3124
    %v3180 = vpack.c.bf16 %v3130, %v3128
    %v3181 = vpack.c.bf16 %v3134, %v3132
    %v3182 = vpack.c.bf16 %v3138, %v3136
    %v3184 = vsel %vm84, %v3179, 0
    %v3187 = vsel %vm84, %v3180, 0
    %v3190 = vsel %vm84, %v3181, 0
    %v3193 = vsel %vm84, %v3182, 0
    %3195 = vmatprep.subr.bf16.mxu0 0
    %3196 = vmatpush1.bf16.msra.mxu0 %v2849
    %3197 = vmatprep.subr.bf16.mxu0 0
    %3198 = vmatpush1.bf16.msra.mxu0 %v2850
    %3199 = vmatprep.subr.bf16.mxu0 0
    %3200 = vmatpush1.bf16.msra.mxu0 %v2851
    %3201 = vmatprep.subr.bf16.mxu0 0
    %3202 = vmatpush1.bf16.msra.mxu0 %v2852
    %3203 = vmatprep.subr.bf16.mxu0 0
    %3204 = vmatpush1.bf16.msra.mxu0 0
    %3205 = vmatprep.subr.bf16.mxu0 0
    %3206 = vmatpush1.bf16.msra.mxu0 0
    %3207 = vmatprep.subr.bf16.mxu0 0
    %3208 = vmatpush1.bf16.msra.mxu0 0
    %3209 = vmatprep.subr.bf16.mxu0 0
    %3210 = vmatpush1.bf16.msra.mxu0 0
    %3211 = vmatprep.subr.bf16.mxu0 0
    %3212 = vmatpush1.bf16.msra.mxu0 0
    %3213 = vmatprep.subr.bf16.mxu0 0
    %3214 = vmatpush1.bf16.msra.mxu0 0
    %3215 = vmatprep.subr.bf16.mxu0 0
    %3216 = vmatpush1.bf16.msra.mxu0 0
    %3217 = vmatprep.subr.bf16.mxu0 0
    %3218 = vmatpush1.bf16.msra.mxu0 0
    %3219 = vmatprep.subr.bf16.mxu0 0
    %3220 = vmatpush1.bf16.msra.mxu0 0
    %3221 = vmatprep.subr.bf16.mxu0 0
    %3222 = vmatpush1.bf16.msra.mxu0 0
    %3223 = vmatprep.subr.bf16.mxu0 0
    %3224 = vmatpush1.bf16.msra.mxu0 0
    %3225 = vmatprep.subr.bf16.mxu0 0
    %3226 = vmatpush1.bf16.msra.mxu0 0
    %3227 = vmatprep.mubr.bf16.mxu0 0
    %3228 = vmatmul.mubr.bf16.gmra.mrb[0].mxu0 %v3184
    %v3229 = vpop.f32.mrb[0].mxu0
    %v3230 = vadd.f32 0.0, %v3229
    %v3231 = vpop.f32.mrb[0].mxu0
    %v3232 = vpop.f32.mrb[0].mxu0
    %v3233 = vadd.f32 0.0, %v3232
    %v3234 = vpop.f32.mrb[0].mxu0
    %3235 = vmatprep.mubr.bf16.mxu0 0
    %3236 = vmatmul.mubr.bf16.gmra.mrb[0].mxu0 %v3187
    %v3237 = vpop.f32.mrb[0].mxu0
    %v3238 = vadd.f32 0.0, %v3237
    %v3239 = vpop.f32.mrb[0].mxu0
    %v3240 = vpop.f32.mrb[0].mxu0
    %v3241 = vadd.f32 0.0, %v3240
    %v3242 = vpop.f32.mrb[0].mxu0
    %3243 = vmatprep.mubr.bf16.mxu0 0
    %3244 = vmatmul.mubr.bf16.gmra.mrb[0].mxu0 %v3190
    %v3245 = vpop.f32.mrb[0].mxu0
    %v3246 = vadd.f32 0.0, %v3245
    %v3247 = vpop.f32.mrb[0].mxu0
    %v3248 = vpop.f32.mrb[0].mxu0
    %v3249 = vadd.f32 0.0, %v3248
    %v3250 = vpop.f32.mrb[0].mxu0
    %3251 = vmatprep.mubr.bf16.mxu0 0
    %3252 = vmatmul.mubr.bf16.gmra.mrb[0].mxu0 %v3193
    %v3253 = vpop.f32.mrb[0].mxu0
    %v3254 = vadd.f32 0.0, %v3253
    %v3255 = vpop.f32.mrb[0].mxu0
    %v3256 = vpop.f32.mrb[0].mxu0
    %v3257 = vadd.f32 0.0, %v3256
    %v3258 = vpop.f32.mrb[0].mxu0
    %3259 = vdwg.mxu0
    %v3260 = vmul.f32 %v3230, %v3171
    %v3261 = vmul.f32 %v3233, %v3172
    %v3262 = vmul.f32 %v3238, %v3173
    %v3263 = vmul.f32 %v3241, %v3174
    %v3264 = vmul.f32 %v3246, %v3175
    %v3265 = vmul.f32 %v3249, %v3176
    %v3266 = vmul.f32 %v3254, %v3177
    %v3267 = vmul.f32 %v3257, %v3178
    %3268 = vset.pattern.permute.xlu0 9
    %3269 = vperm.xlu0 %3268, %v2936
    %v3270 = vpop.permute.xlu0 %3269
    %3272 = vset.pattern.permute.xlu0 9
    %3273 = vperm.xlu0 %3272, %v2941
    %v3274 = vpop.permute.xlu0 %3273
    %3276 = vset.pattern.permute.xlu0 9
    %3277 = vperm.xlu0 %3276, %v2946
    %v3278 = vpop.permute.xlu0 %3277
    %3280 = vset.pattern.permute.xlu0 9
    %3281 = vperm.xlu0 %3280, %v2951
    %v3282 = vpop.permute.xlu0 %3281
    %3284 = vset.pattern.permute.xlu0 9
    %3285 = vperm.xlu0 %3284, %v2956
    %v3286 = vpop.permute.xlu0 %3285
    %3288 = vset.pattern.permute.xlu0 9
    %3289 = vperm.xlu0 %3288, %v2961
    %v3290 = vpop.permute.xlu0 %3289
    %3292 = vset.pattern.permute.xlu0 9
    %3293 = vperm.xlu0 %3292, %v2966
    %v3294 = vpop.permute.xlu0 %3293
    %3296 = vset.pattern.permute.xlu0 9
    %3297 = vperm.xlu0 %3296, %v2971
    %v3298 = vpop.permute.xlu0 %3297
    %v3300 = vlaneseq
    %v3301 = vshrl.u32 %v3300, 7
    %v3302 = vsub.s32 1, %v3301
    %v3303 = vrot.slane %v2990, %v3302
    %v3304 = vadd.f32 %v3270, %v3303
    %v3305 = vadd.f32 %v3274, %v3303
    %v3306 = vadd.f32 %v3278, %v3303
    %v3307 = vadd.f32 %v3282, %v3303
    %v3308 = vadd.f32 %v3286, %v3303
    %v3309 = vadd.f32 %v3290, %v3303
    %v3310 = vadd.f32 %v3294, %v3303
    %v3311 = vadd.f32 %v3298, %v3303
    %vm3312 = vcmp.gt.f32.partialorder %v3304, 0.0
    %vm3313 = vcmp.gt.f32.partialorder %v3305, 0.0
    %vm3314 = vcmp.gt.f32.partialorder %v3306, 0.0
    %vm3315 = vcmp.gt.f32.partialorder %v3307, 0.0
    %vm3316 = vcmp.gt.f32.partialorder %v3308, 0.0
    %vm3317 = vcmp.gt.f32.partialorder %v3309, 0.0
    %vm3318 = vcmp.gt.f32.partialorder %v3310, 0.0
    %vm3319 = vcmp.gt.f32.partialorder %v3311, 0.0
    %v3320 = vmul.f32 %v3304, 0.2
    %v3321 = vmul.f32 %v3305, 0.2
    %v3322 = vmul.f32 %v3306, 0.2
    %v3323 = vmul.f32 %v3307, 0.2
    %v3324 = vmul.f32 %v3308, 0.2
    %v3325 = vmul.f32 %v3309, 0.2
    %v3326 = vmul.f32 %v3310, 0.2
    %v3327 = vmul.f32 %v3311, 0.2
    %v3328 = vsel %vm3312, %v3304, %v3320
    %v3329 = vsel %vm3313, %v3305, %v3321
    %v3330 = vsel %vm3314, %v3306, %v3322
    %v3331 = vsel %vm3315, %v3307, %v3323
    %v3332 = vsel %vm3316, %v3308, %v3324
    %v3333 = vsel %vm3317, %v3309, %v3325
    %v3334 = vsel %vm3318, %v3310, %v3326
    %v3335 = vsel %vm3319, %v3311, %v3327
    %v3336 = vsel %vm52, %v3328, -1e+30
    %v3337 = vsel %vm53, %v3329, -1e+30
    %v3338 = vsel %vm54, %v3330, -1e+30
    %v3339 = vsel %vm55, %v3331, -1e+30
    %v3340 = vsel %vm56, %v3332, -1e+30
    %v3341 = vsel %vm57, %v3333, -1e+30
    %v3342 = vsel %vm58, %v3334, -1e+30
    %v3343 = vsel %vm59, %v3335, -1e+30
    %v3344 = vsel %vm84, %v3336, -inf
    %3345 = vmax.xlane.f32.xlu0 %v3344
    %v3346 = vpop.xlane.xlu0 %3345
    %v3347 = vsel %vm84, %v3337, -inf
    %3348 = vmax.xlane.f32.xlu0 %v3347
    %v3349 = vpop.xlane.xlu0 %3348
    %v3350 = vsel %vm84, %v3338, -inf
    %3351 = vmax.xlane.f32.xlu0 %v3350
    %v3352 = vpop.xlane.xlu0 %3351
    %v3353 = vsel %vm84, %v3339, -inf
    %3354 = vmax.xlane.f32.xlu0 %v3353
    %v3355 = vpop.xlane.xlu0 %3354
    %v3356 = vsel %vm84, %v3340, -inf
    %3357 = vmax.xlane.f32.xlu0 %v3356
    %v3358 = vpop.xlane.xlu0 %3357
    %v3359 = vsel %vm84, %v3341, -inf
    %3360 = vmax.xlane.f32.xlu0 %v3359
    %v3361 = vpop.xlane.xlu0 %3360
    %v3362 = vsel %vm84, %v3342, -inf
    %3363 = vmax.xlane.f32.xlu0 %v3362
    %v3364 = vpop.xlane.xlu0 %3363
    %v3365 = vsel %vm84, %v3343, -inf
    %3366 = vmax.xlane.f32.xlu0 %v3365
    %v3367 = vpop.xlane.xlu0 %3366
    %v3368 = vsub.f32 %v3336, %v3346
    %v3369 = vsub.f32 %v3337, %v3349
    %v3370 = vsub.f32 %v3338, %v3352
    %v3371 = vsub.f32 %v3339, %v3355
    %v3372 = vsub.f32 %v3340, %v3358
    %v3373 = vsub.f32 %v3341, %v3361
    %v3374 = vsub.f32 %v3342, %v3364
    %v3375 = vsub.f32 %v3343, %v3367
    %v3376 = vmul.f32 %v3368, 1.442695
    %v3377 = vpow.pop %v3376
    %v3378 = vmul.f32 %v3369, 1.442695
    %v3379 = vpow.pop %v3378
    %v3380 = vmul.f32 %v3370, 1.442695
    %v3381 = vpow.pop %v3380
    %v3382 = vmul.f32 %v3371, 1.442695
    %v3383 = vpow.pop %v3382
    %v3384 = vmul.f32 %v3372, 1.442695
    %v3385 = vpow.pop %v3384
    %v3386 = vmul.f32 %v3373, 1.442695
    %v3387 = vpow.pop %v3386
    %v3388 = vmul.f32 %v3374, 1.442695
    %v3389 = vpow.pop %v3388
    %v3390 = vmul.f32 %v3375, 1.442695
    %v3391 = vpow.pop %v3390
    %v3392 = vsel %vm84, %v3377, 0.0
    %3393 = vadd.xlane.f32.xlu0 %v3392
    %v3394 = vpop.xlane.xlu0 %3393
    %v3395 = vsel %vm84, %v3379, 0.0
    %3396 = vadd.xlane.f32.xlu0 %v3395
    %v3397 = vpop.xlane.xlu0 %3396
    %v3398 = vsel %vm84, %v3381, 0.0
    %3399 = vadd.xlane.f32.xlu0 %v3398
    %v3400 = vpop.xlane.xlu0 %3399
    %v3401 = vsel %vm84, %v3383, 0.0
    %3402 = vadd.xlane.f32.xlu0 %v3401
    %v3403 = vpop.xlane.xlu0 %3402
    %v3404 = vsel %vm84, %v3385, 0.0
    %3405 = vadd.xlane.f32.xlu0 %v3404
    %v3406 = vpop.xlane.xlu0 %3405
    %v3407 = vsel %vm84, %v3387, 0.0
    %3408 = vadd.xlane.f32.xlu0 %v3407
    %v3409 = vpop.xlane.xlu0 %3408
    %v3410 = vsel %vm84, %v3389, 0.0
    %3411 = vadd.xlane.f32.xlu0 %v3410
    %v3412 = vpop.xlane.xlu0 %3411
    %v3413 = vsel %vm84, %v3391, 0.0
    %3414 = vadd.xlane.f32.xlu0 %v3413
    %v3415 = vpop.xlane.xlu0 %3414
    %v3416 = vmax.f32 %v3394, 1e-20
    %v3417 = vmax.f32 %v3397, 1e-20
    %v3418 = vmax.f32 %v3400, 1e-20
    %v3419 = vmax.f32 %v3403, 1e-20
    %v3420 = vmax.f32 %v3406, 1e-20
    %v3421 = vmax.f32 %v3409, 1e-20
    %v3422 = vmax.f32 %v3412, 1e-20
    %v3423 = vmax.f32 %v3415, 1e-20
    %v3424 = vrcp.pop %v3416
    %v3425 = vrcp.pop %v3417
    %v3426 = vrcp.pop %v3418
    %v3427 = vrcp.pop %v3419
    %v3428 = vrcp.pop %v3420
    %v3429 = vrcp.pop %v3421
    %v3430 = vrcp.pop %v3422
    %v3431 = vrcp.pop %v3423
    %v3432 = vpack.c.bf16 %v3379, %v3377
    %v3433 = vpack.c.bf16 %v3383, %v3381
    %v3434 = vpack.c.bf16 %v3387, %v3385
    %v3435 = vpack.c.bf16 %v3391, %v3389
    %3440 = vrot.lane.b32.xlu0 %v2849, 112
    %v3441 = vpop.permute.xlu0 %3440
    %3442 = vrot.lane.b32.xlu0 %v2850, 112
    %v3443 = vpop.permute.xlu0 %3442
    %3444 = vrot.lane.b32.xlu0 %v2851, 112
    %v3445 = vpop.permute.xlu0 %3444
    %3446 = vrot.lane.b32.xlu0 %v2852, 112
    %v3447 = vpop.permute.xlu0 %3446
    %v3453 = vsel %vm84, %v3432, 0
    %v3456 = vsel %vm84, %v3433, 0
    %v3459 = vsel %vm84, %v3434, 0
    %v3462 = vsel %vm84, %v3435, 0
    %3464 = vmatprep.subr.bf16.mxu0 0
    %3465 = vmatpush1.bf16.msra.mxu0 %v3441
    %3466 = vmatprep.subr.bf16.mxu0 0
    %3467 = vmatpush1.bf16.msra.mxu0 %v3443
    %3468 = vmatprep.subr.bf16.mxu0 0
    %3469 = vmatpush1.bf16.msra.mxu0 %v3445
    %3470 = vmatprep.subr.bf16.mxu0 0
    %3471 = vmatpush1.bf16.msra.mxu0 %v3447
    %3472 = vmatprep.subr.bf16.mxu0 0
    %3473 = vmatpush1.bf16.msra.mxu0 0
    %3474 = vmatprep.subr.bf16.mxu0 0
    %3475 = vmatpush1.bf16.msra.mxu0 0
    %3476 = vmatprep.subr.bf16.mxu0 0
    %3477 = vmatpush1.bf16.msra.mxu0 0
    %3478 = vmatprep.subr.bf16.mxu0 0
    %3479 = vmatpush1.bf16.msra.mxu0 0
    %3480 = vmatprep.subr.bf16.mxu0 0
    %3481 = vmatpush1.bf16.msra.mxu0 0
    %3482 = vmatprep.subr.bf16.mxu0 0
    %3483 = vmatpush1.bf16.msra.mxu0 0
    %3484 = vmatprep.subr.bf16.mxu0 0
    %3485 = vmatpush1.bf16.msra.mxu0 0
    %3486 = vmatprep.subr.bf16.mxu0 0
    %3487 = vmatpush1.bf16.msra.mxu0 0
    %3488 = vmatprep.subr.bf16.mxu0 0
    %3489 = vmatpush1.bf16.msra.mxu0 0
    %3490 = vmatprep.subr.bf16.mxu0 0
    %3491 = vmatpush1.bf16.msra.mxu0 0
    %3492 = vmatprep.subr.bf16.mxu0 0
    %3493 = vmatpush1.bf16.msra.mxu0 0
    %3494 = vmatprep.subr.bf16.mxu0 0
    %3495 = vmatpush1.bf16.msra.mxu0 0
    %3496 = vmatprep.mubr.bf16.mxu0 0
    %3497 = vmatmul.mubr.bf16.gmra.mrb[0].mxu0 %v3453
    %v3498 = vpop.f32.mrb[0].mxu0
    %v3499 = vadd.f32 0.0, %v3498
    %v3500 = vpop.f32.mrb[0].mxu0
    %v3501 = vpop.f32.mrb[0].mxu0
    %v3502 = vadd.f32 0.0, %v3501
    %v3503 = vpop.f32.mrb[0].mxu0
    %3504 = vmatprep.mubr.bf16.mxu0 0
    %3505 = vmatmul.mubr.bf16.gmra.mrb[0].mxu0 %v3456
    %v3506 = vpop.f32.mrb[0].mxu0
    %v3507 = vadd.f32 0.0, %v3506
    %v3508 = vpop.f32.mrb[0].mxu0
    %v3509 = vpop.f32.mrb[0].mxu0
    %v3510 = vadd.f32 0.0, %v3509
    %v3511 = vpop.f32.mrb[0].mxu0
    %3512 = vmatprep.mubr.bf16.mxu0 0
    %3513 = vmatmul.mubr.bf16.gmra.mrb[0].mxu0 %v3459
    %v3514 = vpop.f32.mrb[0].mxu0
    %v3515 = vadd.f32 0.0, %v3514
    %v3516 = vpop.f32.mrb[0].mxu0
    %v3517 = vpop.f32.mrb[0].mxu0
    %v3518 = vadd.f32 0.0, %v3517
    %v3519 = vpop.f32.mrb[0].mxu0
    %3520 = vmatprep.mubr.bf16.mxu0 0
    %3521 = vmatmul.mubr.bf16.gmra.mrb[0].mxu0 %v3462
    %v3522 = vpop.f32.mrb[0].mxu0
    %v3523 = vadd.f32 0.0, %v3522
    %v3524 = vpop.f32.mrb[0].mxu0
    %v3525 = vpop.f32.mrb[0].mxu0
    %v3526 = vadd.f32 0.0, %v3525
    %v3527 = vpop.f32.mrb[0].mxu0
    %3528 = vdwg.mxu0
    %v3529 = vmul.f32 %v3499, %v3424
    %v3530 = vmul.f32 %v3502, %v3425
    %v3531 = vmul.f32 %v3507, %v3426
    %v3532 = vmul.f32 %v3510, %v3427
    %v3533 = vmul.f32 %v3515, %v3428
    %v3534 = vmul.f32 %v3518, %v3429
    %v3535 = vmul.f32 %v3523, %v3430
    %v3536 = vmul.f32 %v3526, %v3431
    %3545 = vrot.lane.b32.xlu0 %v3529, 16
    %v3546 = vpop.permute.xlu0 %3545
    %3547 = vrot.lane.b32.xlu0 %v3530, 16
    %v3548 = vpop.permute.xlu0 %3547
    %3549 = vrot.lane.b32.xlu0 %v3531, 16
    %v3550 = vpop.permute.xlu0 %3549
    %3551 = vrot.lane.b32.xlu0 %v3532, 16
    %v3552 = vpop.permute.xlu0 %3551
    %3553 = vrot.lane.b32.xlu0 %v3533, 16
    %v3554 = vpop.permute.xlu0 %3553
    %3555 = vrot.lane.b32.xlu0 %v3534, 16
    %v3556 = vpop.permute.xlu0 %3555
    %3557 = vrot.lane.b32.xlu0 %v3535, 16
    %v3558 = vpop.permute.xlu0 %3557
    %3559 = vrot.lane.b32.xlu0 %v3536, 16
    %v3560 = vpop.permute.xlu0 %3559
    %v3569 = vsel %vm882, %v3260, %v3546
    %v3570 = vsel %vm882, %v3261, %v3548
    %v3571 = vsel %vm882, %v3262, %v3550
    %v3572 = vsel %vm882, %v3263, %v3552
    %v3573 = vsel %vm882, %v3264, %v3554
    %v3574 = vsel %vm882, %v3265, %v3556
    %v3575 = vsel %vm882, %v3266, %v3558
    %v3576 = vsel %vm882, %v3267, %v3560
    %3577 = vset.pattern.permute.xlu0 10
    %3578 = vperm.xlu0 %3577, %v2936
    %v3579 = vpop.permute.xlu0 %3578
    %3581 = vset.pattern.permute.xlu0 10
    %3582 = vperm.xlu0 %3581, %v2941
    %v3583 = vpop.permute.xlu0 %3582
    %3585 = vset.pattern.permute.xlu0 10
    %3586 = vperm.xlu0 %3585, %v2946
    %v3587 = vpop.permute.xlu0 %3586
    %3589 = vset.pattern.permute.xlu0 10
    %3590 = vperm.xlu0 %3589, %v2951
    %v3591 = vpop.permute.xlu0 %3590
    %3593 = vset.pattern.permute.xlu0 10
    %3594 = vperm.xlu0 %3593, %v2956
    %v3595 = vpop.permute.xlu0 %3594
    %3597 = vset.pattern.permute.xlu0 10
    %3598 = vperm.xlu0 %3597, %v2961
    %v3599 = vpop.permute.xlu0 %3598
    %3601 = vset.pattern.permute.xlu0 10
    %3602 = vperm.xlu0 %3601, %v2966
    %v3603 = vpop.permute.xlu0 %3602
    %3605 = vset.pattern.permute.xlu0 10
    %3606 = vperm.xlu0 %3605, %v2971
    %v3607 = vpop.permute.xlu0 %3606
    %v3609 = vlaneseq
    %v3610 = vshrl.u32 %v3609, 7
    %v3611 = vsub.s32 2, %v3610
    %v3612 = vrot.slane %v2990, %v3611
    %v3613 = vadd.f32 %v3579, %v3612
    %v3614 = vadd.f32 %v3583, %v3612
    %v3615 = vadd.f32 %v3587, %v3612
    %v3616 = vadd.f32 %v3591, %v3612
    %v3617 = vadd.f32 %v3595, %v3612
    %v3618 = vadd.f32 %v3599, %v3612
    %v3619 = vadd.f32 %v3603, %v3612
    %v3620 = vadd.f32 %v3607, %v3612
    %vm3621 = vcmp.gt.f32.partialorder %v3613, 0.0
    %vm3622 = vcmp.gt.f32.partialorder %v3614, 0.0
    %vm3623 = vcmp.gt.f32.partialorder %v3615, 0.0
    %vm3624 = vcmp.gt.f32.partialorder %v3616, 0.0
    %vm3625 = vcmp.gt.f32.partialorder %v3617, 0.0
    %vm3626 = vcmp.gt.f32.partialorder %v3618, 0.0
    %vm3627 = vcmp.gt.f32.partialorder %v3619, 0.0
    %vm3628 = vcmp.gt.f32.partialorder %v3620, 0.0
    %v3629 = vmul.f32 %v3613, 0.2
    %v3630 = vmul.f32 %v3614, 0.2
    %v3631 = vmul.f32 %v3615, 0.2
    %v3632 = vmul.f32 %v3616, 0.2
    %v3633 = vmul.f32 %v3617, 0.2
    %v3634 = vmul.f32 %v3618, 0.2
    %v3635 = vmul.f32 %v3619, 0.2
    %v3636 = vmul.f32 %v3620, 0.2
    %v3637 = vsel %vm3621, %v3613, %v3629
    %v3638 = vsel %vm3622, %v3614, %v3630
    %v3639 = vsel %vm3623, %v3615, %v3631
    %v3640 = vsel %vm3624, %v3616, %v3632
    %v3641 = vsel %vm3625, %v3617, %v3633
    %v3642 = vsel %vm3626, %v3618, %v3634
    %v3643 = vsel %vm3627, %v3619, %v3635
    %v3644 = vsel %vm3628, %v3620, %v3636
    %v3645 = vsel %vm52, %v3637, -1e+30
    %v3646 = vsel %vm53, %v3638, -1e+30
    %v3647 = vsel %vm54, %v3639, -1e+30
    %v3648 = vsel %vm55, %v3640, -1e+30
    %v3649 = vsel %vm56, %v3641, -1e+30
    %v3650 = vsel %vm57, %v3642, -1e+30
    %v3651 = vsel %vm58, %v3643, -1e+30
    %v3652 = vsel %vm59, %v3644, -1e+30
    %v3653 = vsel %vm84, %v3645, -inf
    %3654 = vmax.xlane.f32.xlu0 %v3653
    %v3655 = vpop.xlane.xlu0 %3654
    %v3656 = vsel %vm84, %v3646, -inf
    %3657 = vmax.xlane.f32.xlu0 %v3656
    %v3658 = vpop.xlane.xlu0 %3657
    %v3659 = vsel %vm84, %v3647, -inf
    %3660 = vmax.xlane.f32.xlu0 %v3659
    %v3661 = vpop.xlane.xlu0 %3660
    %v3662 = vsel %vm84, %v3648, -inf
    %3663 = vmax.xlane.f32.xlu0 %v3662
    %v3664 = vpop.xlane.xlu0 %3663
    %v3665 = vsel %vm84, %v3649, -inf
    %3666 = vmax.xlane.f32.xlu0 %v3665
    %v3667 = vpop.xlane.xlu0 %3666
    %v3668 = vsel %vm84, %v3650, -inf
    %3669 = vmax.xlane.f32.xlu0 %v3668
    %v3670 = vpop.xlane.xlu0 %3669
    %v3671 = vsel %vm84, %v3651, -inf
    %3672 = vmax.xlane.f32.xlu0 %v3671
    %v3673 = vpop.xlane.xlu0 %3672
    %v3674 = vsel %vm84, %v3652, -inf
    %3675 = vmax.xlane.f32.xlu0 %v3674
    %v3676 = vpop.xlane.xlu0 %3675
    %v3677 = vsub.f32 %v3645, %v3655
    %v3678 = vsub.f32 %v3646, %v3658
    %v3679 = vsub.f32 %v3647, %v3661
    %v3680 = vsub.f32 %v3648, %v3664
    %v3681 = vsub.f32 %v3649, %v3667
    %v3682 = vsub.f32 %v3650, %v3670
    %v3683 = vsub.f32 %v3651, %v3673
    %v3684 = vsub.f32 %v3652, %v3676
    %v3685 = vmul.f32 %v3677, 1.442695
    %v3686 = vpow.pop %v3685
    %v3687 = vmul.f32 %v3678, 1.442695
    %v3688 = vpow.pop %v3687
    %v3689 = vmul.f32 %v3679, 1.442695
    %v3690 = vpow.pop %v3689
    %v3691 = vmul.f32 %v3680, 1.442695
    %v3692 = vpow.pop %v3691
    %v3693 = vmul.f32 %v3681, 1.442695
    %v3694 = vpow.pop %v3693
    %v3695 = vmul.f32 %v3682, 1.442695
    %v3696 = vpow.pop %v3695
    %v3697 = vmul.f32 %v3683, 1.442695
    %v3698 = vpow.pop %v3697
    %v3699 = vmul.f32 %v3684, 1.442695
    %v3700 = vpow.pop %v3699
    %v3701 = vsel %vm84, %v3686, 0.0
    %3702 = vadd.xlane.f32.xlu0 %v3701
    %v3703 = vpop.xlane.xlu0 %3702
    %v3704 = vsel %vm84, %v3688, 0.0
    %3705 = vadd.xlane.f32.xlu0 %v3704
    %v3706 = vpop.xlane.xlu0 %3705
    %v3707 = vsel %vm84, %v3690, 0.0
    %3708 = vadd.xlane.f32.xlu0 %v3707
    %v3709 = vpop.xlane.xlu0 %3708
    %v3710 = vsel %vm84, %v3692, 0.0
    %3711 = vadd.xlane.f32.xlu0 %v3710
    %v3712 = vpop.xlane.xlu0 %3711
    %v3713 = vsel %vm84, %v3694, 0.0
    %3714 = vadd.xlane.f32.xlu0 %v3713
    %v3715 = vpop.xlane.xlu0 %3714
    %v3716 = vsel %vm84, %v3696, 0.0
    %3717 = vadd.xlane.f32.xlu0 %v3716
    %v3718 = vpop.xlane.xlu0 %3717
    %v3719 = vsel %vm84, %v3698, 0.0
    %3720 = vadd.xlane.f32.xlu0 %v3719
    %v3721 = vpop.xlane.xlu0 %3720
    %v3722 = vsel %vm84, %v3700, 0.0
    %3723 = vadd.xlane.f32.xlu0 %v3722
    %v3724 = vpop.xlane.xlu0 %3723
    %v3725 = vmax.f32 %v3703, 1e-20
    %v3726 = vmax.f32 %v3706, 1e-20
    %v3727 = vmax.f32 %v3709, 1e-20
    %v3728 = vmax.f32 %v3712, 1e-20
    %v3729 = vmax.f32 %v3715, 1e-20
    %v3730 = vmax.f32 %v3718, 1e-20
    %v3731 = vmax.f32 %v3721, 1e-20
    %v3732 = vmax.f32 %v3724, 1e-20
    %v3733 = vrcp.pop %v3725
    %v3734 = vrcp.pop %v3726
    %v3735 = vrcp.pop %v3727
    %v3736 = vrcp.pop %v3728
    %v3737 = vrcp.pop %v3729
    %v3738 = vrcp.pop %v3730
    %v3739 = vrcp.pop %v3731
    %v3740 = vrcp.pop %v3732
    %v3741 = vpack.c.bf16 %v3688, %v3686
    %v3742 = vpack.c.bf16 %v3692, %v3690
    %v3743 = vpack.c.bf16 %v3696, %v3694
    %v3744 = vpack.c.bf16 %v3700, %v3698
    %3745 = vrot.lane.b32.xlu0 %v2849, 96
    %v3746 = vpop.permute.xlu0 %3745
    %3747 = vrot.lane.b32.xlu0 %v2850, 96
    %v3748 = vpop.permute.xlu0 %3747
    %3749 = vrot.lane.b32.xlu0 %v2851, 96
    %v3750 = vpop.permute.xlu0 %3749
    %3751 = vrot.lane.b32.xlu0 %v2852, 96
    %v3752 = vpop.permute.xlu0 %3751
    %v3758 = vsel %vm84, %v3741, 0
    %v3761 = vsel %vm84, %v3742, 0
    %v3764 = vsel %vm84, %v3743, 0
    %v3767 = vsel %vm84, %v3744, 0
    %3769 = vmatprep.subr.bf16.mxu0 0
    %3770 = vmatpush1.bf16.msra.mxu0 %v3746
    %3771 = vmatprep.subr.bf16.mxu0 0
    %3772 = vmatpush1.bf16.msra.mxu0 %v3748
    %3773 = vmatprep.subr.bf16.mxu0 0
    %3774 = vmatpush1.bf16.msra.mxu0 %v3750
    %3775 = vmatprep.subr.bf16.mxu0 0
    %3776 = vmatpush1.bf16.msra.mxu0 %v3752
    %3777 = vmatprep.subr.bf16.mxu0 0
    %3778 = vmatpush1.bf16.msra.mxu0 0
    %3779 = vmatprep.subr.bf16.mxu0 0
    %3780 = vmatpush1.bf16.msra.mxu0 0
    %3781 = vmatprep.subr.bf16.mxu0 0
    %3782 = vmatpush1.bf16.msra.mxu0 0
    %3783 = vmatprep.subr.bf16.mxu0 0
    %3784 = vmatpush1.bf16.msra.mxu0 0
    %3785 = vmatprep.subr.bf16.mxu0 0
    %3786 = vmatpush1.bf16.msra.mxu0 0
    %3787 = vmatprep.subr.bf16.mxu0 0
    %3788 = vmatpush1.bf16.msra.mxu0 0
    %3789 = vmatprep.subr.bf16.mxu0 0
    %3790 = vmatpush1.bf16.msra.mxu0 0
    %3791 = vmatprep.subr.bf16.mxu0 0
    %3792 = vmatpush1.bf16.msra.mxu0 0
    %3793 = vmatprep.subr.bf16.mxu0 0
    %3794 = vmatpush1.bf16.msra.mxu0 0
    %3795 = vmatprep.subr.bf16.mxu0 0
    %3796 = vmatpush1.bf16.msra.mxu0 0
    %3797 = vmatprep.subr.bf16.mxu0 0
    %3798 = vmatpush1.bf16.msra.mxu0 0
    %3799 = vmatprep.subr.bf16.mxu0 0
    %3800 = vmatpush1.bf16.msra.mxu0 0
    %3801 = vmatprep.mubr.bf16.mxu0 0
    %3802 = vmatmul.mubr.bf16.gmra.mrb[0].mxu0 %v3758
    %v3803 = vpop.f32.mrb[0].mxu0
    %v3804 = vadd.f32 0.0, %v3803
    %v3805 = vpop.f32.mrb[0].mxu0
    %v3806 = vpop.f32.mrb[0].mxu0
    %v3807 = vadd.f32 0.0, %v3806
    %v3808 = vpop.f32.mrb[0].mxu0
    %3809 = vmatprep.mubr.bf16.mxu0 0
    %3810 = vmatmul.mubr.bf16.gmra.mrb[0].mxu0 %v3761
    %v3811 = vpop.f32.mrb[0].mxu0
    %v3812 = vadd.f32 0.0, %v3811
    %v3813 = vpop.f32.mrb[0].mxu0
    %v3814 = vpop.f32.mrb[0].mxu0
    %v3815 = vadd.f32 0.0, %v3814
    %v3816 = vpop.f32.mrb[0].mxu0
    %3817 = vmatprep.mubr.bf16.mxu0 0
    %3818 = vmatmul.mubr.bf16.gmra.mrb[0].mxu0 %v3764
    %v3819 = vpop.f32.mrb[0].mxu0
    %v3820 = vadd.f32 0.0, %v3819
    %v3821 = vpop.f32.mrb[0].mxu0
    %v3822 = vpop.f32.mrb[0].mxu0
    %v3823 = vadd.f32 0.0, %v3822
    %v3824 = vpop.f32.mrb[0].mxu0
    %3825 = vmatprep.mubr.bf16.mxu0 0
    %3826 = vmatmul.mubr.bf16.gmra.mrb[0].mxu0 %v3767
    %v3827 = vpop.f32.mrb[0].mxu0
    %v3828 = vadd.f32 0.0, %v3827
    %v3829 = vpop.f32.mrb[0].mxu0
    %v3830 = vpop.f32.mrb[0].mxu0
    %v3831 = vadd.f32 0.0, %v3830
    %v3832 = vpop.f32.mrb[0].mxu0
    %3833 = vdwg.mxu0
    %v3834 = vmul.f32 %v3804, %v3733
    %v3835 = vmul.f32 %v3807, %v3734
    %v3836 = vmul.f32 %v3812, %v3735
    %v3837 = vmul.f32 %v3815, %v3736
    %v3838 = vmul.f32 %v3820, %v3737
    %v3839 = vmul.f32 %v3823, %v3738
    %v3840 = vmul.f32 %v3828, %v3739
    %v3841 = vmul.f32 %v3831, %v3740
    %3850 = vrot.lane.b32.xlu0 %v3834, 32
    %v3851 = vpop.permute.xlu0 %3850
    %3852 = vrot.lane.b32.xlu0 %v3835, 32
    %v3853 = vpop.permute.xlu0 %3852
    %3854 = vrot.lane.b32.xlu0 %v3836, 32
    %v3855 = vpop.permute.xlu0 %3854
    %3856 = vrot.lane.b32.xlu0 %v3837, 32
    %v3857 = vpop.permute.xlu0 %3856
    %3858 = vrot.lane.b32.xlu0 %v3838, 32
    %v3859 = vpop.permute.xlu0 %3858
    %3860 = vrot.lane.b32.xlu0 %v3839, 32
    %v3861 = vpop.permute.xlu0 %3860
    %3862 = vrot.lane.b32.xlu0 %v3840, 32
    %v3863 = vpop.permute.xlu0 %3862
    %3864 = vrot.lane.b32.xlu0 %v3841, 32
    %v3865 = vpop.permute.xlu0 %3864
    %v3874 = vsel %vm1188, %v3569, %v3851
    %v3875 = vsel %vm1188, %v3570, %v3853
    %v3876 = vsel %vm1188, %v3571, %v3855
    %v3877 = vsel %vm1188, %v3572, %v3857
    %v3878 = vsel %vm1188, %v3573, %v3859
    %v3879 = vsel %vm1188, %v3574, %v3861
    %v3880 = vsel %vm1188, %v3575, %v3863
    %v3881 = vsel %vm1188, %v3576, %v3865
    %3882 = vset.pattern.permute.xlu0 11
    %3883 = vperm.xlu0 %3882, %v2936
    %v3884 = vpop.permute.xlu0 %3883
    %3886 = vset.pattern.permute.xlu0 11
    %3887 = vperm.xlu0 %3886, %v2941
    %v3888 = vpop.permute.xlu0 %3887
    %3890 = vset.pattern.permute.xlu0 11
    %3891 = vperm.xlu0 %3890, %v2946
    %v3892 = vpop.permute.xlu0 %3891
    %3894 = vset.pattern.permute.xlu0 11
    %3895 = vperm.xlu0 %3894, %v2951
    %v3896 = vpop.permute.xlu0 %3895
    %3898 = vset.pattern.permute.xlu0 11
    %3899 = vperm.xlu0 %3898, %v2956
    %v3900 = vpop.permute.xlu0 %3899
    %3902 = vset.pattern.permute.xlu0 11
    %3903 = vperm.xlu0 %3902, %v2961
    %v3904 = vpop.permute.xlu0 %3903
    %3906 = vset.pattern.permute.xlu0 11
    %3907 = vperm.xlu0 %3906, %v2966
    %v3908 = vpop.permute.xlu0 %3907
    %3910 = vset.pattern.permute.xlu0 11
    %3911 = vperm.xlu0 %3910, %v2971
    %v3912 = vpop.permute.xlu0 %3911
    %v3914 = vlaneseq
    %v3915 = vshrl.u32 %v3914, 7
    %v3916 = vsub.s32 3, %v3915
    %v3917 = vrot.slane %v2990, %v3916
    %v3918 = vadd.f32 %v3884, %v3917
    %v3919 = vadd.f32 %v3888, %v3917
    %v3920 = vadd.f32 %v3892, %v3917
    %v3921 = vadd.f32 %v3896, %v3917
    %v3922 = vadd.f32 %v3900, %v3917
    %v3923 = vadd.f32 %v3904, %v3917
    %v3924 = vadd.f32 %v3908, %v3917
    %v3925 = vadd.f32 %v3912, %v3917
    %vm3926 = vcmp.gt.f32.partialorder %v3918, 0.0
    %vm3927 = vcmp.gt.f32.partialorder %v3919, 0.0
    %vm3928 = vcmp.gt.f32.partialorder %v3920, 0.0
    %vm3929 = vcmp.gt.f32.partialorder %v3921, 0.0
    %vm3930 = vcmp.gt.f32.partialorder %v3922, 0.0
    %vm3931 = vcmp.gt.f32.partialorder %v3923, 0.0
    %vm3932 = vcmp.gt.f32.partialorder %v3924, 0.0
    %vm3933 = vcmp.gt.f32.partialorder %v3925, 0.0
    %v3934 = vmul.f32 %v3918, 0.2
    %v3935 = vmul.f32 %v3919, 0.2
    %v3936 = vmul.f32 %v3920, 0.2
    %v3937 = vmul.f32 %v3921, 0.2
    %v3938 = vmul.f32 %v3922, 0.2
    %v3939 = vmul.f32 %v3923, 0.2
    %v3940 = vmul.f32 %v3924, 0.2
    %v3941 = vmul.f32 %v3925, 0.2
    %v3942 = vsel %vm3926, %v3918, %v3934
    %v3943 = vsel %vm3927, %v3919, %v3935
    %v3944 = vsel %vm3928, %v3920, %v3936
    %v3945 = vsel %vm3929, %v3921, %v3937
    %v3946 = vsel %vm3930, %v3922, %v3938
    %v3947 = vsel %vm3931, %v3923, %v3939
    %v3948 = vsel %vm3932, %v3924, %v3940
    %v3949 = vsel %vm3933, %v3925, %v3941
    %v3950 = vsel %vm52, %v3942, -1e+30
    %v3951 = vsel %vm53, %v3943, -1e+30
    %v3952 = vsel %vm54, %v3944, -1e+30
    %v3953 = vsel %vm55, %v3945, -1e+30
    %v3954 = vsel %vm56, %v3946, -1e+30
    %v3955 = vsel %vm57, %v3947, -1e+30
    %v3956 = vsel %vm58, %v3948, -1e+30
    %v3957 = vsel %vm59, %v3949, -1e+30
    %v3958 = vsel %vm84, %v3950, -inf
    %3959 = vmax.xlane.f32.xlu0 %v3958
    %v3960 = vpop.xlane.xlu0 %3959
    %v3961 = vsel %vm84, %v3951, -inf
    %3962 = vmax.xlane.f32.xlu0 %v3961
    %v3963 = vpop.xlane.xlu0 %3962
    %v3964 = vsel %vm84, %v3952, -inf
    %3965 = vmax.xlane.f32.xlu0 %v3964
    %v3966 = vpop.xlane.xlu0 %3965
    %v3967 = vsel %vm84, %v3953, -inf
    %3968 = vmax.xlane.f32.xlu0 %v3967
    %v3969 = vpop.xlane.xlu0 %3968
    %v3970 = vsel %vm84, %v3954, -inf
    %3971 = vmax.xlane.f32.xlu0 %v3970
    %v3972 = vpop.xlane.xlu0 %3971
    %v3973 = vsel %vm84, %v3955, -inf
    %3974 = vmax.xlane.f32.xlu0 %v3973
    %v3975 = vpop.xlane.xlu0 %3974
    %v3976 = vsel %vm84, %v3956, -inf
    %3977 = vmax.xlane.f32.xlu0 %v3976
    %v3978 = vpop.xlane.xlu0 %3977
    %v3979 = vsel %vm84, %v3957, -inf
    %3980 = vmax.xlane.f32.xlu0 %v3979
    %v3981 = vpop.xlane.xlu0 %3980
    %v3982 = vsub.f32 %v3950, %v3960
    %v3983 = vsub.f32 %v3951, %v3963
    %v3984 = vsub.f32 %v3952, %v3966
    %v3985 = vsub.f32 %v3953, %v3969
    %v3986 = vsub.f32 %v3954, %v3972
    %v3987 = vsub.f32 %v3955, %v3975
    %v3988 = vsub.f32 %v3956, %v3978
    %v3989 = vsub.f32 %v3957, %v3981
    %v3990 = vmul.f32 %v3982, 1.442695
    %v3991 = vpow.pop %v3990
    %v3992 = vmul.f32 %v3983, 1.442695
    %v3993 = vpow.pop %v3992
    %v3994 = vmul.f32 %v3984, 1.442695
    %v3995 = vpow.pop %v3994
    %v3996 = vmul.f32 %v3985, 1.442695
    %v3997 = vpow.pop %v3996
    %v3998 = vmul.f32 %v3986, 1.442695
    %v3999 = vpow.pop %v3998
    %v4000 = vmul.f32 %v3987, 1.442695
    %v4001 = vpow.pop %v4000
    %v4002 = vmul.f32 %v3988, 1.442695
    %v4003 = vpow.pop %v4002
    %v4004 = vmul.f32 %v3989, 1.442695
    %v4005 = vpow.pop %v4004
    %v4006 = vsel %vm84, %v3991, 0.0
    %4007 = vadd.xlane.f32.xlu0 %v4006
    %v4008 = vpop.xlane.xlu0 %4007
    %v4009 = vsel %vm84, %v3993, 0.0
    %4010 = vadd.xlane.f32.xlu0 %v4009
    %v4011 = vpop.xlane.xlu0 %4010
    %v4012 = vsel %vm84, %v3995, 0.0
    %4013 = vadd.xlane.f32.xlu0 %v4012
    %v4014 = vpop.xlane.xlu0 %4013
    %v4015 = vsel %vm84, %v3997, 0.0
    %4016 = vadd.xlane.f32.xlu0 %v4015
    %v4017 = vpop.xlane.xlu0 %4016
    %v4018 = vsel %vm84, %v3999, 0.0
    %4019 = vadd.xlane.f32.xlu0 %v4018
    %v4020 = vpop.xlane.xlu0 %4019
    %v4021 = vsel %vm84, %v4001, 0.0
    %4022 = vadd.xlane.f32.xlu0 %v4021
    %v4023 = vpop.xlane.xlu0 %4022
    %v4024 = vsel %vm84, %v4003, 0.0
    %4025 = vadd.xlane.f32.xlu0 %v4024
    %v4026 = vpop.xlane.xlu0 %4025
    %v4027 = vsel %vm84, %v4005, 0.0
    %4028 = vadd.xlane.f32.xlu0 %v4027
    %v4029 = vpop.xlane.xlu0 %4028
    %v4030 = vmax.f32 %v4008, 1e-20
    %v4031 = vmax.f32 %v4011, 1e-20
    %v4032 = vmax.f32 %v4014, 1e-20
    %v4033 = vmax.f32 %v4017, 1e-20
    %v4034 = vmax.f32 %v4020, 1e-20
    %v4035 = vmax.f32 %v4023, 1e-20
    %v4036 = vmax.f32 %v4026, 1e-20
    %v4037 = vmax.f32 %v4029, 1e-20
    %v4038 = vrcp.pop %v4030
    %v4039 = vrcp.pop %v4031
    %v4040 = vrcp.pop %v4032
    %v4041 = vrcp.pop %v4033
    %v4042 = vrcp.pop %v4034
    %v4043 = vrcp.pop %v4035
    %v4044 = vrcp.pop %v4036
    %v4045 = vrcp.pop %v4037
    %v4046 = vpack.c.bf16 %v3993, %v3991
    %v4047 = vpack.c.bf16 %v3997, %v3995
    %v4048 = vpack.c.bf16 %v4001, %v3999
    %v4049 = vpack.c.bf16 %v4005, %v4003
    %4050 = vrot.lane.b32.xlu0 %v2849, 80
    %v4051 = vpop.permute.xlu0 %4050
    %4052 = vrot.lane.b32.xlu0 %v2850, 80
    %v4053 = vpop.permute.xlu0 %4052
    %4054 = vrot.lane.b32.xlu0 %v2851, 80
    %v4055 = vpop.permute.xlu0 %4054
    %4056 = vrot.lane.b32.xlu0 %v2852, 80
    %v4057 = vpop.permute.xlu0 %4056
    %v4063 = vsel %vm84, %v4046, 0
    %v4066 = vsel %vm84, %v4047, 0
    %v4069 = vsel %vm84, %v4048, 0
    %v4072 = vsel %vm84, %v4049, 0
    %4074 = vmatprep.subr.bf16.mxu0 0
    %4075 = vmatpush1.bf16.msra.mxu0 %v4051
    %4076 = vmatprep.subr.bf16.mxu0 0
    %4077 = vmatpush1.bf16.msra.mxu0 %v4053
    %4078 = vmatprep.subr.bf16.mxu0 0
    %4079 = vmatpush1.bf16.msra.mxu0 %v4055
    %4080 = vmatprep.subr.bf16.mxu0 0
    %4081 = vmatpush1.bf16.msra.mxu0 %v4057
    %4082 = vmatprep.subr.bf16.mxu0 0
    %4083 = vmatpush1.bf16.msra.mxu0 0
    %4084 = vmatprep.subr.bf16.mxu0 0
    %4085 = vmatpush1.bf16.msra.mxu0 0
    %4086 = vmatprep.subr.bf16.mxu0 0
    %4087 = vmatpush1.bf16.msra.mxu0 0
    %4088 = vmatprep.subr.bf16.mxu0 0
    %4089 = vmatpush1.bf16.msra.mxu0 0
    %4090 = vmatprep.subr.bf16.mxu0 0
    %4091 = vmatpush1.bf16.msra.mxu0 0
    %4092 = vmatprep.subr.bf16.mxu0 0
    %4093 = vmatpush1.bf16.msra.mxu0 0
    %4094 = vmatprep.subr.bf16.mxu0 0
    %4095 = vmatpush1.bf16.msra.mxu0 0
    %4096 = vmatprep.subr.bf16.mxu0 0
    %4097 = vmatpush1.bf16.msra.mxu0 0
    %4098 = vmatprep.subr.bf16.mxu0 0
    %4099 = vmatpush1.bf16.msra.mxu0 0
    %4100 = vmatprep.subr.bf16.mxu0 0
    %4101 = vmatpush1.bf16.msra.mxu0 0
    %4102 = vmatprep.subr.bf16.mxu0 0
    %4103 = vmatpush1.bf16.msra.mxu0 0
    %4104 = vmatprep.subr.bf16.mxu0 0
    %4105 = vmatpush1.bf16.msra.mxu0 0
    %4106 = vmatprep.mubr.bf16.mxu0 0
    %4107 = vmatmul.mubr.bf16.gmra.mrb[0].mxu0 %v4063
    %v4108 = vpop.f32.mrb[0].mxu0
    %v4109 = vadd.f32 0.0, %v4108
    %v4110 = vpop.f32.mrb[0].mxu0
    %v4111 = vpop.f32.mrb[0].mxu0
    %v4112 = vadd.f32 0.0, %v4111
    %v4113 = vpop.f32.mrb[0].mxu0
    %4114 = vmatprep.mubr.bf16.mxu0 0
    %4115 = vmatmul.mubr.bf16.gmra.mrb[0].mxu0 %v4066
    %v4116 = vpop.f32.mrb[0].mxu0
    %v4117 = vadd.f32 0.0, %v4116
    %v4118 = vpop.f32.mrb[0].mxu0
    %v4119 = vpop.f32.mrb[0].mxu0
    %v4120 = vadd.f32 0.0, %v4119
    %v4121 = vpop.f32.mrb[0].mxu0
    %4122 = vmatprep.mubr.bf16.mxu0 0
    %4123 = vmatmul.mubr.bf16.gmra.mrb[0].mxu0 %v4069
    %v4124 = vpop.f32.mrb[0].mxu0
    %v4125 = vadd.f32 0.0, %v4124
    %v4126 = vpop.f32.mrb[0].mxu0
    %v4127 = vpop.f32.mrb[0].mxu0
    %v4128 = vadd.f32 0.0, %v4127
    %v4129 = vpop.f32.mrb[0].mxu0
    %4130 = vmatprep.mubr.bf16.mxu0 0
    %4131 = vmatmul.mubr.bf16.gmra.mrb[0].mxu0 %v4072
    %v4132 = vpop.f32.mrb[0].mxu0
    %v4133 = vadd.f32 0.0, %v4132
    %v4134 = vpop.f32.mrb[0].mxu0
    %v4135 = vpop.f32.mrb[0].mxu0
    %v4136 = vadd.f32 0.0, %v4135
    %v4137 = vpop.f32.mrb[0].mxu0
    %4138 = vdwg.mxu0
    %v4139 = vmul.f32 %v4109, %v4038
    %v4140 = vmul.f32 %v4112, %v4039
    %v4141 = vmul.f32 %v4117, %v4040
    %v4142 = vmul.f32 %v4120, %v4041
    %v4143 = vmul.f32 %v4125, %v4042
    %v4144 = vmul.f32 %v4128, %v4043
    %v4145 = vmul.f32 %v4133, %v4044
    %v4146 = vmul.f32 %v4136, %v4045
    %4155 = vrot.lane.b32.xlu0 %v4139, 48
    %v4156 = vpop.permute.xlu0 %4155
    %4157 = vrot.lane.b32.xlu0 %v4140, 48
    %v4158 = vpop.permute.xlu0 %4157
    %4159 = vrot.lane.b32.xlu0 %v4141, 48
    %v4160 = vpop.permute.xlu0 %4159
    %4161 = vrot.lane.b32.xlu0 %v4142, 48
    %v4162 = vpop.permute.xlu0 %4161
    %4163 = vrot.lane.b32.xlu0 %v4143, 48
    %v4164 = vpop.permute.xlu0 %4163
    %4165 = vrot.lane.b32.xlu0 %v4144, 48
    %v4166 = vpop.permute.xlu0 %4165
    %4167 = vrot.lane.b32.xlu0 %v4145, 48
    %v4168 = vpop.permute.xlu0 %4167
    %4169 = vrot.lane.b32.xlu0 %v4146, 48
    %v4170 = vpop.permute.xlu0 %4169
    %v4179 = vsel %vm1494, %v3874, %v4156
    %v4180 = vsel %vm1494, %v3875, %v4158
    %v4181 = vsel %vm1494, %v3876, %v4160
    %v4182 = vsel %vm1494, %v3877, %v4162
    %v4183 = vsel %vm1494, %v3878, %v4164
    %v4184 = vsel %vm1494, %v3879, %v4166
    %v4185 = vsel %vm1494, %v3880, %v4168
    %v4186 = vsel %vm1494, %v3881, %v4170
    %4187 = vset.pattern.permute.xlu0 12
    %4188 = vperm.xlu0 %4187, %v2936
    %v4189 = vpop.permute.xlu0 %4188
    %4191 = vset.pattern.permute.xlu0 12
    %4192 = vperm.xlu0 %4191, %v2941
    %v4193 = vpop.permute.xlu0 %4192
    %4195 = vset.pattern.permute.xlu0 12
    %4196 = vperm.xlu0 %4195, %v2946
    %v4197 = vpop.permute.xlu0 %4196
    %4199 = vset.pattern.permute.xlu0 12
    %4200 = vperm.xlu0 %4199, %v2951
    %v4201 = vpop.permute.xlu0 %4200
    %4203 = vset.pattern.permute.xlu0 12
    %4204 = vperm.xlu0 %4203, %v2956
    %v4205 = vpop.permute.xlu0 %4204
    %4207 = vset.pattern.permute.xlu0 12
    %4208 = vperm.xlu0 %4207, %v2961
    %v4209 = vpop.permute.xlu0 %4208
    %4211 = vset.pattern.permute.xlu0 12
    %4212 = vperm.xlu0 %4211, %v2966
    %v4213 = vpop.permute.xlu0 %4212
    %4215 = vset.pattern.permute.xlu0 12
    %4216 = vperm.xlu0 %4215, %v2971
    %v4217 = vpop.permute.xlu0 %4216
    %v4219 = vlaneseq
    %v4220 = vshrl.u32 %v4219, 7
    %v4221 = vsub.s32 4, %v4220
    %v4222 = vrot.slane %v2990, %v4221
    %v4223 = vadd.f32 %v4189, %v4222
    %v4224 = vadd.f32 %v4193, %v4222
    %v4225 = vadd.f32 %v4197, %v4222
    %v4226 = vadd.f32 %v4201, %v4222
    %v4227 = vadd.f32 %v4205, %v4222
    %v4228 = vadd.f32 %v4209, %v4222
    %v4229 = vadd.f32 %v4213, %v4222
    %v4230 = vadd.f32 %v4217, %v4222
    %vm4231 = vcmp.gt.f32.partialorder %v4223, 0.0
    %vm4232 = vcmp.gt.f32.partialorder %v4224, 0.0
    %vm4233 = vcmp.gt.f32.partialorder %v4225, 0.0
    %vm4234 = vcmp.gt.f32.partialorder %v4226, 0.0
    %vm4235 = vcmp.gt.f32.partialorder %v4227, 0.0
    %vm4236 = vcmp.gt.f32.partialorder %v4228, 0.0
    %vm4237 = vcmp.gt.f32.partialorder %v4229, 0.0
    %vm4238 = vcmp.gt.f32.partialorder %v4230, 0.0
    %v4239 = vmul.f32 %v4223, 0.2
    %v4240 = vmul.f32 %v4224, 0.2
    %v4241 = vmul.f32 %v4225, 0.2
    %v4242 = vmul.f32 %v4226, 0.2
    %v4243 = vmul.f32 %v4227, 0.2
    %v4244 = vmul.f32 %v4228, 0.2
    %v4245 = vmul.f32 %v4229, 0.2
    %v4246 = vmul.f32 %v4230, 0.2
    %v4247 = vsel %vm4231, %v4223, %v4239
    %v4248 = vsel %vm4232, %v4224, %v4240
    %v4249 = vsel %vm4233, %v4225, %v4241
    %v4250 = vsel %vm4234, %v4226, %v4242
    %v4251 = vsel %vm4235, %v4227, %v4243
    %v4252 = vsel %vm4236, %v4228, %v4244
    %v4253 = vsel %vm4237, %v4229, %v4245
    %v4254 = vsel %vm4238, %v4230, %v4246
    %v4255 = vsel %vm52, %v4247, -1e+30
    %v4256 = vsel %vm53, %v4248, -1e+30
    %v4257 = vsel %vm54, %v4249, -1e+30
    %v4258 = vsel %vm55, %v4250, -1e+30
    %v4259 = vsel %vm56, %v4251, -1e+30
    %v4260 = vsel %vm57, %v4252, -1e+30
    %v4261 = vsel %vm58, %v4253, -1e+30
    %v4262 = vsel %vm59, %v4254, -1e+30
    %v4263 = vsel %vm84, %v4255, -inf
    %4264 = vmax.xlane.f32.xlu0 %v4263
    %v4265 = vpop.xlane.xlu0 %4264
    %v4266 = vsel %vm84, %v4256, -inf
    %4267 = vmax.xlane.f32.xlu0 %v4266
    %v4268 = vpop.xlane.xlu0 %4267
    %v4269 = vsel %vm84, %v4257, -inf
    %4270 = vmax.xlane.f32.xlu0 %v4269
    %v4271 = vpop.xlane.xlu0 %4270
    %v4272 = vsel %vm84, %v4258, -inf
    %4273 = vmax.xlane.f32.xlu0 %v4272
    %v4274 = vpop.xlane.xlu0 %4273
    %v4275 = vsel %vm84, %v4259, -inf
    %4276 = vmax.xlane.f32.xlu0 %v4275
    %v4277 = vpop.xlane.xlu0 %4276
    %v4278 = vsel %vm84, %v4260, -inf
    %4279 = vmax.xlane.f32.xlu0 %v4278
    %v4280 = vpop.xlane.xlu0 %4279
    %v4281 = vsel %vm84, %v4261, -inf
    %4282 = vmax.xlane.f32.xlu0 %v4281
    %v4283 = vpop.xlane.xlu0 %4282
    %v4284 = vsel %vm84, %v4262, -inf
    %4285 = vmax.xlane.f32.xlu0 %v4284
    %v4286 = vpop.xlane.xlu0 %4285
    %v4287 = vsub.f32 %v4255, %v4265
    %v4288 = vsub.f32 %v4256, %v4268
    %v4289 = vsub.f32 %v4257, %v4271
    %v4290 = vsub.f32 %v4258, %v4274
    %v4291 = vsub.f32 %v4259, %v4277
    %v4292 = vsub.f32 %v4260, %v4280
    %v4293 = vsub.f32 %v4261, %v4283
    %v4294 = vsub.f32 %v4262, %v4286
    %v4295 = vmul.f32 %v4287, 1.442695
    %v4296 = vpow.pop %v4295
    %v4297 = vmul.f32 %v4288, 1.442695
    %v4298 = vpow.pop %v4297
    %v4299 = vmul.f32 %v4289, 1.442695
    %v4300 = vpow.pop %v4299
    %v4301 = vmul.f32 %v4290, 1.442695
    %v4302 = vpow.pop %v4301
    %v4303 = vmul.f32 %v4291, 1.442695
    %v4304 = vpow.pop %v4303
    %v4305 = vmul.f32 %v4292, 1.442695
    %v4306 = vpow.pop %v4305
    %v4307 = vmul.f32 %v4293, 1.442695
    %v4308 = vpow.pop %v4307
    %v4309 = vmul.f32 %v4294, 1.442695
    %v4310 = vpow.pop %v4309
    %v4311 = vsel %vm84, %v4296, 0.0
    %4312 = vadd.xlane.f32.xlu0 %v4311
    %v4313 = vpop.xlane.xlu0 %4312
    %v4314 = vsel %vm84, %v4298, 0.0
    %4315 = vadd.xlane.f32.xlu0 %v4314
    %v4316 = vpop.xlane.xlu0 %4315
    %v4317 = vsel %vm84, %v4300, 0.0
    %4318 = vadd.xlane.f32.xlu0 %v4317
    %v4319 = vpop.xlane.xlu0 %4318
    %v4320 = vsel %vm84, %v4302, 0.0
    %4321 = vadd.xlane.f32.xlu0 %v4320
    %v4322 = vpop.xlane.xlu0 %4321
    %v4323 = vsel %vm84, %v4304, 0.0
    %4324 = vadd.xlane.f32.xlu0 %v4323
    %v4325 = vpop.xlane.xlu0 %4324
    %v4326 = vsel %vm84, %v4306, 0.0
    %4327 = vadd.xlane.f32.xlu0 %v4326
    %v4328 = vpop.xlane.xlu0 %4327
    %v4329 = vsel %vm84, %v4308, 0.0
    %4330 = vadd.xlane.f32.xlu0 %v4329
    %v4331 = vpop.xlane.xlu0 %4330
    %v4332 = vsel %vm84, %v4310, 0.0
    %4333 = vadd.xlane.f32.xlu0 %v4332
    %v4334 = vpop.xlane.xlu0 %4333
    %v4335 = vmax.f32 %v4313, 1e-20
    %v4336 = vmax.f32 %v4316, 1e-20
    %v4337 = vmax.f32 %v4319, 1e-20
    %v4338 = vmax.f32 %v4322, 1e-20
    %v4339 = vmax.f32 %v4325, 1e-20
    %v4340 = vmax.f32 %v4328, 1e-20
    %v4341 = vmax.f32 %v4331, 1e-20
    %v4342 = vmax.f32 %v4334, 1e-20
    %v4343 = vrcp.pop %v4335
    %v4344 = vrcp.pop %v4336
    %v4345 = vrcp.pop %v4337
    %v4346 = vrcp.pop %v4338
    %v4347 = vrcp.pop %v4339
    %v4348 = vrcp.pop %v4340
    %v4349 = vrcp.pop %v4341
    %v4350 = vrcp.pop %v4342
    %v4351 = vpack.c.bf16 %v4298, %v4296
    %v4352 = vpack.c.bf16 %v4302, %v4300
    %v4353 = vpack.c.bf16 %v4306, %v4304
    %v4354 = vpack.c.bf16 %v4310, %v4308
    %4355 = vrot.lane.b32.xlu0 %v2849, 64
    %v4356 = vpop.permute.xlu0 %4355
    %4357 = vrot.lane.b32.xlu0 %v2850, 64
    %v4358 = vpop.permute.xlu0 %4357
    %4359 = vrot.lane.b32.xlu0 %v2851, 64
    %v4360 = vpop.permute.xlu0 %4359
    %4361 = vrot.lane.b32.xlu0 %v2852, 64
    %v4362 = vpop.permute.xlu0 %4361
    %v4368 = vsel %vm84, %v4351, 0
    %v4371 = vsel %vm84, %v4352, 0
    %v4374 = vsel %vm84, %v4353, 0
    %v4377 = vsel %vm84, %v4354, 0
    %4379 = vmatprep.subr.bf16.mxu0 0
    %4380 = vmatpush1.bf16.msra.mxu0 %v4356
    %4381 = vmatprep.subr.bf16.mxu0 0
    %4382 = vmatpush1.bf16.msra.mxu0 %v4358
    %4383 = vmatprep.subr.bf16.mxu0 0
    %4384 = vmatpush1.bf16.msra.mxu0 %v4360
    %4385 = vmatprep.subr.bf16.mxu0 0
    %4386 = vmatpush1.bf16.msra.mxu0 %v4362
    %4387 = vmatprep.subr.bf16.mxu0 0
    %4388 = vmatpush1.bf16.msra.mxu0 0
    %4389 = vmatprep.subr.bf16.mxu0 0
    %4390 = vmatpush1.bf16.msra.mxu0 0
    %4391 = vmatprep.subr.bf16.mxu0 0
    %4392 = vmatpush1.bf16.msra.mxu0 0
    %4393 = vmatprep.subr.bf16.mxu0 0
    %4394 = vmatpush1.bf16.msra.mxu0 0
    %4395 = vmatprep.subr.bf16.mxu0 0
    %4396 = vmatpush1.bf16.msra.mxu0 0
    %4397 = vmatprep.subr.bf16.mxu0 0
    %4398 = vmatpush1.bf16.msra.mxu0 0
    %4399 = vmatprep.subr.bf16.mxu0 0
    %4400 = vmatpush1.bf16.msra.mxu0 0
    %4401 = vmatprep.subr.bf16.mxu0 0
    %4402 = vmatpush1.bf16.msra.mxu0 0
    %4403 = vmatprep.subr.bf16.mxu0 0
    %4404 = vmatpush1.bf16.msra.mxu0 0
    %4405 = vmatprep.subr.bf16.mxu0 0
    %4406 = vmatpush1.bf16.msra.mxu0 0
    %4407 = vmatprep.subr.bf16.mxu0 0
    %4408 = vmatpush1.bf16.msra.mxu0 0
    %4409 = vmatprep.subr.bf16.mxu0 0
    %4410 = vmatpush1.bf16.msra.mxu0 0
    %4411 = vmatprep.mubr.bf16.mxu0 0
    %4412 = vmatmul.mubr.bf16.gmra.mrb[0].mxu0 %v4368
    %v4413 = vpop.f32.mrb[0].mxu0
    %v4414 = vadd.f32 0.0, %v4413
    %v4415 = vpop.f32.mrb[0].mxu0
    %v4416 = vpop.f32.mrb[0].mxu0
    %v4417 = vadd.f32 0.0, %v4416
    %v4418 = vpop.f32.mrb[0].mxu0
    %4419 = vmatprep.mubr.bf16.mxu0 0
    %4420 = vmatmul.mubr.bf16.gmra.mrb[0].mxu0 %v4371
    %v4421 = vpop.f32.mrb[0].mxu0
    %v4422 = vadd.f32 0.0, %v4421
    %v4423 = vpop.f32.mrb[0].mxu0
    %v4424 = vpop.f32.mrb[0].mxu0
    %v4425 = vadd.f32 0.0, %v4424
    %v4426 = vpop.f32.mrb[0].mxu0
    %4427 = vmatprep.mubr.bf16.mxu0 0
    %4428 = vmatmul.mubr.bf16.gmra.mrb[0].mxu0 %v4374
    %v4429 = vpop.f32.mrb[0].mxu0
    %v4430 = vadd.f32 0.0, %v4429
    %v4431 = vpop.f32.mrb[0].mxu0
    %v4432 = vpop.f32.mrb[0].mxu0
    %v4433 = vadd.f32 0.0, %v4432
    %v4434 = vpop.f32.mrb[0].mxu0
    %4435 = vmatprep.mubr.bf16.mxu0 0
    %4436 = vmatmul.mubr.bf16.gmra.mrb[0].mxu0 %v4377
    %v4437 = vpop.f32.mrb[0].mxu0
    %v4438 = vadd.f32 0.0, %v4437
    %v4439 = vpop.f32.mrb[0].mxu0
    %v4440 = vpop.f32.mrb[0].mxu0
    %v4441 = vadd.f32 0.0, %v4440
    %v4442 = vpop.f32.mrb[0].mxu0
    %4443 = vdwg.mxu0
    %v4444 = vmul.f32 %v4414, %v4343
    %v4445 = vmul.f32 %v4417, %v4344
    %v4446 = vmul.f32 %v4422, %v4345
    %v4447 = vmul.f32 %v4425, %v4346
    %v4448 = vmul.f32 %v4430, %v4347
    %v4449 = vmul.f32 %v4433, %v4348
    %v4450 = vmul.f32 %v4438, %v4349
    %v4451 = vmul.f32 %v4441, %v4350
    %4460 = vrot.lane.b32.xlu0 %v4444, 64
    %v4461 = vpop.permute.xlu0 %4460
    %4462 = vrot.lane.b32.xlu0 %v4445, 64
    %v4463 = vpop.permute.xlu0 %4462
    %4464 = vrot.lane.b32.xlu0 %v4446, 64
    %v4465 = vpop.permute.xlu0 %4464
    %4466 = vrot.lane.b32.xlu0 %v4447, 64
    %v4467 = vpop.permute.xlu0 %4466
    %4468 = vrot.lane.b32.xlu0 %v4448, 64
    %v4469 = vpop.permute.xlu0 %4468
    %4470 = vrot.lane.b32.xlu0 %v4449, 64
    %v4471 = vpop.permute.xlu0 %4470
    %4472 = vrot.lane.b32.xlu0 %v4450, 64
    %v4473 = vpop.permute.xlu0 %4472
    %4474 = vrot.lane.b32.xlu0 %v4451, 64
    %v4475 = vpop.permute.xlu0 %4474
    %v4484 = vsel %vm84, %v4179, %v4461
    %v4485 = vsel %vm84, %v4180, %v4463
    %v4486 = vsel %vm84, %v4181, %v4465
    %v4487 = vsel %vm84, %v4182, %v4467
    %v4488 = vsel %vm84, %v4183, %v4469
    %v4489 = vsel %vm84, %v4184, %v4471
    %v4490 = vsel %vm84, %v4185, %v4473
    %v4491 = vsel %vm84, %v4186, %v4475
    %4492 = vset.pattern.permute.xlu0 13
    %4493 = vperm.xlu0 %4492, %v2936
    %v4494 = vpop.permute.xlu0 %4493
    %4496 = vset.pattern.permute.xlu0 13
    %4497 = vperm.xlu0 %4496, %v2941
    %v4498 = vpop.permute.xlu0 %4497
    %4500 = vset.pattern.permute.xlu0 13
    %4501 = vperm.xlu0 %4500, %v2946
    %v4502 = vpop.permute.xlu0 %4501
    %4504 = vset.pattern.permute.xlu0 13
    %4505 = vperm.xlu0 %4504, %v2951
    %v4506 = vpop.permute.xlu0 %4505
    %4508 = vset.pattern.permute.xlu0 13
    %4509 = vperm.xlu0 %4508, %v2956
    %v4510 = vpop.permute.xlu0 %4509
    %4512 = vset.pattern.permute.xlu0 13
    %4513 = vperm.xlu0 %4512, %v2961
    %v4514 = vpop.permute.xlu0 %4513
    %4516 = vset.pattern.permute.xlu0 13
    %4517 = vperm.xlu0 %4516, %v2966
    %v4518 = vpop.permute.xlu0 %4517
    %4520 = vset.pattern.permute.xlu0 13
    %4521 = vperm.xlu0 %4520, %v2971
    %v4522 = vpop.permute.xlu0 %4521
    %v4524 = vlaneseq
    %v4525 = vshrl.u32 %v4524, 7
    %v4526 = vsub.s32 5, %v4525
    %v4527 = vrot.slane %v2990, %v4526
    %v4528 = vadd.f32 %v4494, %v4527
    %v4529 = vadd.f32 %v4498, %v4527
    %v4530 = vadd.f32 %v4502, %v4527
    %v4531 = vadd.f32 %v4506, %v4527
    %v4532 = vadd.f32 %v4510, %v4527
    %v4533 = vadd.f32 %v4514, %v4527
    %v4534 = vadd.f32 %v4518, %v4527
    %v4535 = vadd.f32 %v4522, %v4527
    %vm4536 = vcmp.gt.f32.partialorder %v4528, 0.0
    %vm4537 = vcmp.gt.f32.partialorder %v4529, 0.0
    %vm4538 = vcmp.gt.f32.partialorder %v4530, 0.0
    %vm4539 = vcmp.gt.f32.partialorder %v4531, 0.0
    %vm4540 = vcmp.gt.f32.partialorder %v4532, 0.0
    %vm4541 = vcmp.gt.f32.partialorder %v4533, 0.0
    %vm4542 = vcmp.gt.f32.partialorder %v4534, 0.0
    %vm4543 = vcmp.gt.f32.partialorder %v4535, 0.0
    %v4544 = vmul.f32 %v4528, 0.2
    %v4545 = vmul.f32 %v4529, 0.2
    %v4546 = vmul.f32 %v4530, 0.2
    %v4547 = vmul.f32 %v4531, 0.2
    %v4548 = vmul.f32 %v4532, 0.2
    %v4549 = vmul.f32 %v4533, 0.2
    %v4550 = vmul.f32 %v4534, 0.2
    %v4551 = vmul.f32 %v4535, 0.2
    %v4552 = vsel %vm4536, %v4528, %v4544
    %v4553 = vsel %vm4537, %v4529, %v4545
    %v4554 = vsel %vm4538, %v4530, %v4546
    %v4555 = vsel %vm4539, %v4531, %v4547
    %v4556 = vsel %vm4540, %v4532, %v4548
    %v4557 = vsel %vm4541, %v4533, %v4549
    %v4558 = vsel %vm4542, %v4534, %v4550
    %v4559 = vsel %vm4543, %v4535, %v4551
    %v4560 = vsel %vm52, %v4552, -1e+30
    %v4561 = vsel %vm53, %v4553, -1e+30
    %v4562 = vsel %vm54, %v4554, -1e+30
    %v4563 = vsel %vm55, %v4555, -1e+30
    %v4564 = vsel %vm56, %v4556, -1e+30
    %v4565 = vsel %vm57, %v4557, -1e+30
    %v4566 = vsel %vm58, %v4558, -1e+30
    %v4567 = vsel %vm59, %v4559, -1e+30
    %v4568 = vsel %vm84, %v4560, -inf
    %4569 = vmax.xlane.f32.xlu0 %v4568
    %v4570 = vpop.xlane.xlu0 %4569
    %v4571 = vsel %vm84, %v4561, -inf
    %4572 = vmax.xlane.f32.xlu0 %v4571
    %v4573 = vpop.xlane.xlu0 %4572
    %v4574 = vsel %vm84, %v4562, -inf
    %4575 = vmax.xlane.f32.xlu0 %v4574
    %v4576 = vpop.xlane.xlu0 %4575
    %v4577 = vsel %vm84, %v4563, -inf
    %4578 = vmax.xlane.f32.xlu0 %v4577
    %v4579 = vpop.xlane.xlu0 %4578
    %v4580 = vsel %vm84, %v4564, -inf
    %4581 = vmax.xlane.f32.xlu0 %v4580
    %v4582 = vpop.xlane.xlu0 %4581
    %v4583 = vsel %vm84, %v4565, -inf
    %4584 = vmax.xlane.f32.xlu0 %v4583
    %v4585 = vpop.xlane.xlu0 %4584
    %v4586 = vsel %vm84, %v4566, -inf
    %4587 = vmax.xlane.f32.xlu0 %v4586
    %v4588 = vpop.xlane.xlu0 %4587
    %v4589 = vsel %vm84, %v4567, -inf
    %4590 = vmax.xlane.f32.xlu0 %v4589
    %v4591 = vpop.xlane.xlu0 %4590
    %v4592 = vsub.f32 %v4560, %v4570
    %v4593 = vsub.f32 %v4561, %v4573
    %v4594 = vsub.f32 %v4562, %v4576
    %v4595 = vsub.f32 %v4563, %v4579
    %v4596 = vsub.f32 %v4564, %v4582
    %v4597 = vsub.f32 %v4565, %v4585
    %v4598 = vsub.f32 %v4566, %v4588
    %v4599 = vsub.f32 %v4567, %v4591
    %v4600 = vmul.f32 %v4592, 1.442695
    %v4601 = vpow.pop %v4600
    %v4602 = vmul.f32 %v4593, 1.442695
    %v4603 = vpow.pop %v4602
    %v4604 = vmul.f32 %v4594, 1.442695
    %v4605 = vpow.pop %v4604
    %v4606 = vmul.f32 %v4595, 1.442695
    %v4607 = vpow.pop %v4606
    %v4608 = vmul.f32 %v4596, 1.442695
    %v4609 = vpow.pop %v4608
    %v4610 = vmul.f32 %v4597, 1.442695
    %v4611 = vpow.pop %v4610
    %v4612 = vmul.f32 %v4598, 1.442695
    %v4613 = vpow.pop %v4612
    %v4614 = vmul.f32 %v4599, 1.442695
    %v4615 = vpow.pop %v4614
    %v4616 = vsel %vm84, %v4601, 0.0
    %4617 = vadd.xlane.f32.xlu0 %v4616
    %v4618 = vpop.xlane.xlu0 %4617
    %v4619 = vsel %vm84, %v4603, 0.0
    %4620 = vadd.xlane.f32.xlu0 %v4619
    %v4621 = vpop.xlane.xlu0 %4620
    %v4622 = vsel %vm84, %v4605, 0.0
    %4623 = vadd.xlane.f32.xlu0 %v4622
    %v4624 = vpop.xlane.xlu0 %4623
    %v4625 = vsel %vm84, %v4607, 0.0
    %4626 = vadd.xlane.f32.xlu0 %v4625
    %v4627 = vpop.xlane.xlu0 %4626
    %v4628 = vsel %vm84, %v4609, 0.0
    %4629 = vadd.xlane.f32.xlu0 %v4628
    %v4630 = vpop.xlane.xlu0 %4629
    %v4631 = vsel %vm84, %v4611, 0.0
    %4632 = vadd.xlane.f32.xlu0 %v4631
    %v4633 = vpop.xlane.xlu0 %4632
    %v4634 = vsel %vm84, %v4613, 0.0
    %4635 = vadd.xlane.f32.xlu0 %v4634
    %v4636 = vpop.xlane.xlu0 %4635
    %v4637 = vsel %vm84, %v4615, 0.0
    %4638 = vadd.xlane.f32.xlu0 %v4637
    %v4639 = vpop.xlane.xlu0 %4638
    %v4640 = vmax.f32 %v4618, 1e-20
    %v4641 = vmax.f32 %v4621, 1e-20
    %v4642 = vmax.f32 %v4624, 1e-20
    %v4643 = vmax.f32 %v4627, 1e-20
    %v4644 = vmax.f32 %v4630, 1e-20
    %v4645 = vmax.f32 %v4633, 1e-20
    %v4646 = vmax.f32 %v4636, 1e-20
    %v4647 = vmax.f32 %v4639, 1e-20
    %v4648 = vrcp.pop %v4640
    %v4649 = vrcp.pop %v4641
    %v4650 = vrcp.pop %v4642
    %v4651 = vrcp.pop %v4643
    %v4652 = vrcp.pop %v4644
    %v4653 = vrcp.pop %v4645
    %v4654 = vrcp.pop %v4646
    %v4655 = vrcp.pop %v4647
    %v4656 = vpack.c.bf16 %v4603, %v4601
    %v4657 = vpack.c.bf16 %v4607, %v4605
    %v4658 = vpack.c.bf16 %v4611, %v4609
    %v4659 = vpack.c.bf16 %v4615, %v4613
    %4660 = vrot.lane.b32.xlu0 %v2849, 48
    %v4661 = vpop.permute.xlu0 %4660
    %4662 = vrot.lane.b32.xlu0 %v2850, 48
    %v4663 = vpop.permute.xlu0 %4662
    %4664 = vrot.lane.b32.xlu0 %v2851, 48
    %v4665 = vpop.permute.xlu0 %4664
    %4666 = vrot.lane.b32.xlu0 %v2852, 48
    %v4667 = vpop.permute.xlu0 %4666
    %v4673 = vsel %vm84, %v4656, 0
    %v4676 = vsel %vm84, %v4657, 0
    %v4679 = vsel %vm84, %v4658, 0
    %v4682 = vsel %vm84, %v4659, 0
    %4684 = vmatprep.subr.bf16.mxu0 0
    %4685 = vmatpush1.bf16.msra.mxu0 %v4661
    %4686 = vmatprep.subr.bf16.mxu0 0
    %4687 = vmatpush1.bf16.msra.mxu0 %v4663
    %4688 = vmatprep.subr.bf16.mxu0 0
    %4689 = vmatpush1.bf16.msra.mxu0 %v4665
    %4690 = vmatprep.subr.bf16.mxu0 0
    %4691 = vmatpush1.bf16.msra.mxu0 %v4667
    %4692 = vmatprep.subr.bf16.mxu0 0
    %4693 = vmatpush1.bf16.msra.mxu0 0
    %4694 = vmatprep.subr.bf16.mxu0 0
    %4695 = vmatpush1.bf16.msra.mxu0 0
    %4696 = vmatprep.subr.bf16.mxu0 0
    %4697 = vmatpush1.bf16.msra.mxu0 0
    %4698 = vmatprep.subr.bf16.mxu0 0
    %4699 = vmatpush1.bf16.msra.mxu0 0
    %4700 = vmatprep.subr.bf16.mxu0 0
    %4701 = vmatpush1.bf16.msra.mxu0 0
    %4702 = vmatprep.subr.bf16.mxu0 0
    %4703 = vmatpush1.bf16.msra.mxu0 0
    %4704 = vmatprep.subr.bf16.mxu0 0
    %4705 = vmatpush1.bf16.msra.mxu0 0
    %4706 = vmatprep.subr.bf16.mxu0 0
    %4707 = vmatpush1.bf16.msra.mxu0 0
    %4708 = vmatprep.subr.bf16.mxu0 0
    %4709 = vmatpush1.bf16.msra.mxu0 0
    %4710 = vmatprep.subr.bf16.mxu0 0
    %4711 = vmatpush1.bf16.msra.mxu0 0
    %4712 = vmatprep.subr.bf16.mxu0 0
    %4713 = vmatpush1.bf16.msra.mxu0 0
    %4714 = vmatprep.subr.bf16.mxu0 0
    %4715 = vmatpush1.bf16.msra.mxu0 0
    %4716 = vmatprep.mubr.bf16.mxu0 0
    %4717 = vmatmul.mubr.bf16.gmra.mrb[0].mxu0 %v4673
    %v4718 = vpop.f32.mrb[0].mxu0
    %v4719 = vadd.f32 0.0, %v4718
    %v4720 = vpop.f32.mrb[0].mxu0
    %v4721 = vpop.f32.mrb[0].mxu0
    %v4722 = vadd.f32 0.0, %v4721
    %v4723 = vpop.f32.mrb[0].mxu0
    %4724 = vmatprep.mubr.bf16.mxu0 0
    %4725 = vmatmul.mubr.bf16.gmra.mrb[0].mxu0 %v4676
    %v4726 = vpop.f32.mrb[0].mxu0
    %v4727 = vadd.f32 0.0, %v4726
    %v4728 = vpop.f32.mrb[0].mxu0
    %v4729 = vpop.f32.mrb[0].mxu0
    %v4730 = vadd.f32 0.0, %v4729
    %v4731 = vpop.f32.mrb[0].mxu0
    %4732 = vmatprep.mubr.bf16.mxu0 0
    %4733 = vmatmul.mubr.bf16.gmra.mrb[0].mxu0 %v4679
    %v4734 = vpop.f32.mrb[0].mxu0
    %v4735 = vadd.f32 0.0, %v4734
    %v4736 = vpop.f32.mrb[0].mxu0
    %v4737 = vpop.f32.mrb[0].mxu0
    %v4738 = vadd.f32 0.0, %v4737
    %v4739 = vpop.f32.mrb[0].mxu0
    %4740 = vmatprep.mubr.bf16.mxu0 0
    %4741 = vmatmul.mubr.bf16.gmra.mrb[0].mxu0 %v4682
    %v4742 = vpop.f32.mrb[0].mxu0
    %v4743 = vadd.f32 0.0, %v4742
    %v4744 = vpop.f32.mrb[0].mxu0
    %v4745 = vpop.f32.mrb[0].mxu0
    %v4746 = vadd.f32 0.0, %v4745
    %v4747 = vpop.f32.mrb[0].mxu0
    %4748 = vdwg.mxu0
    %v4749 = vmul.f32 %v4719, %v4648
    %v4750 = vmul.f32 %v4722, %v4649
    %v4751 = vmul.f32 %v4727, %v4650
    %v4752 = vmul.f32 %v4730, %v4651
    %v4753 = vmul.f32 %v4735, %v4652
    %v4754 = vmul.f32 %v4738, %v4653
    %v4755 = vmul.f32 %v4743, %v4654
    %v4756 = vmul.f32 %v4746, %v4655
    %4765 = vrot.lane.b32.xlu0 %v4749, 80
    %v4766 = vpop.permute.xlu0 %4765
    %4767 = vrot.lane.b32.xlu0 %v4750, 80
    %v4768 = vpop.permute.xlu0 %4767
    %4769 = vrot.lane.b32.xlu0 %v4751, 80
    %v4770 = vpop.permute.xlu0 %4769
    %4771 = vrot.lane.b32.xlu0 %v4752, 80
    %v4772 = vpop.permute.xlu0 %4771
    %4773 = vrot.lane.b32.xlu0 %v4753, 80
    %v4774 = vpop.permute.xlu0 %4773
    %4775 = vrot.lane.b32.xlu0 %v4754, 80
    %v4776 = vpop.permute.xlu0 %4775
    %4777 = vrot.lane.b32.xlu0 %v4755, 80
    %v4778 = vpop.permute.xlu0 %4777
    %4779 = vrot.lane.b32.xlu0 %v4756, 80
    %v4780 = vpop.permute.xlu0 %4779
    %v4789 = vsel %vm2105, %v4484, %v4766
    %v4790 = vsel %vm2105, %v4485, %v4768
    %v4791 = vsel %vm2105, %v4486, %v4770
    %v4792 = vsel %vm2105, %v4487, %v4772
    %v4793 = vsel %vm2105, %v4488, %v4774
    %v4794 = vsel %vm2105, %v4489, %v4776
    %v4795 = vsel %vm2105, %v4490, %v4778
    %v4796 = vsel %vm2105, %v4491, %v4780
    %4797 = vset.pattern.permute.xlu0 14
    %4798 = vperm.xlu0 %4797, %v2936
    %v4799 = vpop.permute.xlu0 %4798
    %4801 = vset.pattern.permute.xlu0 14
    %4802 = vperm.xlu0 %4801, %v2941
    %v4803 = vpop.permute.xlu0 %4802
    %4805 = vset.pattern.permute.xlu0 14
    %4806 = vperm.xlu0 %4805, %v2946
    %v4807 = vpop.permute.xlu0 %4806
    %4809 = vset.pattern.permute.xlu0 14
    %4810 = vperm.xlu0 %4809, %v2951
    %v4811 = vpop.permute.xlu0 %4810
    %4813 = vset.pattern.permute.xlu0 14
    %4814 = vperm.xlu0 %4813, %v2956
    %v4815 = vpop.permute.xlu0 %4814
    %4817 = vset.pattern.permute.xlu0 14
    %4818 = vperm.xlu0 %4817, %v2961
    %v4819 = vpop.permute.xlu0 %4818
    %4821 = vset.pattern.permute.xlu0 14
    %4822 = vperm.xlu0 %4821, %v2966
    %v4823 = vpop.permute.xlu0 %4822
    %4825 = vset.pattern.permute.xlu0 14
    %4826 = vperm.xlu0 %4825, %v2971
    %v4827 = vpop.permute.xlu0 %4826
    %v4829 = vlaneseq
    %v4830 = vshrl.u32 %v4829, 7
    %v4831 = vsub.s32 6, %v4830
    %v4832 = vrot.slane %v2990, %v4831
    %v4833 = vadd.f32 %v4799, %v4832
    %v4834 = vadd.f32 %v4803, %v4832
    %v4835 = vadd.f32 %v4807, %v4832
    %v4836 = vadd.f32 %v4811, %v4832
    %v4837 = vadd.f32 %v4815, %v4832
    %v4838 = vadd.f32 %v4819, %v4832
    %v4839 = vadd.f32 %v4823, %v4832
    %v4840 = vadd.f32 %v4827, %v4832
    %vm4841 = vcmp.gt.f32.partialorder %v4833, 0.0
    %vm4842 = vcmp.gt.f32.partialorder %v4834, 0.0
    %vm4843 = vcmp.gt.f32.partialorder %v4835, 0.0
    %vm4844 = vcmp.gt.f32.partialorder %v4836, 0.0
    %vm4845 = vcmp.gt.f32.partialorder %v4837, 0.0
    %vm4846 = vcmp.gt.f32.partialorder %v4838, 0.0
    %vm4847 = vcmp.gt.f32.partialorder %v4839, 0.0
    %vm4848 = vcmp.gt.f32.partialorder %v4840, 0.0
    %v4849 = vmul.f32 %v4833, 0.2
    %v4850 = vmul.f32 %v4834, 0.2
    %v4851 = vmul.f32 %v4835, 0.2
    %v4852 = vmul.f32 %v4836, 0.2
    %v4853 = vmul.f32 %v4837, 0.2
    %v4854 = vmul.f32 %v4838, 0.2
    %v4855 = vmul.f32 %v4839, 0.2
    %v4856 = vmul.f32 %v4840, 0.2
    %v4857 = vsel %vm4841, %v4833, %v4849
    %v4858 = vsel %vm4842, %v4834, %v4850
    %v4859 = vsel %vm4843, %v4835, %v4851
    %v4860 = vsel %vm4844, %v4836, %v4852
    %v4861 = vsel %vm4845, %v4837, %v4853
    %v4862 = vsel %vm4846, %v4838, %v4854
    %v4863 = vsel %vm4847, %v4839, %v4855
    %v4864 = vsel %vm4848, %v4840, %v4856
    %v4865 = vsel %vm52, %v4857, -1e+30
    %v4866 = vsel %vm53, %v4858, -1e+30
    %v4867 = vsel %vm54, %v4859, -1e+30
    %v4868 = vsel %vm55, %v4860, -1e+30
    %v4869 = vsel %vm56, %v4861, -1e+30
    %v4870 = vsel %vm57, %v4862, -1e+30
    %v4871 = vsel %vm58, %v4863, -1e+30
    %v4872 = vsel %vm59, %v4864, -1e+30
    %v4873 = vsel %vm84, %v4865, -inf
    %4874 = vmax.xlane.f32.xlu0 %v4873
    %v4875 = vpop.xlane.xlu0 %4874
    %v4876 = vsel %vm84, %v4866, -inf
    %4877 = vmax.xlane.f32.xlu0 %v4876
    %v4878 = vpop.xlane.xlu0 %4877
    %v4879 = vsel %vm84, %v4867, -inf
    %4880 = vmax.xlane.f32.xlu0 %v4879
    %v4881 = vpop.xlane.xlu0 %4880
    %v4882 = vsel %vm84, %v4868, -inf
    %4883 = vmax.xlane.f32.xlu0 %v4882
    %v4884 = vpop.xlane.xlu0 %4883
    %v4885 = vsel %vm84, %v4869, -inf
    %4886 = vmax.xlane.f32.xlu0 %v4885
    %v4887 = vpop.xlane.xlu0 %4886
    %v4888 = vsel %vm84, %v4870, -inf
    %4889 = vmax.xlane.f32.xlu0 %v4888
    %v4890 = vpop.xlane.xlu0 %4889
    %v4891 = vsel %vm84, %v4871, -inf
    %4892 = vmax.xlane.f32.xlu0 %v4891
    %v4893 = vpop.xlane.xlu0 %4892
    %v4894 = vsel %vm84, %v4872, -inf
    %4895 = vmax.xlane.f32.xlu0 %v4894
    %v4896 = vpop.xlane.xlu0 %4895
    %v4897 = vsub.f32 %v4865, %v4875
    %v4898 = vsub.f32 %v4866, %v4878
    %v4899 = vsub.f32 %v4867, %v4881
    %v4900 = vsub.f32 %v4868, %v4884
    %v4901 = vsub.f32 %v4869, %v4887
    %v4902 = vsub.f32 %v4870, %v4890
    %v4903 = vsub.f32 %v4871, %v4893
    %v4904 = vsub.f32 %v4872, %v4896
    %v4905 = vmul.f32 %v4897, 1.442695
    %v4906 = vpow.pop %v4905
    %v4907 = vmul.f32 %v4898, 1.442695
    %v4908 = vpow.pop %v4907
    %v4909 = vmul.f32 %v4899, 1.442695
    %v4910 = vpow.pop %v4909
    %v4911 = vmul.f32 %v4900, 1.442695
    %v4912 = vpow.pop %v4911
    %v4913 = vmul.f32 %v4901, 1.442695
    %v4914 = vpow.pop %v4913
    %v4915 = vmul.f32 %v4902, 1.442695
    %v4916 = vpow.pop %v4915
    %v4917 = vmul.f32 %v4903, 1.442695
    %v4918 = vpow.pop %v4917
    %v4919 = vmul.f32 %v4904, 1.442695
    %v4920 = vpow.pop %v4919
    %v4921 = vsel %vm84, %v4906, 0.0
    %4922 = vadd.xlane.f32.xlu0 %v4921
    %v4923 = vpop.xlane.xlu0 %4922
    %v4924 = vsel %vm84, %v4908, 0.0
    %4925 = vadd.xlane.f32.xlu0 %v4924
    %v4926 = vpop.xlane.xlu0 %4925
    %v4927 = vsel %vm84, %v4910, 0.0
    %4928 = vadd.xlane.f32.xlu0 %v4927
    %v4929 = vpop.xlane.xlu0 %4928
    %v4930 = vsel %vm84, %v4912, 0.0
    %4931 = vadd.xlane.f32.xlu0 %v4930
    %v4932 = vpop.xlane.xlu0 %4931
    %v4933 = vsel %vm84, %v4914, 0.0
    %4934 = vadd.xlane.f32.xlu0 %v4933
    %v4935 = vpop.xlane.xlu0 %4934
    %v4936 = vsel %vm84, %v4916, 0.0
    %4937 = vadd.xlane.f32.xlu0 %v4936
    %v4938 = vpop.xlane.xlu0 %4937
    %v4939 = vsel %vm84, %v4918, 0.0
    %4940 = vadd.xlane.f32.xlu0 %v4939
    %v4941 = vpop.xlane.xlu0 %4940
    %v4942 = vsel %vm84, %v4920, 0.0
    %4943 = vadd.xlane.f32.xlu0 %v4942
    %v4944 = vpop.xlane.xlu0 %4943
    %v4945 = vmax.f32 %v4923, 1e-20
    %v4946 = vmax.f32 %v4926, 1e-20
    %v4947 = vmax.f32 %v4929, 1e-20
    %v4948 = vmax.f32 %v4932, 1e-20
    %v4949 = vmax.f32 %v4935, 1e-20
    %v4950 = vmax.f32 %v4938, 1e-20
    %v4951 = vmax.f32 %v4941, 1e-20
    %v4952 = vmax.f32 %v4944, 1e-20
    %v4953 = vrcp.pop %v4945
    %v4954 = vrcp.pop %v4946
    %v4955 = vrcp.pop %v4947
    %v4956 = vrcp.pop %v4948
    %v4957 = vrcp.pop %v4949
    %v4958 = vrcp.pop %v4950
    %v4959 = vrcp.pop %v4951
    %v4960 = vrcp.pop %v4952
    %v4961 = vpack.c.bf16 %v4908, %v4906
    %v4962 = vpack.c.bf16 %v4912, %v4910
    %v4963 = vpack.c.bf16 %v4916, %v4914
    %v4964 = vpack.c.bf16 %v4920, %v4918
    %4965 = vrot.lane.b32.xlu0 %v2849, 32
    %v4966 = vpop.permute.xlu0 %4965
    %4967 = vrot.lane.b32.xlu0 %v2850, 32
    %v4968 = vpop.permute.xlu0 %4967
    %4969 = vrot.lane.b32.xlu0 %v2851, 32
    %v4970 = vpop.permute.xlu0 %4969
    %4971 = vrot.lane.b32.xlu0 %v2852, 32
    %v4972 = vpop.permute.xlu0 %4971
    %v4978 = vsel %vm84, %v4961, 0
    %v4981 = vsel %vm84, %v4962, 0
    %v4984 = vsel %vm84, %v4963, 0
    %v4987 = vsel %vm84, %v4964, 0
    %4989 = vmatprep.subr.bf16.mxu0 0
    %4990 = vmatpush1.bf16.msra.mxu0 %v4966
    %4991 = vmatprep.subr.bf16.mxu0 0
    %4992 = vmatpush1.bf16.msra.mxu0 %v4968
    %4993 = vmatprep.subr.bf16.mxu0 0
    %4994 = vmatpush1.bf16.msra.mxu0 %v4970
    %4995 = vmatprep.subr.bf16.mxu0 0
    %4996 = vmatpush1.bf16.msra.mxu0 %v4972
    %4997 = vmatprep.subr.bf16.mxu0 0
    %4998 = vmatpush1.bf16.msra.mxu0 0
    %4999 = vmatprep.subr.bf16.mxu0 0
    %5000 = vmatpush1.bf16.msra.mxu0 0
    %5001 = vmatprep.subr.bf16.mxu0 0
    %5002 = vmatpush1.bf16.msra.mxu0 0
    %5003 = vmatprep.subr.bf16.mxu0 0
    %5004 = vmatpush1.bf16.msra.mxu0 0
    %5005 = vmatprep.subr.bf16.mxu0 0
    %5006 = vmatpush1.bf16.msra.mxu0 0
    %5007 = vmatprep.subr.bf16.mxu0 0
    %5008 = vmatpush1.bf16.msra.mxu0 0
    %5009 = vmatprep.subr.bf16.mxu0 0
    %5010 = vmatpush1.bf16.msra.mxu0 0
    %5011 = vmatprep.subr.bf16.mxu0 0
    %5012 = vmatpush1.bf16.msra.mxu0 0
    %5013 = vmatprep.subr.bf16.mxu0 0
    %5014 = vmatpush1.bf16.msra.mxu0 0
    %5015 = vmatprep.subr.bf16.mxu0 0
    %5016 = vmatpush1.bf16.msra.mxu0 0
    %5017 = vmatprep.subr.bf16.mxu0 0
    %5018 = vmatpush1.bf16.msra.mxu0 0
    %5019 = vmatprep.subr.bf16.mxu0 0
    %5020 = vmatpush1.bf16.msra.mxu0 0
    %5021 = vmatprep.mubr.bf16.mxu0 0
    %5022 = vmatmul.mubr.bf16.gmra.mrb[0].mxu0 %v4978
    %v5023 = vpop.f32.mrb[0].mxu0
    %v5024 = vadd.f32 0.0, %v5023
    %v5025 = vpop.f32.mrb[0].mxu0
    %v5026 = vpop.f32.mrb[0].mxu0
    %v5027 = vadd.f32 0.0, %v5026
    %v5028 = vpop.f32.mrb[0].mxu0
    %5029 = vmatprep.mubr.bf16.mxu0 0
    %5030 = vmatmul.mubr.bf16.gmra.mrb[0].mxu0 %v4981
    %v5031 = vpop.f32.mrb[0].mxu0
    %v5032 = vadd.f32 0.0, %v5031
    %v5033 = vpop.f32.mrb[0].mxu0
    %v5034 = vpop.f32.mrb[0].mxu0
    %v5035 = vadd.f32 0.0, %v5034
    %v5036 = vpop.f32.mrb[0].mxu0
    %5037 = vmatprep.mubr.bf16.mxu0 0
    %5038 = vmatmul.mubr.bf16.gmra.mrb[0].mxu0 %v4984
    %v5039 = vpop.f32.mrb[0].mxu0
    %v5040 = vadd.f32 0.0, %v5039
    %v5041 = vpop.f32.mrb[0].mxu0
    %v5042 = vpop.f32.mrb[0].mxu0
    %v5043 = vadd.f32 0.0, %v5042
    %v5044 = vpop.f32.mrb[0].mxu0
    %5045 = vmatprep.mubr.bf16.mxu0 0
    %5046 = vmatmul.mubr.bf16.gmra.mrb[0].mxu0 %v4987
    %v5047 = vpop.f32.mrb[0].mxu0
    %v5048 = vadd.f32 0.0, %v5047
    %v5049 = vpop.f32.mrb[0].mxu0
    %v5050 = vpop.f32.mrb[0].mxu0
    %v5051 = vadd.f32 0.0, %v5050
    %v5052 = vpop.f32.mrb[0].mxu0
    %5053 = vdwg.mxu0
    %v5054 = vmul.f32 %v5024, %v4953
    %v5055 = vmul.f32 %v5027, %v4954
    %v5056 = vmul.f32 %v5032, %v4955
    %v5057 = vmul.f32 %v5035, %v4956
    %v5058 = vmul.f32 %v5040, %v4957
    %v5059 = vmul.f32 %v5043, %v4958
    %v5060 = vmul.f32 %v5048, %v4959
    %v5061 = vmul.f32 %v5051, %v4960
    %5070 = vrot.lane.b32.xlu0 %v5054, 96
    %v5071 = vpop.permute.xlu0 %5070
    %5072 = vrot.lane.b32.xlu0 %v5055, 96
    %v5073 = vpop.permute.xlu0 %5072
    %5074 = vrot.lane.b32.xlu0 %v5056, 96
    %v5075 = vpop.permute.xlu0 %5074
    %5076 = vrot.lane.b32.xlu0 %v5057, 96
    %v5077 = vpop.permute.xlu0 %5076
    %5078 = vrot.lane.b32.xlu0 %v5058, 96
    %v5079 = vpop.permute.xlu0 %5078
    %5080 = vrot.lane.b32.xlu0 %v5059, 96
    %v5081 = vpop.permute.xlu0 %5080
    %5082 = vrot.lane.b32.xlu0 %v5060, 96
    %v5083 = vpop.permute.xlu0 %5082
    %5084 = vrot.lane.b32.xlu0 %v5061, 96
    %v5085 = vpop.permute.xlu0 %5084
    %v5094 = vsel %vm2411, %v4789, %v5071
    %v5095 = vsel %vm2411, %v4790, %v5073
    %v5096 = vsel %vm2411, %v4791, %v5075
    %v5097 = vsel %vm2411, %v4792, %v5077
    %v5098 = vsel %vm2411, %v4793, %v5079
    %v5099 = vsel %vm2411, %v4794, %v5081
    %v5100 = vsel %vm2411, %v4795, %v5083
    %v5101 = vsel %vm2411, %v4796, %v5085
    %5102 = vset.pattern.permute.xlu0 15
    %5103 = vperm.xlu0 %5102, %v2936
    %v5104 = vpop.permute.xlu0 %5103
    %5106 = vset.pattern.permute.xlu0 15
    %5107 = vperm.xlu0 %5106, %v2941
    %v5108 = vpop.permute.xlu0 %5107
    %5110 = vset.pattern.permute.xlu0 15
    %5111 = vperm.xlu0 %5110, %v2946
    %v5112 = vpop.permute.xlu0 %5111
    %5114 = vset.pattern.permute.xlu0 15
    %5115 = vperm.xlu0 %5114, %v2951
    %v5116 = vpop.permute.xlu0 %5115
    %5118 = vset.pattern.permute.xlu0 15
    %5119 = vperm.xlu0 %5118, %v2956
    %v5120 = vpop.permute.xlu0 %5119
    %5122 = vset.pattern.permute.xlu0 15
    %5123 = vperm.xlu0 %5122, %v2961
    %v5124 = vpop.permute.xlu0 %5123
    %5126 = vset.pattern.permute.xlu0 15
    %5127 = vperm.xlu0 %5126, %v2966
    %v5128 = vpop.permute.xlu0 %5127
    %5130 = vset.pattern.permute.xlu0 15
    %5131 = vperm.xlu0 %5130, %v2971
    %v5132 = vpop.permute.xlu0 %5131
    %v5134 = vlaneseq
    %v5135 = vshrl.u32 %v5134, 7
    %v5136 = vsub.s32 7, %v5135
    %v5137 = vrot.slane %v2990, %v5136
    %v5138 = vadd.f32 %v5104, %v5137
    %v5139 = vadd.f32 %v5108, %v5137
    %v5140 = vadd.f32 %v5112, %v5137
    %v5141 = vadd.f32 %v5116, %v5137
    %v5142 = vadd.f32 %v5120, %v5137
    %v5143 = vadd.f32 %v5124, %v5137
    %v5144 = vadd.f32 %v5128, %v5137
    %v5145 = vadd.f32 %v5132, %v5137
    %vm5146 = vcmp.gt.f32.partialorder %v5138, 0.0
    %vm5147 = vcmp.gt.f32.partialorder %v5139, 0.0
    %vm5148 = vcmp.gt.f32.partialorder %v5140, 0.0
    %vm5149 = vcmp.gt.f32.partialorder %v5141, 0.0
    %vm5150 = vcmp.gt.f32.partialorder %v5142, 0.0
    %vm5151 = vcmp.gt.f32.partialorder %v5143, 0.0
    %vm5152 = vcmp.gt.f32.partialorder %v5144, 0.0
    %vm5153 = vcmp.gt.f32.partialorder %v5145, 0.0
    %v5154 = vmul.f32 %v5138, 0.2
    %v5155 = vmul.f32 %v5139, 0.2
    %v5156 = vmul.f32 %v5140, 0.2
    %v5157 = vmul.f32 %v5141, 0.2
    %v5158 = vmul.f32 %v5142, 0.2
    %v5159 = vmul.f32 %v5143, 0.2
    %v5160 = vmul.f32 %v5144, 0.2
    %v5161 = vmul.f32 %v5145, 0.2
    %v5162 = vsel %vm5146, %v5138, %v5154
    %v5163 = vsel %vm5147, %v5139, %v5155
    %v5164 = vsel %vm5148, %v5140, %v5156
    %v5165 = vsel %vm5149, %v5141, %v5157
    %v5166 = vsel %vm5150, %v5142, %v5158
    %v5167 = vsel %vm5151, %v5143, %v5159
    %v5168 = vsel %vm5152, %v5144, %v5160
    %v5169 = vsel %vm5153, %v5145, %v5161
    %v5170 = vsel %vm52, %v5162, -1e+30
    %v5171 = vsel %vm53, %v5163, -1e+30
    %v5172 = vsel %vm54, %v5164, -1e+30
    %v5173 = vsel %vm55, %v5165, -1e+30
    %v5174 = vsel %vm56, %v5166, -1e+30
    %v5175 = vsel %vm57, %v5167, -1e+30
    %v5176 = vsel %vm58, %v5168, -1e+30
    %v5177 = vsel %vm59, %v5169, -1e+30
    %v5178 = vsel %vm84, %v5170, -inf
    %5179 = vmax.xlane.f32.xlu0 %v5178
    %v5180 = vpop.xlane.xlu0 %5179
    %v5181 = vsel %vm84, %v5171, -inf
    %5182 = vmax.xlane.f32.xlu0 %v5181
    %v5183 = vpop.xlane.xlu0 %5182
    %v5184 = vsel %vm84, %v5172, -inf
    %5185 = vmax.xlane.f32.xlu0 %v5184
    %v5186 = vpop.xlane.xlu0 %5185
    %v5187 = vsel %vm84, %v5173, -inf
    %5188 = vmax.xlane.f32.xlu0 %v5187
    %v5189 = vpop.xlane.xlu0 %5188
    %v5190 = vsel %vm84, %v5174, -inf
    %5191 = vmax.xlane.f32.xlu0 %v5190
    %v5192 = vpop.xlane.xlu0 %5191
    %v5193 = vsel %vm84, %v5175, -inf
    %5194 = vmax.xlane.f32.xlu0 %v5193
    %v5195 = vpop.xlane.xlu0 %5194
    %v5196 = vsel %vm84, %v5176, -inf
    %5197 = vmax.xlane.f32.xlu0 %v5196
    %v5198 = vpop.xlane.xlu0 %5197
    %v5199 = vsel %vm84, %v5177, -inf
    %5200 = vmax.xlane.f32.xlu0 %v5199
    %v5201 = vpop.xlane.xlu0 %5200
    %v5202 = vsub.f32 %v5170, %v5180
    %v5203 = vsub.f32 %v5171, %v5183
    %v5204 = vsub.f32 %v5172, %v5186
    %v5205 = vsub.f32 %v5173, %v5189
    %v5206 = vsub.f32 %v5174, %v5192
    %v5207 = vsub.f32 %v5175, %v5195
    %v5208 = vsub.f32 %v5176, %v5198
    %v5209 = vsub.f32 %v5177, %v5201
    %v5210 = vmul.f32 %v5202, 1.442695
    %v5211 = vpow.pop %v5210
    %v5212 = vmul.f32 %v5203, 1.442695
    %v5213 = vpow.pop %v5212
    %v5214 = vmul.f32 %v5204, 1.442695
    %v5215 = vpow.pop %v5214
    %v5216 = vmul.f32 %v5205, 1.442695
    %v5217 = vpow.pop %v5216
    %v5218 = vmul.f32 %v5206, 1.442695
    %v5219 = vpow.pop %v5218
    %v5220 = vmul.f32 %v5207, 1.442695
    %v5221 = vpow.pop %v5220
    %v5222 = vmul.f32 %v5208, 1.442695
    %v5223 = vpow.pop %v5222
    %v5224 = vmul.f32 %v5209, 1.442695
    %v5225 = vpow.pop %v5224
    %v5226 = vsel %vm84, %v5211, 0.0
    %5227 = vadd.xlane.f32.xlu0 %v5226
    %v5228 = vpop.xlane.xlu0 %5227
    %v5229 = vsel %vm84, %v5213, 0.0
    %5230 = vadd.xlane.f32.xlu0 %v5229
    %v5231 = vpop.xlane.xlu0 %5230
    %v5232 = vsel %vm84, %v5215, 0.0
    %5233 = vadd.xlane.f32.xlu0 %v5232
    %v5234 = vpop.xlane.xlu0 %5233
    %v5235 = vsel %vm84, %v5217, 0.0
    %5236 = vadd.xlane.f32.xlu0 %v5235
    %v5237 = vpop.xlane.xlu0 %5236
    %v5238 = vsel %vm84, %v5219, 0.0
    %5239 = vadd.xlane.f32.xlu0 %v5238
    %v5240 = vpop.xlane.xlu0 %5239
    %v5241 = vsel %vm84, %v5221, 0.0
    %5242 = vadd.xlane.f32.xlu0 %v5241
    %v5243 = vpop.xlane.xlu0 %5242
    %v5244 = vsel %vm84, %v5223, 0.0
    %5245 = vadd.xlane.f32.xlu0 %v5244
    %v5246 = vpop.xlane.xlu0 %5245
    %v5247 = vsel %vm84, %v5225, 0.0
    %5248 = vadd.xlane.f32.xlu0 %v5247
    %v5249 = vpop.xlane.xlu0 %5248
    %v5250 = vmax.f32 %v5228, 1e-20
    %v5251 = vmax.f32 %v5231, 1e-20
    %v5252 = vmax.f32 %v5234, 1e-20
    %v5253 = vmax.f32 %v5237, 1e-20
    %v5254 = vmax.f32 %v5240, 1e-20
    %v5255 = vmax.f32 %v5243, 1e-20
    %v5256 = vmax.f32 %v5246, 1e-20
    %v5257 = vmax.f32 %v5249, 1e-20
    %v5258 = vrcp.pop %v5250
    %v5259 = vrcp.pop %v5251
    %v5260 = vrcp.pop %v5252
    %v5261 = vrcp.pop %v5253
    %v5262 = vrcp.pop %v5254
    %v5263 = vrcp.pop %v5255
    %v5264 = vrcp.pop %v5256
    %v5265 = vrcp.pop %v5257
    %v5266 = vpack.c.bf16 %v5213, %v5211
    %v5267 = vpack.c.bf16 %v5217, %v5215
    %v5268 = vpack.c.bf16 %v5221, %v5219
    %v5269 = vpack.c.bf16 %v5225, %v5223
    %5270 = vrot.lane.b32.xlu0 %v2849, 16
    %v5271 = vpop.permute.xlu0 %5270
    %5272 = vrot.lane.b32.xlu0 %v2850, 16
    %v5273 = vpop.permute.xlu0 %5272
    %5274 = vrot.lane.b32.xlu0 %v2851, 16
    %v5275 = vpop.permute.xlu0 %5274
    %5276 = vrot.lane.b32.xlu0 %v2852, 16
    %v5277 = vpop.permute.xlu0 %5276
    %v5283 = vsel %vm84, %v5266, 0
    %v5286 = vsel %vm84, %v5267, 0
    %v5289 = vsel %vm84, %v5268, 0
    %v5292 = vsel %vm84, %v5269, 0
    %5294 = vmatprep.subr.bf16.mxu0 0
    %5295 = vmatpush1.bf16.msra.mxu0 %v5271
    %5296 = vmatprep.subr.bf16.mxu0 0
    %5297 = vmatpush1.bf16.msra.mxu0 %v5273
    %5298 = vmatprep.subr.bf16.mxu0 0
    %5299 = vmatpush1.bf16.msra.mxu0 %v5275
    %5300 = vmatprep.subr.bf16.mxu0 0
    %5301 = vmatpush1.bf16.msra.mxu0 %v5277
    %5302 = vmatprep.subr.bf16.mxu0 0
    %5303 = vmatpush1.bf16.msra.mxu0 0
    %5304 = vmatprep.subr.bf16.mxu0 0
    %5305 = vmatpush1.bf16.msra.mxu0 0
    %5306 = vmatprep.subr.bf16.mxu0 0
    %5307 = vmatpush1.bf16.msra.mxu0 0
    %5308 = vmatprep.subr.bf16.mxu0 0
    %5309 = vmatpush1.bf16.msra.mxu0 0
    %5310 = vmatprep.subr.bf16.mxu0 0
    %5311 = vmatpush1.bf16.msra.mxu0 0
    %5312 = vmatprep.subr.bf16.mxu0 0
    %5313 = vmatpush1.bf16.msra.mxu0 0
    %5314 = vmatprep.subr.bf16.mxu0 0
    %5315 = vmatpush1.bf16.msra.mxu0 0
    %5316 = vmatprep.subr.bf16.mxu0 0
    %5317 = vmatpush1.bf16.msra.mxu0 0
    %5318 = vmatprep.subr.bf16.mxu0 0
    %5319 = vmatpush1.bf16.msra.mxu0 0
    %5320 = vmatprep.subr.bf16.mxu0 0
    %5321 = vmatpush1.bf16.msra.mxu0 0
    %5322 = vmatprep.subr.bf16.mxu0 0
    %5323 = vmatpush1.bf16.msra.mxu0 0
    %5324 = vmatprep.subr.bf16.mxu0 0
    %5325 = vmatpush1.bf16.msra.mxu0 0
    %5326 = vmatprep.mubr.bf16.mxu0 0
    %5327 = vmatmul.mubr.bf16.gmra.mrb[0].mxu0 %v5283
    %v5328 = vpop.f32.mrb[0].mxu0
    %v5329 = vadd.f32 0.0, %v5328
    %v5330 = vpop.f32.mrb[0].mxu0
    %v5331 = vpop.f32.mrb[0].mxu0
    %v5332 = vadd.f32 0.0, %v5331
    %v5333 = vpop.f32.mrb[0].mxu0
    %5334 = vmatprep.mubr.bf16.mxu0 0
    %5335 = vmatmul.mubr.bf16.gmra.mrb[0].mxu0 %v5286
    %v5336 = vpop.f32.mrb[0].mxu0
    %v5337 = vadd.f32 0.0, %v5336
    %v5338 = vpop.f32.mrb[0].mxu0
    %v5339 = vpop.f32.mrb[0].mxu0
    %v5340 = vadd.f32 0.0, %v5339
    %v5341 = vpop.f32.mrb[0].mxu0
    %5342 = vmatprep.mubr.bf16.mxu0 0
    %5343 = vmatmul.mubr.bf16.gmra.mrb[0].mxu0 %v5289
    %v5344 = vpop.f32.mrb[0].mxu0
    %v5345 = vadd.f32 0.0, %v5344
    %v5346 = vpop.f32.mrb[0].mxu0
    %v5347 = vpop.f32.mrb[0].mxu0
    %v5348 = vadd.f32 0.0, %v5347
    %v5349 = vpop.f32.mrb[0].mxu0
    %5350 = vmatprep.mubr.bf16.mxu0 0
    %5351 = vmatmul.mubr.bf16.gmra.mrb[0].mxu0 %v5292
    %v5352 = vpop.f32.mrb[0].mxu0
    %v5353 = vadd.f32 0.0, %v5352
    %v5354 = vpop.f32.mrb[0].mxu0
    %v5355 = vpop.f32.mrb[0].mxu0
    %v5356 = vadd.f32 0.0, %v5355
    %v5357 = vpop.f32.mrb[0].mxu0
    %5358 = vdwg.mxu0
    %v5359 = vmul.f32 %v5329, %v5258
    %v5360 = vmul.f32 %v5332, %v5259
    %v5361 = vmul.f32 %v5337, %v5260
    %v5362 = vmul.f32 %v5340, %v5261
    %v5363 = vmul.f32 %v5345, %v5262
    %v5364 = vmul.f32 %v5348, %v5263
    %v5365 = vmul.f32 %v5353, %v5264
    %v5366 = vmul.f32 %v5356, %v5265
    %5375 = vrot.lane.b32.xlu0 %v5359, 112
    %v5376 = vpop.permute.xlu0 %5375
    %5377 = vrot.lane.b32.xlu0 %v5360, 112
    %v5378 = vpop.permute.xlu0 %5377
    %5379 = vrot.lane.b32.xlu0 %v5361, 112
    %v5380 = vpop.permute.xlu0 %5379
    %5381 = vrot.lane.b32.xlu0 %v5362, 112
    %v5382 = vpop.permute.xlu0 %5381
    %5383 = vrot.lane.b32.xlu0 %v5363, 112
    %v5384 = vpop.permute.xlu0 %5383
    %5385 = vrot.lane.b32.xlu0 %v5364, 112
    %v5386 = vpop.permute.xlu0 %5385
    %5387 = vrot.lane.b32.xlu0 %v5365, 112
    %v5388 = vpop.permute.xlu0 %5387
    %5389 = vrot.lane.b32.xlu0 %v5366, 112
    %v5390 = vpop.permute.xlu0 %5389
    %v5399 = vsel %vm2717, %v5094, %v5376
    %v5400 = vsel %vm2717, %v5095, %v5378
    %v5401 = vsel %vm2717, %v5096, %v5380
    %v5402 = vsel %vm2717, %v5097, %v5382
    %v5403 = vsel %vm2717, %v5098, %v5384
    %v5404 = vsel %vm2717, %v5099, %v5386
    %v5405 = vsel %vm2717, %v5100, %v5388
    %v5406 = vsel %vm2717, %v5101, %v5390
    %v5408 = vlaneseq
    %v5409 = vshrl.u32 %v5408, 7
    %v5410 = vsub.s32 0, %v5409
    %v5411 = vrot.slane %v3006, %v5410
    %v5413 = vadd.f32 %v5399, %v5411
    %v5414 = vadd.f32 %v5400, %v5411
    %v5415 = vadd.f32 %v5401, %v5411
    %v5416 = vadd.f32 %v5402, %v5411
    %v5417 = vadd.f32 %v5403, %v5411
    %v5418 = vadd.f32 %v5404, %v5411
    %v5419 = vadd.f32 %v5405, %v5411
    %v5420 = vadd.f32 %v5406, %v5411
    %v5421 = vmax.f32 %v5413, 0.0
    %v5422 = vmax.f32 %v5414, 0.0
    %v5423 = vmax.f32 %v5415, 0.0
    %v5424 = vmax.f32 %v5416, 0.0
    %v5425 = vmax.f32 %v5417, 0.0
    %v5426 = vmax.f32 %v5418, 0.0
    %v5427 = vmax.f32 %v5419, 0.0
    %v5428 = vmax.f32 %v5420, 0.0
    %5429 = vst [vmem:[#allocation4] sm:$0xff] %v5421
    %5430 = vst [vmem:[#allocation4 + $0x8] sm:$0xff] %v5422
    %5431 = vst [vmem:[#allocation4 + $0x10] sm:$0xff] %v5423
    %5432 = vst [vmem:[#allocation4 + $0x18] sm:$0xff] %v5424
    %5433 = vst [vmem:[#allocation4 + $0x20] sm:$0xff] %v5425
    %5434 = vst [vmem:[#allocation4 + $0x28] sm:$0xff] %v5426
    %5435 = vst [vmem:[#allocation4 + $0x30] sm:$0xff] %v5427
    %5436 = vst [vmem:[#allocation4 + $0x38] sm:$0xff] %v5428
    %v5437 = vpack.c.bf16 %v5422, %v5421
    %v5438 = vpack.c.bf16 %v5424, %v5423
    %v5439 = vpack.c.bf16 %v5426, %v5425
    %v5440 = vpack.c.bf16 %v5428, %v5427
    %v5441 = vld [vmem:[%s8] sm:$0xff]
    %v5442 = vld [vmem:[%s8 + $0x8] sm:$0xff]
    %v5443 = vld [vmem:[%s8 + $0x10] sm:$0xff]
    %v5444 = vld [vmem:[%s8 + $0x18] sm:$0xff]
    %v5445 = vld [vmem:[%s8 + $0x20] sm:$0xff]
    %v5446 = vld [vmem:[%s8 + $0x28] sm:$0xff]
    %v5447 = vld [vmem:[%s8 + $0x30] sm:$0xff]
    %v5448 = vld [vmem:[%s8 + $0x38] sm:$0xff]
    %v5449 = vld [vmem:[%s8 + $0x40] sm:$0xff]
    %v5450 = vld [vmem:[%s8 + $0x48] sm:$0xff]
    %v5451 = vld [vmem:[%s8 + $0x50] sm:$0xff]
    %v5452 = vld [vmem:[%s8 + $0x58] sm:$0xff]
    %v5453 = vld [vmem:[%s8 + $0x60] sm:$0xff]
    %v5454 = vld [vmem:[%s8 + $0x68] sm:$0xff]
    %v5455 = vld [vmem:[%s8 + $0x70] sm:$0xff]
    %v5456 = vld [vmem:[%s8 + $0x78] sm:$0xff]
    %v5457 = vpack.c.bf16 %v5442, %v5441
    %v5458 = vpack.c.bf16 %v5444, %v5443
    %v5459 = vpack.c.bf16 %v5446, %v5445
    %v5460 = vpack.c.bf16 %v5448, %v5447
    %v5461 = vpack.c.bf16 %v5450, %v5449
    %v5462 = vpack.c.bf16 %v5452, %v5451
    %v5463 = vpack.c.bf16 %v5454, %v5453
    %v5464 = vpack.c.bf16 %v5456, %v5455
    %5465 = vmatprep.subr.bf16.mxu0 0
    %5466 = vmatpush1.bf16.msra.mxu0 %v5457
    %5467 = vmatprep.subr.bf16.mxu0 0
    %5468 = vmatpush1.bf16.msra.mxu0 %v5458
    %5469 = vmatprep.subr.bf16.mxu0 0
    %5470 = vmatpush1.bf16.msra.mxu0 %v5459
    %5471 = vmatprep.subr.bf16.mxu0 0
    %5472 = vmatpush1.bf16.msra.mxu0 %v5460
    %5473 = vmatprep.subr.bf16.mxu0 0
    %5474 = vmatpush1.bf16.msra.mxu0 %v5461
    %5475 = vmatprep.subr.bf16.mxu0 0
    %5476 = vmatpush1.bf16.msra.mxu0 %v5462
    %5477 = vmatprep.subr.bf16.mxu0 0
    %5478 = vmatpush1.bf16.msra.mxu0 %v5463
    %5479 = vmatprep.subr.bf16.mxu0 0
    %5480 = vmatpush1.bf16.msra.mxu0 %v5464
    %5481 = vmatprep.subr.bf16.mxu0 0
    %5482 = vmatpush1.bf16.msra.mxu0 0
    %5483 = vmatprep.subr.bf16.mxu0 0
    %5484 = vmatpush1.bf16.msra.mxu0 0
    %5485 = vmatprep.subr.bf16.mxu0 0
    %5486 = vmatpush1.bf16.msra.mxu0 0
    %5487 = vmatprep.subr.bf16.mxu0 0
    %5488 = vmatpush1.bf16.msra.mxu0 0
    %5489 = vmatprep.subr.bf16.mxu0 0
    %5490 = vmatpush1.bf16.msra.mxu0 0
    %5491 = vmatprep.subr.bf16.mxu0 0
    %5492 = vmatpush1.bf16.msra.mxu0 0
    %5493 = vmatprep.subr.bf16.mxu0 0
    %5494 = vmatpush1.bf16.msra.mxu0 0
    %5495 = vmatprep.subr.bf16.mxu0 0
    %5496 = vmatpush1.bf16.msra.mxu0 0
    %5497 = vmatprep.mubr.bf16.mxu0 0
    %5498 = vmatmul.mubr.bf16.gmra.mrb[0].mxu0 %v5437
    %v5499 = vpop.f32.mrb[0].mxu0
    %v5500 = vadd.f32 0.0, %v5499
    %v5501 = vpop.f32.mrb[0].mxu0
    %v5502 = vpop.f32.mrb[0].mxu0
    %v5503 = vadd.f32 0.0, %v5502
    %v5504 = vpop.f32.mrb[0].mxu0
    %5505 = vmatprep.mubr.bf16.mxu0 0
    %5506 = vmatmul.mubr.bf16.gmra.mrb[0].mxu0 %v5438
    %v5507 = vpop.f32.mrb[0].mxu0
    %v5508 = vadd.f32 0.0, %v5507
    %v5509 = vpop.f32.mrb[0].mxu0
    %v5510 = vpop.f32.mrb[0].mxu0
    %v5511 = vadd.f32 0.0, %v5510
    %v5512 = vpop.f32.mrb[0].mxu0
    %5513 = vmatprep.mubr.bf16.mxu0 0
    %5514 = vmatmul.mubr.bf16.gmra.mrb[0].mxu0 %v5439
    %v5515 = vpop.f32.mrb[0].mxu0
    %v5516 = vadd.f32 0.0, %v5515
    %v5517 = vpop.f32.mrb[0].mxu0
    %v5518 = vpop.f32.mrb[0].mxu0
    %v5519 = vadd.f32 0.0, %v5518
    %v5520 = vpop.f32.mrb[0].mxu0
    %5521 = vmatprep.mubr.bf16.mxu0 0
    %5522 = vmatmul.mubr.bf16.gmra.mrb[0].mxu0 %v5440
    %v5523 = vpop.f32.mrb[0].mxu0
    %v5524 = vadd.f32 0.0, %v5523
    %v5525 = vpop.f32.mrb[0].mxu0
    %v5526 = vpop.f32.mrb[0].mxu0
    %v5527 = vadd.f32 0.0, %v5526
    %v5528 = vpop.f32.mrb[0].mxu0
    %5529 = vdwg.mxu0
    %v5530 = vpack.c.bf16 %v5503, %v5500
    %v5531 = vpack.c.bf16 %v5511, %v5508
    %v5532 = vpack.c.bf16 %v5519, %v5516
    %v5533 = vpack.c.bf16 %v5527, %v5524
    %v5534 = vld [vmem:[%s9] sm:$0xff]
    %v5535 = vld [vmem:[%s9 + $0x8] sm:$0xff]
    %v5536 = vld [vmem:[%s9 + $0x10] sm:$0xff]
    %v5537 = vld [vmem:[%s9 + $0x18] sm:$0xff]
    %v5539 = vsel %vm1188, %v5500, 0
    %v5542 = vsel %vm1188, %v5503, 0
    %v5545 = vsel %vm1188, %v5508, 0
    %v5548 = vsel %vm1188, %v5511, 0
    %v5551 = vsel %vm1188, %v5516, 0
    %v5554 = vsel %vm1188, %v5519, 0
    %v5557 = vsel %vm1188, %v5524, 0
    %v5560 = vsel %vm1188, %v5527, 0
    %5562 = vmatprep.subr.mxu0 0.0
    %5563 = vmatpush1.msra.mxu0 %v5534
    %5564 = vmatprep.subr.mxu0 0.0
    %5565 = vmatpush1.msra.mxu0 %v5535
    %5566 = vmatprep.subr.mxu0 0.0
    %5567 = vmatpush1.msra.mxu0 %v5536
    %5568 = vmatprep.subr.mxu0 0.0
    %5569 = vmatpush1.msra.mxu0 %v5537
    %5570 = vmatprep.subr.mxu0 0.0
    %5571 = vmatpush1.msra.mxu0 0.0
    %5572 = vmatprep.subr.mxu0 0.0
    %5573 = vmatpush1.msra.mxu0 0.0
    %5574 = vmatprep.subr.mxu0 0.0
    %5575 = vmatpush1.msra.mxu0 0.0
    %5576 = vmatprep.subr.mxu0 0.0
    %5577 = vmatpush1.msra.mxu0 0.0
    %5578 = vmatprep.subr.mxu0 0.0
    %5579 = vmatpush1.msra.mxu0 0.0
    %5580 = vmatprep.subr.mxu0 0.0
    %5581 = vmatpush1.msra.mxu0 0.0
    %5582 = vmatprep.subr.mxu0 0.0
    %5583 = vmatpush1.msra.mxu0 0.0
    %5584 = vmatprep.subr.mxu0 0.0
    %5585 = vmatpush1.msra.mxu0 0.0
    %5586 = vmatprep.subr.mxu0 0.0
    %5587 = vmatpush1.msra.mxu0 0.0
    %5588 = vmatprep.subr.mxu0 0.0
    %5589 = vmatpush1.msra.mxu0 0.0
    %5590 = vmatprep.subr.mxu0 0.0
    %5591 = vmatpush1.msra.mxu0 0.0
    %5592 = vmatprep.subr.mxu0 0.0
    %5593 = vmatpush1.msra.mxu0 0.0
    %5594 = vmatprep.subr.mxu0 0.0
    %5595 = vmatpush1.msra.mxu0 0.0
    %5596 = vmatprep.subr.mxu0 0.0
    %5597 = vmatpush1.msra.mxu0 0.0
    %5598 = vmatprep.subr.mxu0 0.0
    %5599 = vmatpush1.msra.mxu0 0.0
    %5600 = vmatprep.subr.mxu0 0.0
    %5601 = vmatpush1.msra.mxu0 0.0
    %5602 = vmatprep.subr.mxu0 0.0
    %5603 = vmatpush1.msra.mxu0 0.0
    %5604 = vmatprep.subr.mxu0 0.0
    %5605 = vmatpush1.msra.mxu0 0.0
    %5606 = vmatprep.subr.mxu0 0.0
    %5607 = vmatpush1.msra.mxu0 0.0
    %5608 = vmatprep.subr.mxu0 0.0
    %5609 = vmatpush1.msra.mxu0 0.0
    %5610 = vmatprep.subr.mxu0 0.0
    %5611 = vmatpush1.msra.mxu0 0.0
    %5612 = vmatprep.subr.mxu0 0.0
    %5613 = vmatpush1.msra.mxu0 0.0
    %5614 = vmatprep.subr.mxu0 0.0
    %5615 = vmatpush1.msra.mxu0 0.0
    %5616 = vmatprep.subr.mxu0 0.0
    %5617 = vmatpush1.msra.mxu0 0.0
    %5618 = vmatprep.subr.mxu0 0.0
    %5619 = vmatpush1.msra.mxu0 0.0
    %5620 = vmatprep.subr.mxu0 0.0
    %5621 = vmatpush1.msra.mxu0 0.0
    %5622 = vmatprep.subr.mxu0 0.0
    %5623 = vmatpush1.msra.mxu0 0.0
    %5624 = vmatprep.subr.mxu0 0.0
    %5625 = vmatpush1.msra.mxu0 0.0
    %5626 = vmatprep.mubr.f32.mxu0 0.0
    %5627 = vmatmul.mubr.f32.gmra.mrb[0].mxu0 %v5539
    %v5628 = vpop.f32.mrb[0].mxu0
    %v5629 = vadd.f32 0.0, %v5628
    %v5630 = vpop.f32.mrb[0].mxu0
    %5631 = vmatprep.mubr.f32.mxu0 0.0
    %5632 = vmatmul.mubr.f32.gmra.mrb[0].mxu0 %v5542
    %v5633 = vpop.f32.mrb[0].mxu0
    %v5634 = vadd.f32 0.0, %v5633
    %v5635 = vpop.f32.mrb[0].mxu0
    %5636 = vmatprep.mubr.f32.mxu0 0.0
    %5637 = vmatmul.mubr.f32.gmra.mrb[0].mxu0 %v5545
    %v5638 = vpop.f32.mrb[0].mxu0
    %v5639 = vadd.f32 0.0, %v5638
    %v5640 = vpop.f32.mrb[0].mxu0
    %5641 = vmatprep.mubr.f32.mxu0 0.0
    %5642 = vmatmul.mubr.f32.gmra.mrb[0].mxu0 %v5548
    %v5643 = vpop.f32.mrb[0].mxu0
    %v5644 = vadd.f32 0.0, %v5643
    %v5645 = vpop.f32.mrb[0].mxu0
    %5646 = vmatprep.mubr.f32.mxu0 0.0
    %5647 = vmatmul.mubr.f32.gmra.mrb[0].mxu0 %v5551
    %v5648 = vpop.f32.mrb[0].mxu0
    %v5649 = vadd.f32 0.0, %v5648
    %v5650 = vpop.f32.mrb[0].mxu0
    %5651 = vmatprep.mubr.f32.mxu0 0.0
    %5652 = vmatmul.mubr.f32.gmra.mrb[0].mxu0 %v5554
    %v5653 = vpop.f32.mrb[0].mxu0
    %v5654 = vadd.f32 0.0, %v5653
    %v5655 = vpop.f32.mrb[0].mxu0
    %5656 = vmatprep.mubr.f32.mxu0 0.0
    %5657 = vmatmul.mubr.f32.gmra.mrb[0].mxu0 %v5557
    %v5658 = vpop.f32.mrb[0].mxu0
    %v5659 = vadd.f32 0.0, %v5658
    %v5660 = vpop.f32.mrb[0].mxu0
    %5661 = vmatprep.mubr.f32.mxu0 0.0
    %5662 = vmatmul.mubr.f32.gmra.mrb[0].mxu0 %v5560
    %v5663 = vpop.f32.mrb[0].mxu0
    %v5664 = vadd.f32 0.0, %v5663
    %v5665 = vpop.f32.mrb[0].mxu0
    %5666 = vdwg.mxu0
    %5667 = vxpose.xlu0.b32.start [1/16] %v5629, 128
    %5668 = vxpose.xlu0.b32.cont [2/16] %v5634, 128
    %5669 = vxpose.xlu0.b32.cont [3/16] %v5639, 128
    %5670 = vxpose.xlu0.b32.cont [4/16] %v5644, 128
    %5671 = vxpose.xlu0.b32.cont [5/16] %v5649, 128
    %5672 = vxpose.xlu0.b32.cont [6/16] %v5654, 128
    %5673 = vxpose.xlu0.b32.cont [7/16] %v5659, 128
    %5674 = vxpose.xlu0.b32.cont [8/16] %v5664, 128
    %5675 = vxpose.xlu0.b32.cont [9/16] 0.0, 128
    %5676 = vxpose.xlu0.b32.cont [10/16] 0.0, 128
    %5677 = vxpose.xlu0.b32.cont [11/16] 0.0, 128
    %5678 = vxpose.xlu0.b32.cont [12/16] 0.0, 128
    %5679 = vxpose.xlu0.b32.cont [13/16] 0.0, 128
    %5680 = vxpose.xlu0.b32.cont [14/16] 0.0, 128
    %5681 = vxpose.xlu0.b32.cont [15/16] 0.0, 128
    %5682 = vxpose.xlu0.b32.end [16/16] 0.0, 128
    %v5683 = vpop.trf.xlu0
    %v5684 = vpop.trf.xlu0
    %v5685 = vpop.trf.xlu0
    %v5686 = vpop.trf.xlu0
    %v5687 = vpop.trf.xlu0
    %v5688 = vpop.trf.xlu0
    %v5689 = vpop.trf.xlu0
    %v5690 = vpop.trf.xlu0
    %v5691 = vpop.trf.xlu0
    %v5692 = vpop.trf.xlu0
    %v5693 = vpop.trf.xlu0
    %v5694 = vpop.trf.xlu0
    %v5695 = vpop.trf.xlu0
    %v5696 = vpop.trf.xlu0
    %v5697 = vpop.trf.xlu0
    %v5698 = vpop.trf.xlu0
    %v5699 = vld [vmem:[%s10] sm:$0x1]
    %5701 = vset.pattern.permute.xlu0 8
    %5702 = vperm.xlu0 %5701, %v5629
    %v5703 = vpop.permute.xlu0 %5702
    %5706 = vset.pattern.permute.xlu0 8
    %5707 = vperm.xlu0 %5706, %v5634
    %v5708 = vpop.permute.xlu0 %5707
    %5711 = vset.pattern.permute.xlu0 8
    %5712 = vperm.xlu0 %5711, %v5639
    %v5713 = vpop.permute.xlu0 %5712
    %5716 = vset.pattern.permute.xlu0 8
    %5717 = vperm.xlu0 %5716, %v5644
    %v5718 = vpop.permute.xlu0 %5717
    %5721 = vset.pattern.permute.xlu0 8
    %5722 = vperm.xlu0 %5721, %v5649
    %v5723 = vpop.permute.xlu0 %5722
    %5726 = vset.pattern.permute.xlu0 8
    %5727 = vperm.xlu0 %5726, %v5654
    %v5728 = vpop.permute.xlu0 %5727
    %5731 = vset.pattern.permute.xlu0 8
    %5732 = vperm.xlu0 %5731, %v5659
    %v5733 = vpop.permute.xlu0 %5732
    %5736 = vset.pattern.permute.xlu0 8
    %5737 = vperm.xlu0 %5736, %v5664
    %v5738 = vpop.permute.xlu0 %5737
    %v5740 = vlaneseq
    %v5741 = vshrl.u32 %v5740, 7
    %v5742 = vsub.s32 0, %v5741
    %v5743 = vrot.slane %v5683, %v5742
    %v5744 = vadd.f32 %v5703, %v5743
    %v5745 = vadd.f32 %v5708, %v5743
    %v5746 = vadd.f32 %v5713, %v5743
    %v5747 = vadd.f32 %v5718, %v5743
    %v5748 = vadd.f32 %v5723, %v5743
    %v5749 = vadd.f32 %v5728, %v5743
    %v5750 = vadd.f32 %v5733, %v5743
    %v5751 = vadd.f32 %v5738, %v5743
    %vm5752 = vcmp.gt.f32.partialorder %v5744, 0.0
    %vm5753 = vcmp.gt.f32.partialorder %v5745, 0.0
    %vm5754 = vcmp.gt.f32.partialorder %v5746, 0.0
    %vm5755 = vcmp.gt.f32.partialorder %v5747, 0.0
    %vm5756 = vcmp.gt.f32.partialorder %v5748, 0.0
    %vm5757 = vcmp.gt.f32.partialorder %v5749, 0.0
    %vm5758 = vcmp.gt.f32.partialorder %v5750, 0.0
    %vm5759 = vcmp.gt.f32.partialorder %v5751, 0.0
    %v5760 = vmul.f32 %v5744, 0.2
    %v5761 = vmul.f32 %v5745, 0.2
    %v5762 = vmul.f32 %v5746, 0.2
    %v5763 = vmul.f32 %v5747, 0.2
    %v5764 = vmul.f32 %v5748, 0.2
    %v5765 = vmul.f32 %v5749, 0.2
    %v5766 = vmul.f32 %v5750, 0.2
    %v5767 = vmul.f32 %v5751, 0.2
    %v5768 = vsel %vm5752, %v5744, %v5760
    %v5769 = vsel %vm5753, %v5745, %v5761
    %v5770 = vsel %vm5754, %v5746, %v5762
    %v5771 = vsel %vm5755, %v5747, %v5763
    %v5772 = vsel %vm5756, %v5748, %v5764
    %v5773 = vsel %vm5757, %v5749, %v5765
    %v5774 = vsel %vm5758, %v5750, %v5766
    %v5775 = vsel %vm5759, %v5751, %v5767
    %v5776 = vsel %vm52, %v5768, -1e+30
    %v5777 = vsel %vm53, %v5769, -1e+30
    %v5778 = vsel %vm54, %v5770, -1e+30
    %v5779 = vsel %vm55, %v5771, -1e+30
    %v5780 = vsel %vm56, %v5772, -1e+30
    %v5781 = vsel %vm57, %v5773, -1e+30
    %v5782 = vsel %vm58, %v5774, -1e+30
    %v5783 = vsel %vm59, %v5775, -1e+30
    %v5784 = vsel %vm84, %v5776, -inf
    %5785 = vmax.xlane.f32.xlu0 %v5784
    %v5786 = vpop.xlane.xlu0 %5785
    %v5787 = vsel %vm84, %v5777, -inf
    %5788 = vmax.xlane.f32.xlu0 %v5787
    %v5789 = vpop.xlane.xlu0 %5788
    %v5790 = vsel %vm84, %v5778, -inf
    %5791 = vmax.xlane.f32.xlu0 %v5790
    %v5792 = vpop.xlane.xlu0 %5791
    %v5793 = vsel %vm84, %v5779, -inf
    %5794 = vmax.xlane.f32.xlu0 %v5793
    %v5795 = vpop.xlane.xlu0 %5794
    %v5796 = vsel %vm84, %v5780, -inf
    %5797 = vmax.xlane.f32.xlu0 %v5796
    %v5798 = vpop.xlane.xlu0 %5797
    %v5799 = vsel %vm84, %v5781, -inf
    %5800 = vmax.xlane.f32.xlu0 %v5799
    %v5801 = vpop.xlane.xlu0 %5800
    %v5802 = vsel %vm84, %v5782, -inf
    %5803 = vmax.xlane.f32.xlu0 %v5802
    %v5804 = vpop.xlane.xlu0 %5803
    %v5805 = vsel %vm84, %v5783, -inf
    %5806 = vmax.xlane.f32.xlu0 %v5805
    %v5807 = vpop.xlane.xlu0 %5806
    %v5808 = vsub.f32 %v5776, %v5786
    %v5809 = vsub.f32 %v5777, %v5789
    %v5810 = vsub.f32 %v5778, %v5792
    %v5811 = vsub.f32 %v5779, %v5795
    %v5812 = vsub.f32 %v5780, %v5798
    %v5813 = vsub.f32 %v5781, %v5801
    %v5814 = vsub.f32 %v5782, %v5804
    %v5815 = vsub.f32 %v5783, %v5807
    %v5816 = vmul.f32 %v5808, 1.442695
    %v5817 = vpow.pop %v5816
    %v5818 = vmul.f32 %v5809, 1.442695
    %v5819 = vpow.pop %v5818
    %v5820 = vmul.f32 %v5810, 1.442695
    %v5821 = vpow.pop %v5820
    %v5822 = vmul.f32 %v5811, 1.442695
    %v5823 = vpow.pop %v5822
    %v5824 = vmul.f32 %v5812, 1.442695
    %v5825 = vpow.pop %v5824
    %v5826 = vmul.f32 %v5813, 1.442695
    %v5827 = vpow.pop %v5826
    %v5828 = vmul.f32 %v5814, 1.442695
    %v5829 = vpow.pop %v5828
    %v5830 = vmul.f32 %v5815, 1.442695
    %v5831 = vpow.pop %v5830
    %v5832 = vsel %vm84, %v5817, 0.0
    %5833 = vadd.xlane.f32.xlu0 %v5832
    %v5834 = vpop.xlane.xlu0 %5833
    %v5835 = vsel %vm84, %v5819, 0.0
    %5836 = vadd.xlane.f32.xlu0 %v5835
    %v5837 = vpop.xlane.xlu0 %5836
    %v5838 = vsel %vm84, %v5821, 0.0
    %5839 = vadd.xlane.f32.xlu0 %v5838
    %v5840 = vpop.xlane.xlu0 %5839
    %v5841 = vsel %vm84, %v5823, 0.0
    %5842 = vadd.xlane.f32.xlu0 %v5841
    %v5843 = vpop.xlane.xlu0 %5842
    %v5844 = vsel %vm84, %v5825, 0.0
    %5845 = vadd.xlane.f32.xlu0 %v5844
    %v5846 = vpop.xlane.xlu0 %5845
    %v5847 = vsel %vm84, %v5827, 0.0
    %5848 = vadd.xlane.f32.xlu0 %v5847
    %v5849 = vpop.xlane.xlu0 %5848
    %v5850 = vsel %vm84, %v5829, 0.0
    %5851 = vadd.xlane.f32.xlu0 %v5850
    %v5852 = vpop.xlane.xlu0 %5851
    %v5853 = vsel %vm84, %v5831, 0.0
    %5854 = vadd.xlane.f32.xlu0 %v5853
    %v5855 = vpop.xlane.xlu0 %5854
    %v5856 = vmax.f32 %v5834, 1e-20
    %v5857 = vmax.f32 %v5837, 1e-20
    %v5858 = vmax.f32 %v5840, 1e-20
    %v5859 = vmax.f32 %v5843, 1e-20
    %v5860 = vmax.f32 %v5846, 1e-20
    %v5861 = vmax.f32 %v5849, 1e-20
    %v5862 = vmax.f32 %v5852, 1e-20
    %v5863 = vmax.f32 %v5855, 1e-20
    %v5864 = vrcp.pop %v5856
    %v5865 = vrcp.pop %v5857
    %v5866 = vrcp.pop %v5858
    %v5867 = vrcp.pop %v5859
    %v5868 = vrcp.pop %v5860
    %v5869 = vrcp.pop %v5861
    %v5870 = vrcp.pop %v5862
    %v5871 = vrcp.pop %v5863
    %v5872 = vpack.c.bf16 %v5819, %v5817
    %v5873 = vpack.c.bf16 %v5823, %v5821
    %v5874 = vpack.c.bf16 %v5827, %v5825
    %v5875 = vpack.c.bf16 %v5831, %v5829
    %v5877 = vsel %vm84, %v5872, 0
    %v5880 = vsel %vm84, %v5873, 0
    %v5883 = vsel %vm84, %v5874, 0
    %v5886 = vsel %vm84, %v5875, 0
    %5888 = vmatprep.subr.bf16.mxu0 0
    %5889 = vmatpush1.bf16.msra.mxu0 %v5530
    %5890 = vmatprep.subr.bf16.mxu0 0
    %5891 = vmatpush1.bf16.msra.mxu0 %v5531
    %5892 = vmatprep.subr.bf16.mxu0 0
    %5893 = vmatpush1.bf16.msra.mxu0 %v5532
    %5894 = vmatprep.subr.bf16.mxu0 0
    %5895 = vmatpush1.bf16.msra.mxu0 %v5533
    %5896 = vmatprep.subr.bf16.mxu0 0
    %5897 = vmatpush1.bf16.msra.mxu0 0
    %5898 = vmatprep.subr.bf16.mxu0 0
    %5899 = vmatpush1.bf16.msra.mxu0 0
    %5900 = vmatprep.subr.bf16.mxu0 0
    %5901 = vmatpush1.bf16.msra.mxu0 0
    %5902 = vmatprep.subr.bf16.mxu0 0
    %5903 = vmatpush1.bf16.msra.mxu0 0
    %5904 = vmatprep.subr.bf16.mxu0 0
    %5905 = vmatpush1.bf16.msra.mxu0 0
    %5906 = vmatprep.subr.bf16.mxu0 0
    %5907 = vmatpush1.bf16.msra.mxu0 0
    %5908 = vmatprep.subr.bf16.mxu0 0
    %5909 = vmatpush1.bf16.msra.mxu0 0
    %5910 = vmatprep.subr.bf16.mxu0 0
    %5911 = vmatpush1.bf16.msra.mxu0 0
    %5912 = vmatprep.subr.bf16.mxu0 0
    %5913 = vmatpush1.bf16.msra.mxu0 0
    %5914 = vmatprep.subr.bf16.mxu0 0
    %5915 = vmatpush1.bf16.msra.mxu0 0
    %5916 = vmatprep.subr.bf16.mxu0 0
    %5917 = vmatpush1.bf16.msra.mxu0 0
    %5918 = vmatprep.subr.bf16.mxu0 0
    %5919 = vmatpush1.bf16.msra.mxu0 0
    %5920 = vmatprep.mubr.bf16.mxu0 0
    %5921 = vmatmul.mubr.bf16.gmra.mrb[0].mxu0 %v5877
    %v5922 = vpop.f32.mrb[0].mxu0
    %v5923 = vadd.f32 0.0, %v5922
    %v5924 = vpop.f32.mrb[0].mxu0
    %v5925 = vpop.f32.mrb[0].mxu0
    %v5926 = vadd.f32 0.0, %v5925
    %v5927 = vpop.f32.mrb[0].mxu0
    %5928 = vmatprep.mubr.bf16.mxu0 0
    %5929 = vmatmul.mubr.bf16.gmra.mrb[0].mxu0 %v5880
    %v5930 = vpop.f32.mrb[0].mxu0
    %v5931 = vadd.f32 0.0, %v5930
    %v5932 = vpop.f32.mrb[0].mxu0
    %v5933 = vpop.f32.mrb[0].mxu0
    %v5934 = vadd.f32 0.0, %v5933
    %v5935 = vpop.f32.mrb[0].mxu0
    %5936 = vmatprep.mubr.bf16.mxu0 0
    %5937 = vmatmul.mubr.bf16.gmra.mrb[0].mxu0 %v5883
    %v5938 = vpop.f32.mrb[0].mxu0
    %v5939 = vadd.f32 0.0, %v5938
    %v5940 = vpop.f32.mrb[0].mxu0
    %v5941 = vpop.f32.mrb[0].mxu0
    %v5942 = vadd.f32 0.0, %v5941
    %v5943 = vpop.f32.mrb[0].mxu0
    %5944 = vmatprep.mubr.bf16.mxu0 0
    %5945 = vmatmul.mubr.bf16.gmra.mrb[0].mxu0 %v5886
    %v5946 = vpop.f32.mrb[0].mxu0
    %v5947 = vadd.f32 0.0, %v5946
    %v5948 = vpop.f32.mrb[0].mxu0
    %v5949 = vpop.f32.mrb[0].mxu0
    %v5950 = vadd.f32 0.0, %v5949
    %v5951 = vpop.f32.mrb[0].mxu0
    %5952 = vdwg.mxu0
    %v5953 = vmul.f32 %v5923, %v5864
    %v5954 = vmul.f32 %v5926, %v5865
    %v5955 = vmul.f32 %v5931, %v5866
    %v5956 = vmul.f32 %v5934, %v5867
    %v5957 = vmul.f32 %v5939, %v5868
    %v5958 = vmul.f32 %v5942, %v5869
    %v5959 = vmul.f32 %v5947, %v5870
    %v5960 = vmul.f32 %v5950, %v5871
    %v5962 = vlaneseq
    %v5963 = vshrl.u32 %v5962, 7
    %v5964 = vsub.s32 0, %v5963
    %v5965 = vrot.slane %v5699, %v5964
    %v5967 = vadd.f32 %v5953, %v5965
    %v5968 = vadd.f32 %v5954, %v5965
    %v5969 = vadd.f32 %v5955, %v5965
    %v5970 = vadd.f32 %v5956, %v5965
    %v5971 = vadd.f32 %v5957, %v5965
    %v5972 = vadd.f32 %v5958, %v5965
    %v5973 = vadd.f32 %v5959, %v5965
    %v5974 = vadd.f32 %v5960, %v5965
    %v5975 = vsel %vm1188, %v5967, 0.0
    %v5976 = vsel %vm1188, %v5968, 0.0
    %v5977 = vsel %vm1188, %v5969, 0.0
    %v5978 = vsel %vm1188, %v5970, 0.0
    %v5979 = vsel %vm1188, %v5971, 0.0
    %v5980 = vsel %vm1188, %v5972, 0.0
    %v5981 = vsel %vm1188, %v5973, 0.0
    %v5982 = vsel %vm1188, %v5974, 0.0
    %5983 = vst [vmem:[#allocation6] sm:$0xff] %v5975
    %5984 = vst [vmem:[#allocation6 + $0x8] sm:$0xff] %v5976
    %5985 = vst [vmem:[#allocation6 + $0x10] sm:$0xff] %v5977
    %5986 = vst [vmem:[#allocation6 + $0x18] sm:$0xff] %v5978
    %5987 = vst [vmem:[#allocation6 + $0x20] sm:$0xff] %v5979
    %5988 = vst [vmem:[#allocation6 + $0x28] sm:$0xff] %v5980
    %5989 = vst [vmem:[#allocation6 + $0x30] sm:$0xff] %v5981
    %5990 = vst [vmem:[#allocation6 + $0x38] sm:$0xff] %v5982
    // Predicated region
    $region46: #{tpu_custom_call.1} parent=1 // pred_check
      _
    $region47: #{tpu_custom_call.1} parent=1 // pred_check_branch
      %5992 = sbr.rel (0) target = $region49
    $region48: #{tpu_custom_call.1} parent=1 // pred_region
      %s5994 = ssub.s32 1024, 1024
      %5995 = vsyncadd [#allocation3], %s5994
      %s5996 = sshll.u32 [#allocation2], 4
      %s5997 = int_to_ptr.vmem [resolvable:$true] %s5996
      %6002 = dma.vmem_to_hbm [thread:$0]  %s5997, 1024, %s11, [#allocation3], 128, 128, 8
    $region49: #{tpu_custom_call.1} parent=1 // pred_fallthru
      _
    // Predicated region
    $region50: #{tpu_custom_call.1} parent=1 // pred_check
      _
    $region51: #{tpu_custom_call.1} parent=1 // pred_check_branch
      %6004 = sbr.rel (0) target = $region53
    $region52: #{tpu_custom_call.1} parent=1 // pred_region
      %s6006 = ssub.s32 1024, 1024
      %6007 = vsyncadd [#allocation5], %s6006
      %s6008 = sshll.u32 [#allocation4], 4
      %s6009 = int_to_ptr.vmem [resolvable:$true] %s6008
      %6014 = dma.vmem_to_hbm [thread:$0]  %s6009, 1024, %s12, [#allocation5], 128, 128, 8
    $region53: #{tpu_custom_call.1} parent=1 // pred_fallthru
      _
    // Predicated region
    $region54: #{tpu_custom_call.1} parent=1 // pred_check
      _
    $region55: #{tpu_custom_call.1} parent=1 // pred_check_branch
      %6016 = sbr.rel (0) target = $region57
    $region56: #{tpu_custom_call.1} parent=1 // pred_region
      %s6018 = ssub.s32 1024, 1024
      %6019 = vsyncadd [#allocation5], %s6018
      %s6020 = sshll.u32 [#allocation6], 4
      %s6021 = int_to_ptr.vmem [resolvable:$true] %s6020
      %6026 = dma.vmem_to_hbm [thread:$0]  %s6021, 1024, %s13, [#allocation5], 128, 128, 8
    $region57: #{tpu_custom_call.1} parent=1 // pred_fallthru
      _
    // Predicated region
    $region58: #{tpu_custom_call.1} parent=1 // pred_check
      _
    $region59: #{tpu_custom_call.1} parent=1 // pred_check_branch
      %6028 = sbr.rel (0) target = $region61
    $region60: #{tpu_custom_call.1} parent=1 // pred_region
      %6029 = dma.done [#allocation3], 1024
    $region61: #{tpu_custom_call.1} parent=1 // pred_fallthru
      _
    // Predicated region
    $region62: #{tpu_custom_call.1} parent=1 // pred_check
      _
    $region63: #{tpu_custom_call.1} parent=1 // pred_check_branch
      %6031 = sbr.rel (0) target = $region65
    $region64: #{tpu_custom_call.1} parent=1 // pred_region
      %6032 = dma.done [#allocation5], 1024
    $region65: #{tpu_custom_call.1} parent=1 // pred_fallthru
      _
    // Predicated region
    $region66: #{tpu_custom_call.1} parent=1 // pred_check
      _
    $region67: #{tpu_custom_call.1} parent=1 // pred_check_branch
      %6034 = sbr.rel (0) target = $region69
    $region68: #{tpu_custom_call.1} parent=1 // pred_region
      %6035 = dma.done [#allocation5], 1024
    $region69: #{tpu_custom_call.1} parent=1 // pred_fallthru
      _
    %6036 = vsyncpa [#allocation3], 1
    %6037 = vsyncpa [#allocation5], 1

</llo_original>
